<compile_context>
chip_gen: v6e
topology: v6e:2x2x1
jax: 0.10.0
libtpu: 0.0.40
codegen_flags: <defaults>
</compile_context>

<pallas_src>
import jax
import jax.numpy as jnp
from jax import lax
from jax.experimental import pallas as pl
from jax.experimental.pallas import tpu as pltpu


def _round_up(x: int, m: int) -> int:
    return ((x + m - 1) // m) * m


def _choose_tile(t: int, tile: int) -> int:
    return min(_round_up(tile, 128), _round_up(t, 128))


def _vmem_budget_bytes() -> int:
    """Conservative per-call VMEM budget for the fast (table-resident) path.

    ~35% of physical VMEM leaves headroom for double-buffered index / label /
    output streams and compiler temporaries (v7x: 64 MiB physical -> ~22 MiB;
    v5e/v6e: 128 MiB -> ~45 MiB)."""
    cap = 64 * 2**20
    try:
        cap = int(pltpu.get_tpu_info().vmem_capacity_bytes)
    except Exception:
        pass
    return int(cap * 0.35)


def _fast_need_bytes(n: int, r_n: int, h: int, tile: int, esize: int) -> int:
    table = (n + r_n) * h * esize              # resident embedding + w_relation
    onehot = (2 * n + r_n) * tile * 4          # one-hot gather intermediates
    gathered = 3 * tile * h * 4                # s, r, o rows in f32
    io = 5 * tile * 4 * 2                      # double-buffered idx/label/out rows
    return table + onehot + gathered + io


# ---------------------------------------------------------------------------
# In-kernel gather helpers
# ---------------------------------------------------------------------------
def _onehot_gather(idx_row, table):
    """Gather rows of `table` (rows, h) at `idx_row` (1, tile) int32 via a
    one-hot matmul on the MXU.  Exact: each output row is 1.0 * table[row]."""
    rows = table.shape[0]
    tile = idx_row.shape[-1]
    iota = lax.broadcasted_iota(jnp.int32, (rows, tile), 0)
    onehot = (iota == idx_row).astype(table.dtype)          # (rows, tile)
    # Contract dim 0 of both: (tile, rows) @ (rows, h) without materializing
    # a transpose of the index row.
    return lax.dot_general(onehot, table,
                           dimension_numbers=(((0,), (0,)), ((), ())),
                           preferred_element_type=jnp.float32)   # (tile, h) f32


def _fast_scores(src_row, rel_row, dst_row, emb_ref, wrel_ref):
    """Fast path: both tables are resident in VMEM; gather via MXU one-hot."""
    emb = emb_ref[...]
    wrel = wrel_ref[...]
    s = _onehot_gather(src_row, emb)
    r = _onehot_gather(rel_row, wrel)
    o = _onehot_gather(dst_row, emb)
    return jnp.sum(s * r * o, axis=1)[None, :]               # (1, tile) f32


def _dma_scores(i, src_sref, dst_sref, rel_row, emb_hbm, wrel_ref,
                s_buf, o_buf, sem):
    """Fallback path: embedding stays in HBM; s/o rows are gathered with
    per-row DMAs, double-buffered across grid steps, with ONE aggregate wait
    per buffer per step.  w_relation is resident in VMEM (one-hot gather)."""
    n_steps = pl.num_programs(0)
    tile = s_buf.shape[1]

    def issue(step, slot):
        base = step * tile

        def body(row, carry):
            t = base + row
            pltpu.make_async_copy(emb_hbm.at[pl.ds(src_sref[t], 1)],
                                  s_buf.at[slot, pl.ds(row, 1)],
                                  sem.at[0, slot]).start()
            pltpu.make_async_copy(emb_hbm.at[pl.ds(dst_sref[t], 1)],
                                  o_buf.at[slot, pl.ds(row, 1)],
                                  sem.at[1, slot]).start()
            return carry

        # Unrolled so several descriptors are in flight per few cycles.
        lax.fori_loop(0, tile, body, None, unroll=8)

    slot = i & 1

    @pl.when(i == 0)
    def _():                       # prologue: prime slot 0 with tile 0
        issue(0, 0)

    @pl.when(i + 1 < n_steps)
    def _():                       # prefetch next tile into the other slot
        issue(i + 1, 1 - slot)

    # Aggregate wait: one dummy descriptor sized to the whole (tile, H) slot
    # per semaphore; byte accounting matches the tile row-copies exactly.
    pltpu.make_async_copy(s_buf.at[slot], s_buf.at[slot], sem.at[0, slot]).wait()
    pltpu.make_async_copy(o_buf.at[slot], o_buf.at[slot], sem.at[1, slot]).wait()

    s = s_buf[slot].astype(jnp.float32)
    o = o_buf[slot].astype(jnp.float32)
    r = _onehot_gather(rel_row, wrel_ref[...])
    return jnp.sum(s * r * o, axis=1)[None, :]                # (1, tile) f32


def _bce_row(scores, labels_row, i, tile, t_total):
    """Masked per-element BCE row (mask derived in-kernel, no streamed mask).
    Reproduces the reference quirk: sigmoid(score) fed to the with-logits BCE."""
    x = jax.nn.sigmoid(scores)
    y = labels_row
    bce = jnp.maximum(x, 0.0) - x * y + jnp.log1p(jnp.exp(-jnp.abs(x)))
    cols = i * tile + lax.broadcasted_iota(jnp.int32, (1, tile), 1)
    return jnp.where(cols < t_total, bce, 0.0)


# ---------------------------------------------------------------------------
# Kernels
# ---------------------------------------------------------------------------
def _score_fast_kernel(src_ref, rel_ref, dst_ref, emb_ref, wrel_ref, score_ref):
    score_ref[...] = _fast_scores(src_ref[...], rel_ref[...], dst_ref[...],
                                  emb_ref, wrel_ref)


def _make_bce_fast_kernel(t_total):
    def kernel(src_ref, rel_ref, dst_ref, labels_ref, emb_ref, wrel_ref, bce_ref):
        i = pl.program_id(0)
        tile = labels_ref.shape[-1]
        scores = _fast_scores(src_ref[...], rel_ref[...], dst_ref[...],
                              emb_ref, wrel_ref)
        bce_ref[...] = _bce_row(scores, labels_ref[...], i, tile, t_total)
    return kernel


def _score_dma_kernel(src_sref, dst_sref, rel_ref, emb_hbm, wrel_ref, score_ref,
                      s_buf, o_buf, sem):
    i = pl.program_id(0)
    score_ref[...] = _dma_scores(i, src_sref, dst_sref, rel_ref[...],
                                 emb_hbm, wrel_ref, s_buf, o_buf, sem)


def _make_bce_dma_kernel(t_total):
    def kernel(src_sref, dst_sref, rel_ref, labels_ref, emb_hbm, wrel_ref,
               bce_ref, s_buf, o_buf, sem):
        i = pl.program_id(0)
        tile = labels_ref.shape[-1]
        scores = _dma_scores(i, src_sref, dst_sref, rel_ref[...],
                             emb_hbm, wrel_ref, s_buf, o_buf, sem)
        bce_ref[...] = _bce_row(scores, labels_ref[...], i, tile, t_total)
    return kernel


# ---------------------------------------------------------------------------
# Wrappers
# ---------------------------------------------------------------------------
def _prep_indices(triplets, t_pad):
    trip = triplets.astype(jnp.int32)
    pad = t_pad - trip.shape[0]
    src = jnp.pad(trip[:, 0], (0, pad))     # padded rows gather row 0 (valid)
    rel = jnp.pad(trip[:, 1], (0, pad))
    dst = jnp.pad(trip[:, 2], (0, pad))
    return src, rel, dst


def calc_score(embedding, w_relation, triplets, *, tile=512, force_dma=False):
    """embedding: (N, H), w_relation: (R, H), triplets: (T, 3) int -> (T,) f32."""
    t = triplets.shape[0]
    n, h = embedding.shape
    r_n = w_relation.shape[0]
    tile = _choose_tile(t, tile)
    t_pad = _round_up(t, tile)
    grid = (t_pad // tile,)
    src, rel, dst = _prep_indices(triplets, t_pad)

    esize = jnp.dtype(embedding.dtype).itemsize
    fast_need = _fast_need_bytes(n, r_n, h, tile, esize)
    use_fast = (not force_dma) and fast_need <= _vmem_budget_bytes()

    if use_fast:
        score = pl.pallas_call(
            _score_fast_kernel,
            out_shape=jax.ShapeDtypeStruct((1, t_pad), jnp.float32),
            grid_spec=pltpu.PrefetchScalarGridSpec(
                num_scalar_prefetch=0,
                grid=grid,
                in_specs=[pl.BlockSpec((1, tile), lambda i: (0, i)),    # src idx
                          pl.BlockSpec((1, tile), lambda i: (0, i)),    # rel idx
                          pl.BlockSpec((1, tile), lambda i: (0, i)),    # dst idx
                          pl.BlockSpec((n, h), lambda i: (0, 0)),       # embedding (resident)
                          pl.BlockSpec((r_n, h), lambda i: (0, 0))],    # w_relation (resident)
                out_specs=pl.BlockSpec((1, tile), lambda i: (0, i))),
            compiler_params=pltpu.CompilerParams(
                dimension_semantics=("parallel",),
                vmem_limit_bytes=int(max(32 * 2**20, 3 * fast_need))),
        )(src.reshape(1, t_pad), rel.reshape(1, t_pad), dst.reshape(1, t_pad),
          embedding, w_relation)
    else:
        score = pl.pallas_call(
            _score_dma_kernel,
            out_shape=jax.ShapeDtypeStruct((1, t_pad), jnp.float32),
            grid_spec=pltpu.PrefetchScalarGridSpec(
                num_scalar_prefetch=2,                                  # src, dst in SMEM
                grid=grid,
                in_specs=[pl.BlockSpec((1, tile), lambda i, s, d: (0, i)),   # rel idx
                          pl.BlockSpec(memory_space=pl.ANY),                 # embedding in HBM
                          pl.BlockSpec((r_n, h), lambda i, s, d: (0, 0))],   # w_relation (resident)
                out_specs=pl.BlockSpec((1, tile), lambda i, s, d: (0, i)),
                scratch_shapes=[pltpu.VMEM((2, tile, h), embedding.dtype),   # s rows (dbl-buf)
                                pltpu.VMEM((2, tile, h), embedding.dtype),   # o rows (dbl-buf)
                                pltpu.SemaphoreType.DMA((2, 2))]),
            compiler_params=pltpu.CompilerParams(
                dimension_semantics=("arbitrary",),   # dbl-buffer prologue needs step 0
                vmem_limit_bytes=int(max(32 * 2**20, 6 * tile * h * esize))),
        )(src, dst, rel.reshape(1, t_pad), embedding, w_relation)

    return score[0, :t]


def get_loss(embedding, w_relation, triplets, labels, *, reg_param,
             tile=512, force_dma=False):
    """BCEWithLogits(sigmoid(score), labels) + reg_param * (mean(emb^2)+mean(w^2))."""
    t = triplets.shape[0]
    n, h = embedding.shape
    r_n = w_relation.shape[0]
    tile = _choose_tile(t, tile)
    t_pad = _round_up(t, tile)
    grid = (t_pad // tile,)
    src, rel, dst = _prep_indices(triplets, t_pad)
    labels_row = jnp.pad(labels.astype(jnp.float32), (0, t_pad - t)).reshape(1, t_pad)

    esize = jnp.dtype(embedding.dtype).itemsize
    fast_need = _fast_need_bytes(n, r_n, h, tile, esize)
    use_fast = (not force_dma) and fast_need <= _vmem_budget_bytes()

    if use_fast:
        bce_rows = pl.pallas_call(
            _make_bce_fast_kernel(t),
            out_shape=jax.ShapeDtypeStruct((1, t_pad), jnp.float32),
            grid_spec=pltpu.PrefetchScalarGridSpec(
                num_scalar_prefetch=0,
                grid=grid,
                in_specs=[pl.BlockSpec((1, tile), lambda i: (0, i)),
                          pl.BlockSpec((1, tile), lambda i: (0, i)),
                          pl.BlockSpec((1, tile), lambda i: (0, i)),
                          pl.BlockSpec((1, tile), lambda i: (0, i)),    # labels
                          pl.BlockSpec((n, h), lambda i: (0, 0)),
                          pl.BlockSpec((r_n, h), lambda i: (0, 0))],
                out_specs=pl.BlockSpec((1, tile), lambda i: (0, i))),
            compiler_params=pltpu.CompilerParams(
                dimension_semantics=("parallel",),                      # megacore-friendly
                vmem_limit_bytes=int(max(32 * 2**20, 3 * fast_need))),
        )(src.reshape(1, t_pad), rel.reshape(1, t_pad), dst.reshape(1, t_pad),
          labels_row, embedding, w_relation)
    else:
        bce_rows = pl.pallas_call(
            _make_bce_dma_kernel(t),
            out_shape=jax.ShapeDtypeStruct((1, t_pad), jnp.float32),
            grid_spec=pltpu.PrefetchScalarGridSpec(
                num_scalar_prefetch=2,
                grid=grid,
                in_specs=[pl.BlockSpec((1, tile), lambda i, s, d: (0, i)),   # rel idx
                          pl.BlockSpec((1, tile), lambda i, s, d: (0, i)),   # labels
                          pl.BlockSpec(memory_space=pl.ANY),                 # embedding in HBM
                          pl.BlockSpec((r_n, h), lambda i, s, d: (0, 0))],   # w_relation
                out_specs=pl.BlockSpec((1, tile), lambda i, s, d: (0, i)),
                scratch_shapes=[pltpu.VMEM((2, tile, h), embedding.dtype),
                                pltpu.VMEM((2, tile, h), embedding.dtype),
                                pltpu.SemaphoreType.DMA((2, 2))]),
            compiler_params=pltpu.CompilerParams(
                dimension_semantics=("arbitrary",),
                vmem_limit_bytes=int(max(32 * 2**20, 6 * tile * h * esize))),
        )(src, dst, rel.reshape(1, t_pad), labels_row, embedding, w_relation)

    predict_loss = jnp.sum(bce_rows) / t
    # Regularization term: plain XLA reduction (HBM-roofline already; a Pallas
    # kernel only added launch overhead + an extra padded table copy).
    reg_loss = (jnp.mean(jnp.square(embedding.astype(jnp.float32)))
                + jnp.mean(jnp.square(w_relation.astype(jnp.float32))))
    return predict_loss + reg_param * reg_loss


# ---------------------------------------------------------------------------
# "Module": deterministic parameter init + forward
# ---------------------------------------------------------------------------
def init_w_relation(key, num_rels, h_dim):
    # nn.init.xavier_uniform_(w, gain=calculate_gain('relu')) on (num_rels, h_dim)
    gain = jnp.sqrt(2.0)
    bound = gain * jnp.sqrt(6.0 / (h_dim + num_rels))
    return jax.random.uniform(key, (num_rels, h_dim), jnp.float32,
                              minval=-bound, maxval=bound)


def link_predict_forward(embedding):
    # TODO(synk): BGHGNN backbone (self.h2h) is not defined in the provided
    # source; forward() returns the node embedding unchanged.
    return embedding


if __name__ == "__main__":
    key = jax.random.PRNGKey(0)
    k_emb, k_rel, ks, kr, ko, kl = jax.random.split(key, 6)

    N, H = 64, 32          # nodes, hidden dim (args.n_hid stand-in)
    R = 8                  # num_rels
    T = 1000               # triplets (deliberately not a tile multiple)
    reg_param = 0.01

    embedding = jax.random.normal(k_emb, (N, H), jnp.float32)
    w_relation = init_w_relation(k_rel, R, H)
    triplets = jnp.stack([jax.random.randint(ks, (T,), 0, N),
                          jax.random.randint(kr, (T,), 0, R),
                          jax.random.randint(ko, (T,), 0, N)], axis=1)  # (T, 3)
    labels = jax.random.bernoulli(kl, 0.5, (T,)).astype(jnp.float32)

    emb_out = link_predict_forward(embedding)

    # Fast (VMEM-resident, MXU one-hot gather) path — auto-selected here.
    score = calc_score(emb_out, w_relation, triplets)
    loss = get_loss(emb_out, w_relation, triplets, labels, reg_param=reg_param)

    # Manual-DMA fallback path (used for tables too large for VMEM) —
    # exercised here as well so both code paths are validated on-device.
    score_dma = calc_score(emb_out, w_relation, triplets, force_dma=True)
    loss_dma = get_loss(emb_out, w_relation, triplets, labels,
                        reg_param=reg_param, force_dma=True)
    jax.block_until_ready((score, loss, score_dma, loss_dma))

    # Pure-JAX reference
    s = emb_out[triplets[:, 0]]
    r = w_relation[triplets[:, 1]]
    o = emb_out[triplets[:, 2]]
    score_ref = jnp.sum(s * r * o, axis=1)
    x = jax.nn.sigmoid(score_ref)
    bce_ref = jnp.mean(jnp.maximum(x, 0.0) - x * labels
                       + jnp.log1p(jnp.exp(-jnp.abs(x))))
    reg_ref = jnp.mean(emb_out ** 2) + jnp.mean(w_relation ** 2)
    loss_ref = bce_ref + reg_param * reg_ref

    assert jnp.allclose(score, score_ref, atol=1e-4, rtol=1e-4)
    assert jnp.allclose(score_dma, score_ref, atol=1e-4, rtol=1e-4)
    assert jnp.allclose(loss, loss_ref, atol=1e-4, rtol=1e-4)
    assert jnp.allclose(loss_dma, loss_ref, atol=1e-4, rtol=1e-4)

    print("KERNEL_OK")
</pallas_src>

<mosaic_0001>
module attributes {stable_mosaic.version = 11 : i64} {
  func.func @_score_fast_kernel(%arg0: i32, %arg1: memref<1x512xi32, #tpu.memory_space<vmem>>, %arg2: memref<1x512xi32, #tpu.memory_space<vmem>>, %arg3: memref<1x512xi32, #tpu.memory_space<vmem>>, %arg4: memref<64x32xf32, #tpu.memory_space<vmem>>, %arg5: memref<8x32xf32, #tpu.memory_space<vmem>>, %arg6: memref<1x512xf32, #tpu.memory_space<vmem>>) attributes {dimension_semantics = [#tpu.dimension_semantics<parallel>], iteration_bounds = array<i64: 2>, scalar_prefetch = 0 : i64, scratch_operands = 0 : i64, tpu.core_type = #tpu.core_type<tc>, window_params = [{transform_indices = @transform_0, window_bounds = array<i64: 1, 512>}, {transform_indices = @transform_1, window_bounds = array<i64: 1, 512>}, {transform_indices = @transform_2, window_bounds = array<i64: 1, 512>}, {pipeline_mode = #tpu.pipeline_mode<synchronous>, transform_indices = @transform_3, window_bounds = array<i64: 64, 32>}, {pipeline_mode = #tpu.pipeline_mode<synchronous>, transform_indices = @transform_4, window_bounds = array<i64: 8, 32>}, {transform_indices = @transform_5, window_bounds = array<i64: 1, 512>}]} {
    %c0 = arith.constant 0 : index
    %c0_0 = arith.constant 0 : index
    %0 = vector.load %arg1[%c0, %c0_0] : memref<1x512xi32, #tpu.memory_space<vmem>>, vector<1x512xi32>
    %c0_1 = arith.constant 0 : index
    %c0_2 = arith.constant 0 : index
    %1 = vector.load %arg2[%c0_1, %c0_2] : memref<1x512xi32, #tpu.memory_space<vmem>>, vector<1x512xi32>
    %c0_3 = arith.constant 0 : index
    %c0_4 = arith.constant 0 : index
    %2 = vector.load %arg3[%c0_3, %c0_4] : memref<1x512xi32, #tpu.memory_space<vmem>>, vector<1x512xi32>
    %c0_5 = arith.constant 0 : index
    %c0_6 = arith.constant 0 : index
    %3 = vector.load %arg4[%c0_5, %c0_6] : memref<64x32xf32, #tpu.memory_space<vmem>>, vector<64x32xf32>
    %c0_7 = arith.constant 0 : index
    %c0_8 = arith.constant 0 : index
    %4 = vector.load %arg5[%c0_7, %c0_8] : memref<8x32xf32, #tpu.memory_space<vmem>>, vector<8x32xf32>
    %5 = tpu.iota {dimensions = array<i32: 0>} : vector<64x512xi32>
    %6 = vector.broadcast %0 : vector<1x512xi32> to vector<64x512xi32>
    %7 = arith.cmpi eq, %5, %6 : vector<64x512xi32>
    %8 = arith.extui %7 : vector<64x512xi1> to vector<64x512xi32>
    %9 = arith.sitofp %8 : vector<64x512xi32> to vector<64x512xf32>
    %cst = arith.constant dense<0.000000e+00> : vector<512x32xf32>
    %10 = tpu.matmul %9, %3, %cst {dimension_numbers = #tpu.dot_dimension_numbers<[0], [0], [1], [1], [0, 1, 1, 1], [], []>} : vector<64x512xf32>, vector<64x32xf32>, vector<512x32xf32> -> vector<512x32xf32>
    %11 = tpu.iota {dimensions = array<i32: 0>} : vector<8x512xi32>
    %12 = vector.broadcast %1 : vector<1x512xi32> to vector<8x512xi32>
    %13 = arith.cmpi eq, %11, %12 : vector<8x512xi32>
    %14 = arith.extui %13 : vector<8x512xi1> to vector<8x512xi32>
    %15 = arith.sitofp %14 : vector<8x512xi32> to vector<8x512xf32>
    %cst_9 = arith.constant dense<0.000000e+00> : vector<512x32xf32>
    %16 = tpu.matmul %15, %4, %cst_9 {dimension_numbers = #tpu.dot_dimension_numbers<[0], [0], [1], [1], [0, 1, 1, 1], [], []>} : vector<8x512xf32>, vector<8x32xf32>, vector<512x32xf32> -> vector<512x32xf32>
    %17 = tpu.iota {dimensions = array<i32: 0>} : vector<64x512xi32>
    %18 = vector.broadcast %2 : vector<1x512xi32> to vector<64x512xi32>
    %19 = arith.cmpi eq, %17, %18 : vector<64x512xi32>
    %20 = arith.extui %19 : vector<64x512xi1> to vector<64x512xi32>
    %21 = arith.sitofp %20 : vector<64x512xi32> to vector<64x512xf32>
    %cst_10 = arith.constant dense<0.000000e+00> : vector<512x32xf32>
    %22 = tpu.matmul %21, %3, %cst_10 {dimension_numbers = #tpu.dot_dimension_numbers<[0], [0], [1], [1], [0, 1, 1, 1], [], []>} : vector<64x512xf32>, vector<64x32xf32>, vector<512x32xf32> -> vector<512x32xf32>
    %23 = arith.mulf %10, %16 : vector<512x32xf32>
    %24 = arith.mulf %23, %22 : vector<512x32xf32>
    %cst_11 = arith.constant dense<0.000000e+00> : vector<512xf32>
    %25 = vector.multi_reduction <add>, %24, %cst_11 [1] : vector<512x32xf32> to vector<512xf32>
    %26 = vector.shape_cast %25 : vector<512xf32> to vector<1x512xf32>
    %c0_12 = arith.constant 0 : index
    %c0_13 = arith.constant 0 : index
    %27 = vector.load %arg6[%c0_12, %c0_13] : memref<1x512xf32, #tpu.memory_space<vmem>>, vector<1x512xf32>
    tpu.vector_store %arg6[%c0_12, %c0_13], %26 {strides = array<i32>} : memref<1x512xf32, #tpu.memory_space<vmem>>, vector<1x512xf32>,
    return
  }
  func.func @transform_0(%arg0: i32) -> (i32, i32) {
    %c0_i32 = arith.constant 0 : i32
    %c0_i32_0 = arith.constant 0 : i32
    return %c0_i32, %arg0 : i32, i32
  }
  func.func @transform_1(%arg0: i32) -> (i32, i32) {
    %c0_i32 = arith.constant 0 : i32
    %c0_i32_0 = arith.constant 0 : i32
    return %c0_i32, %arg0 : i32, i32
  }
  func.func @transform_2(%arg0: i32) -> (i32, i32) {
    %c0_i32 = arith.constant 0 : i32
    %c0_i32_0 = arith.constant 0 : i32
    return %c0_i32, %arg0 : i32, i32
  }
  func.func @transform_3(%arg0: i32) -> (i32, i32) {
    %c0_i32 = arith.constant 0 : i32
    %c0_i32_0 = arith.constant 0 : i32
    %c0_i32_1 = arith.constant 0 : i32
    return %c0_i32, %c0_i32_0 : i32, i32
  }
  func.func @transform_4(%arg0: i32) -> (i32, i32) {
    %c0_i32 = arith.constant 0 : i32
    %c0_i32_0 = arith.constant 0 : i32
    %c0_i32_1 = arith.constant 0 : i32
    return %c0_i32, %c0_i32_0 : i32, i32
  }
  func.func @transform_5(%arg0: i32) -> (i32, i32) {
    %c0_i32 = arith.constant 0 : i32
    %c0_i32_0 = arith.constant 0 : i32
    return %c0_i32, %arg0 : i32, i32
  }
}

</mosaic_0001>

<llo_original>
// kernel: tpu_custom_call.1
$region0: #{tpu_custom_call.1}
  #allocation0 [shape = 'u32[]', space=smem, size = 0x4, offset = 0x4, fixed_abs, tag = 'smem constant byte address 0x4 - core index']
  #allocation1 [shape = 'u32[144,128]{1,0:T(1,128)}', space=vmem, size = 0x12000, scoped, tag = 'internal scratch']
  %s0 = inlined_call_operand.vmem [shape: s32[1,1024], index: 0, kind: input, shape index: {}]
  %s1 = inlined_call_operand.vmem [shape: s32[1,1024], index: 1, kind: input, shape index: {}]
  %s2 = inlined_call_operand.vmem [shape: s32[1,1024], index: 2, kind: input, shape index: {}]
  %s3 = inlined_call_operand.vmem [shape: f32[64,32], index: 3, kind: input, shape index: {}]
  %s4 = inlined_call_operand.vmem [shape: f32[8,32], index: 4, kind: input, shape index: {}]
  %s5 = inlined_call_operand.hbm [shape: f32[1,1024], index: 5, kind: output, shape index: {}]
  %s6 = sld [smem:[#allocation0]]
  $region53: #{tpu_custom_call.1} parent=0
    _
  %s8 = ssub.s32 1, %s6
  %s9 = scalar_select 0, %s8, %s6
  $region1: #{tpu_custom_call.1} parent=0
    #allocation2 [shape = 'u8[4096]{0}', space=vmem, size = 0x1000, scoped, tag = 'output window, operand 0']
    #allocation3 [shape = 's32[2]{0}', space=sflag, size = 0x8, scoped, tag = 'scoped memory for tpu_custom_call.1']
    %10 = vsyncpa [#allocation3], 0
    %s11 = scalar_lea.sflag [#allocation3], 1
    %12 = vsyncpa %s11, 0
    loop: start=0, step=1, limit=4
    $region2: #{tpu_custom_call.1} parent=1 // loop_pre_header
      _
    $region3: #{tpu_custom_call.1} parent=1 // loop_header
      %s14 = sphi 0, %s18
      %p15 = scmp.ge.s32.totalorder %s14, 4
      %s24 = sphi 0, %s26
      %s27 = sphi 0, %s24
      %s28 = sphi 0, %s27
      %s44 = sphi 0, %s28
      %s50 = sphi 0, %s52
      %s53 = sphi 0, %s50
      %s54 = sphi 0, %s53
      %s70 = sphi 0, %s54
      %s76 = sphi 0, %s78
      %s79 = sphi 0, %s76
      %s80 = sphi 0, %s79
      %s96 = sphi 0, %s80
      %s100 = sphi 0, %s100
      %s102 = sphi 0, %s100
      %s103 = sphi 0, %s102
      %s117 = sphi 0, %s103
      %s121 = sphi 0, %s121
      %s123 = sphi 0, %s121
      %s124 = sphi 0, %s123
      %s138 = sphi 0, %s124
      %s144 = sphi 0, %s146
      %s147 = sphi 0, %s144
      %s148 = sphi 0, %s147
      %s164 = sphi 0, %s148
    $region4: #{tpu_custom_call.1} parent=1 // loop_header_branch
      %17 = sbr.rel (%p15) target = $region8
    $region5: #{tpu_custom_call.1} parent=1 // loop_body
      %s19 = ssub.s32 %s14, 1
      %s20 = ssub.s32 %s14, 2
      %s21 = sadd.s32 %s14, 1
      %s22 = ssub.s32 %s14, %s21
      %p23 = scmp.eq.s32.totalorder %s22, 0
      %s25 = sadd.s32 %s24, 1
      %s26 = scalar_select %p23, %s24, %s25
      %p29 = pneg %p23
      %p30 = scmp.eq.s32.totalorder %s14, 1
      %p31 = por %p29, %p30
      %p32 = scmp.ne.s32.totalorder %s24, %s27
      %p33 = scmp.eq.s32.totalorder %s14, 0
      %p34 = por %p32, %p33
      %p35 = scmp.ne.s32.totalorder %s24, %s27
      %p36 = scmp.eq.s32.totalorder %s19, 1
      %p37 = por %p35, %p36
      %p38 = scmp.ne.s32.totalorder %s27, %s28
      %p39 = scmp.eq.s32.totalorder %s19, 0
      %p40 = por %p38, %p39
      %p41 = scmp.ne.s32.totalorder %s27, %s28
      %p42 = scmp.eq.s32.totalorder %s20, 1
      %p43 = por %p41, %p42
      %p45 = scmp.ne.s32.totalorder %s28, %s44
      %p46 = scmp.eq.s32.totalorder %s20, 0
      %p47 = por %p45, %p46
      %s48 = ssub.s32 %s14, %s21
      %p49 = scmp.eq.s32.totalorder %s48, 0
      %s51 = sadd.s32 %s50, 1
      %s52 = scalar_select %p49, %s50, %s51
      %p55 = pneg %p49
      %p56 = scmp.eq.s32.totalorder %s14, 1
      %p57 = por %p55, %p56
      %p58 = scmp.ne.s32.totalorder %s50, %s53
      %p59 = scmp.eq.s32.totalorder %s14, 0
      %p60 = por %p58, %p59
      %p61 = scmp.ne.s32.totalorder %s50, %s53
      %p62 = scmp.eq.s32.totalorder %s19, 1
      %p63 = por %p61, %p62
      %p64 = scmp.ne.s32.totalorder %s53, %s54
      %p65 = scmp.eq.s32.totalorder %s19, 0
      %p66 = por %p64, %p65
      %p67 = scmp.ne.s32.totalorder %s53, %s54
      %p68 = scmp.eq.s32.totalorder %s20, 1
      %p69 = por %p67, %p68
      %p71 = scmp.ne.s32.totalorder %s54, %s70
      %p72 = scmp.eq.s32.totalorder %s20, 0
      %p73 = por %p71, %p72
      %s74 = ssub.s32 %s14, %s21
      %p75 = scmp.eq.s32.totalorder %s74, 0
      %s77 = sadd.s32 %s76, 1
      %s78 = scalar_select %p75, %s76, %s77
      %p81 = pneg %p75
      %p82 = scmp.eq.s32.totalorder %s14, 1
      %p83 = por %p81, %p82
      %p84 = scmp.ne.s32.totalorder %s76, %s79
      %p85 = scmp.eq.s32.totalorder %s14, 0
      %p86 = por %p84, %p85
      %p87 = scmp.ne.s32.totalorder %s76, %s79
      %p88 = scmp.eq.s32.totalorder %s19, 1
      %p89 = por %p87, %p88
      %p90 = scmp.ne.s32.totalorder %s79, %s80
      %p91 = scmp.eq.s32.totalorder %s19, 0
      %p92 = por %p90, %p91
      %p93 = scmp.ne.s32.totalorder %s79, %s80
      %p94 = scmp.eq.s32.totalorder %s20, 1
      %p95 = por %p93, %p94
      %p97 = scmp.ne.s32.totalorder %s80, %s96
      %p98 = scmp.eq.s32.totalorder %s20, 0
      %p99 = por %p97, %p98
      %s101 = sadd.s32 %s100, 1
      %p104 = scmp.eq.s32.totalorder %s14, 1
      %p105 = scmp.ne.s32.totalorder %s100, %s102
      %p106 = scmp.eq.s32.totalorder %s14, 0
      %p107 = por %p105, %p106
      %p108 = scmp.ne.s32.totalorder %s100, %s102
      %p109 = scmp.eq.s32.totalorder %s19, 1
      %p110 = por %p108, %p109
      %p111 = scmp.ne.s32.totalorder %s102, %s103
      %p112 = scmp.eq.s32.totalorder %s19, 0
      %p113 = por %p111, %p112
      %p114 = scmp.ne.s32.totalorder %s102, %s103
      %p115 = scmp.eq.s32.totalorder %s20, 1
      %p116 = por %p114, %p115
      %p118 = scmp.ne.s32.totalorder %s103, %s117
      %p119 = scmp.eq.s32.totalorder %s20, 0
      %p120 = por %p118, %p119
      %s122 = sadd.s32 %s121, 1
      %p125 = scmp.eq.s32.totalorder %s14, 1
      %p126 = scmp.ne.s32.totalorder %s121, %s123
      %p127 = scmp.eq.s32.totalorder %s14, 0
      %p128 = por %p126, %p127
      %p129 = scmp.ne.s32.totalorder %s121, %s123
      %p130 = scmp.eq.s32.totalorder %s19, 1
      %p131 = por %p129, %p130
      %p132 = scmp.ne.s32.totalorder %s123, %s124
      %p133 = scmp.eq.s32.totalorder %s19, 0
      %p134 = por %p132, %p133
      %p135 = scmp.ne.s32.totalorder %s123, %s124
      %p136 = scmp.eq.s32.totalorder %s20, 1
      %p137 = por %p135, %p136
      %p139 = scmp.ne.s32.totalorder %s124, %s138
      %p140 = scmp.eq.s32.totalorder %s20, 0
      %p141 = por %p139, %p140
      %s142 = ssub.s32 %s14, %s21
      %p143 = scmp.eq.s32.totalorder %s142, 0
      %s145 = sadd.s32 %s144, 1
      %s146 = scalar_select %p143, %s144, %s145
      %p149 = pneg %p143
      %p150 = scmp.eq.s32.totalorder %s14, 1
      %p151 = por %p149, %p150
      %p152 = scmp.ne.s32.totalorder %s144, %s147
      %p153 = scmp.eq.s32.totalorder %s14, 0
      %p154 = por %p152, %p153
      %p155 = scmp.ne.s32.totalorder %s144, %s147
      %p156 = scmp.eq.s32.totalorder %s19, 1
      %p157 = por %p155, %p156
      %p158 = scmp.ne.s32.totalorder %s147, %s148
      %p159 = scmp.eq.s32.totalorder %s19, 0
      %p160 = por %p158, %p159
      %p161 = scmp.ne.s32.totalorder %s147, %s148
      %p162 = scmp.eq.s32.totalorder %s20, 1
      %p163 = por %p161, %p162
      %p165 = scmp.ne.s32.totalorder %s148, %s164
      %p166 = scmp.eq.s32.totalorder %s20, 0
      %p167 = por %p165, %p166
      %p168 = scmp.le.s32.totalorder 1, %s14
      %p169 = scmp.lt.s32.totalorder %s14, 3
      %p170 = pnand %p168, %p169
      %p171 = pneg %p170
      // Predicated region
      $region9: #{tpu_custom_call.1} parent=5 // pred_check
        _
      $region10: #{tpu_custom_call.1} parent=5 // pred_check_branch
        %173 = sbr.rel (%p170) target = $region12
      $region11: #{tpu_custom_call.1} parent=5 // pred_region
        %s174 = ssub.s32 %s14, 1
        // Predicated region
        $region13: #{tpu_custom_call.1} parent=11 // pred_check
          %p175 = pneg %p113
        $region14: #{tpu_custom_call.1} parent=11 // pred_check_branch
          %177 = sbr.rel (%p175) target = $region16
        $region15: #{tpu_custom_call.1} parent=11 // pred_region
          _
        $region16: #{tpu_custom_call.1} parent=11 // pred_fallthru
          _
        // Predicated region
        $region17: #{tpu_custom_call.1} parent=11 // pred_check
          %p178 = pneg %p134
        $region18: #{tpu_custom_call.1} parent=11 // pred_check_branch
          %180 = sbr.rel (%p178) target = $region20
        $region19: #{tpu_custom_call.1} parent=11 // pred_region
          _
        $region20: #{tpu_custom_call.1} parent=11 // pred_fallthru
          _
      $region12: #{tpu_custom_call.1} parent=5 // pred_fallthru
        _
      %p181 = scmp.lt.s32.totalorder %s14, 2
      // Predicated region
      $region21: #{tpu_custom_call.1} parent=5 // pred_check
        %p182 = pneg %p181
      $region22: #{tpu_custom_call.1} parent=5 // pred_check_branch
        %184 = sbr.rel (%p182) target = $region24
      $region23: #{tpu_custom_call.1} parent=5 // pred_region
        // Predicated region
        $region25: #{tpu_custom_call.1} parent=23 // pred_check
          %p185 = pneg %p34
        $region26: #{tpu_custom_call.1} parent=23 // pred_check_branch
          %187 = sbr.rel (%p185) target = $region28
        $region27: #{tpu_custom_call.1} parent=23 // pred_region
          %s188 = smul.u32 4, %s14
          %p189 = scmp.lt.s32.totalorder %s188, 7
          %s190 = scalar_select %p189, %s188, 7
          %s191 = scalar_lea.vmem %s0, %s190
          %s192 = smul.u32 4, %s14
        $region28: #{tpu_custom_call.1} parent=23 // pred_fallthru
          _
        // Predicated region
        $region29: #{tpu_custom_call.1} parent=23 // pred_check
          %p193 = pneg %p60
        $region30: #{tpu_custom_call.1} parent=23 // pred_check_branch
          %195 = sbr.rel (%p193) target = $region32
        $region31: #{tpu_custom_call.1} parent=23 // pred_region
          %s196 = smul.u32 4, %s14
          %p197 = scmp.lt.s32.totalorder %s196, 7
          %s198 = scalar_select %p197, %s196, 7
          %s199 = scalar_lea.vmem %s1, %s198
          %s200 = smul.u32 4, %s14
        $region32: #{tpu_custom_call.1} parent=23 // pred_fallthru
          _
        // Predicated region
        $region33: #{tpu_custom_call.1} parent=23 // pred_check
          %p201 = pneg %p86
        $region34: #{tpu_custom_call.1} parent=23 // pred_check_branch
          %203 = sbr.rel (%p201) target = $region36
        $region35: #{tpu_custom_call.1} parent=23 // pred_region
          %s204 = smul.u32 4, %s14
          %p205 = scmp.lt.s32.totalorder %s204, 7
          %s206 = scalar_select %p205, %s204, 7
          %s207 = scalar_lea.vmem %s2, %s206
          %s208 = smul.u32 4, %s14
        $region36: #{tpu_custom_call.1} parent=23 // pred_fallthru
          _
      $region24: #{tpu_custom_call.1} parent=5 // pred_fallthru
        _
      %p209 = scmp.le.s32.totalorder 1, %s14
      %p210 = scmp.lt.s32.totalorder %s14, 3
      %p211 = pnand %p209, %p210
      %p212 = pneg %p211
      // Predicated region
      $region37: #{tpu_custom_call.1} parent=5 // pred_check
        _
      $region38: #{tpu_custom_call.1} parent=5 // pred_check_branch
        %214 = sbr.rel (%p211) target = $region40
      $region39: #{tpu_custom_call.1} parent=5 // pred_region
        %s215 = ssub.s32 %s14, 1
        %s216 = smul.u32 4, %s19
        %p217 = scmp.lt.s32.totalorder %s216, 7
        %s218 = scalar_select %p217, %s216, 7
        %s219 = scalar_lea.vmem %s0, %s218
        %p220 = pneg %p40
        %p221 = pneg %p37
        %s222 = smul.u32 4, %s19
        %p223 = scmp.lt.s32.totalorder %s222, 7
        %s224 = scalar_select %p223, %s222, 7
        %s225 = scalar_lea.vmem %s1, %s224
        %p226 = pneg %p66
        %p227 = pneg %p63
        %s228 = smul.u32 4, %s19
        %p229 = scmp.lt.s32.totalorder %s228, 7
        %s230 = scalar_select %p229, %s228, 7
        %s231 = scalar_lea.vmem %s2, %s230
        %p232 = pneg %p92
        %p233 = pneg %p89
        %p234 = pneg %p113
        %p235 = pneg %p110
        %p236 = pneg %p134
        %p237 = pneg %p131
        %p238 = pneg %p160
        %p239 = pneg %p157
        %s240 = sand.u32 %s147, 1
        %s241 = scalar_lea.sflag [#allocation3], %s240
        %s242 = sand.u32 %s147, 1
        %s243 = smul.addr %s242, 4
        %s244 = scalar_lea.vmem [#allocation2], %s243
        %s245 = smul.u32 4, %s19
        %p246 = scmp.lt.s32.totalorder %s245, 7
        %s247 = scalar_select %p246, %s245, 7
        %s248 = scalar_lea.vmem %s0, %s247
        %s249 = smul.u32 4, %s19
        %s250 = smul.u32 4, %s19
        %p251 = scmp.lt.s32.totalorder %s250, 7
        %s252 = scalar_select %p251, %s250, 7
        %s253 = scalar_lea.vmem %s1, %s252
        %s254 = smul.u32 4, %s19
        %s255 = smul.u32 4, %s19
        %p256 = scmp.lt.s32.totalorder %s255, 7
        %s257 = scalar_select %p256, %s255, 7
        %s258 = scalar_lea.vmem %s2, %s257
        %s259 = smul.u32 4, %s19
        %s260 = smul.u32 4, %s19
        %v261 = vld [vmem:[%s248] sm:$0xf]
        %v262 = vld [vmem:[%s253] sm:$0xf]
        %v263 = vld [vmem:[%s258] sm:$0xf]
        %v264 = vld [vmem:[%s3] sm:$0xff]
        %v265 = vld [vmem:[%s3 + $0x8] sm:$0xff]
        %v266 = vld [vmem:[%s3 + $0x10] sm:$0xff]
        %v267 = vld [vmem:[%s3 + $0x18] sm:$0xff]
        %v268 = vld [vmem:[%s3 + $0x20] sm:$0xff]
        %v269 = vld [vmem:[%s3 + $0x28] sm:$0xff]
        %v270 = vld [vmem:[%s3 + $0x30] sm:$0xff]
        %v271 = vld [vmem:[%s3 + $0x38] sm:$0xff]
        %v272 = vld [vmem:[%s4] sm:$0xff]
        %v273 = vlaneseq
        %v274 = vshrl.u32 %v273, 7
        %v275 = vadd.s32 %v274, 8
        %v276 = vadd.s32 %v274, 16
        %v277 = vadd.s32 %v274, 24
        %v278 = vadd.s32 %v274, 32
        %v279 = vadd.s32 %v274, 40
        %v280 = vadd.s32 %v274, 48
        %v281 = vadd.s32 %v274, 56
        %v282 = vlaneseq
        %v283 = vshrl.u32 %v282, 7
        %v284 = vsub.s32 0, %v283
        %v285 = vrot.slane %v261, %v284
        %v286 = vlaneseq
        %v287 = vshrl.u32 %v286, 7
        %v288 = vsub.s32 1, %v287
        %v289 = vrot.slane %v261, %v288
        %v290 = vlaneseq
        %v291 = vshrl.u32 %v290, 7
        %v292 = vsub.s32 2, %v291
        %v293 = vrot.slane %v261, %v292
        %v294 = vlaneseq
        %v295 = vshrl.u32 %v294, 7
        %v296 = vsub.s32 3, %v295
        %v297 = vrot.slane %v261, %v296
        %vm298 = vcmp.eq.s32.totalorder %v274, %v285
        %vm299 = vcmp.eq.s32.totalorder %v274, %v289
        %vm300 = vcmp.eq.s32.totalorder %v274, %v293
        %vm301 = vcmp.eq.s32.totalorder %v274, %v297
        %vm302 = vcmp.eq.s32.totalorder %v275, %v285
        %vm303 = vcmp.eq.s32.totalorder %v275, %v289
        %vm304 = vcmp.eq.s32.totalorder %v275, %v293
        %vm305 = vcmp.eq.s32.totalorder %v275, %v297
        %vm306 = vcmp.eq.s32.totalorder %v276, %v285
        %vm307 = vcmp.eq.s32.totalorder %v276, %v289
        %vm308 = vcmp.eq.s32.totalorder %v276, %v293
        %vm309 = vcmp.eq.s32.totalorder %v276, %v297
        %vm310 = vcmp.eq.s32.totalorder %v277, %v285
        %vm311 = vcmp.eq.s32.totalorder %v277, %v289
        %vm312 = vcmp.eq.s32.totalorder %v277, %v293
        %vm313 = vcmp.eq.s32.totalorder %v277, %v297
        %vm314 = vcmp.eq.s32.totalorder %v278, %v285
        %vm315 = vcmp.eq.s32.totalorder %v278, %v289
        %vm316 = vcmp.eq.s32.totalorder %v278, %v293
        %vm317 = vcmp.eq.s32.totalorder %v278, %v297
        %vm318 = vcmp.eq.s32.totalorder %v279, %v285
        %vm319 = vcmp.eq.s32.totalorder %v279, %v289
        %vm320 = vcmp.eq.s32.totalorder %v279, %v293
        %vm321 = vcmp.eq.s32.totalorder %v279, %v297
        %vm322 = vcmp.eq.s32.totalorder %v280, %v285
        %vm323 = vcmp.eq.s32.totalorder %v280, %v289
        %vm324 = vcmp.eq.s32.totalorder %v280, %v293
        %vm325 = vcmp.eq.s32.totalorder %v280, %v297
        %vm326 = vcmp.eq.s32.totalorder %v281, %v285
        %vm327 = vcmp.eq.s32.totalorder %v281, %v289
        %vm328 = vcmp.eq.s32.totalorder %v281, %v293
        %vm329 = vcmp.eq.s32.totalorder %v281, %v297
        %v330 = vsel %vm298, 1, 0
        %v331 = vsel %vm299, 1, 0
        %v332 = vsel %vm300, 1, 0
        %v333 = vsel %vm301, 1, 0
        %v334 = vsel %vm302, 1, 0
        %v335 = vsel %vm303, 1, 0
        %v336 = vsel %vm304, 1, 0
        %v337 = vsel %vm305, 1, 0
        %v338 = vsel %vm306, 1, 0
        %v339 = vsel %vm307, 1, 0
        %v340 = vsel %vm308, 1, 0
        %v341 = vsel %vm309, 1, 0
        %v342 = vsel %vm310, 1, 0
        %v343 = vsel %vm311, 1, 0
        %v344 = vsel %vm312, 1, 0
        %v345 = vsel %vm313, 1, 0
        %v346 = vsel %vm314, 1, 0
        %v347 = vsel %vm315, 1, 0
        %v348 = vsel %vm316, 1, 0
        %v349 = vsel %vm317, 1, 0
        %v350 = vsel %vm318, 1, 0
        %v351 = vsel %vm319, 1, 0
        %v352 = vsel %vm320, 1, 0
        %v353 = vsel %vm321, 1, 0
        %v354 = vsel %vm322, 1, 0
        %v355 = vsel %vm323, 1, 0
        %v356 = vsel %vm324, 1, 0
        %v357 = vsel %vm325, 1, 0
        %v358 = vsel %vm326, 1, 0
        %v359 = vsel %vm327, 1, 0
        %v360 = vsel %vm328, 1, 0
        %v361 = vsel %vm329, 1, 0
        %v362 = vcvt.s32.f32 %v330
        %v363 = vcvt.s32.f32 %v331
        %v364 = vcvt.s32.f32 %v332
        %v365 = vcvt.s32.f32 %v333
        %v366 = vcvt.s32.f32 %v334
        %v367 = vcvt.s32.f32 %v335
        %v368 = vcvt.s32.f32 %v336
        %v369 = vcvt.s32.f32 %v337
        %v370 = vcvt.s32.f32 %v338
        %v371 = vcvt.s32.f32 %v339
        %v372 = vcvt.s32.f32 %v340
        %v373 = vcvt.s32.f32 %v341
        %v374 = vcvt.s32.f32 %v342
        %v375 = vcvt.s32.f32 %v343
        %v376 = vcvt.s32.f32 %v344
        %v377 = vcvt.s32.f32 %v345
        %v378 = vcvt.s32.f32 %v346
        %v379 = vcvt.s32.f32 %v347
        %v380 = vcvt.s32.f32 %v348
        %v381 = vcvt.s32.f32 %v349
        %v382 = vcvt.s32.f32 %v350
        %v383 = vcvt.s32.f32 %v351
        %v384 = vcvt.s32.f32 %v352
        %v385 = vcvt.s32.f32 %v353
        %v386 = vcvt.s32.f32 %v354
        %v387 = vcvt.s32.f32 %v355
        %v388 = vcvt.s32.f32 %v356
        %v389 = vcvt.s32.f32 %v357
        %v390 = vcvt.s32.f32 %v358
        %v391 = vcvt.s32.f32 %v359
        %v392 = vcvt.s32.f32 %v360
        %v393 = vcvt.s32.f32 %v361
        %394 = vxpose.xlu0.b32.start [1/16] %v362, 128
        %395 = vxpose.xlu0.b32.cont [2/16] %v366, 128
        %396 = vxpose.xlu0.b32.cont [3/16] %v370, 128
        %397 = vxpose.xlu0.b32.cont [4/16] %v374, 128
        %398 = vxpose.xlu0.b32.cont [5/16] %v378, 128
        %399 = vxpose.xlu0.b32.cont [6/16] %v382, 128
        %400 = vxpose.xlu0.b32.cont [7/16] %v386, 128
        %401 = vxpose.xlu0.b32.cont [8/16] %v390, 128
        %402 = vxpose.xlu0.b32.cont [9/16] 0.0, 128
        %403 = vxpose.xlu0.b32.cont [10/16] 0.0, 128
        %404 = vxpose.xlu0.b32.cont [11/16] 0.0, 128
        %405 = vxpose.xlu0.b32.cont [12/16] 0.0, 128
        %406 = vxpose.xlu0.b32.cont [13/16] 0.0, 128
        %407 = vxpose.xlu0.b32.cont [14/16] 0.0, 128
        %408 = vxpose.xlu0.b32.cont [15/16] 0.0, 128
        %409 = vxpose.xlu0.b32.end [16/16] 0.0, 128
        %v410 = vpop.trf.xlu0
        %v411 = vpop.trf.xlu0
        %v412 = vpop.trf.xlu0
        %v413 = vpop.trf.xlu0
        %v414 = vpop.trf.xlu0
        %v415 = vpop.trf.xlu0
        %v416 = vpop.trf.xlu0
        %v417 = vpop.trf.xlu0
        %v418 = vpop.trf.xlu0
        %v419 = vpop.trf.xlu0
        %v420 = vpop.trf.xlu0
        %v421 = vpop.trf.xlu0
        %v422 = vpop.trf.xlu0
        %v423 = vpop.trf.xlu0
        %v424 = vpop.trf.xlu0
        %v425 = vpop.trf.xlu0
        %426 = vxpose.xlu0.b32.start [1/16] %v363, 128
        %427 = vxpose.xlu0.b32.cont [2/16] %v367, 128
        %428 = vxpose.xlu0.b32.cont [3/16] %v371, 128
        %429 = vxpose.xlu0.b32.cont [4/16] %v375, 128
        %430 = vxpose.xlu0.b32.cont [5/16] %v379, 128
        %431 = vxpose.xlu0.b32.cont [6/16] %v383, 128
        %432 = vxpose.xlu0.b32.cont [7/16] %v387, 128
        %433 = vxpose.xlu0.b32.cont [8/16] %v391, 128
        %434 = vxpose.xlu0.b32.cont [9/16] 0.0, 128
        %435 = vxpose.xlu0.b32.cont [10/16] 0.0, 128
        %436 = vxpose.xlu0.b32.cont [11/16] 0.0, 128
        %437 = vxpose.xlu0.b32.cont [12/16] 0.0, 128
        %438 = vxpose.xlu0.b32.cont [13/16] 0.0, 128
        %439 = vxpose.xlu0.b32.cont [14/16] 0.0, 128
        %440 = vxpose.xlu0.b32.cont [15/16] 0.0, 128
        %441 = vxpose.xlu0.b32.end [16/16] 0.0, 128
        %v442 = vpop.trf.xlu0
        %v443 = vpop.trf.xlu0
        %v444 = vpop.trf.xlu0
        %v445 = vpop.trf.xlu0
        %v446 = vpop.trf.xlu0
        %v447 = vpop.trf.xlu0
        %v448 = vpop.trf.xlu0
        %v449 = vpop.trf.xlu0
        %v450 = vpop.trf.xlu0
        %v451 = vpop.trf.xlu0
        %v452 = vpop.trf.xlu0
        %v453 = vpop.trf.xlu0
        %v454 = vpop.trf.xlu0
        %v455 = vpop.trf.xlu0
        %v456 = vpop.trf.xlu0
        %v457 = vpop.trf.xlu0
        %458 = vxpose.xlu0.b32.start [1/16] %v364, 128
        %459 = vxpose.xlu0.b32.cont [2/16] %v368, 128
        %460 = vxpose.xlu0.b32.cont [3/16] %v372, 128
        %461 = vxpose.xlu0.b32.cont [4/16] %v376, 128
        %462 = vxpose.xlu0.b32.cont [5/16] %v380, 128
        %463 = vxpose.xlu0.b32.cont [6/16] %v384, 128
        %464 = vxpose.xlu0.b32.cont [7/16] %v388, 128
        %465 = vxpose.xlu0.b32.cont [8/16] %v392, 128
        %466 = vxpose.xlu0.b32.cont [9/16] 0.0, 128
        %467 = vxpose.xlu0.b32.cont [10/16] 0.0, 128
        %468 = vxpose.xlu0.b32.cont [11/16] 0.0, 128
        %469 = vxpose.xlu0.b32.cont [12/16] 0.0, 128
        %470 = vxpose.xlu0.b32.cont [13/16] 0.0, 128
        %471 = vxpose.xlu0.b32.cont [14/16] 0.0, 128
        %472 = vxpose.xlu0.b32.cont [15/16] 0.0, 128
        %473 = vxpose.xlu0.b32.end [16/16] 0.0, 128
        %v474 = vpop.trf.xlu0
        %v475 = vpop.trf.xlu0
        %v476 = vpop.trf.xlu0
        %v477 = vpop.trf.xlu0
        %v478 = vpop.trf.xlu0
        %v479 = vpop.trf.xlu0
        %v480 = vpop.trf.xlu0
        %v481 = vpop.trf.xlu0
        %v482 = vpop.trf.xlu0
        %v483 = vpop.trf.xlu0
        %v484 = vpop.trf.xlu0
        %v485 = vpop.trf.xlu0
        %v486 = vpop.trf.xlu0
        %v487 = vpop.trf.xlu0
        %v488 = vpop.trf.xlu0
        %v489 = vpop.trf.xlu0
        %490 = vxpose.xlu0.b32.start [1/16] %v365, 128
        %491 = vxpose.xlu0.b32.cont [2/16] %v369, 128
        %492 = vxpose.xlu0.b32.cont [3/16] %v373, 128
        %493 = vxpose.xlu0.b32.cont [4/16] %v377, 128
        %494 = vxpose.xlu0.b32.cont [5/16] %v381, 128
        %495 = vxpose.xlu0.b32.cont [6/16] %v385, 128
        %496 = vxpose.xlu0.b32.cont [7/16] %v389, 128
        %497 = vxpose.xlu0.b32.cont [8/16] %v393, 128
        %498 = vxpose.xlu0.b32.cont [9/16] 0.0, 128
        %499 = vxpose.xlu0.b32.cont [10/16] 0.0, 128
        %500 = vxpose.xlu0.b32.cont [11/16] 0.0, 128
        %501 = vxpose.xlu0.b32.cont [12/16] 0.0, 128
        %502 = vxpose.xlu0.b32.cont [13/16] 0.0, 128
        %503 = vxpose.xlu0.b32.cont [14/16] 0.0, 128
        %504 = vxpose.xlu0.b32.cont [15/16] 0.0, 128
        %505 = vxpose.xlu0.b32.end [16/16] 0.0, 128
        %v506 = vpop.trf.xlu0
        %v507 = vpop.trf.xlu0
        %v508 = vpop.trf.xlu0
        %v509 = vpop.trf.xlu0
        %v510 = vpop.trf.xlu0
        %v511 = vpop.trf.xlu0
        %v512 = vpop.trf.xlu0
        %v513 = vpop.trf.xlu0
        %v514 = vpop.trf.xlu0
        %v515 = vpop.trf.xlu0
        %v516 = vpop.trf.xlu0
        %v517 = vpop.trf.xlu0
        %v518 = vpop.trf.xlu0
        %v519 = vpop.trf.xlu0
        %v520 = vpop.trf.xlu0
        %v521 = vpop.trf.xlu0
        %vm522 = vcmask 523264
        %v524 = vsel %vm522, %v410, 0
        %v527 = vsel %vm522, %v411, 0
        %v530 = vsel %vm522, %v412, 0
        %v533 = vsel %vm522, %v413, 0
        %v536 = vsel %vm522, %v414, 0
        %v539 = vsel %vm522, %v415, 0
        %v542 = vsel %vm522, %v416, 0
        %v545 = vsel %vm522, %v417, 0
        %v548 = vsel %vm522, %v418, 0
        %v551 = vsel %vm522, %v419, 0
        %v554 = vsel %vm522, %v420, 0
        %v557 = vsel %vm522, %v421, 0
        %v560 = vsel %vm522, %v422, 0
        %v563 = vsel %vm522, %v423, 0
        %v566 = vsel %vm522, %v424, 0
        %v569 = vsel %vm522, %v425, 0
        %v572 = vsel %vm522, %v442, 0
        %v575 = vsel %vm522, %v443, 0
        %v578 = vsel %vm522, %v444, 0
        %v581 = vsel %vm522, %v445, 0
        %v584 = vsel %vm522, %v446, 0
        %v587 = vsel %vm522, %v447, 0
        %v590 = vsel %vm522, %v448, 0
        %v593 = vsel %vm522, %v449, 0
        %v596 = vsel %vm522, %v450, 0
        %v599 = vsel %vm522, %v451, 0
        %v602 = vsel %vm522, %v452, 0
        %v605 = vsel %vm522, %v453, 0
        %v608 = vsel %vm522, %v454, 0
        %v611 = vsel %vm522, %v455, 0
        %v614 = vsel %vm522, %v456, 0
        %v617 = vsel %vm522, %v457, 0
        %v620 = vsel %vm522, %v474, 0
        %v623 = vsel %vm522, %v475, 0
        %v626 = vsel %vm522, %v476, 0
        %v629 = vsel %vm522, %v477, 0
        %v632 = vsel %vm522, %v478, 0
        %v635 = vsel %vm522, %v479, 0
        %v638 = vsel %vm522, %v480, 0
        %v641 = vsel %vm522, %v481, 0
        %v644 = vsel %vm522, %v482, 0
        %v647 = vsel %vm522, %v483, 0
        %v650 = vsel %vm522, %v484, 0
        %v653 = vsel %vm522, %v485, 0
        %v656 = vsel %vm522, %v486, 0
        %v659 = vsel %vm522, %v487, 0
        %v662 = vsel %vm522, %v488, 0
        %v665 = vsel %vm522, %v489, 0
        %v668 = vsel %vm522, %v506, 0
        %v671 = vsel %vm522, %v507, 0
        %v674 = vsel %vm522, %v508, 0
        %v677 = vsel %vm522, %v509, 0
        %v680 = vsel %vm522, %v510, 0
        %v683 = vsel %vm522, %v511, 0
        %v686 = vsel %vm522, %v512, 0
        %v689 = vsel %vm522, %v513, 0
        %v692 = vsel %vm522, %v514, 0
        %v695 = vsel %vm522, %v515, 0
        %v698 = vsel %vm522, %v516, 0
        %v701 = vsel %vm522, %v517, 0
        %v704 = vsel %vm522, %v518, 0
        %v707 = vsel %vm522, %v519, 0
        %v710 = vsel %vm522, %v520, 0
        %v713 = vsel %vm522, %v521, 0
        %715 = vmatprep.subr.mxu0 0.0
        %716 = vmatpush1.msra.mxu0 0.0
        %717 = vmatprep.subr.mxu0 0.0
        %718 = vmatpush1.msra.mxu0 0.0
        %719 = vmatprep.subr.mxu0 0.0
        %720 = vmatpush1.msra.mxu0 0.0
        %721 = vmatprep.subr.mxu0 0.0
        %722 = vmatpush1.msra.mxu0 0.0
        %723 = vmatprep.subr.mxu0 0.0
        %724 = vmatpush1.msra.mxu0 0.0
        %725 = vmatprep.subr.mxu0 0.0
        %726 = vmatpush1.msra.mxu0 0.0
        %727 = vmatprep.subr.mxu0 0.0
        %728 = vmatpush1.msra.mxu0 0.0
        %729 = vmatprep.subr.mxu0 0.0
        %730 = vmatpush1.msra.mxu0 0.0
        %731 = vmatprep.subr.mxu0 0.0
        %732 = vmatpush1.msra.mxu0 %v271
        %733 = vmatprep.subr.mxu0 0.0
        %734 = vmatpush1.msra.mxu0 %v270
        %735 = vmatprep.subr.mxu0 0.0
        %736 = vmatpush1.msra.mxu0 %v269
        %737 = vmatprep.subr.mxu0 0.0
        %738 = vmatpush1.msra.mxu0 %v268
        %739 = vmatprep.subr.mxu0 0.0
        %740 = vmatpush1.msra.mxu0 %v267
        %741 = vmatprep.subr.mxu0 0.0
        %742 = vmatpush1.msra.mxu0 %v266
        %743 = vmatprep.subr.mxu0 0.0
        %744 = vmatpush1.msra.mxu0 %v265
        %745 = vmatprep.subr.mxu0 0.0
        %746 = vmatpush1.msra.mxu0 %v264
        %747 = vmatprep.subr.mxu0 0.0
        %748 = vmatpush2.msra.mxu0 0.0
        %749 = vmatprep.subr.mxu0 0.0
        %750 = vmatpush2.msra.mxu0 0.0
        %751 = vmatprep.subr.mxu0 0.0
        %752 = vmatpush2.msra.mxu0 0.0
        %753 = vmatprep.subr.mxu0 0.0
        %754 = vmatpush2.msra.mxu0 0.0
        %755 = vmatprep.subr.mxu0 0.0
        %756 = vmatpush2.msra.mxu0 0.0
        %757 = vmatprep.subr.mxu0 0.0
        %758 = vmatpush2.msra.mxu0 0.0
        %759 = vmatprep.subr.mxu0 0.0
        %760 = vmatpush2.msra.mxu0 0.0
        %761 = vmatprep.subr.mxu0 0.0
        %762 = vmatpush2.msra.mxu0 0.0
        %763 = vmatprep.subr.mxu0 0.0
        %764 = vmatpush2.msra.mxu0 0.0
        %765 = vmatprep.subr.mxu0 0.0
        %766 = vmatpush2.msra.mxu0 0.0
        %767 = vmatprep.subr.mxu0 0.0
        %768 = vmatpush2.msra.mxu0 0.0
        %769 = vmatprep.subr.mxu0 0.0
        %770 = vmatpush2.msra.mxu0 0.0
        %771 = vmatprep.subr.mxu0 0.0
        %772 = vmatpush2.msra.mxu0 0.0
        %773 = vmatprep.subr.mxu0 0.0
        %774 = vmatpush2.msra.mxu0 0.0
        %775 = vmatprep.subr.mxu0 0.0
        %776 = vmatpush2.msra.mxu0 0.0
        %777 = vmatprep.subr.mxu0 0.0
        %778 = vmatpush2.msra.mxu0 0.0
        %779 = vmatprep.mubr.f32.mxu0 0.0
        %780 = vmatmul.mubr.f32.gmra.mxu0 %v524
        %v781 = vpop.f32.mrf.mxu0
        %v782 = vadd.f32 0.0, %v781
        %v783 = vpop.f32.mrf.mxu0
        %784 = vmatprep.mubr.f32.mxu0 0.0
        %785 = vmatmul.mubr.f32.gmra.mxu0 %v527
        %v786 = vpop.f32.mrf.mxu0
        %v787 = vadd.f32 0.0, %v786
        %v788 = vpop.f32.mrf.mxu0
        %789 = vmatprep.mubr.f32.mxu0 0.0
        %790 = vmatmul.mubr.f32.gmra.mxu0 %v530
        %v791 = vpop.f32.mrf.mxu0
        %v792 = vadd.f32 0.0, %v791
        %v793 = vpop.f32.mrf.mxu0
        %794 = vmatprep.mubr.f32.mxu0 0.0
        %795 = vmatmul.mubr.f32.gmra.mxu0 %v533
        %v796 = vpop.f32.mrf.mxu0
        %v797 = vadd.f32 0.0, %v796
        %v798 = vpop.f32.mrf.mxu0
        %799 = vmatprep.mubr.f32.mxu0 0.0
        %800 = vmatmul.mubr.f32.gmra.mxu0 %v536
        %v801 = vpop.f32.mrf.mxu0
        %v802 = vadd.f32 0.0, %v801
        %v803 = vpop.f32.mrf.mxu0
        %804 = vmatprep.mubr.f32.mxu0 0.0
        %805 = vmatmul.mubr.f32.gmra.mxu0 %v539
        %v806 = vpop.f32.mrf.mxu0
        %v807 = vadd.f32 0.0, %v806
        %v808 = vpop.f32.mrf.mxu0
        %809 = vmatprep.mubr.f32.mxu0 0.0
        %810 = vmatmul.mubr.f32.gmra.mxu0 %v542
        %v811 = vpop.f32.mrf.mxu0
        %v812 = vadd.f32 0.0, %v811
        %v813 = vpop.f32.mrf.mxu0
        %814 = vmatprep.mubr.f32.mxu0 0.0
        %815 = vmatmul.mubr.f32.gmra.mxu0 %v545
        %v816 = vpop.f32.mrf.mxu0
        %v817 = vadd.f32 0.0, %v816
        %v818 = vpop.f32.mrf.mxu0
        %819 = vmatprep.mubr.f32.mxu0 0.0
        %820 = vmatmul.mubr.f32.gmra.mxu0 %v548
        %v821 = vpop.f32.mrf.mxu0
        %v822 = vadd.f32 0.0, %v821
        %v823 = vpop.f32.mrf.mxu0
        %824 = vmatprep.mubr.f32.mxu0 0.0
        %825 = vmatmul.mubr.f32.gmra.mxu0 %v551
        %v826 = vpop.f32.mrf.mxu0
        %v827 = vadd.f32 0.0, %v826
        %v828 = vpop.f32.mrf.mxu0
        %829 = vmatprep.mubr.f32.mxu0 0.0
        %830 = vmatmul.mubr.f32.gmra.mxu0 %v554
        %v831 = vpop.f32.mrf.mxu0
        %v832 = vadd.f32 0.0, %v831
        %v833 = vpop.f32.mrf.mxu0
        %834 = vmatprep.mubr.f32.mxu0 0.0
        %835 = vmatmul.mubr.f32.gmra.mxu0 %v557
        %v836 = vpop.f32.mrf.mxu0
        %v837 = vadd.f32 0.0, %v836
        %v838 = vpop.f32.mrf.mxu0
        %839 = vmatprep.mubr.f32.mxu0 0.0
        %840 = vmatmul.mubr.f32.gmra.mxu0 %v560
        %v841 = vpop.f32.mrf.mxu0
        %v842 = vadd.f32 0.0, %v841
        %v843 = vpop.f32.mrf.mxu0
        %844 = vmatprep.mubr.f32.mxu0 0.0
        %845 = vmatmul.mubr.f32.gmra.mxu0 %v563
        %v846 = vpop.f32.mrf.mxu0
        %v847 = vadd.f32 0.0, %v846
        %v848 = vpop.f32.mrf.mxu0
        %849 = vmatprep.mubr.f32.mxu0 0.0
        %850 = vmatmul.mubr.f32.gmra.mxu0 %v566
        %v851 = vpop.f32.mrf.mxu0
        %v852 = vadd.f32 0.0, %v851
        %v853 = vpop.f32.mrf.mxu0
        %854 = vmatprep.mubr.f32.mxu0 0.0
        %855 = vmatmul.mubr.f32.gmra.mxu0 %v569
        %v856 = vpop.f32.mrf.mxu0
        %v857 = vadd.f32 0.0, %v856
        %v858 = vpop.f32.mrf.mxu0
        %859 = vmatprep.mubr.f32.mxu0 0.0
        %860 = vmatmul.mubr.f32.gmra.mxu0 %v572
        %v861 = vpop.f32.mrf.mxu0
        %v862 = vadd.f32 0.0, %v861
        %v863 = vpop.f32.mrf.mxu0
        %864 = vmatprep.mubr.f32.mxu0 0.0
        %865 = vmatmul.mubr.f32.gmra.mxu0 %v575
        %v866 = vpop.f32.mrf.mxu0
        %v867 = vadd.f32 0.0, %v866
        %v868 = vpop.f32.mrf.mxu0
        %869 = vmatprep.mubr.f32.mxu0 0.0
        %870 = vmatmul.mubr.f32.gmra.mxu0 %v578
        %v871 = vpop.f32.mrf.mxu0
        %v872 = vadd.f32 0.0, %v871
        %v873 = vpop.f32.mrf.mxu0
        %874 = vmatprep.mubr.f32.mxu0 0.0
        %875 = vmatmul.mubr.f32.gmra.mxu0 %v581
        %v876 = vpop.f32.mrf.mxu0
        %v877 = vadd.f32 0.0, %v876
        %v878 = vpop.f32.mrf.mxu0
        %879 = vmatprep.mubr.f32.mxu0 0.0
        %880 = vmatmul.mubr.f32.gmra.mxu0 %v584
        %v881 = vpop.f32.mrf.mxu0
        %v882 = vadd.f32 0.0, %v881
        %v883 = vpop.f32.mrf.mxu0
        %884 = vmatprep.mubr.f32.mxu0 0.0
        %885 = vmatmul.mubr.f32.gmra.mxu0 %v587
        %v886 = vpop.f32.mrf.mxu0
        %v887 = vadd.f32 0.0, %v886
        %v888 = vpop.f32.mrf.mxu0
        %889 = vmatprep.mubr.f32.mxu0 0.0
        %890 = vmatmul.mubr.f32.gmra.mxu0 %v590
        %v891 = vpop.f32.mrf.mxu0
        %v892 = vadd.f32 0.0, %v891
        %v893 = vpop.f32.mrf.mxu0
        %894 = vmatprep.mubr.f32.mxu0 0.0
        %895 = vmatmul.mubr.f32.gmra.mxu0 %v593
        %v896 = vpop.f32.mrf.mxu0
        %v897 = vadd.f32 0.0, %v896
        %v898 = vpop.f32.mrf.mxu0
        %899 = vmatprep.mubr.f32.mxu0 0.0
        %900 = vmatmul.mubr.f32.gmra.mxu0 %v596
        %v901 = vpop.f32.mrf.mxu0
        %v902 = vadd.f32 0.0, %v901
        %v903 = vpop.f32.mrf.mxu0
        %904 = vmatprep.mubr.f32.mxu0 0.0
        %905 = vmatmul.mubr.f32.gmra.mxu0 %v599
        %v906 = vpop.f32.mrf.mxu0
        %v907 = vadd.f32 0.0, %v906
        %v908 = vpop.f32.mrf.mxu0
        %909 = vmatprep.mubr.f32.mxu0 0.0
        %910 = vmatmul.mubr.f32.gmra.mxu0 %v602
        %v911 = vpop.f32.mrf.mxu0
        %v912 = vadd.f32 0.0, %v911
        %v913 = vpop.f32.mrf.mxu0
        %914 = vmatprep.mubr.f32.mxu0 0.0
        %915 = vmatmul.mubr.f32.gmra.mxu0 %v605
        %v916 = vpop.f32.mrf.mxu0
        %v917 = vadd.f32 0.0, %v916
        %v918 = vpop.f32.mrf.mxu0
        %919 = vmatprep.mubr.f32.mxu0 0.0
        %920 = vmatmul.mubr.f32.gmra.mxu0 %v608
        %v921 = vpop.f32.mrf.mxu0
        %v922 = vadd.f32 0.0, %v921
        %v923 = vpop.f32.mrf.mxu0
        %924 = vmatprep.mubr.f32.mxu0 0.0
        %925 = vmatmul.mubr.f32.gmra.mxu0 %v611
        %v926 = vpop.f32.mrf.mxu0
        %v927 = vadd.f32 0.0, %v926
        %v928 = vpop.f32.mrf.mxu0
        %929 = vmatprep.mubr.f32.mxu0 0.0
        %930 = vmatmul.mubr.f32.gmra.mxu0 %v614
        %v931 = vpop.f32.mrf.mxu0
        %v932 = vadd.f32 0.0, %v931
        %v933 = vpop.f32.mrf.mxu0
        %934 = vmatprep.mubr.f32.mxu0 0.0
        %935 = vmatmul.mubr.f32.gmra.mxu0 %v617
        %v936 = vpop.f32.mrf.mxu0
        %v937 = vadd.f32 0.0, %v936
        %v938 = vpop.f32.mrf.mxu0
        %939 = vmatprep.mubr.f32.mxu0 0.0
        %940 = vmatmul.mubr.f32.gmra.mxu0 %v620
        %v941 = vpop.f32.mrf.mxu0
        %v942 = vadd.f32 0.0, %v941
        %v943 = vpop.f32.mrf.mxu0
        %944 = vmatprep.mubr.f32.mxu0 0.0
        %945 = vmatmul.mubr.f32.gmra.mxu0 %v623
        %v946 = vpop.f32.mrf.mxu0
        %v947 = vadd.f32 0.0, %v946
        %v948 = vpop.f32.mrf.mxu0
        %949 = vmatprep.mubr.f32.mxu0 0.0
        %950 = vmatmul.mubr.f32.gmra.mxu0 %v626
        %v951 = vpop.f32.mrf.mxu0
        %v952 = vadd.f32 0.0, %v951
        %v953 = vpop.f32.mrf.mxu0
        %954 = vmatprep.mubr.f32.mxu0 0.0
        %955 = vmatmul.mubr.f32.gmra.mxu0 %v629
        %v956 = vpop.f32.mrf.mxu0
        %v957 = vadd.f32 0.0, %v956
        %v958 = vpop.f32.mrf.mxu0
        %959 = vmatprep.mubr.f32.mxu0 0.0
        %960 = vmatmul.mubr.f32.gmra.mxu0 %v632
        %v961 = vpop.f32.mrf.mxu0
        %v962 = vadd.f32 0.0, %v961
        %v963 = vpop.f32.mrf.mxu0
        %964 = vmatprep.mubr.f32.mxu0 0.0
        %965 = vmatmul.mubr.f32.gmra.mxu0 %v635
        %v966 = vpop.f32.mrf.mxu0
        %v967 = vadd.f32 0.0, %v966
        %v968 = vpop.f32.mrf.mxu0
        %969 = vmatprep.mubr.f32.mxu0 0.0
        %970 = vmatmul.mubr.f32.gmra.mxu0 %v638
        %v971 = vpop.f32.mrf.mxu0
        %v972 = vadd.f32 0.0, %v971
        %v973 = vpop.f32.mrf.mxu0
        %974 = vmatprep.mubr.f32.mxu0 0.0
        %975 = vmatmul.mubr.f32.gmra.mxu0 %v641
        %v976 = vpop.f32.mrf.mxu0
        %v977 = vadd.f32 0.0, %v976
        %v978 = vpop.f32.mrf.mxu0
        %979 = vmatprep.mubr.f32.mxu0 0.0
        %980 = vmatmul.mubr.f32.gmra.mxu0 %v644
        %v981 = vpop.f32.mrf.mxu0
        %v982 = vadd.f32 0.0, %v981
        %v983 = vpop.f32.mrf.mxu0
        %984 = vmatprep.mubr.f32.mxu0 0.0
        %985 = vmatmul.mubr.f32.gmra.mxu0 %v647
        %v986 = vpop.f32.mrf.mxu0
        %v987 = vadd.f32 0.0, %v986
        %v988 = vpop.f32.mrf.mxu0
        %989 = vmatprep.mubr.f32.mxu0 0.0
        %990 = vmatmul.mubr.f32.gmra.mxu0 %v650
        %v991 = vpop.f32.mrf.mxu0
        %v992 = vadd.f32 0.0, %v991
        %v993 = vpop.f32.mrf.mxu0
        %994 = vmatprep.mubr.f32.mxu0 0.0
        %995 = vmatmul.mubr.f32.gmra.mxu0 %v653
        %v996 = vpop.f32.mrf.mxu0
        %v997 = vadd.f32 0.0, %v996
        %v998 = vpop.f32.mrf.mxu0
        %999 = vmatprep.mubr.f32.mxu0 0.0
        %1000 = vmatmul.mubr.f32.gmra.mxu0 %v656
        %v1001 = vpop.f32.mrf.mxu0
        %v1002 = vadd.f32 0.0, %v1001
        %v1003 = vpop.f32.mrf.mxu0
        %1004 = vmatprep.mubr.f32.mxu0 0.0
        %1005 = vmatmul.mubr.f32.gmra.mxu0 %v659
        %v1006 = vpop.f32.mrf.mxu0
        %v1007 = vadd.f32 0.0, %v1006
        %v1008 = vpop.f32.mrf.mxu0
        %1009 = vmatprep.mubr.f32.mxu0 0.0
        %1010 = vmatmul.mubr.f32.gmra.mxu0 %v662
        %v1011 = vpop.f32.mrf.mxu0
        %v1012 = vadd.f32 0.0, %v1011
        %v1013 = vpop.f32.mrf.mxu0
        %1014 = vmatprep.mubr.f32.mxu0 0.0
        %1015 = vmatmul.mubr.f32.gmra.mxu0 %v665
        %v1016 = vpop.f32.mrf.mxu0
        %v1017 = vadd.f32 0.0, %v1016
        %v1018 = vpop.f32.mrf.mxu0
        %1019 = vmatprep.mubr.f32.mxu0 0.0
        %1020 = vmatmul.mubr.f32.gmra.mxu0 %v668
        %v1021 = vpop.f32.mrf.mxu0
        %v1022 = vadd.f32 0.0, %v1021
        %v1023 = vpop.f32.mrf.mxu0
        %1024 = vmatprep.mubr.f32.mxu0 0.0
        %1025 = vmatmul.mubr.f32.gmra.mxu0 %v671
        %v1026 = vpop.f32.mrf.mxu0
        %v1027 = vadd.f32 0.0, %v1026
        %v1028 = vpop.f32.mrf.mxu0
        %1029 = vmatprep.mubr.f32.mxu0 0.0
        %1030 = vmatmul.mubr.f32.gmra.mxu0 %v674
        %v1031 = vpop.f32.mrf.mxu0
        %v1032 = vadd.f32 0.0, %v1031
        %v1033 = vpop.f32.mrf.mxu0
        %1034 = vmatprep.mubr.f32.mxu0 0.0
        %1035 = vmatmul.mubr.f32.gmra.mxu0 %v677
        %v1036 = vpop.f32.mrf.mxu0
        %v1037 = vadd.f32 0.0, %v1036
        %v1038 = vpop.f32.mrf.mxu0
        %1039 = vmatprep.mubr.f32.mxu0 0.0
        %1040 = vmatmul.mubr.f32.gmra.mxu0 %v680
        %v1041 = vpop.f32.mrf.mxu0
        %v1042 = vadd.f32 0.0, %v1041
        %v1043 = vpop.f32.mrf.mxu0
        %1044 = vmatprep.mubr.f32.mxu0 0.0
        %1045 = vmatmul.mubr.f32.gmra.mxu0 %v683
        %v1046 = vpop.f32.mrf.mxu0
        %v1047 = vadd.f32 0.0, %v1046
        %v1048 = vpop.f32.mrf.mxu0
        %1049 = vmatprep.mubr.f32.mxu0 0.0
        %1050 = vmatmul.mubr.f32.gmra.mxu0 %v686
        %v1051 = vpop.f32.mrf.mxu0
        %v1052 = vadd.f32 0.0, %v1051
        %v1053 = vpop.f32.mrf.mxu0
        %1054 = vmatprep.mubr.f32.mxu0 0.0
        %1055 = vmatmul.mubr.f32.gmra.mxu0 %v689
        %v1056 = vpop.f32.mrf.mxu0
        %v1057 = vadd.f32 0.0, %v1056
        %v1058 = vpop.f32.mrf.mxu0
        %1059 = vmatprep.mubr.f32.mxu0 0.0
        %1060 = vmatmul.mubr.f32.gmra.mxu0 %v692
        %v1061 = vpop.f32.mrf.mxu0
        %v1062 = vadd.f32 0.0, %v1061
        %v1063 = vpop.f32.mrf.mxu0
        %1064 = vmatprep.mubr.f32.mxu0 0.0
        %1065 = vmatmul.mubr.f32.gmra.mxu0 %v695
        %v1066 = vpop.f32.mrf.mxu0
        %v1067 = vadd.f32 0.0, %v1066
        %v1068 = vpop.f32.mrf.mxu0
        %1069 = vmatprep.mubr.f32.mxu0 0.0
        %1070 = vmatmul.mubr.f32.gmra.mxu0 %v698
        %v1071 = vpop.f32.mrf.mxu0
        %v1072 = vadd.f32 0.0, %v1071
        %v1073 = vpop.f32.mrf.mxu0
        %1074 = vmatprep.mubr.f32.mxu0 0.0
        %1075 = vmatmul.mubr.f32.gmra.mxu0 %v701
        %v1076 = vpop.f32.mrf.mxu0
        %v1077 = vadd.f32 0.0, %v1076
        %v1078 = vpop.f32.mrf.mxu0
        %1079 = vmatprep.mubr.f32.mxu0 0.0
        %1080 = vmatmul.mubr.f32.gmra.mxu0 %v704
        %v1081 = vpop.f32.mrf.mxu0
        %v1082 = vadd.f32 0.0, %v1081
        %v1083 = vpop.f32.mrf.mxu0
        %1084 = vmatprep.mubr.f32.mxu0 0.0
        %1085 = vmatmul.mubr.f32.gmra.mxu0 %v707
        %v1086 = vpop.f32.mrf.mxu0
        %v1087 = vadd.f32 0.0, %v1086
        %v1088 = vpop.f32.mrf.mxu0
        %1089 = vmatprep.mubr.f32.mxu0 0.0
        %1090 = vmatmul.mubr.f32.gmra.mxu0 %v710
        %v1091 = vpop.f32.mrf.mxu0
        %v1092 = vadd.f32 0.0, %v1091
        %v1093 = vpop.f32.mrf.mxu0
        %1094 = vmatprep.mubr.f32.mxu0 0.0
        %1095 = vmatmul.mubr.f32.gmra.mxu0 %v713
        %v1096 = vpop.f32.mrf.mxu0
        %v1097 = vadd.f32 0.0, %v1096
        %v1098 = vpop.f32.mrf.mxu0
        %1099 = vdwg.mxu0
        %v1100 = vlaneseq
        %v1101 = vshrl.u32 %v1100, 7
        %v1102 = vsub.s32 0, %v1101
        %v1103 = vrot.slane %v262, %v1102
        %v1104 = vlaneseq
        %v1105 = vshrl.u32 %v1104, 7
        %v1106 = vsub.s32 1, %v1105
        %v1107 = vrot.slane %v262, %v1106
        %v1108 = vlaneseq
        %v1109 = vshrl.u32 %v1108, 7
        %v1110 = vsub.s32 2, %v1109
        %v1111 = vrot.slane %v262, %v1110
        %v1112 = vlaneseq
        %v1113 = vshrl.u32 %v1112, 7
        %v1114 = vsub.s32 3, %v1113
        %v1115 = vrot.slane %v262, %v1114
        %vm1116 = vcmp.eq.s32.totalorder %v274, %v1103
        %vm1117 = vcmp.eq.s32.totalorder %v274, %v1107
        %vm1118 = vcmp.eq.s32.totalorder %v274, %v1111
        %vm1119 = vcmp.eq.s32.totalorder %v274, %v1115
        %v1120 = vsel %vm1116, 1, 0
        %v1121 = vsel %vm1117, 1, 0
        %v1122 = vsel %vm1118, 1, 0
        %v1123 = vsel %vm1119, 1, 0
        %v1124 = vcvt.s32.f32 %v1120
        %v1125 = vcvt.s32.f32 %v1121
        %v1126 = vcvt.s32.f32 %v1122
        %v1127 = vcvt.s32.f32 %v1123
        %1128 = vxpose.xlu0.b32.start [1/16] %v1124, 128
        %1129 = vxpose.xlu0.b32.cont [2/16] 0.0, 128
        %1130 = vxpose.xlu0.b32.cont [3/16] 0.0, 128
        %1131 = vxpose.xlu0.b32.cont [4/16] 0.0, 128
        %1132 = vxpose.xlu0.b32.cont [5/16] 0.0, 128
        %1133 = vxpose.xlu0.b32.cont [6/16] 0.0, 128
        %1134 = vxpose.xlu0.b32.cont [7/16] 0.0, 128
        %1135 = vxpose.xlu0.b32.cont [8/16] 0.0, 128
        %1136 = vxpose.xlu0.b32.cont [9/16] 0.0, 128
        %1137 = vxpose.xlu0.b32.cont [10/16] 0.0, 128
        %1138 = vxpose.xlu0.b32.cont [11/16] 0.0, 128
        %1139 = vxpose.xlu0.b32.cont [12/16] 0.0, 128
        %1140 = vxpose.xlu0.b32.cont [13/16] 0.0, 128
        %1141 = vxpose.xlu0.b32.cont [14/16] 0.0, 128
        %1142 = vxpose.xlu0.b32.cont [15/16] 0.0, 128
        %1143 = vxpose.xlu0.b32.end [16/16] 0.0, 128
        %v1144 = vpop.trf.xlu0
        %v1145 = vpop.trf.xlu0
        %v1146 = vpop.trf.xlu0
        %v1147 = vpop.trf.xlu0
        %v1148 = vpop.trf.xlu0
        %v1149 = vpop.trf.xlu0
        %v1150 = vpop.trf.xlu0
        %v1151 = vpop.trf.xlu0
        %v1152 = vpop.trf.xlu0
        %v1153 = vpop.trf.xlu0
        %v1154 = vpop.trf.xlu0
        %v1155 = vpop.trf.xlu0
        %v1156 = vpop.trf.xlu0
        %v1157 = vpop.trf.xlu0
        %v1158 = vpop.trf.xlu0
        %v1159 = vpop.trf.xlu0
        %1160 = vxpose.xlu0.b32.start [1/16] %v1125, 128
        %1161 = vxpose.xlu0.b32.cont [2/16] 0.0, 128
        %1162 = vxpose.xlu0.b32.cont [3/16] 0.0, 128
        %1163 = vxpose.xlu0.b32.cont [4/16] 0.0, 128
        %1164 = vxpose.xlu0.b32.cont [5/16] 0.0, 128
        %1165 = vxpose.xlu0.b32.cont [6/16] 0.0, 128
        %1166 = vxpose.xlu0.b32.cont [7/16] 0.0, 128
        %1167 = vxpose.xlu0.b32.cont [8/16] 0.0, 128
        %1168 = vxpose.xlu0.b32.cont [9/16] 0.0, 128
        %1169 = vxpose.xlu0.b32.cont [10/16] 0.0, 128
        %1170 = vxpose.xlu0.b32.cont [11/16] 0.0, 128
        %1171 = vxpose.xlu0.b32.cont [12/16] 0.0, 128
        %1172 = vxpose.xlu0.b32.cont [13/16] 0.0, 128
        %1173 = vxpose.xlu0.b32.cont [14/16] 0.0, 128
        %1174 = vxpose.xlu0.b32.cont [15/16] 0.0, 128
        %1175 = vxpose.xlu0.b32.end [16/16] 0.0, 128
        %v1176 = vpop.trf.xlu0
        %v1177 = vpop.trf.xlu0
        %v1178 = vpop.trf.xlu0
        %v1179 = vpop.trf.xlu0
        %v1180 = vpop.trf.xlu0
        %v1181 = vpop.trf.xlu0
        %v1182 = vpop.trf.xlu0
        %v1183 = vpop.trf.xlu0
        %v1184 = vpop.trf.xlu0
        %v1185 = vpop.trf.xlu0
        %v1186 = vpop.trf.xlu0
        %v1187 = vpop.trf.xlu0
        %v1188 = vpop.trf.xlu0
        %v1189 = vpop.trf.xlu0
        %v1190 = vpop.trf.xlu0
        %v1191 = vpop.trf.xlu0
        %1192 = vxpose.xlu0.b32.start [1/16] %v1126, 128
        %1193 = vxpose.xlu0.b32.cont [2/16] 0.0, 128
        %1194 = vxpose.xlu0.b32.cont [3/16] 0.0, 128
        %1195 = vxpose.xlu0.b32.cont [4/16] 0.0, 128
        %1196 = vxpose.xlu0.b32.cont [5/16] 0.0, 128
        %1197 = vxpose.xlu0.b32.cont [6/16] 0.0, 128
        %1198 = vxpose.xlu0.b32.cont [7/16] 0.0, 128
        %1199 = vxpose.xlu0.b32.cont [8/16] 0.0, 128
        %1200 = vxpose.xlu0.b32.cont [9/16] 0.0, 128
        %1201 = vxpose.xlu0.b32.cont [10/16] 0.0, 128
        %1202 = vxpose.xlu0.b32.cont [11/16] 0.0, 128
        %1203 = vxpose.xlu0.b32.cont [12/16] 0.0, 128
        %1204 = vxpose.xlu0.b32.cont [13/16] 0.0, 128
        %1205 = vxpose.xlu0.b32.cont [14/16] 0.0, 128
        %1206 = vxpose.xlu0.b32.cont [15/16] 0.0, 128
        %1207 = vxpose.xlu0.b32.end [16/16] 0.0, 128
        %v1208 = vpop.trf.xlu0
        %v1209 = vpop.trf.xlu0
        %v1210 = vpop.trf.xlu0
        %v1211 = vpop.trf.xlu0
        %v1212 = vpop.trf.xlu0
        %v1213 = vpop.trf.xlu0
        %v1214 = vpop.trf.xlu0
        %v1215 = vpop.trf.xlu0
        %v1216 = vpop.trf.xlu0
        %v1217 = vpop.trf.xlu0
        %v1218 = vpop.trf.xlu0
        %v1219 = vpop.trf.xlu0
        %v1220 = vpop.trf.xlu0
        %v1221 = vpop.trf.xlu0
        %v1222 = vpop.trf.xlu0
        %v1223 = vpop.trf.xlu0
        %1224 = vxpose.xlu0.b32.start [1/16] %v1127, 128
        %1225 = vxpose.xlu0.b32.cont [2/16] 0.0, 128
        %1226 = vxpose.xlu0.b32.cont [3/16] 0.0, 128
        %1227 = vxpose.xlu0.b32.cont [4/16] 0.0, 128
        %1228 = vxpose.xlu0.b32.cont [5/16] 0.0, 128
        %1229 = vxpose.xlu0.b32.cont [6/16] 0.0, 128
        %1230 = vxpose.xlu0.b32.cont [7/16] 0.0, 128
        %1231 = vxpose.xlu0.b32.cont [8/16] 0.0, 128
        %1232 = vxpose.xlu0.b32.cont [9/16] 0.0, 128
        %1233 = vxpose.xlu0.b32.cont [10/16] 0.0, 128
        %1234 = vxpose.xlu0.b32.cont [11/16] 0.0, 128
        %1235 = vxpose.xlu0.b32.cont [12/16] 0.0, 128
        %1236 = vxpose.xlu0.b32.cont [13/16] 0.0, 128
        %1237 = vxpose.xlu0.b32.cont [14/16] 0.0, 128
        %1238 = vxpose.xlu0.b32.cont [15/16] 0.0, 128
        %1239 = vxpose.xlu0.b32.end [16/16] 0.0, 128
        %v1240 = vpop.trf.xlu0
        %v1241 = vpop.trf.xlu0
        %v1242 = vpop.trf.xlu0
        %v1243 = vpop.trf.xlu0
        %v1244 = vpop.trf.xlu0
        %v1245 = vpop.trf.xlu0
        %v1246 = vpop.trf.xlu0
        %v1247 = vpop.trf.xlu0
        %v1248 = vpop.trf.xlu0
        %v1249 = vpop.trf.xlu0
        %v1250 = vpop.trf.xlu0
        %v1251 = vpop.trf.xlu0
        %v1252 = vpop.trf.xlu0
        %v1253 = vpop.trf.xlu0
        %v1254 = vpop.trf.xlu0
        %v1255 = vpop.trf.xlu0
        %vm1256 = vcmask 64512
        %v1258 = vsel %vm1256, %v1144, 0
        %v1261 = vsel %vm1256, %v1145, 0
        %v1264 = vsel %vm1256, %v1146, 0
        %v1267 = vsel %vm1256, %v1147, 0
        %v1270 = vsel %vm1256, %v1148, 0
        %v1273 = vsel %vm1256, %v1149, 0
        %v1276 = vsel %vm1256, %v1150, 0
        %v1279 = vsel %vm1256, %v1151, 0
        %v1282 = vsel %vm1256, %v1152, 0
        %v1285 = vsel %vm1256, %v1153, 0
        %v1288 = vsel %vm1256, %v1154, 0
        %v1291 = vsel %vm1256, %v1155, 0
        %v1294 = vsel %vm1256, %v1156, 0
        %v1297 = vsel %vm1256, %v1157, 0
        %v1300 = vsel %vm1256, %v1158, 0
        %v1303 = vsel %vm1256, %v1159, 0
        %v1306 = vsel %vm1256, %v1176, 0
        %v1309 = vsel %vm1256, %v1177, 0
        %v1312 = vsel %vm1256, %v1178, 0
        %v1315 = vsel %vm1256, %v1179, 0
        %v1318 = vsel %vm1256, %v1180, 0
        %v1321 = vsel %vm1256, %v1181, 0
        %v1324 = vsel %vm1256, %v1182, 0
        %v1327 = vsel %vm1256, %v1183, 0
        %v1330 = vsel %vm1256, %v1184, 0
        %v1333 = vsel %vm1256, %v1185, 0
        %v1336 = vsel %vm1256, %v1186, 0
        %v1339 = vsel %vm1256, %v1187, 0
        %v1342 = vsel %vm1256, %v1188, 0
        %v1345 = vsel %vm1256, %v1189, 0
        %v1348 = vsel %vm1256, %v1190, 0
        %v1351 = vsel %vm1256, %v1191, 0
        %v1354 = vsel %vm1256, %v1208, 0
        %v1357 = vsel %vm1256, %v1209, 0
        %v1360 = vsel %vm1256, %v1210, 0
        %v1363 = vsel %vm1256, %v1211, 0
        %v1366 = vsel %vm1256, %v1212, 0
        %v1369 = vsel %vm1256, %v1213, 0
        %v1372 = vsel %vm1256, %v1214, 0
        %v1375 = vsel %vm1256, %v1215, 0
        %v1378 = vsel %vm1256, %v1216, 0
        %v1381 = vsel %vm1256, %v1217, 0
        %v1384 = vsel %vm1256, %v1218, 0
        %v1387 = vsel %vm1256, %v1219, 0
        %v1390 = vsel %vm1256, %v1220, 0
        %v1393 = vsel %vm1256, %v1221, 0
        %v1396 = vsel %vm1256, %v1222, 0
        %v1399 = vsel %vm1256, %v1223, 0
        %v1402 = vsel %vm1256, %v1240, 0
        %v1405 = vsel %vm1256, %v1241, 0
        %v1408 = vsel %vm1256, %v1242, 0
        %v1411 = vsel %vm1256, %v1243, 0
        %v1414 = vsel %vm1256, %v1244, 0
        %v1417 = vsel %vm1256, %v1245, 0
        %v1420 = vsel %vm1256, %v1246, 0
        %v1423 = vsel %vm1256, %v1247, 0
        %v1426 = vsel %vm1256, %v1248, 0
        %v1429 = vsel %vm1256, %v1249, 0
        %v1432 = vsel %vm1256, %v1250, 0
        %v1435 = vsel %vm1256, %v1251, 0
        %v1438 = vsel %vm1256, %v1252, 0
        %v1441 = vsel %vm1256, %v1253, 0
        %v1444 = vsel %vm1256, %v1254, 0
        %v1447 = vsel %vm1256, %v1255, 0
        %1449 = vmatprep.subr.mxu0 0.0
        %1450 = vmatpush1.msra.mxu0 0.0
        %1451 = vmatprep.subr.mxu0 0.0
        %1452 = vmatpush1.msra.mxu0 0.0
        %1453 = vmatprep.subr.mxu0 0.0
        %1454 = vmatpush1.msra.mxu0 0.0
        %1455 = vmatprep.subr.mxu0 0.0
        %1456 = vmatpush1.msra.mxu0 0.0
        %1457 = vmatprep.subr.mxu0 0.0
        %1458 = vmatpush1.msra.mxu0 0.0
        %1459 = vmatprep.subr.mxu0 0.0
        %1460 = vmatpush1.msra.mxu0 0.0
        %1461 = vmatprep.subr.mxu0 0.0
        %1462 = vmatpush1.msra.mxu0 0.0
        %1463 = vmatprep.subr.mxu0 0.0
        %1464 = vmatpush1.msra.mxu0 0.0
        %1465 = vmatprep.subr.mxu0 0.0
        %1466 = vmatpush1.msra.mxu0 0.0
        %1467 = vmatprep.subr.mxu0 0.0
        %1468 = vmatpush1.msra.mxu0 0.0
        %1469 = vmatprep.subr.mxu0 0.0
        %1470 = vmatpush1.msra.mxu0 0.0
        %1471 = vmatprep.subr.mxu0 0.0
        %1472 = vmatpush1.msra.mxu0 0.0
        %1473 = vmatprep.subr.mxu0 0.0
        %1474 = vmatpush1.msra.mxu0 0.0
        %1475 = vmatprep.subr.mxu0 0.0
        %1476 = vmatpush1.msra.mxu0 0.0
        %1477 = vmatprep.subr.mxu0 0.0
        %1478 = vmatpush1.msra.mxu0 0.0
        %1479 = vmatprep.subr.mxu0 0.0
        %1480 = vmatpush1.msra.mxu0 %v272
        %1481 = vmatprep.subr.mxu0 0.0
        %1482 = vmatpush2.msra.mxu0 0.0
        %1483 = vmatprep.subr.mxu0 0.0
        %1484 = vmatpush2.msra.mxu0 0.0
        %1485 = vmatprep.subr.mxu0 0.0
        %1486 = vmatpush2.msra.mxu0 0.0
        %1487 = vmatprep.subr.mxu0 0.0
        %1488 = vmatpush2.msra.mxu0 0.0
        %1489 = vmatprep.subr.mxu0 0.0
        %1490 = vmatpush2.msra.mxu0 0.0
        %1491 = vmatprep.subr.mxu0 0.0
        %1492 = vmatpush2.msra.mxu0 0.0
        %1493 = vmatprep.subr.mxu0 0.0
        %1494 = vmatpush2.msra.mxu0 0.0
        %1495 = vmatprep.subr.mxu0 0.0
        %1496 = vmatpush2.msra.mxu0 0.0
        %1497 = vmatprep.subr.mxu0 0.0
        %1498 = vmatpush2.msra.mxu0 0.0
        %1499 = vmatprep.subr.mxu0 0.0
        %1500 = vmatpush2.msra.mxu0 0.0
        %1501 = vmatprep.subr.mxu0 0.0
        %1502 = vmatpush2.msra.mxu0 0.0
        %1503 = vmatprep.subr.mxu0 0.0
        %1504 = vmatpush2.msra.mxu0 0.0
        %1505 = vmatprep.subr.mxu0 0.0
        %1506 = vmatpush2.msra.mxu0 0.0
        %1507 = vmatprep.subr.mxu0 0.0
        %1508 = vmatpush2.msra.mxu0 0.0
        %1509 = vmatprep.subr.mxu0 0.0
        %1510 = vmatpush2.msra.mxu0 0.0
        %1511 = vmatprep.subr.mxu0 0.0
        %1512 = vmatpush2.msra.mxu0 0.0
        %1513 = vmatprep.mubr.f32.mxu0 0.0
        %1514 = vmatmul.mubr.f32.gmra.mxu0 %v1258
        %v1515 = vpop.f32.mrf.mxu0
        %v1516 = vadd.f32 0.0, %v1515
        %v1517 = vpop.f32.mrf.mxu0
        %1518 = vmatprep.mubr.f32.mxu0 0.0
        %1519 = vmatmul.mubr.f32.gmra.mxu0 %v1261
        %v1520 = vpop.f32.mrf.mxu0
        %v1521 = vadd.f32 0.0, %v1520
        %v1522 = vpop.f32.mrf.mxu0
        %1523 = vmatprep.mubr.f32.mxu0 0.0
        %1524 = vmatmul.mubr.f32.gmra.mxu0 %v1264
        %v1525 = vpop.f32.mrf.mxu0
        %v1526 = vadd.f32 0.0, %v1525
        %v1527 = vpop.f32.mrf.mxu0
        %1528 = vmatprep.mubr.f32.mxu0 0.0
        %1529 = vmatmul.mubr.f32.gmra.mxu0 %v1267
        %v1530 = vpop.f32.mrf.mxu0
        %v1531 = vadd.f32 0.0, %v1530
        %v1532 = vpop.f32.mrf.mxu0
        %1533 = vmatprep.mubr.f32.mxu0 0.0
        %1534 = vmatmul.mubr.f32.gmra.mxu0 %v1270
        %v1535 = vpop.f32.mrf.mxu0
        %v1536 = vadd.f32 0.0, %v1535
        %v1537 = vpop.f32.mrf.mxu0
        %1538 = vmatprep.mubr.f32.mxu0 0.0
        %1539 = vmatmul.mubr.f32.gmra.mxu0 %v1273
        %v1540 = vpop.f32.mrf.mxu0
        %v1541 = vadd.f32 0.0, %v1540
        %v1542 = vpop.f32.mrf.mxu0
        %1543 = vmatprep.mubr.f32.mxu0 0.0
        %1544 = vmatmul.mubr.f32.gmra.mxu0 %v1276
        %v1545 = vpop.f32.mrf.mxu0
        %v1546 = vadd.f32 0.0, %v1545
        %v1547 = vpop.f32.mrf.mxu0
        %1548 = vmatprep.mubr.f32.mxu0 0.0
        %1549 = vmatmul.mubr.f32.gmra.mxu0 %v1279
        %v1550 = vpop.f32.mrf.mxu0
        %v1551 = vadd.f32 0.0, %v1550
        %v1552 = vpop.f32.mrf.mxu0
        %1553 = vmatprep.mubr.f32.mxu0 0.0
        %1554 = vmatmul.mubr.f32.gmra.mxu0 %v1282
        %v1555 = vpop.f32.mrf.mxu0
        %v1556 = vadd.f32 0.0, %v1555
        %v1557 = vpop.f32.mrf.mxu0
        %1558 = vmatprep.mubr.f32.mxu0 0.0
        %1559 = vmatmul.mubr.f32.gmra.mxu0 %v1285
        %v1560 = vpop.f32.mrf.mxu0
        %v1561 = vadd.f32 0.0, %v1560
        %v1562 = vpop.f32.mrf.mxu0
        %1563 = vmatprep.mubr.f32.mxu0 0.0
        %1564 = vmatmul.mubr.f32.gmra.mxu0 %v1288
        %v1565 = vpop.f32.mrf.mxu0
        %v1566 = vadd.f32 0.0, %v1565
        %v1567 = vpop.f32.mrf.mxu0
        %1568 = vmatprep.mubr.f32.mxu0 0.0
        %1569 = vmatmul.mubr.f32.gmra.mxu0 %v1291
        %v1570 = vpop.f32.mrf.mxu0
        %v1571 = vadd.f32 0.0, %v1570
        %v1572 = vpop.f32.mrf.mxu0
        %1573 = vmatprep.mubr.f32.mxu0 0.0
        %1574 = vmatmul.mubr.f32.gmra.mxu0 %v1294
        %v1575 = vpop.f32.mrf.mxu0
        %v1576 = vadd.f32 0.0, %v1575
        %v1577 = vpop.f32.mrf.mxu0
        %1578 = vmatprep.mubr.f32.mxu0 0.0
        %1579 = vmatmul.mubr.f32.gmra.mxu0 %v1297
        %v1580 = vpop.f32.mrf.mxu0
        %v1581 = vadd.f32 0.0, %v1580
        %v1582 = vpop.f32.mrf.mxu0
        %1583 = vmatprep.mubr.f32.mxu0 0.0
        %1584 = vmatmul.mubr.f32.gmra.mxu0 %v1300
        %v1585 = vpop.f32.mrf.mxu0
        %v1586 = vadd.f32 0.0, %v1585
        %v1587 = vpop.f32.mrf.mxu0
        %1588 = vmatprep.mubr.f32.mxu0 0.0
        %1589 = vmatmul.mubr.f32.gmra.mxu0 %v1303
        %v1590 = vpop.f32.mrf.mxu0
        %v1591 = vadd.f32 0.0, %v1590
        %v1592 = vpop.f32.mrf.mxu0
        %1593 = vmatprep.mubr.f32.mxu0 0.0
        %1594 = vmatmul.mubr.f32.gmra.mxu0 %v1306
        %v1595 = vpop.f32.mrf.mxu0
        %v1596 = vadd.f32 0.0, %v1595
        %v1597 = vpop.f32.mrf.mxu0
        %1598 = vmatprep.mubr.f32.mxu0 0.0
        %1599 = vmatmul.mubr.f32.gmra.mxu0 %v1309
        %v1600 = vpop.f32.mrf.mxu0
        %v1601 = vadd.f32 0.0, %v1600
        %v1602 = vpop.f32.mrf.mxu0
        %1603 = vmatprep.mubr.f32.mxu0 0.0
        %1604 = vmatmul.mubr.f32.gmra.mxu0 %v1312
        %v1605 = vpop.f32.mrf.mxu0
        %v1606 = vadd.f32 0.0, %v1605
        %v1607 = vpop.f32.mrf.mxu0
        %1608 = vmatprep.mubr.f32.mxu0 0.0
        %1609 = vmatmul.mubr.f32.gmra.mxu0 %v1315
        %v1610 = vpop.f32.mrf.mxu0
        %v1611 = vadd.f32 0.0, %v1610
        %v1612 = vpop.f32.mrf.mxu0
        %1613 = vmatprep.mubr.f32.mxu0 0.0
        %1614 = vmatmul.mubr.f32.gmra.mxu0 %v1318
        %v1615 = vpop.f32.mrf.mxu0
        %v1616 = vadd.f32 0.0, %v1615
        %v1617 = vpop.f32.mrf.mxu0
        %1618 = vmatprep.mubr.f32.mxu0 0.0
        %1619 = vmatmul.mubr.f32.gmra.mxu0 %v1321
        %v1620 = vpop.f32.mrf.mxu0
        %v1621 = vadd.f32 0.0, %v1620
        %v1622 = vpop.f32.mrf.mxu0
        %1623 = vmatprep.mubr.f32.mxu0 0.0
        %1624 = vmatmul.mubr.f32.gmra.mxu0 %v1324
        %v1625 = vpop.f32.mrf.mxu0
        %v1626 = vadd.f32 0.0, %v1625
        %v1627 = vpop.f32.mrf.mxu0
        %1628 = vmatprep.mubr.f32.mxu0 0.0
        %1629 = vmatmul.mubr.f32.gmra.mxu0 %v1327
        %v1630 = vpop.f32.mrf.mxu0
        %v1631 = vadd.f32 0.0, %v1630
        %v1632 = vpop.f32.mrf.mxu0
        %1633 = vmatprep.mubr.f32.mxu0 0.0
        %1634 = vmatmul.mubr.f32.gmra.mxu0 %v1330
        %v1635 = vpop.f32.mrf.mxu0
        %v1636 = vadd.f32 0.0, %v1635
        %v1637 = vpop.f32.mrf.mxu0
        %1638 = vmatprep.mubr.f32.mxu0 0.0
        %1639 = vmatmul.mubr.f32.gmra.mxu0 %v1333
        %v1640 = vpop.f32.mrf.mxu0
        %v1641 = vadd.f32 0.0, %v1640
        %v1642 = vpop.f32.mrf.mxu0
        %1643 = vmatprep.mubr.f32.mxu0 0.0
        %1644 = vmatmul.mubr.f32.gmra.mxu0 %v1336
        %v1645 = vpop.f32.mrf.mxu0
        %v1646 = vadd.f32 0.0, %v1645
        %v1647 = vpop.f32.mrf.mxu0
        %1648 = vmatprep.mubr.f32.mxu0 0.0
        %1649 = vmatmul.mubr.f32.gmra.mxu0 %v1339
        %v1650 = vpop.f32.mrf.mxu0
        %v1651 = vadd.f32 0.0, %v1650
        %v1652 = vpop.f32.mrf.mxu0
        %1653 = vmatprep.mubr.f32.mxu0 0.0
        %1654 = vmatmul.mubr.f32.gmra.mxu0 %v1342
        %v1655 = vpop.f32.mrf.mxu0
        %v1656 = vadd.f32 0.0, %v1655
        %v1657 = vpop.f32.mrf.mxu0
        %1658 = vmatprep.mubr.f32.mxu0 0.0
        %1659 = vmatmul.mubr.f32.gmra.mxu0 %v1345
        %v1660 = vpop.f32.mrf.mxu0
        %v1661 = vadd.f32 0.0, %v1660
        %v1662 = vpop.f32.mrf.mxu0
        %1663 = vmatprep.mubr.f32.mxu0 0.0
        %1664 = vmatmul.mubr.f32.gmra.mxu0 %v1348
        %v1665 = vpop.f32.mrf.mxu0
        %v1666 = vadd.f32 0.0, %v1665
        %v1667 = vpop.f32.mrf.mxu0
        %1668 = vmatprep.mubr.f32.mxu0 0.0
        %1669 = vmatmul.mubr.f32.gmra.mxu0 %v1351
        %v1670 = vpop.f32.mrf.mxu0
        %v1671 = vadd.f32 0.0, %v1670
        %v1672 = vpop.f32.mrf.mxu0
        %1673 = vmatprep.mubr.f32.mxu0 0.0
        %1674 = vmatmul.mubr.f32.gmra.mxu0 %v1354
        %v1675 = vpop.f32.mrf.mxu0
        %v1676 = vadd.f32 0.0, %v1675
        %v1677 = vpop.f32.mrf.mxu0
        %1678 = vmatprep.mubr.f32.mxu0 0.0
        %1679 = vmatmul.mubr.f32.gmra.mxu0 %v1357
        %v1680 = vpop.f32.mrf.mxu0
        %v1681 = vadd.f32 0.0, %v1680
        %v1682 = vpop.f32.mrf.mxu0
        %1683 = vmatprep.mubr.f32.mxu0 0.0
        %1684 = vmatmul.mubr.f32.gmra.mxu0 %v1360
        %v1685 = vpop.f32.mrf.mxu0
        %v1686 = vadd.f32 0.0, %v1685
        %v1687 = vpop.f32.mrf.mxu0
        %1688 = vmatprep.mubr.f32.mxu0 0.0
        %1689 = vmatmul.mubr.f32.gmra.mxu0 %v1363
        %v1690 = vpop.f32.mrf.mxu0
        %v1691 = vadd.f32 0.0, %v1690
        %v1692 = vpop.f32.mrf.mxu0
        %1693 = vmatprep.mubr.f32.mxu0 0.0
        %1694 = vmatmul.mubr.f32.gmra.mxu0 %v1366
        %v1695 = vpop.f32.mrf.mxu0
        %v1696 = vadd.f32 0.0, %v1695
        %v1697 = vpop.f32.mrf.mxu0
        %1698 = vmatprep.mubr.f32.mxu0 0.0
        %1699 = vmatmul.mubr.f32.gmra.mxu0 %v1369
        %v1700 = vpop.f32.mrf.mxu0
        %v1701 = vadd.f32 0.0, %v1700
        %v1702 = vpop.f32.mrf.mxu0
        %1703 = vmatprep.mubr.f32.mxu0 0.0
        %1704 = vmatmul.mubr.f32.gmra.mxu0 %v1372
        %v1705 = vpop.f32.mrf.mxu0
        %v1706 = vadd.f32 0.0, %v1705
        %v1707 = vpop.f32.mrf.mxu0
        %1708 = vmatprep.mubr.f32.mxu0 0.0
        %1709 = vmatmul.mubr.f32.gmra.mxu0 %v1375
        %v1710 = vpop.f32.mrf.mxu0
        %v1711 = vadd.f32 0.0, %v1710
        %v1712 = vpop.f32.mrf.mxu0
        %1713 = vmatprep.mubr.f32.mxu0 0.0
        %1714 = vmatmul.mubr.f32.gmra.mxu0 %v1378
        %v1715 = vpop.f32.mrf.mxu0
        %v1716 = vadd.f32 0.0, %v1715
        %v1717 = vpop.f32.mrf.mxu0
        %1718 = vmatprep.mubr.f32.mxu0 0.0
        %1719 = vmatmul.mubr.f32.gmra.mxu0 %v1381
        %v1720 = vpop.f32.mrf.mxu0
        %v1721 = vadd.f32 0.0, %v1720
        %v1722 = vpop.f32.mrf.mxu0
        %1723 = vmatprep.mubr.f32.mxu0 0.0
        %1724 = vmatmul.mubr.f32.gmra.mxu0 %v1384
        %v1725 = vpop.f32.mrf.mxu0
        %v1726 = vadd.f32 0.0, %v1725
        %v1727 = vpop.f32.mrf.mxu0
        %1728 = vmatprep.mubr.f32.mxu0 0.0
        %1729 = vmatmul.mubr.f32.gmra.mxu0 %v1387
        %v1730 = vpop.f32.mrf.mxu0
        %v1731 = vadd.f32 0.0, %v1730
        %v1732 = vpop.f32.mrf.mxu0
        %1733 = vmatprep.mubr.f32.mxu0 0.0
        %1734 = vmatmul.mubr.f32.gmra.mxu0 %v1390
        %v1735 = vpop.f32.mrf.mxu0
        %v1736 = vadd.f32 0.0, %v1735
        %v1737 = vpop.f32.mrf.mxu0
        %1738 = vmatprep.mubr.f32.mxu0 0.0
        %1739 = vmatmul.mubr.f32.gmra.mxu0 %v1393
        %v1740 = vpop.f32.mrf.mxu0
        %v1741 = vadd.f32 0.0, %v1740
        %v1742 = vpop.f32.mrf.mxu0
        %1743 = vmatprep.mubr.f32.mxu0 0.0
        %1744 = vmatmul.mubr.f32.gmra.mxu0 %v1396
        %v1745 = vpop.f32.mrf.mxu0
        %v1746 = vadd.f32 0.0, %v1745
        %v1747 = vpop.f32.mrf.mxu0
        %1748 = vmatprep.mubr.f32.mxu0 0.0
        %1749 = vmatmul.mubr.f32.gmra.mxu0 %v1399
        %v1750 = vpop.f32.mrf.mxu0
        %v1751 = vadd.f32 0.0, %v1750
        %v1752 = vpop.f32.mrf.mxu0
        %1753 = vmatprep.mubr.f32.mxu0 0.0
        %1754 = vmatmul.mubr.f32.gmra.mxu0 %v1402
        %v1755 = vpop.f32.mrf.mxu0
        %v1756 = vadd.f32 0.0, %v1755
        %v1757 = vpop.f32.mrf.mxu0
        %1758 = vmatprep.mubr.f32.mxu0 0.0
        %1759 = vmatmul.mubr.f32.gmra.mxu0 %v1405
        %v1760 = vpop.f32.mrf.mxu0
        %v1761 = vadd.f32 0.0, %v1760
        %v1762 = vpop.f32.mrf.mxu0
        %1763 = vmatprep.mubr.f32.mxu0 0.0
        %1764 = vmatmul.mubr.f32.gmra.mxu0 %v1408
        %v1765 = vpop.f32.mrf.mxu0
        %v1766 = vadd.f32 0.0, %v1765
        %v1767 = vpop.f32.mrf.mxu0
        %1768 = vmatprep.mubr.f32.mxu0 0.0
        %1769 = vmatmul.mubr.f32.gmra.mxu0 %v1411
        %v1770 = vpop.f32.mrf.mxu0
        %v1771 = vadd.f32 0.0, %v1770
        %v1772 = vpop.f32.mrf.mxu0
        %1773 = vmatprep.mubr.f32.mxu0 0.0
        %1774 = vmatmul.mubr.f32.gmra.mxu0 %v1414
        %v1775 = vpop.f32.mrf.mxu0
        %v1776 = vadd.f32 0.0, %v1775
        %v1777 = vpop.f32.mrf.mxu0
        %1778 = vmatprep.mubr.f32.mxu0 0.0
        %1779 = vmatmul.mubr.f32.gmra.mxu0 %v1417
        %v1780 = vpop.f32.mrf.mxu0
        %v1781 = vadd.f32 0.0, %v1780
        %v1782 = vpop.f32.mrf.mxu0
        %1783 = vmatprep.mubr.f32.mxu0 0.0
        %1784 = vmatmul.mubr.f32.gmra.mxu0 %v1420
        %v1785 = vpop.f32.mrf.mxu0
        %v1786 = vadd.f32 0.0, %v1785
        %v1787 = vpop.f32.mrf.mxu0
        %1788 = vmatprep.mubr.f32.mxu0 0.0
        %1789 = vmatmul.mubr.f32.gmra.mxu0 %v1423
        %v1790 = vpop.f32.mrf.mxu0
        %v1791 = vadd.f32 0.0, %v1790
        %v1792 = vpop.f32.mrf.mxu0
        %1793 = vmatprep.mubr.f32.mxu0 0.0
        %1794 = vmatmul.mubr.f32.gmra.mxu0 %v1426
        %v1795 = vpop.f32.mrf.mxu0
        %v1796 = vadd.f32 0.0, %v1795
        %v1797 = vpop.f32.mrf.mxu0
        %1798 = vmatprep.mubr.f32.mxu0 0.0
        %1799 = vmatmul.mubr.f32.gmra.mxu0 %v1429
        %v1800 = vpop.f32.mrf.mxu0
        %v1801 = vadd.f32 0.0, %v1800
        %v1802 = vpop.f32.mrf.mxu0
        %1803 = vmatprep.mubr.f32.mxu0 0.0
        %1804 = vmatmul.mubr.f32.gmra.mxu0 %v1432
        %v1805 = vpop.f32.mrf.mxu0
        %v1806 = vadd.f32 0.0, %v1805
        %v1807 = vpop.f32.mrf.mxu0
        %1808 = vmatprep.mubr.f32.mxu0 0.0
        %1809 = vmatmul.mubr.f32.gmra.mxu0 %v1435
        %v1810 = vpop.f32.mrf.mxu0
        %v1811 = vadd.f32 0.0, %v1810
        %v1812 = vpop.f32.mrf.mxu0
        %1813 = vmatprep.mubr.f32.mxu0 0.0
        %1814 = vmatmul.mubr.f32.gmra.mxu0 %v1438
        %v1815 = vpop.f32.mrf.mxu0
        %v1816 = vadd.f32 0.0, %v1815
        %v1817 = vpop.f32.mrf.mxu0
        %1818 = vmatprep.mubr.f32.mxu0 0.0
        %1819 = vmatmul.mubr.f32.gmra.mxu0 %v1441
        %v1820 = vpop.f32.mrf.mxu0
        %v1821 = vadd.f32 0.0, %v1820
        %v1822 = vpop.f32.mrf.mxu0
        %1823 = vmatprep.mubr.f32.mxu0 0.0
        %1824 = vmatmul.mubr.f32.gmra.mxu0 %v1444
        %v1825 = vpop.f32.mrf.mxu0
        %v1826 = vadd.f32 0.0, %v1825
        %v1827 = vpop.f32.mrf.mxu0
        %1828 = vmatprep.mubr.f32.mxu0 0.0
        %1829 = vmatmul.mubr.f32.gmra.mxu0 %v1447
        %v1830 = vpop.f32.mrf.mxu0
        %v1831 = vadd.f32 0.0, %v1830
        %v1832 = vpop.f32.mrf.mxu0
        %1833 = vdwg.mxu0
        %v1834 = vlaneseq
        %v1835 = vshrl.u32 %v1834, 7
        %v1836 = vsub.s32 0, %v1835
        %v1837 = vrot.slane %v263, %v1836
        %v1838 = vlaneseq
        %v1839 = vshrl.u32 %v1838, 7
        %v1840 = vsub.s32 1, %v1839
        %v1841 = vrot.slane %v263, %v1840
        %v1842 = vlaneseq
        %v1843 = vshrl.u32 %v1842, 7
        %v1844 = vsub.s32 2, %v1843
        %v1845 = vrot.slane %v263, %v1844
        %v1846 = vlaneseq
        %v1847 = vshrl.u32 %v1846, 7
        %v1848 = vsub.s32 3, %v1847
        %v1849 = vrot.slane %v263, %v1848
        %vm1850 = vcmp.eq.s32.totalorder %v274, %v1837
        %vm1851 = vcmp.eq.s32.totalorder %v274, %v1841
        %vm1852 = vcmp.eq.s32.totalorder %v274, %v1845
        %vm1853 = vcmp.eq.s32.totalorder %v274, %v1849
        %vm1854 = vcmp.eq.s32.totalorder %v275, %v1837
        %vm1855 = vcmp.eq.s32.totalorder %v275, %v1841
        %vm1856 = vcmp.eq.s32.totalorder %v275, %v1845
        %vm1857 = vcmp.eq.s32.totalorder %v275, %v1849
        %vm1858 = vcmp.eq.s32.totalorder %v276, %v1837
        %vm1859 = vcmp.eq.s32.totalorder %v276, %v1841
        %vm1860 = vcmp.eq.s32.totalorder %v276, %v1845
        %vm1861 = vcmp.eq.s32.totalorder %v276, %v1849
        %vm1862 = vcmp.eq.s32.totalorder %v277, %v1837
        %vm1863 = vcmp.eq.s32.totalorder %v277, %v1841
        %vm1864 = vcmp.eq.s32.totalorder %v277, %v1845
        %vm1865 = vcmp.eq.s32.totalorder %v277, %v1849
        %vm1866 = vcmp.eq.s32.totalorder %v278, %v1837
        %vm1867 = vcmp.eq.s32.totalorder %v278, %v1841
        %vm1868 = vcmp.eq.s32.totalorder %v278, %v1845
        %vm1869 = vcmp.eq.s32.totalorder %v278, %v1849
        %vm1870 = vcmp.eq.s32.totalorder %v279, %v1837
        %vm1871 = vcmp.eq.s32.totalorder %v279, %v1841
        %vm1872 = vcmp.eq.s32.totalorder %v279, %v1845
        %vm1873 = vcmp.eq.s32.totalorder %v279, %v1849
        %vm1874 = vcmp.eq.s32.totalorder %v280, %v1837
        %vm1875 = vcmp.eq.s32.totalorder %v280, %v1841
        %vm1876 = vcmp.eq.s32.totalorder %v280, %v1845
        %vm1877 = vcmp.eq.s32.totalorder %v280, %v1849
        %vm1878 = vcmp.eq.s32.totalorder %v281, %v1837
        %vm1879 = vcmp.eq.s32.totalorder %v281, %v1841
        %vm1880 = vcmp.eq.s32.totalorder %v281, %v1845
        %vm1881 = vcmp.eq.s32.totalorder %v281, %v1849
        %v1882 = vsel %vm1850, 1, 0
        %v1883 = vsel %vm1851, 1, 0
        %v1884 = vsel %vm1852, 1, 0
        %v1885 = vsel %vm1853, 1, 0
        %v1886 = vsel %vm1854, 1, 0
        %v1887 = vsel %vm1855, 1, 0
        %v1888 = vsel %vm1856, 1, 0
        %v1889 = vsel %vm1857, 1, 0
        %v1890 = vsel %vm1858, 1, 0
        %v1891 = vsel %vm1859, 1, 0
        %v1892 = vsel %vm1860, 1, 0
        %v1893 = vsel %vm1861, 1, 0
        %v1894 = vsel %vm1862, 1, 0
        %v1895 = vsel %vm1863, 1, 0
        %v1896 = vsel %vm1864, 1, 0
        %v1897 = vsel %vm1865, 1, 0
        %v1898 = vsel %vm1866, 1, 0
        %v1899 = vsel %vm1867, 1, 0
        %v1900 = vsel %vm1868, 1, 0
        %v1901 = vsel %vm1869, 1, 0
        %v1902 = vsel %vm1870, 1, 0
        %v1903 = vsel %vm1871, 1, 0
        %v1904 = vsel %vm1872, 1, 0
        %v1905 = vsel %vm1873, 1, 0
        %v1906 = vsel %vm1874, 1, 0
        %v1907 = vsel %vm1875, 1, 0
        %v1908 = vsel %vm1876, 1, 0
        %v1909 = vsel %vm1877, 1, 0
        %v1910 = vsel %vm1878, 1, 0
        %v1911 = vsel %vm1879, 1, 0
        %v1912 = vsel %vm1880, 1, 0
        %v1913 = vsel %vm1881, 1, 0
        %v1914 = vcvt.s32.f32 %v1882
        %v1915 = vcvt.s32.f32 %v1883
        %v1916 = vcvt.s32.f32 %v1884
        %v1917 = vcvt.s32.f32 %v1885
        %v1918 = vcvt.s32.f32 %v1886
        %v1919 = vcvt.s32.f32 %v1887
        %v1920 = vcvt.s32.f32 %v1888
        %v1921 = vcvt.s32.f32 %v1889
        %v1922 = vcvt.s32.f32 %v1890
        %v1923 = vcvt.s32.f32 %v1891
        %v1924 = vcvt.s32.f32 %v1892
        %v1925 = vcvt.s32.f32 %v1893
        %v1926 = vcvt.s32.f32 %v1894
        %v1927 = vcvt.s32.f32 %v1895
        %v1928 = vcvt.s32.f32 %v1896
        %v1929 = vcvt.s32.f32 %v1897
        %v1930 = vcvt.s32.f32 %v1898
        %v1931 = vcvt.s32.f32 %v1899
        %v1932 = vcvt.s32.f32 %v1900
        %v1933 = vcvt.s32.f32 %v1901
        %v1934 = vcvt.s32.f32 %v1902
        %v1935 = vcvt.s32.f32 %v1903
        %v1936 = vcvt.s32.f32 %v1904
        %v1937 = vcvt.s32.f32 %v1905
        %v1938 = vcvt.s32.f32 %v1906
        %v1939 = vcvt.s32.f32 %v1907
        %v1940 = vcvt.s32.f32 %v1908
        %v1941 = vcvt.s32.f32 %v1909
        %v1942 = vcvt.s32.f32 %v1910
        %v1943 = vcvt.s32.f32 %v1911
        %v1944 = vcvt.s32.f32 %v1912
        %v1945 = vcvt.s32.f32 %v1913
        %1946 = vxpose.xlu0.b32.start [1/16] %v1914, 128
        %1947 = vxpose.xlu0.b32.cont [2/16] %v1918, 128
        %1948 = vxpose.xlu0.b32.cont [3/16] %v1922, 128
        %1949 = vxpose.xlu0.b32.cont [4/16] %v1926, 128
        %1950 = vxpose.xlu0.b32.cont [5/16] %v1930, 128
        %1951 = vxpose.xlu0.b32.cont [6/16] %v1934, 128
        %1952 = vxpose.xlu0.b32.cont [7/16] %v1938, 128
        %1953 = vxpose.xlu0.b32.cont [8/16] %v1942, 128
        %1954 = vxpose.xlu0.b32.cont [9/16] 0.0, 128
        %1955 = vxpose.xlu0.b32.cont [10/16] 0.0, 128
        %1956 = vxpose.xlu0.b32.cont [11/16] 0.0, 128
        %1957 = vxpose.xlu0.b32.cont [12/16] 0.0, 128
        %1958 = vxpose.xlu0.b32.cont [13/16] 0.0, 128
        %1959 = vxpose.xlu0.b32.cont [14/16] 0.0, 128
        %1960 = vxpose.xlu0.b32.cont [15/16] 0.0, 128
        %1961 = vxpose.xlu0.b32.end [16/16] 0.0, 128
        %v1962 = vpop.trf.xlu0
        %v1963 = vpop.trf.xlu0
        %v1964 = vpop.trf.xlu0
        %v1965 = vpop.trf.xlu0
        %v1966 = vpop.trf.xlu0
        %v1967 = vpop.trf.xlu0
        %v1968 = vpop.trf.xlu0
        %v1969 = vpop.trf.xlu0
        %v1970 = vpop.trf.xlu0
        %v1971 = vpop.trf.xlu0
        %v1972 = vpop.trf.xlu0
        %v1973 = vpop.trf.xlu0
        %v1974 = vpop.trf.xlu0
        %v1975 = vpop.trf.xlu0
        %v1976 = vpop.trf.xlu0
        %v1977 = vpop.trf.xlu0
        %1978 = vxpose.xlu0.b32.start [1/16] %v1915, 128
        %1979 = vxpose.xlu0.b32.cont [2/16] %v1919, 128
        %1980 = vxpose.xlu0.b32.cont [3/16] %v1923, 128
        %1981 = vxpose.xlu0.b32.cont [4/16] %v1927, 128
        %1982 = vxpose.xlu0.b32.cont [5/16] %v1931, 128
        %1983 = vxpose.xlu0.b32.cont [6/16] %v1935, 128
        %1984 = vxpose.xlu0.b32.cont [7/16] %v1939, 128
        %1985 = vxpose.xlu0.b32.cont [8/16] %v1943, 128
        %1986 = vxpose.xlu0.b32.cont [9/16] 0.0, 128
        %1987 = vxpose.xlu0.b32.cont [10/16] 0.0, 128
        %1988 = vxpose.xlu0.b32.cont [11/16] 0.0, 128
        %1989 = vxpose.xlu0.b32.cont [12/16] 0.0, 128
        %1990 = vxpose.xlu0.b32.cont [13/16] 0.0, 128
        %1991 = vxpose.xlu0.b32.cont [14/16] 0.0, 128
        %1992 = vxpose.xlu0.b32.cont [15/16] 0.0, 128
        %1993 = vxpose.xlu0.b32.end [16/16] 0.0, 128
        %v1994 = vpop.trf.xlu0
        %v1995 = vpop.trf.xlu0
        %v1996 = vpop.trf.xlu0
        %v1997 = vpop.trf.xlu0
        %v1998 = vpop.trf.xlu0
        %v1999 = vpop.trf.xlu0
        %v2000 = vpop.trf.xlu0
        %v2001 = vpop.trf.xlu0
        %v2002 = vpop.trf.xlu0
        %v2003 = vpop.trf.xlu0
        %v2004 = vpop.trf.xlu0
        %v2005 = vpop.trf.xlu0
        %v2006 = vpop.trf.xlu0
        %v2007 = vpop.trf.xlu0
        %v2008 = vpop.trf.xlu0
        %v2009 = vpop.trf.xlu0
        %2010 = vxpose.xlu0.b32.start [1/16] %v1916, 128
        %2011 = vxpose.xlu0.b32.cont [2/16] %v1920, 128
        %2012 = vxpose.xlu0.b32.cont [3/16] %v1924, 128
        %2013 = vxpose.xlu0.b32.cont [4/16] %v1928, 128
        %2014 = vxpose.xlu0.b32.cont [5/16] %v1932, 128
        %2015 = vxpose.xlu0.b32.cont [6/16] %v1936, 128
        %2016 = vxpose.xlu0.b32.cont [7/16] %v1940, 128
        %2017 = vxpose.xlu0.b32.cont [8/16] %v1944, 128
        %2018 = vxpose.xlu0.b32.cont [9/16] 0.0, 128
        %2019 = vxpose.xlu0.b32.cont [10/16] 0.0, 128
        %2020 = vxpose.xlu0.b32.cont [11/16] 0.0, 128
        %2021 = vxpose.xlu0.b32.cont [12/16] 0.0, 128
        %2022 = vxpose.xlu0.b32.cont [13/16] 0.0, 128
        %2023 = vxpose.xlu0.b32.cont [14/16] 0.0, 128
        %2024 = vxpose.xlu0.b32.cont [15/16] 0.0, 128
        %2025 = vxpose.xlu0.b32.end [16/16] 0.0, 128
        %v2026 = vpop.trf.xlu0
        %v2027 = vpop.trf.xlu0
        %v2028 = vpop.trf.xlu0
        %v2029 = vpop.trf.xlu0
        %v2030 = vpop.trf.xlu0
        %v2031 = vpop.trf.xlu0
        %v2032 = vpop.trf.xlu0
        %v2033 = vpop.trf.xlu0
        %v2034 = vpop.trf.xlu0
        %v2035 = vpop.trf.xlu0
        %v2036 = vpop.trf.xlu0
        %v2037 = vpop.trf.xlu0
        %v2038 = vpop.trf.xlu0
        %v2039 = vpop.trf.xlu0
        %v2040 = vpop.trf.xlu0
        %v2041 = vpop.trf.xlu0
        %2042 = vxpose.xlu0.b32.start [1/16] %v1917, 128
        %2043 = vxpose.xlu0.b32.cont [2/16] %v1921, 128
        %2044 = vxpose.xlu0.b32.cont [3/16] %v1925, 128
        %2045 = vxpose.xlu0.b32.cont [4/16] %v1929, 128
        %2046 = vxpose.xlu0.b32.cont [5/16] %v1933, 128
        %2047 = vxpose.xlu0.b32.cont [6/16] %v1937, 128
        %2048 = vxpose.xlu0.b32.cont [7/16] %v1941, 128
        %2049 = vxpose.xlu0.b32.cont [8/16] %v1945, 128
        %2050 = vxpose.xlu0.b32.cont [9/16] 0.0, 128
        %2051 = vxpose.xlu0.b32.cont [10/16] 0.0, 128
        %2052 = vxpose.xlu0.b32.cont [11/16] 0.0, 128
        %2053 = vxpose.xlu0.b32.cont [12/16] 0.0, 128
        %2054 = vxpose.xlu0.b32.cont [13/16] 0.0, 128
        %2055 = vxpose.xlu0.b32.cont [14/16] 0.0, 128
        %2056 = vxpose.xlu0.b32.cont [15/16] 0.0, 128
        %2057 = vxpose.xlu0.b32.end [16/16] 0.0, 128
        %v2058 = vpop.trf.xlu0
        %v2059 = vpop.trf.xlu0
        %v2060 = vpop.trf.xlu0
        %v2061 = vpop.trf.xlu0
        %v2062 = vpop.trf.xlu0
        %v2063 = vpop.trf.xlu0
        %v2064 = vpop.trf.xlu0
        %v2065 = vpop.trf.xlu0
        %v2066 = vpop.trf.xlu0
        %v2067 = vpop.trf.xlu0
        %v2068 = vpop.trf.xlu0
        %v2069 = vpop.trf.xlu0
        %v2070 = vpop.trf.xlu0
        %v2071 = vpop.trf.xlu0
        %v2072 = vpop.trf.xlu0
        %v2073 = vpop.trf.xlu0
        %v2075 = vsel %vm522, %v1962, 0
        %v2078 = vsel %vm522, %v1963, 0
        %v2081 = vsel %vm522, %v1964, 0
        %v2084 = vsel %vm522, %v1965, 0
        %v2087 = vsel %vm522, %v1966, 0
        %v2090 = vsel %vm522, %v1967, 0
        %v2093 = vsel %vm522, %v1968, 0
        %v2096 = vsel %vm522, %v1969, 0
        %v2099 = vsel %vm522, %v1970, 0
        %v2102 = vsel %vm522, %v1971, 0
        %v2105 = vsel %vm522, %v1972, 0
        %v2108 = vsel %vm522, %v1973, 0
        %v2111 = vsel %vm522, %v1974, 0
        %v2114 = vsel %vm522, %v1975, 0
        %v2117 = vsel %vm522, %v1976, 0
        %v2120 = vsel %vm522, %v1977, 0
        %v2123 = vsel %vm522, %v1994, 0
        %v2126 = vsel %vm522, %v1995, 0
        %v2129 = vsel %vm522, %v1996, 0
        %v2132 = vsel %vm522, %v1997, 0
        %v2135 = vsel %vm522, %v1998, 0
        %v2138 = vsel %vm522, %v1999, 0
        %v2141 = vsel %vm522, %v2000, 0
        %v2144 = vsel %vm522, %v2001, 0
        %v2147 = vsel %vm522, %v2002, 0
        %v2150 = vsel %vm522, %v2003, 0
        %v2153 = vsel %vm522, %v2004, 0
        %v2156 = vsel %vm522, %v2005, 0
        %v2159 = vsel %vm522, %v2006, 0
        %v2162 = vsel %vm522, %v2007, 0
        %v2165 = vsel %vm522, %v2008, 0
        %v2168 = vsel %vm522, %v2009, 0
        %v2171 = vsel %vm522, %v2026, 0
        %v2174 = vsel %vm522, %v2027, 0
        %v2177 = vsel %vm522, %v2028, 0
        %v2180 = vsel %vm522, %v2029, 0
        %v2183 = vsel %vm522, %v2030, 0
        %v2186 = vsel %vm522, %v2031, 0
        %v2189 = vsel %vm522, %v2032, 0
        %v2192 = vsel %vm522, %v2033, 0
        %v2195 = vsel %vm522, %v2034, 0
        %v2198 = vsel %vm522, %v2035, 0
        %v2201 = vsel %vm522, %v2036, 0
        %v2204 = vsel %vm522, %v2037, 0
        %v2207 = vsel %vm522, %v2038, 0
        %v2210 = vsel %vm522, %v2039, 0
        %v2213 = vsel %vm522, %v2040, 0
        %v2216 = vsel %vm522, %v2041, 0
        %v2219 = vsel %vm522, %v2058, 0
        %v2222 = vsel %vm522, %v2059, 0
        %v2225 = vsel %vm522, %v2060, 0
        %v2228 = vsel %vm522, %v2061, 0
        %v2231 = vsel %vm522, %v2062, 0
        %v2234 = vsel %vm522, %v2063, 0
        %v2237 = vsel %vm522, %v2064, 0
        %v2240 = vsel %vm522, %v2065, 0
        %v2243 = vsel %vm522, %v2066, 0
        %v2246 = vsel %vm522, %v2067, 0
        %v2249 = vsel %vm522, %v2068, 0
        %v2252 = vsel %vm522, %v2069, 0
        %v2255 = vsel %vm522, %v2070, 0
        %v2258 = vsel %vm522, %v2071, 0
        %v2261 = vsel %vm522, %v2072, 0
        %v2264 = vsel %vm522, %v2073, 0
        %2266 = vmatprep.subr.mxu0 0.0
        %2267 = vmatpush1.msra.mxu0 0.0
        %2268 = vmatprep.subr.mxu0 0.0
        %2269 = vmatpush1.msra.mxu0 0.0
        %2270 = vmatprep.subr.mxu0 0.0
        %2271 = vmatpush1.msra.mxu0 0.0
        %2272 = vmatprep.subr.mxu0 0.0
        %2273 = vmatpush1.msra.mxu0 0.0
        %2274 = vmatprep.subr.mxu0 0.0
        %2275 = vmatpush1.msra.mxu0 0.0
        %2276 = vmatprep.subr.mxu0 0.0
        %2277 = vmatpush1.msra.mxu0 0.0
        %2278 = vmatprep.subr.mxu0 0.0
        %2279 = vmatpush1.msra.mxu0 0.0
        %2280 = vmatprep.subr.mxu0 0.0
        %2281 = vmatpush1.msra.mxu0 0.0
        %2282 = vmatprep.subr.mxu0 0.0
        %2283 = vmatpush1.msra.mxu0 %v271
        %2284 = vmatprep.subr.mxu0 0.0
        %2285 = vmatpush1.msra.mxu0 %v270
        %2286 = vmatprep.subr.mxu0 0.0
        %2287 = vmatpush1.msra.mxu0 %v269
        %2288 = vmatprep.subr.mxu0 0.0
        %2289 = vmatpush1.msra.mxu0 %v268
        %2290 = vmatprep.subr.mxu0 0.0
        %2291 = vmatpush1.msra.mxu0 %v267
        %2292 = vmatprep.subr.mxu0 0.0
        %2293 = vmatpush1.msra.mxu0 %v266
        %2294 = vmatprep.subr.mxu0 0.0
        %2295 = vmatpush1.msra.mxu0 %v265
        %2296 = vmatprep.subr.mxu0 0.0
        %2297 = vmatpush1.msra.mxu0 %v264
        %2298 = vmatprep.subr.mxu0 0.0
        %2299 = vmatpush2.msra.mxu0 0.0
        %2300 = vmatprep.subr.mxu0 0.0
        %2301 = vmatpush2.msra.mxu0 0.0
        %2302 = vmatprep.subr.mxu0 0.0
        %2303 = vmatpush2.msra.mxu0 0.0
        %2304 = vmatprep.subr.mxu0 0.0
        %2305 = vmatpush2.msra.mxu0 0.0
        %2306 = vmatprep.subr.mxu0 0.0
        %2307 = vmatpush2.msra.mxu0 0.0
        %2308 = vmatprep.subr.mxu0 0.0
        %2309 = vmatpush2.msra.mxu0 0.0
        %2310 = vmatprep.subr.mxu0 0.0
        %2311 = vmatpush2.msra.mxu0 0.0
        %2312 = vmatprep.subr.mxu0 0.0
        %2313 = vmatpush2.msra.mxu0 0.0
        %2314 = vmatprep.subr.mxu0 0.0
        %2315 = vmatpush2.msra.mxu0 0.0
        %2316 = vmatprep.subr.mxu0 0.0
        %2317 = vmatpush2.msra.mxu0 0.0
        %2318 = vmatprep.subr.mxu0 0.0
        %2319 = vmatpush2.msra.mxu0 0.0
        %2320 = vmatprep.subr.mxu0 0.0
        %2321 = vmatpush2.msra.mxu0 0.0
        %2322 = vmatprep.subr.mxu0 0.0
        %2323 = vmatpush2.msra.mxu0 0.0
        %2324 = vmatprep.subr.mxu0 0.0
        %2325 = vmatpush2.msra.mxu0 0.0
        %2326 = vmatprep.subr.mxu0 0.0
        %2327 = vmatpush2.msra.mxu0 0.0
        %2328 = vmatprep.subr.mxu0 0.0
        %2329 = vmatpush2.msra.mxu0 0.0
        %2330 = vmatprep.mubr.f32.mxu0 0.0
        %2331 = vmatmul.mubr.f32.gmra.mxu0 %v2075
        %v2332 = vpop.f32.mrf.mxu0
        %v2333 = vadd.f32 0.0, %v2332
        %v2334 = vpop.f32.mrf.mxu0
        %2335 = vmatprep.mubr.f32.mxu0 0.0
        %2336 = vmatmul.mubr.f32.gmra.mxu0 %v2078
        %v2337 = vpop.f32.mrf.mxu0
        %v2338 = vadd.f32 0.0, %v2337
        %v2339 = vpop.f32.mrf.mxu0
        %2340 = vmatprep.mubr.f32.mxu0 0.0
        %2341 = vmatmul.mubr.f32.gmra.mxu0 %v2081
        %v2342 = vpop.f32.mrf.mxu0
        %v2343 = vadd.f32 0.0, %v2342
        %v2344 = vpop.f32.mrf.mxu0
        %2345 = vmatprep.mubr.f32.mxu0 0.0
        %2346 = vmatmul.mubr.f32.gmra.mxu0 %v2084
        %v2347 = vpop.f32.mrf.mxu0
        %v2348 = vadd.f32 0.0, %v2347
        %v2349 = vpop.f32.mrf.mxu0
        %2350 = vmatprep.mubr.f32.mxu0 0.0
        %2351 = vmatmul.mubr.f32.gmra.mxu0 %v2087
        %v2352 = vpop.f32.mrf.mxu0
        %v2353 = vadd.f32 0.0, %v2352
        %v2354 = vpop.f32.mrf.mxu0
        %2355 = vmatprep.mubr.f32.mxu0 0.0
        %2356 = vmatmul.mubr.f32.gmra.mxu0 %v2090
        %v2357 = vpop.f32.mrf.mxu0
        %v2358 = vadd.f32 0.0, %v2357
        %v2359 = vpop.f32.mrf.mxu0
        %2360 = vmatprep.mubr.f32.mxu0 0.0
        %2361 = vmatmul.mubr.f32.gmra.mxu0 %v2093
        %v2362 = vpop.f32.mrf.mxu0
        %v2363 = vadd.f32 0.0, %v2362
        %v2364 = vpop.f32.mrf.mxu0
        %2365 = vmatprep.mubr.f32.mxu0 0.0
        %2366 = vmatmul.mubr.f32.gmra.mxu0 %v2096
        %v2367 = vpop.f32.mrf.mxu0
        %v2368 = vadd.f32 0.0, %v2367
        %v2369 = vpop.f32.mrf.mxu0
        %2370 = vmatprep.mubr.f32.mxu0 0.0
        %2371 = vmatmul.mubr.f32.gmra.mxu0 %v2099
        %v2372 = vpop.f32.mrf.mxu0
        %v2373 = vadd.f32 0.0, %v2372
        %v2374 = vpop.f32.mrf.mxu0
        %2375 = vmatprep.mubr.f32.mxu0 0.0
        %2376 = vmatmul.mubr.f32.gmra.mxu0 %v2102
        %v2377 = vpop.f32.mrf.mxu0
        %v2378 = vadd.f32 0.0, %v2377
        %v2379 = vpop.f32.mrf.mxu0
        %2380 = vmatprep.mubr.f32.mxu0 0.0
        %2381 = vmatmul.mubr.f32.gmra.mxu0 %v2105
        %v2382 = vpop.f32.mrf.mxu0
        %v2383 = vadd.f32 0.0, %v2382
        %v2384 = vpop.f32.mrf.mxu0
        %2385 = vmatprep.mubr.f32.mxu0 0.0
        %2386 = vmatmul.mubr.f32.gmra.mxu0 %v2108
        %v2387 = vpop.f32.mrf.mxu0
        %v2388 = vadd.f32 0.0, %v2387
        %v2389 = vpop.f32.mrf.mxu0
        %2390 = vmatprep.mubr.f32.mxu0 0.0
        %2391 = vmatmul.mubr.f32.gmra.mxu0 %v2111
        %v2392 = vpop.f32.mrf.mxu0
        %v2393 = vadd.f32 0.0, %v2392
        %v2394 = vpop.f32.mrf.mxu0
        %2395 = vmatprep.mubr.f32.mxu0 0.0
        %2396 = vmatmul.mubr.f32.gmra.mxu0 %v2114
        %v2397 = vpop.f32.mrf.mxu0
        %v2398 = vadd.f32 0.0, %v2397
        %v2399 = vpop.f32.mrf.mxu0
        %2400 = vmatprep.mubr.f32.mxu0 0.0
        %2401 = vmatmul.mubr.f32.gmra.mxu0 %v2117
        %v2402 = vpop.f32.mrf.mxu0
        %v2403 = vadd.f32 0.0, %v2402
        %v2404 = vpop.f32.mrf.mxu0
        %2405 = vmatprep.mubr.f32.mxu0 0.0
        %2406 = vmatmul.mubr.f32.gmra.mxu0 %v2120
        %v2407 = vpop.f32.mrf.mxu0
        %v2408 = vadd.f32 0.0, %v2407
        %v2409 = vpop.f32.mrf.mxu0
        %2410 = vmatprep.mubr.f32.mxu0 0.0
        %2411 = vmatmul.mubr.f32.gmra.mxu0 %v2123
        %v2412 = vpop.f32.mrf.mxu0
        %v2413 = vadd.f32 0.0, %v2412
        %v2414 = vpop.f32.mrf.mxu0
        %2415 = vmatprep.mubr.f32.mxu0 0.0
        %2416 = vmatmul.mubr.f32.gmra.mxu0 %v2126
        %v2417 = vpop.f32.mrf.mxu0
        %v2418 = vadd.f32 0.0, %v2417
        %v2419 = vpop.f32.mrf.mxu0
        %2420 = vmatprep.mubr.f32.mxu0 0.0
        %2421 = vmatmul.mubr.f32.gmra.mxu0 %v2129
        %v2422 = vpop.f32.mrf.mxu0
        %v2423 = vadd.f32 0.0, %v2422
        %v2424 = vpop.f32.mrf.mxu0
        %2425 = vmatprep.mubr.f32.mxu0 0.0
        %2426 = vmatmul.mubr.f32.gmra.mxu0 %v2132
        %v2427 = vpop.f32.mrf.mxu0
        %v2428 = vadd.f32 0.0, %v2427
        %v2429 = vpop.f32.mrf.mxu0
        %2430 = vmatprep.mubr.f32.mxu0 0.0
        %2431 = vmatmul.mubr.f32.gmra.mxu0 %v2135
        %v2432 = vpop.f32.mrf.mxu0
        %v2433 = vadd.f32 0.0, %v2432
        %v2434 = vpop.f32.mrf.mxu0
        %2435 = vmatprep.mubr.f32.mxu0 0.0
        %2436 = vmatmul.mubr.f32.gmra.mxu0 %v2138
        %v2437 = vpop.f32.mrf.mxu0
        %v2438 = vadd.f32 0.0, %v2437
        %v2439 = vpop.f32.mrf.mxu0
        %2440 = vmatprep.mubr.f32.mxu0 0.0
        %2441 = vmatmul.mubr.f32.gmra.mxu0 %v2141
        %v2442 = vpop.f32.mrf.mxu0
        %v2443 = vadd.f32 0.0, %v2442
        %v2444 = vpop.f32.mrf.mxu0
        %2445 = vmatprep.mubr.f32.mxu0 0.0
        %2446 = vmatmul.mubr.f32.gmra.mxu0 %v2144
        %v2447 = vpop.f32.mrf.mxu0
        %v2448 = vadd.f32 0.0, %v2447
        %v2449 = vpop.f32.mrf.mxu0
        %2450 = vmatprep.mubr.f32.mxu0 0.0
        %2451 = vmatmul.mubr.f32.gmra.mxu0 %v2147
        %v2452 = vpop.f32.mrf.mxu0
        %v2453 = vadd.f32 0.0, %v2452
        %v2454 = vpop.f32.mrf.mxu0
        %2455 = vmatprep.mubr.f32.mxu0 0.0
        %2456 = vmatmul.mubr.f32.gmra.mxu0 %v2150
        %v2457 = vpop.f32.mrf.mxu0
        %v2458 = vadd.f32 0.0, %v2457
        %v2459 = vpop.f32.mrf.mxu0
        %2460 = vmatprep.mubr.f32.mxu0 0.0
        %2461 = vmatmul.mubr.f32.gmra.mxu0 %v2153
        %v2462 = vpop.f32.mrf.mxu0
        %v2463 = vadd.f32 0.0, %v2462
        %v2464 = vpop.f32.mrf.mxu0
        %2465 = vmatprep.mubr.f32.mxu0 0.0
        %2466 = vmatmul.mubr.f32.gmra.mxu0 %v2156
        %v2467 = vpop.f32.mrf.mxu0
        %v2468 = vadd.f32 0.0, %v2467
        %v2469 = vpop.f32.mrf.mxu0
        %2470 = vmatprep.mubr.f32.mxu0 0.0
        %2471 = vmatmul.mubr.f32.gmra.mxu0 %v2159
        %v2472 = vpop.f32.mrf.mxu0
        %v2473 = vadd.f32 0.0, %v2472
        %v2474 = vpop.f32.mrf.mxu0
        %2475 = vmatprep.mubr.f32.mxu0 0.0
        %2476 = vmatmul.mubr.f32.gmra.mxu0 %v2162
        %v2477 = vpop.f32.mrf.mxu0
        %v2478 = vadd.f32 0.0, %v2477
        %v2479 = vpop.f32.mrf.mxu0
        %2480 = vmatprep.mubr.f32.mxu0 0.0
        %2481 = vmatmul.mubr.f32.gmra.mxu0 %v2165
        %v2482 = vpop.f32.mrf.mxu0
        %v2483 = vadd.f32 0.0, %v2482
        %v2484 = vpop.f32.mrf.mxu0
        %2485 = vmatprep.mubr.f32.mxu0 0.0
        %2486 = vmatmul.mubr.f32.gmra.mxu0 %v2168
        %v2487 = vpop.f32.mrf.mxu0
        %v2488 = vadd.f32 0.0, %v2487
        %v2489 = vpop.f32.mrf.mxu0
        %2490 = vmatprep.mubr.f32.mxu0 0.0
        %2491 = vmatmul.mubr.f32.gmra.mxu0 %v2171
        %v2492 = vpop.f32.mrf.mxu0
        %v2493 = vadd.f32 0.0, %v2492
        %v2494 = vpop.f32.mrf.mxu0
        %2495 = vmatprep.mubr.f32.mxu0 0.0
        %2496 = vmatmul.mubr.f32.gmra.mxu0 %v2174
        %v2497 = vpop.f32.mrf.mxu0
        %v2498 = vadd.f32 0.0, %v2497
        %v2499 = vpop.f32.mrf.mxu0
        %2500 = vmatprep.mubr.f32.mxu0 0.0
        %2501 = vmatmul.mubr.f32.gmra.mxu0 %v2177
        %v2502 = vpop.f32.mrf.mxu0
        %v2503 = vadd.f32 0.0, %v2502
        %v2504 = vpop.f32.mrf.mxu0
        %2505 = vmatprep.mubr.f32.mxu0 0.0
        %2506 = vmatmul.mubr.f32.gmra.mxu0 %v2180
        %v2507 = vpop.f32.mrf.mxu0
        %v2508 = vadd.f32 0.0, %v2507
        %v2509 = vpop.f32.mrf.mxu0
        %2510 = vmatprep.mubr.f32.mxu0 0.0
        %2511 = vmatmul.mubr.f32.gmra.mxu0 %v2183
        %v2512 = vpop.f32.mrf.mxu0
        %v2513 = vadd.f32 0.0, %v2512
        %v2514 = vpop.f32.mrf.mxu0
        %2515 = vmatprep.mubr.f32.mxu0 0.0
        %2516 = vmatmul.mubr.f32.gmra.mxu0 %v2186
        %v2517 = vpop.f32.mrf.mxu0
        %v2518 = vadd.f32 0.0, %v2517
        %v2519 = vpop.f32.mrf.mxu0
        %2520 = vmatprep.mubr.f32.mxu0 0.0
        %2521 = vmatmul.mubr.f32.gmra.mxu0 %v2189
        %v2522 = vpop.f32.mrf.mxu0
        %v2523 = vadd.f32 0.0, %v2522
        %v2524 = vpop.f32.mrf.mxu0
        %2525 = vmatprep.mubr.f32.mxu0 0.0
        %2526 = vmatmul.mubr.f32.gmra.mxu0 %v2192
        %v2527 = vpop.f32.mrf.mxu0
        %v2528 = vadd.f32 0.0, %v2527
        %v2529 = vpop.f32.mrf.mxu0
        %2530 = vmatprep.mubr.f32.mxu0 0.0
        %2531 = vmatmul.mubr.f32.gmra.mxu0 %v2195
        %v2532 = vpop.f32.mrf.mxu0
        %v2533 = vadd.f32 0.0, %v2532
        %v2534 = vpop.f32.mrf.mxu0
        %2535 = vmatprep.mubr.f32.mxu0 0.0
        %2536 = vmatmul.mubr.f32.gmra.mxu0 %v2198
        %v2537 = vpop.f32.mrf.mxu0
        %v2538 = vadd.f32 0.0, %v2537
        %v2539 = vpop.f32.mrf.mxu0
        %2540 = vmatprep.mubr.f32.mxu0 0.0
        %2541 = vmatmul.mubr.f32.gmra.mxu0 %v2201
        %v2542 = vpop.f32.mrf.mxu0
        %v2543 = vadd.f32 0.0, %v2542
        %v2544 = vpop.f32.mrf.mxu0
        %2545 = vmatprep.mubr.f32.mxu0 0.0
        %2546 = vmatmul.mubr.f32.gmra.mxu0 %v2204
        %v2547 = vpop.f32.mrf.mxu0
        %v2548 = vadd.f32 0.0, %v2547
        %v2549 = vpop.f32.mrf.mxu0
        %2550 = vmatprep.mubr.f32.mxu0 0.0
        %2551 = vmatmul.mubr.f32.gmra.mxu0 %v2207
        %v2552 = vpop.f32.mrf.mxu0
        %v2553 = vadd.f32 0.0, %v2552
        %v2554 = vpop.f32.mrf.mxu0
        %2555 = vmatprep.mubr.f32.mxu0 0.0
        %2556 = vmatmul.mubr.f32.gmra.mxu0 %v2210
        %v2557 = vpop.f32.mrf.mxu0
        %v2558 = vadd.f32 0.0, %v2557
        %v2559 = vpop.f32.mrf.mxu0
        %2560 = vmatprep.mubr.f32.mxu0 0.0
        %2561 = vmatmul.mubr.f32.gmra.mxu0 %v2213
        %v2562 = vpop.f32.mrf.mxu0
        %v2563 = vadd.f32 0.0, %v2562
        %v2564 = vpop.f32.mrf.mxu0
        %2565 = vmatprep.mubr.f32.mxu0 0.0
        %2566 = vmatmul.mubr.f32.gmra.mxu0 %v2216
        %v2567 = vpop.f32.mrf.mxu0
        %v2568 = vadd.f32 0.0, %v2567
        %v2569 = vpop.f32.mrf.mxu0
        %2570 = vmatprep.mubr.f32.mxu0 0.0
        %2571 = vmatmul.mubr.f32.gmra.mxu0 %v2219
        %v2572 = vpop.f32.mrf.mxu0
        %v2573 = vadd.f32 0.0, %v2572
        %v2574 = vpop.f32.mrf.mxu0
        %2575 = vmatprep.mubr.f32.mxu0 0.0
        %2576 = vmatmul.mubr.f32.gmra.mxu0 %v2222
        %v2577 = vpop.f32.mrf.mxu0
        %v2578 = vadd.f32 0.0, %v2577
        %v2579 = vpop.f32.mrf.mxu0
        %2580 = vmatprep.mubr.f32.mxu0 0.0
        %2581 = vmatmul.mubr.f32.gmra.mxu0 %v2225
        %v2582 = vpop.f32.mrf.mxu0
        %v2583 = vadd.f32 0.0, %v2582
        %v2584 = vpop.f32.mrf.mxu0
        %2585 = vmatprep.mubr.f32.mxu0 0.0
        %2586 = vmatmul.mubr.f32.gmra.mxu0 %v2228
        %v2587 = vpop.f32.mrf.mxu0
        %v2588 = vadd.f32 0.0, %v2587
        %v2589 = vpop.f32.mrf.mxu0
        %2590 = vmatprep.mubr.f32.mxu0 0.0
        %2591 = vmatmul.mubr.f32.gmra.mxu0 %v2231
        %v2592 = vpop.f32.mrf.mxu0
        %v2593 = vadd.f32 0.0, %v2592
        %v2594 = vpop.f32.mrf.mxu0
        %2595 = vmatprep.mubr.f32.mxu0 0.0
        %2596 = vmatmul.mubr.f32.gmra.mxu0 %v2234
        %v2597 = vpop.f32.mrf.mxu0
        %v2598 = vadd.f32 0.0, %v2597
        %v2599 = vpop.f32.mrf.mxu0
        %2600 = vmatprep.mubr.f32.mxu0 0.0
        %2601 = vmatmul.mubr.f32.gmra.mxu0 %v2237
        %v2602 = vpop.f32.mrf.mxu0
        %v2603 = vadd.f32 0.0, %v2602
        %v2604 = vpop.f32.mrf.mxu0
        %2605 = vmatprep.mubr.f32.mxu0 0.0
        %2606 = vmatmul.mubr.f32.gmra.mxu0 %v2240
        %v2607 = vpop.f32.mrf.mxu0
        %v2608 = vadd.f32 0.0, %v2607
        %v2609 = vpop.f32.mrf.mxu0
        %2610 = vmatprep.mubr.f32.mxu0 0.0
        %2611 = vmatmul.mubr.f32.gmra.mxu0 %v2243
        %v2612 = vpop.f32.mrf.mxu0
        %v2613 = vadd.f32 0.0, %v2612
        %v2614 = vpop.f32.mrf.mxu0
        %2615 = vmatprep.mubr.f32.mxu0 0.0
        %2616 = vmatmul.mubr.f32.gmra.mxu0 %v2246
        %v2617 = vpop.f32.mrf.mxu0
        %v2618 = vadd.f32 0.0, %v2617
        %v2619 = vpop.f32.mrf.mxu0
        %2620 = vmatprep.mubr.f32.mxu0 0.0
        %2621 = vmatmul.mubr.f32.gmra.mxu0 %v2249
        %v2622 = vpop.f32.mrf.mxu0
        %v2623 = vadd.f32 0.0, %v2622
        %v2624 = vpop.f32.mrf.mxu0
        %2625 = vmatprep.mubr.f32.mxu0 0.0
        %2626 = vmatmul.mubr.f32.gmra.mxu0 %v2252
        %v2627 = vpop.f32.mrf.mxu0
        %v2628 = vadd.f32 0.0, %v2627
        %v2629 = vpop.f32.mrf.mxu0
        %2630 = vmatprep.mubr.f32.mxu0 0.0
        %2631 = vmatmul.mubr.f32.gmra.mxu0 %v2255
        %v2632 = vpop.f32.mrf.mxu0
        %v2633 = vadd.f32 0.0, %v2632
        %v2634 = vpop.f32.mrf.mxu0
        %2635 = vmatprep.mubr.f32.mxu0 0.0
        %2636 = vmatmul.mubr.f32.gmra.mxu0 %v2258
        %v2637 = vpop.f32.mrf.mxu0
        %v2638 = vadd.f32 0.0, %v2637
        %v2639 = vpop.f32.mrf.mxu0
        %2640 = vmatprep.mubr.f32.mxu0 0.0
        %2641 = vmatmul.mubr.f32.gmra.mxu0 %v2261
        %v2642 = vpop.f32.mrf.mxu0
        %v2643 = vadd.f32 0.0, %v2642
        %v2644 = vpop.f32.mrf.mxu0
        %2645 = vmatprep.mubr.f32.mxu0 0.0
        %2646 = vmatmul.mubr.f32.gmra.mxu0 %v2264
        %v2647 = vpop.f32.mrf.mxu0
        %v2648 = vadd.f32 0.0, %v2647
        %v2649 = vpop.f32.mrf.mxu0
        %2650 = vdwg.mxu0
        %v2651 = vmul.f32 %v782, %v1516
        %v2652 = vmul.f32 %v787, %v1521
        %v2653 = vmul.f32 %v792, %v1526
        %v2654 = vmul.f32 %v797, %v1531
        %v2655 = vmul.f32 %v802, %v1536
        %v2656 = vmul.f32 %v807, %v1541
        %v2657 = vmul.f32 %v812, %v1546
        %v2658 = vmul.f32 %v817, %v1551
        %v2659 = vmul.f32 %v822, %v1556
        %v2660 = vmul.f32 %v827, %v1561
        %v2661 = vmul.f32 %v832, %v1566
        %v2662 = vmul.f32 %v837, %v1571
        %v2663 = vmul.f32 %v842, %v1576
        %v2664 = vmul.f32 %v847, %v1581
        %v2665 = vmul.f32 %v852, %v1586
        %v2666 = vmul.f32 %v857, %v1591
        %v2667 = vmul.f32 %v862, %v1596
        %v2668 = vmul.f32 %v867, %v1601
        %v2669 = vmul.f32 %v872, %v1606
        %v2670 = vmul.f32 %v877, %v1611
        %v2671 = vmul.f32 %v882, %v1616
        %v2672 = vmul.f32 %v887, %v1621
        %v2673 = vmul.f32 %v892, %v1626
        %v2674 = vmul.f32 %v897, %v1631
        %v2675 = vmul.f32 %v902, %v1636
        %v2676 = vmul.f32 %v907, %v1641
        %v2677 = vmul.f32 %v912, %v1646
        %v2678 = vmul.f32 %v917, %v1651
        %v2679 = vmul.f32 %v922, %v1656
        %v2680 = vmul.f32 %v927, %v1661
        %v2681 = vmul.f32 %v932, %v1666
        %v2682 = vmul.f32 %v937, %v1671
        %v2683 = vmul.f32 %v942, %v1676
        %v2684 = vmul.f32 %v947, %v1681
        %v2685 = vmul.f32 %v952, %v1686
        %v2686 = vmul.f32 %v957, %v1691
        %v2687 = vmul.f32 %v962, %v1696
        %v2688 = vmul.f32 %v967, %v1701
        %v2689 = vmul.f32 %v972, %v1706
        %v2690 = vmul.f32 %v977, %v1711
        %v2691 = vmul.f32 %v982, %v1716
        %v2692 = vmul.f32 %v987, %v1721
        %v2693 = vmul.f32 %v992, %v1726
        %v2694 = vmul.f32 %v997, %v1731
        %v2695 = vmul.f32 %v1002, %v1736
        %v2696 = vmul.f32 %v1007, %v1741
        %v2697 = vmul.f32 %v1012, %v1746
        %v2698 = vmul.f32 %v1017, %v1751
        %v2699 = vmul.f32 %v1022, %v1756
        %v2700 = vmul.f32 %v1027, %v1761
        %v2701 = vmul.f32 %v1032, %v1766
        %v2702 = vmul.f32 %v1037, %v1771
        %v2703 = vmul.f32 %v1042, %v1776
        %v2704 = vmul.f32 %v1047, %v1781
        %v2705 = vmul.f32 %v1052, %v1786
        %v2706 = vmul.f32 %v1057, %v1791
        %v2707 = vmul.f32 %v1062, %v1796
        %v2708 = vmul.f32 %v1067, %v1801
        %v2709 = vmul.f32 %v1072, %v1806
        %v2710 = vmul.f32 %v1077, %v1811
        %v2711 = vmul.f32 %v1082, %v1816
        %v2712 = vmul.f32 %v1087, %v1821
        %v2713 = vmul.f32 %v1092, %v1826
        %v2714 = vmul.f32 %v1097, %v1831
        %v2715 = vmul.f32 %v2651, %v2333
        %v2716 = vmul.f32 %v2652, %v2338
        %v2717 = vmul.f32 %v2653, %v2343
        %v2718 = vmul.f32 %v2654, %v2348
        %v2719 = vmul.f32 %v2655, %v2353
        %v2720 = vmul.f32 %v2656, %v2358
        %v2721 = vmul.f32 %v2657, %v2363
        %v2722 = vmul.f32 %v2658, %v2368
        %v2723 = vmul.f32 %v2659, %v2373
        %v2724 = vmul.f32 %v2660, %v2378
        %v2725 = vmul.f32 %v2661, %v2383
        %v2726 = vmul.f32 %v2662, %v2388
        %v2727 = vmul.f32 %v2663, %v2393
        %v2728 = vmul.f32 %v2664, %v2398
        %v2729 = vmul.f32 %v2665, %v2403
        %v2730 = vmul.f32 %v2666, %v2408
        %v2731 = vmul.f32 %v2667, %v2413
        %v2732 = vmul.f32 %v2668, %v2418
        %v2733 = vmul.f32 %v2669, %v2423
        %v2734 = vmul.f32 %v2670, %v2428
        %v2735 = vmul.f32 %v2671, %v2433
        %v2736 = vmul.f32 %v2672, %v2438
        %v2737 = vmul.f32 %v2673, %v2443
        %v2738 = vmul.f32 %v2674, %v2448
        %v2739 = vmul.f32 %v2675, %v2453
        %v2740 = vmul.f32 %v2676, %v2458
        %v2741 = vmul.f32 %v2677, %v2463
        %v2742 = vmul.f32 %v2678, %v2468
        %v2743 = vmul.f32 %v2679, %v2473
        %v2744 = vmul.f32 %v2680, %v2478
        %v2745 = vmul.f32 %v2681, %v2483
        %v2746 = vmul.f32 %v2682, %v2488
        %v2747 = vmul.f32 %v2683, %v2493
        %v2748 = vmul.f32 %v2684, %v2498
        %v2749 = vmul.f32 %v2685, %v2503
        %v2750 = vmul.f32 %v2686, %v2508
        %v2751 = vmul.f32 %v2687, %v2513
        %v2752 = vmul.f32 %v2688, %v2518
        %v2753 = vmul.f32 %v2689, %v2523
        %v2754 = vmul.f32 %v2690, %v2528
        %v2755 = vmul.f32 %v2691, %v2533
        %v2756 = vmul.f32 %v2692, %v2538
        %v2757 = vmul.f32 %v2693, %v2543
        %v2758 = vmul.f32 %v2694, %v2548
        %v2759 = vmul.f32 %v2695, %v2553
        %v2760 = vmul.f32 %v2696, %v2558
        %v2761 = vmul.f32 %v2697, %v2563
        %v2762 = vmul.f32 %v2698, %v2568
        %v2763 = vmul.f32 %v2699, %v2573
        %v2764 = vmul.f32 %v2700, %v2578
        %v2765 = vmul.f32 %v2701, %v2583
        %v2766 = vmul.f32 %v2702, %v2588
        %v2767 = vmul.f32 %v2703, %v2593
        %v2768 = vmul.f32 %v2704, %v2598
        %v2769 = vmul.f32 %v2705, %v2603
        %v2770 = vmul.f32 %v2706, %v2608
        %v2771 = vmul.f32 %v2707, %v2613
        %v2772 = vmul.f32 %v2708, %v2618
        %v2773 = vmul.f32 %v2709, %v2623
        %v2774 = vmul.f32 %v2710, %v2628
        %v2775 = vmul.f32 %v2711, %v2633
        %v2776 = vmul.f32 %v2712, %v2638
        %v2777 = vmul.f32 %v2713, %v2643
        %v2778 = vmul.f32 %v2714, %v2648
        %vm2779 = vcmask 261120
        %v2780 = vsel %vm2779, %v2715, 0.0
        %2781 = vadd.xlane.f32.xlu0 %v2780
        %v2782 = vpop.xlane.xlu0 %2781
        %v2783 = vsel %vm2779, %v2716, 0.0
        %2784 = vadd.xlane.f32.xlu0 %v2783
        %v2785 = vpop.xlane.xlu0 %2784
        %v2786 = vsel %vm2779, %v2717, 0.0
        %2787 = vadd.xlane.f32.xlu0 %v2786
        %v2788 = vpop.xlane.xlu0 %2787
        %v2789 = vsel %vm2779, %v2718, 0.0
        %2790 = vadd.xlane.f32.xlu0 %v2789
        %v2791 = vpop.xlane.xlu0 %2790
        %v2792 = vsel %vm2779, %v2719, 0.0
        %2793 = vadd.xlane.f32.xlu0 %v2792
        %v2794 = vpop.xlane.xlu0 %2793
        %v2795 = vsel %vm2779, %v2720, 0.0
        %2796 = vadd.xlane.f32.xlu0 %v2795
        %v2797 = vpop.xlane.xlu0 %2796
        %v2798 = vsel %vm2779, %v2721, 0.0
        %2799 = vadd.xlane.f32.xlu0 %v2798
        %v2800 = vpop.xlane.xlu0 %2799
        %v2801 = vsel %vm2779, %v2722, 0.0
        %2802 = vadd.xlane.f32.xlu0 %v2801
        %v2803 = vpop.xlane.xlu0 %2802
        %v2804 = vsel %vm2779, %v2723, 0.0
        %2805 = vadd.xlane.f32.xlu0 %v2804
        %v2806 = vpop.xlane.xlu0 %2805
        %v2807 = vsel %vm2779, %v2724, 0.0
        %2808 = vadd.xlane.f32.xlu0 %v2807
        %v2809 = vpop.xlane.xlu0 %2808
        %v2810 = vsel %vm2779, %v2725, 0.0
        %2811 = vadd.xlane.f32.xlu0 %v2810
        %v2812 = vpop.xlane.xlu0 %2811
        %v2813 = vsel %vm2779, %v2726, 0.0
        %2814 = vadd.xlane.f32.xlu0 %v2813
        %v2815 = vpop.xlane.xlu0 %2814
        %v2816 = vsel %vm2779, %v2727, 0.0
        %2817 = vadd.xlane.f32.xlu0 %v2816
        %v2818 = vpop.xlane.xlu0 %2817
        %v2819 = vsel %vm2779, %v2728, 0.0
        %2820 = vadd.xlane.f32.xlu0 %v2819
        %v2821 = vpop.xlane.xlu0 %2820
        %v2822 = vsel %vm2779, %v2729, 0.0
        %2823 = vadd.xlane.f32.xlu0 %v2822
        %v2824 = vpop.xlane.xlu0 %2823
        %v2825 = vsel %vm2779, %v2730, 0.0
        %2826 = vadd.xlane.f32.xlu0 %v2825
        %v2827 = vpop.xlane.xlu0 %2826
        %v2828 = vsel %vm2779, %v2731, 0.0
        %2829 = vadd.xlane.f32.xlu0 %v2828
        %v2830 = vpop.xlane.xlu0 %2829
        %v2831 = vsel %vm2779, %v2732, 0.0
        %2832 = vadd.xlane.f32.xlu0 %v2831
        %v2833 = vpop.xlane.xlu0 %2832
        %v2834 = vsel %vm2779, %v2733, 0.0
        %2835 = vadd.xlane.f32.xlu0 %v2834
        %v2836 = vpop.xlane.xlu0 %2835
        %v2837 = vsel %vm2779, %v2734, 0.0
        %2838 = vadd.xlane.f32.xlu0 %v2837
        %v2839 = vpop.xlane.xlu0 %2838
        %v2840 = vsel %vm2779, %v2735, 0.0
        %2841 = vadd.xlane.f32.xlu0 %v2840
        %v2842 = vpop.xlane.xlu0 %2841
        %v2843 = vsel %vm2779, %v2736, 0.0
        %2844 = vadd.xlane.f32.xlu0 %v2843
        %v2845 = vpop.xlane.xlu0 %2844
        %v2846 = vsel %vm2779, %v2737, 0.0
        %2847 = vadd.xlane.f32.xlu0 %v2846
        %v2848 = vpop.xlane.xlu0 %2847
        %v2849 = vsel %vm2779, %v2738, 0.0
        %2850 = vadd.xlane.f32.xlu0 %v2849
        %v2851 = vpop.xlane.xlu0 %2850
        %v2852 = vsel %vm2779, %v2739, 0.0
        %2853 = vadd.xlane.f32.xlu0 %v2852
        %v2854 = vpop.xlane.xlu0 %2853
        %v2855 = vsel %vm2779, %v2740, 0.0
        %2856 = vadd.xlane.f32.xlu0 %v2855
        %v2857 = vpop.xlane.xlu0 %2856
        %v2858 = vsel %vm2779, %v2741, 0.0
        %2859 = vadd.xlane.f32.xlu0 %v2858
        %v2860 = vpop.xlane.xlu0 %2859
        %v2861 = vsel %vm2779, %v2742, 0.0
        %2862 = vadd.xlane.f32.xlu0 %v2861
        %v2863 = vpop.xlane.xlu0 %2862
        %v2864 = vsel %vm2779, %v2743, 0.0
        %2865 = vadd.xlane.f32.xlu0 %v2864
        %v2866 = vpop.xlane.xlu0 %2865
        %v2867 = vsel %vm2779, %v2744, 0.0
        %2868 = vadd.xlane.f32.xlu0 %v2867
        %v2869 = vpop.xlane.xlu0 %2868
        %v2870 = vsel %vm2779, %v2745, 0.0
        %2871 = vadd.xlane.f32.xlu0 %v2870
        %v2872 = vpop.xlane.xlu0 %2871
        %v2873 = vsel %vm2779, %v2746, 0.0
        %2874 = vadd.xlane.f32.xlu0 %v2873
        %v2875 = vpop.xlane.xlu0 %2874
        %v2876 = vsel %vm2779, %v2747, 0.0
        %2877 = vadd.xlane.f32.xlu0 %v2876
        %v2878 = vpop.xlane.xlu0 %2877
        %v2879 = vsel %vm2779, %v2748, 0.0
        %2880 = vadd.xlane.f32.xlu0 %v2879
        %v2881 = vpop.xlane.xlu0 %2880
        %v2882 = vsel %vm2779, %v2749, 0.0
        %2883 = vadd.xlane.f32.xlu0 %v2882
        %v2884 = vpop.xlane.xlu0 %2883
        %v2885 = vsel %vm2779, %v2750, 0.0
        %2886 = vadd.xlane.f32.xlu0 %v2885
        %v2887 = vpop.xlane.xlu0 %2886
        %v2888 = vsel %vm2779, %v2751, 0.0
        %2889 = vadd.xlane.f32.xlu0 %v2888
        %v2890 = vpop.xlane.xlu0 %2889
        %v2891 = vsel %vm2779, %v2752, 0.0
        %2892 = vadd.xlane.f32.xlu0 %v2891
        %v2893 = vpop.xlane.xlu0 %2892
        %v2894 = vsel %vm2779, %v2753, 0.0
        %2895 = vadd.xlane.f32.xlu0 %v2894
        %v2896 = vpop.xlane.xlu0 %2895
        %v2897 = vsel %vm2779, %v2754, 0.0
        %2898 = vadd.xlane.f32.xlu0 %v2897
        %v2899 = vpop.xlane.xlu0 %2898
        %v2900 = vsel %vm2779, %v2755, 0.0
        %2901 = vadd.xlane.f32.xlu0 %v2900
        %v2902 = vpop.xlane.xlu0 %2901
        %v2903 = vsel %vm2779, %v2756, 0.0
        %2904 = vadd.xlane.f32.xlu0 %v2903
        %v2905 = vpop.xlane.xlu0 %2904
        %v2906 = vsel %vm2779, %v2757, 0.0
        %2907 = vadd.xlane.f32.xlu0 %v2906
        %v2908 = vpop.xlane.xlu0 %2907
        %v2909 = vsel %vm2779, %v2758, 0.0
        %2910 = vadd.xlane.f32.xlu0 %v2909
        %v2911 = vpop.xlane.xlu0 %2910
        %v2912 = vsel %vm2779, %v2759, 0.0
        %2913 = vadd.xlane.f32.xlu0 %v2912
        %v2914 = vpop.xlane.xlu0 %2913
        %v2915 = vsel %vm2779, %v2760, 0.0
        %2916 = vadd.xlane.f32.xlu0 %v2915
        %v2917 = vpop.xlane.xlu0 %2916
        %v2918 = vsel %vm2779, %v2761, 0.0
        %2919 = vadd.xlane.f32.xlu0 %v2918
        %v2920 = vpop.xlane.xlu0 %2919
        %v2921 = vsel %vm2779, %v2762, 0.0
        %2922 = vadd.xlane.f32.xlu0 %v2921
        %v2923 = vpop.xlane.xlu0 %2922
        %v2924 = vsel %vm2779, %v2763, 0.0
        %2925 = vadd.xlane.f32.xlu0 %v2924
        %v2926 = vpop.xlane.xlu0 %2925
        %v2927 = vsel %vm2779, %v2764, 0.0
        %2928 = vadd.xlane.f32.xlu0 %v2927
        %v2929 = vpop.xlane.xlu0 %2928
        %v2930 = vsel %vm2779, %v2765, 0.0
        %2931 = vadd.xlane.f32.xlu0 %v2930
        %v2932 = vpop.xlane.xlu0 %2931
        %v2933 = vsel %vm2779, %v2766, 0.0
        %2934 = vadd.xlane.f32.xlu0 %v2933
        %v2935 = vpop.xlane.xlu0 %2934
        %v2936 = vsel %vm2779, %v2767, 0.0
        %2937 = vadd.xlane.f32.xlu0 %v2936
        %v2938 = vpop.xlane.xlu0 %2937
        %v2939 = vsel %vm2779, %v2768, 0.0
        %2940 = vadd.xlane.f32.xlu0 %v2939
        %v2941 = vpop.xlane.xlu0 %2940
        %v2942 = vsel %vm2779, %v2769, 0.0
        %2943 = vadd.xlane.f32.xlu0 %v2942
        %v2944 = vpop.xlane.xlu0 %2943
        %v2945 = vsel %vm2779, %v2770, 0.0
        %2946 = vadd.xlane.f32.xlu0 %v2945
        %v2947 = vpop.xlane.xlu0 %2946
        %v2948 = vsel %vm2779, %v2771, 0.0
        %2949 = vadd.xlane.f32.xlu0 %v2948
        %v2950 = vpop.xlane.xlu0 %2949
        %v2951 = vsel %vm2779, %v2772, 0.0
        %2952 = vadd.xlane.f32.xlu0 %v2951
        %v2953 = vpop.xlane.xlu0 %2952
        %v2954 = vsel %vm2779, %v2773, 0.0
        %2955 = vadd.xlane.f32.xlu0 %v2954
        %v2956 = vpop.xlane.xlu0 %2955
        %v2957 = vsel %vm2779, %v2774, 0.0
        %2958 = vadd.xlane.f32.xlu0 %v2957
        %v2959 = vpop.xlane.xlu0 %2958
        %v2960 = vsel %vm2779, %v2775, 0.0
        %2961 = vadd.xlane.f32.xlu0 %v2960
        %v2962 = vpop.xlane.xlu0 %2961
        %v2963 = vsel %vm2779, %v2776, 0.0
        %2964 = vadd.xlane.f32.xlu0 %v2963
        %v2965 = vpop.xlane.xlu0 %2964
        %v2966 = vsel %vm2779, %v2777, 0.0
        %2967 = vadd.xlane.f32.xlu0 %v2966
        %v2968 = vpop.xlane.xlu0 %2967
        %v2969 = vsel %vm2779, %v2778, 0.0
        %2970 = vadd.xlane.f32.xlu0 %v2969
        %v2971 = vpop.xlane.xlu0 %2970
        %v3036 = vlaneseq
        %v3037 = vshrl.u32 %v3036, 7
        %v3038 = vsub.s32 0, %v3037
        %v3039 = vrot.slane %v2782, %v3038
        %v3040 = vlaneseq
        %v3041 = vshrl.u32 %v3040, 7
        %v3042 = vsub.s32 1, %v3041
        %v3043 = vrot.slane %v2782, %v3042
        %v3044 = vlaneseq
        %v3045 = vshrl.u32 %v3044, 7
        %v3046 = vsub.s32 2, %v3045
        %v3047 = vrot.slane %v2782, %v3046
        %v3048 = vlaneseq
        %v3049 = vshrl.u32 %v3048, 7
        %v3050 = vsub.s32 3, %v3049
        %v3051 = vrot.slane %v2782, %v3050
        %v3052 = vlaneseq
        %v3053 = vshrl.u32 %v3052, 7
        %v3054 = vsub.s32 4, %v3053
        %v3055 = vrot.slane %v2782, %v3054
        %v3056 = vlaneseq
        %v3057 = vshrl.u32 %v3056, 7
        %v3058 = vsub.s32 5, %v3057
        %v3059 = vrot.slane %v2782, %v3058
        %v3060 = vlaneseq
        %v3061 = vshrl.u32 %v3060, 7
        %v3062 = vsub.s32 6, %v3061
        %v3063 = vrot.slane %v2782, %v3062
        %v3064 = vlaneseq
        %v3065 = vshrl.u32 %v3064, 7
        %v3066 = vsub.s32 7, %v3065
        %v3067 = vrot.slane %v2782, %v3066
        %v3068 = vlaneseq
        %v3069 = vshrl.u32 %v3068, 7
        %v3070 = vsub.s32 0, %v3069
        %v3071 = vrot.slane %v2785, %v3070
        %v3072 = vlaneseq
        %v3073 = vshrl.u32 %v3072, 7
        %v3074 = vsub.s32 1, %v3073
        %v3075 = vrot.slane %v2785, %v3074
        %v3076 = vlaneseq
        %v3077 = vshrl.u32 %v3076, 7
        %v3078 = vsub.s32 2, %v3077
        %v3079 = vrot.slane %v2785, %v3078
        %v3080 = vlaneseq
        %v3081 = vshrl.u32 %v3080, 7
        %v3082 = vsub.s32 3, %v3081
        %v3083 = vrot.slane %v2785, %v3082
        %v3084 = vlaneseq
        %v3085 = vshrl.u32 %v3084, 7
        %v3086 = vsub.s32 4, %v3085
        %v3087 = vrot.slane %v2785, %v3086
        %v3088 = vlaneseq
        %v3089 = vshrl.u32 %v3088, 7
        %v3090 = vsub.s32 5, %v3089
        %v3091 = vrot.slane %v2785, %v3090
        %v3092 = vlaneseq
        %v3093 = vshrl.u32 %v3092, 7
        %v3094 = vsub.s32 6, %v3093
        %v3095 = vrot.slane %v2785, %v3094
        %v3096 = vlaneseq
        %v3097 = vshrl.u32 %v3096, 7
        %v3098 = vsub.s32 7, %v3097
        %v3099 = vrot.slane %v2785, %v3098
        %v3100 = vlaneseq
        %v3101 = vshrl.u32 %v3100, 7
        %v3102 = vsub.s32 0, %v3101
        %v3103 = vrot.slane %v2788, %v3102
        %v3104 = vlaneseq
        %v3105 = vshrl.u32 %v3104, 7
        %v3106 = vsub.s32 1, %v3105
        %v3107 = vrot.slane %v2788, %v3106
        %v3108 = vlaneseq
        %v3109 = vshrl.u32 %v3108, 7
        %v3110 = vsub.s32 2, %v3109
        %v3111 = vrot.slane %v2788, %v3110
        %v3112 = vlaneseq
        %v3113 = vshrl.u32 %v3112, 7
        %v3114 = vsub.s32 3, %v3113
        %v3115 = vrot.slane %v2788, %v3114
        %v3116 = vlaneseq
        %v3117 = vshrl.u32 %v3116, 7
        %v3118 = vsub.s32 4, %v3117
        %v3119 = vrot.slane %v2788, %v3118
        %v3120 = vlaneseq
        %v3121 = vshrl.u32 %v3120, 7
        %v3122 = vsub.s32 5, %v3121
        %v3123 = vrot.slane %v2788, %v3122
        %v3124 = vlaneseq
        %v3125 = vshrl.u32 %v3124, 7
        %v3126 = vsub.s32 6, %v3125
        %v3127 = vrot.slane %v2788, %v3126
        %v3128 = vlaneseq
        %v3129 = vshrl.u32 %v3128, 7
        %v3130 = vsub.s32 7, %v3129
        %v3131 = vrot.slane %v2788, %v3130
        %v3132 = vlaneseq
        %v3133 = vshrl.u32 %v3132, 7
        %v3134 = vsub.s32 0, %v3133
        %v3135 = vrot.slane %v2791, %v3134
        %v3136 = vlaneseq
        %v3137 = vshrl.u32 %v3136, 7
        %v3138 = vsub.s32 1, %v3137
        %v3139 = vrot.slane %v2791, %v3138
        %v3140 = vlaneseq
        %v3141 = vshrl.u32 %v3140, 7
        %v3142 = vsub.s32 2, %v3141
        %v3143 = vrot.slane %v2791, %v3142
        %v3144 = vlaneseq
        %v3145 = vshrl.u32 %v3144, 7
        %v3146 = vsub.s32 3, %v3145
        %v3147 = vrot.slane %v2791, %v3146
        %v3148 = vlaneseq
        %v3149 = vshrl.u32 %v3148, 7
        %v3150 = vsub.s32 4, %v3149
        %v3151 = vrot.slane %v2791, %v3150
        %v3152 = vlaneseq
        %v3153 = vshrl.u32 %v3152, 7
        %v3154 = vsub.s32 5, %v3153
        %v3155 = vrot.slane %v2791, %v3154
        %v3156 = vlaneseq
        %v3157 = vshrl.u32 %v3156, 7
        %v3158 = vsub.s32 6, %v3157
        %v3159 = vrot.slane %v2791, %v3158
        %v3160 = vlaneseq
        %v3161 = vshrl.u32 %v3160, 7
        %v3162 = vsub.s32 7, %v3161
        %v3163 = vrot.slane %v2791, %v3162
        %v3164 = vlaneseq
        %v3165 = vshrl.u32 %v3164, 7
        %v3166 = vsub.s32 0, %v3165
        %v3167 = vrot.slane %v2794, %v3166
        %v3168 = vlaneseq
        %v3169 = vshrl.u32 %v3168, 7
        %v3170 = vsub.s32 1, %v3169
        %v3171 = vrot.slane %v2794, %v3170
        %v3172 = vlaneseq
        %v3173 = vshrl.u32 %v3172, 7
        %v3174 = vsub.s32 2, %v3173
        %v3175 = vrot.slane %v2794, %v3174
        %v3176 = vlaneseq
        %v3177 = vshrl.u32 %v3176, 7
        %v3178 = vsub.s32 3, %v3177
        %v3179 = vrot.slane %v2794, %v3178
        %v3180 = vlaneseq
        %v3181 = vshrl.u32 %v3180, 7
        %v3182 = vsub.s32 4, %v3181
        %v3183 = vrot.slane %v2794, %v3182
        %v3184 = vlaneseq
        %v3185 = vshrl.u32 %v3184, 7
        %v3186 = vsub.s32 5, %v3185
        %v3187 = vrot.slane %v2794, %v3186
        %v3188 = vlaneseq
        %v3189 = vshrl.u32 %v3188, 7
        %v3190 = vsub.s32 6, %v3189
        %v3191 = vrot.slane %v2794, %v3190
        %v3192 = vlaneseq
        %v3193 = vshrl.u32 %v3192, 7
        %v3194 = vsub.s32 7, %v3193
        %v3195 = vrot.slane %v2794, %v3194
        %v3196 = vlaneseq
        %v3197 = vshrl.u32 %v3196, 7
        %v3198 = vsub.s32 0, %v3197
        %v3199 = vrot.slane %v2797, %v3198
        %v3200 = vlaneseq
        %v3201 = vshrl.u32 %v3200, 7
        %v3202 = vsub.s32 1, %v3201
        %v3203 = vrot.slane %v2797, %v3202
        %v3204 = vlaneseq
        %v3205 = vshrl.u32 %v3204, 7
        %v3206 = vsub.s32 2, %v3205
        %v3207 = vrot.slane %v2797, %v3206
        %v3208 = vlaneseq
        %v3209 = vshrl.u32 %v3208, 7
        %v3210 = vsub.s32 3, %v3209
        %v3211 = vrot.slane %v2797, %v3210
        %v3212 = vlaneseq
        %v3213 = vshrl.u32 %v3212, 7
        %v3214 = vsub.s32 4, %v3213
        %v3215 = vrot.slane %v2797, %v3214
        %v3216 = vlaneseq
        %v3217 = vshrl.u32 %v3216, 7
        %v3218 = vsub.s32 5, %v3217
        %v3219 = vrot.slane %v2797, %v3218
        %v3220 = vlaneseq
        %v3221 = vshrl.u32 %v3220, 7
        %v3222 = vsub.s32 6, %v3221
        %v3223 = vrot.slane %v2797, %v3222
        %v3224 = vlaneseq
        %v3225 = vshrl.u32 %v3224, 7
        %v3226 = vsub.s32 7, %v3225
        %v3227 = vrot.slane %v2797, %v3226
        %v3228 = vlaneseq
        %v3229 = vshrl.u32 %v3228, 7
        %v3230 = vsub.s32 0, %v3229
        %v3231 = vrot.slane %v2800, %v3230
        %v3232 = vlaneseq
        %v3233 = vshrl.u32 %v3232, 7
        %v3234 = vsub.s32 1, %v3233
        %v3235 = vrot.slane %v2800, %v3234
        %v3236 = vlaneseq
        %v3237 = vshrl.u32 %v3236, 7
        %v3238 = vsub.s32 2, %v3237
        %v3239 = vrot.slane %v2800, %v3238
        %v3240 = vlaneseq
        %v3241 = vshrl.u32 %v3240, 7
        %v3242 = vsub.s32 3, %v3241
        %v3243 = vrot.slane %v2800, %v3242
        %v3244 = vlaneseq
        %v3245 = vshrl.u32 %v3244, 7
        %v3246 = vsub.s32 4, %v3245
        %v3247 = vrot.slane %v2800, %v3246
        %v3248 = vlaneseq
        %v3249 = vshrl.u32 %v3248, 7
        %v3250 = vsub.s32 5, %v3249
        %v3251 = vrot.slane %v2800, %v3250
        %v3252 = vlaneseq
        %v3253 = vshrl.u32 %v3252, 7
        %v3254 = vsub.s32 6, %v3253
        %v3255 = vrot.slane %v2800, %v3254
        %v3256 = vlaneseq
        %v3257 = vshrl.u32 %v3256, 7
        %v3258 = vsub.s32 7, %v3257
        %v3259 = vrot.slane %v2800, %v3258
        %v3260 = vlaneseq
        %v3261 = vshrl.u32 %v3260, 7
        %v3262 = vsub.s32 0, %v3261
        %v3263 = vrot.slane %v2803, %v3262
        %v3264 = vlaneseq
        %v3265 = vshrl.u32 %v3264, 7
        %v3266 = vsub.s32 1, %v3265
        %v3267 = vrot.slane %v2803, %v3266
        %v3268 = vlaneseq
        %v3269 = vshrl.u32 %v3268, 7
        %v3270 = vsub.s32 2, %v3269
        %v3271 = vrot.slane %v2803, %v3270
        %v3272 = vlaneseq
        %v3273 = vshrl.u32 %v3272, 7
        %v3274 = vsub.s32 3, %v3273
        %v3275 = vrot.slane %v2803, %v3274
        %v3276 = vlaneseq
        %v3277 = vshrl.u32 %v3276, 7
        %v3278 = vsub.s32 4, %v3277
        %v3279 = vrot.slane %v2803, %v3278
        %v3280 = vlaneseq
        %v3281 = vshrl.u32 %v3280, 7
        %v3282 = vsub.s32 5, %v3281
        %v3283 = vrot.slane %v2803, %v3282
        %v3284 = vlaneseq
        %v3285 = vshrl.u32 %v3284, 7
        %v3286 = vsub.s32 6, %v3285
        %v3287 = vrot.slane %v2803, %v3286
        %v3288 = vlaneseq
        %v3289 = vshrl.u32 %v3288, 7
        %v3290 = vsub.s32 7, %v3289
        %v3291 = vrot.slane %v2803, %v3290
        %v3292 = vlaneseq
        %v3293 = vshrl.u32 %v3292, 7
        %v3294 = vsub.s32 0, %v3293
        %v3295 = vrot.slane %v2806, %v3294
        %v3296 = vlaneseq
        %v3297 = vshrl.u32 %v3296, 7
        %v3298 = vsub.s32 1, %v3297
        %v3299 = vrot.slane %v2806, %v3298
        %v3300 = vlaneseq
        %v3301 = vshrl.u32 %v3300, 7
        %v3302 = vsub.s32 2, %v3301
        %v3303 = vrot.slane %v2806, %v3302
        %v3304 = vlaneseq
        %v3305 = vshrl.u32 %v3304, 7
        %v3306 = vsub.s32 3, %v3305
        %v3307 = vrot.slane %v2806, %v3306
        %v3308 = vlaneseq
        %v3309 = vshrl.u32 %v3308, 7
        %v3310 = vsub.s32 4, %v3309
        %v3311 = vrot.slane %v2806, %v3310
        %v3312 = vlaneseq
        %v3313 = vshrl.u32 %v3312, 7
        %v3314 = vsub.s32 5, %v3313
        %v3315 = vrot.slane %v2806, %v3314
        %v3316 = vlaneseq
        %v3317 = vshrl.u32 %v3316, 7
        %v3318 = vsub.s32 6, %v3317
        %v3319 = vrot.slane %v2806, %v3318
        %v3320 = vlaneseq
        %v3321 = vshrl.u32 %v3320, 7
        %v3322 = vsub.s32 7, %v3321
        %v3323 = vrot.slane %v2806, %v3322
        %v3324 = vlaneseq
        %v3325 = vshrl.u32 %v3324, 7
        %v3326 = vsub.s32 0, %v3325
        %v3327 = vrot.slane %v2809, %v3326
        %v3328 = vlaneseq
        %v3329 = vshrl.u32 %v3328, 7
        %v3330 = vsub.s32 1, %v3329
        %v3331 = vrot.slane %v2809, %v3330
        %v3332 = vlaneseq
        %v3333 = vshrl.u32 %v3332, 7
        %v3334 = vsub.s32 2, %v3333
        %v3335 = vrot.slane %v2809, %v3334
        %v3336 = vlaneseq
        %v3337 = vshrl.u32 %v3336, 7
        %v3338 = vsub.s32 3, %v3337
        %v3339 = vrot.slane %v2809, %v3338
        %v3340 = vlaneseq
        %v3341 = vshrl.u32 %v3340, 7
        %v3342 = vsub.s32 4, %v3341
        %v3343 = vrot.slane %v2809, %v3342
        %v3344 = vlaneseq
        %v3345 = vshrl.u32 %v3344, 7
        %v3346 = vsub.s32 5, %v3345
        %v3347 = vrot.slane %v2809, %v3346
        %v3348 = vlaneseq
        %v3349 = vshrl.u32 %v3348, 7
        %v3350 = vsub.s32 6, %v3349
        %v3351 = vrot.slane %v2809, %v3350
        %v3352 = vlaneseq
        %v3353 = vshrl.u32 %v3352, 7
        %v3354 = vsub.s32 7, %v3353
        %v3355 = vrot.slane %v2809, %v3354
        %v3356 = vlaneseq
        %v3357 = vshrl.u32 %v3356, 7
        %v3358 = vsub.s32 0, %v3357
        %v3359 = vrot.slane %v2812, %v3358
        %v3360 = vlaneseq
        %v3361 = vshrl.u32 %v3360, 7
        %v3362 = vsub.s32 1, %v3361
        %v3363 = vrot.slane %v2812, %v3362
        %v3364 = vlaneseq
        %v3365 = vshrl.u32 %v3364, 7
        %v3366 = vsub.s32 2, %v3365
        %v3367 = vrot.slane %v2812, %v3366
        %v3368 = vlaneseq
        %v3369 = vshrl.u32 %v3368, 7
        %v3370 = vsub.s32 3, %v3369
        %v3371 = vrot.slane %v2812, %v3370
        %v3372 = vlaneseq
        %v3373 = vshrl.u32 %v3372, 7
        %v3374 = vsub.s32 4, %v3373
        %v3375 = vrot.slane %v2812, %v3374
        %v3376 = vlaneseq
        %v3377 = vshrl.u32 %v3376, 7
        %v3378 = vsub.s32 5, %v3377
        %v3379 = vrot.slane %v2812, %v3378
        %v3380 = vlaneseq
        %v3381 = vshrl.u32 %v3380, 7
        %v3382 = vsub.s32 6, %v3381
        %v3383 = vrot.slane %v2812, %v3382
        %v3384 = vlaneseq
        %v3385 = vshrl.u32 %v3384, 7
        %v3386 = vsub.s32 7, %v3385
        %v3387 = vrot.slane %v2812, %v3386
        %v3388 = vlaneseq
        %v3389 = vshrl.u32 %v3388, 7
        %v3390 = vsub.s32 0, %v3389
        %v3391 = vrot.slane %v2815, %v3390
        %v3392 = vlaneseq
        %v3393 = vshrl.u32 %v3392, 7
        %v3394 = vsub.s32 1, %v3393
        %v3395 = vrot.slane %v2815, %v3394
        %v3396 = vlaneseq
        %v3397 = vshrl.u32 %v3396, 7
        %v3398 = vsub.s32 2, %v3397
        %v3399 = vrot.slane %v2815, %v3398
        %v3400 = vlaneseq
        %v3401 = vshrl.u32 %v3400, 7
        %v3402 = vsub.s32 3, %v3401
        %v3403 = vrot.slane %v2815, %v3402
        %v3404 = vlaneseq
        %v3405 = vshrl.u32 %v3404, 7
        %v3406 = vsub.s32 4, %v3405
        %v3407 = vrot.slane %v2815, %v3406
        %v3408 = vlaneseq
        %v3409 = vshrl.u32 %v3408, 7
        %v3410 = vsub.s32 5, %v3409
        %v3411 = vrot.slane %v2815, %v3410
        %v3412 = vlaneseq
        %v3413 = vshrl.u32 %v3412, 7
        %v3414 = vsub.s32 6, %v3413
        %v3415 = vrot.slane %v2815, %v3414
        %v3416 = vlaneseq
        %v3417 = vshrl.u32 %v3416, 7
        %v3418 = vsub.s32 7, %v3417
        %v3419 = vrot.slane %v2815, %v3418
        %v3420 = vlaneseq
        %v3421 = vshrl.u32 %v3420, 7
        %v3422 = vsub.s32 0, %v3421
        %v3423 = vrot.slane %v2818, %v3422
        %v3424 = vlaneseq
        %v3425 = vshrl.u32 %v3424, 7
        %v3426 = vsub.s32 1, %v3425
        %v3427 = vrot.slane %v2818, %v3426
        %v3428 = vlaneseq
        %v3429 = vshrl.u32 %v3428, 7
        %v3430 = vsub.s32 2, %v3429
        %v3431 = vrot.slane %v2818, %v3430
        %v3432 = vlaneseq
        %v3433 = vshrl.u32 %v3432, 7
        %v3434 = vsub.s32 3, %v3433
        %v3435 = vrot.slane %v2818, %v3434
        %v3436 = vlaneseq
        %v3437 = vshrl.u32 %v3436, 7
        %v3438 = vsub.s32 4, %v3437
        %v3439 = vrot.slane %v2818, %v3438
        %v3440 = vlaneseq
        %v3441 = vshrl.u32 %v3440, 7
        %v3442 = vsub.s32 5, %v3441
        %v3443 = vrot.slane %v2818, %v3442
        %v3444 = vlaneseq
        %v3445 = vshrl.u32 %v3444, 7
        %v3446 = vsub.s32 6, %v3445
        %v3447 = vrot.slane %v2818, %v3446
        %v3448 = vlaneseq
        %v3449 = vshrl.u32 %v3448, 7
        %v3450 = vsub.s32 7, %v3449
        %v3451 = vrot.slane %v2818, %v3450
        %v3452 = vlaneseq
        %v3453 = vshrl.u32 %v3452, 7
        %v3454 = vsub.s32 0, %v3453
        %v3455 = vrot.slane %v2821, %v3454
        %v3456 = vlaneseq
        %v3457 = vshrl.u32 %v3456, 7
        %v3458 = vsub.s32 1, %v3457
        %v3459 = vrot.slane %v2821, %v3458
        %v3460 = vlaneseq
        %v3461 = vshrl.u32 %v3460, 7
        %v3462 = vsub.s32 2, %v3461
        %v3463 = vrot.slane %v2821, %v3462
        %v3464 = vlaneseq
        %v3465 = vshrl.u32 %v3464, 7
        %v3466 = vsub.s32 3, %v3465
        %v3467 = vrot.slane %v2821, %v3466
        %v3468 = vlaneseq
        %v3469 = vshrl.u32 %v3468, 7
        %v3470 = vsub.s32 4, %v3469
        %v3471 = vrot.slane %v2821, %v3470
        %v3472 = vlaneseq
        %v3473 = vshrl.u32 %v3472, 7
        %v3474 = vsub.s32 5, %v3473
        %v3475 = vrot.slane %v2821, %v3474
        %v3476 = vlaneseq
        %v3477 = vshrl.u32 %v3476, 7
        %v3478 = vsub.s32 6, %v3477
        %v3479 = vrot.slane %v2821, %v3478
        %v3480 = vlaneseq
        %v3481 = vshrl.u32 %v3480, 7
        %v3482 = vsub.s32 7, %v3481
        %v3483 = vrot.slane %v2821, %v3482
        %v3484 = vlaneseq
        %v3485 = vshrl.u32 %v3484, 7
        %v3486 = vsub.s32 0, %v3485
        %v3487 = vrot.slane %v2824, %v3486
        %v3488 = vlaneseq
        %v3489 = vshrl.u32 %v3488, 7
        %v3490 = vsub.s32 1, %v3489
        %v3491 = vrot.slane %v2824, %v3490
        %v3492 = vlaneseq
        %v3493 = vshrl.u32 %v3492, 7
        %v3494 = vsub.s32 2, %v3493
        %v3495 = vrot.slane %v2824, %v3494
        %v3496 = vlaneseq
        %v3497 = vshrl.u32 %v3496, 7
        %v3498 = vsub.s32 3, %v3497
        %v3499 = vrot.slane %v2824, %v3498
        %v3500 = vlaneseq
        %v3501 = vshrl.u32 %v3500, 7
        %v3502 = vsub.s32 4, %v3501
        %v3503 = vrot.slane %v2824, %v3502
        %v3504 = vlaneseq
        %v3505 = vshrl.u32 %v3504, 7
        %v3506 = vsub.s32 5, %v3505
        %v3507 = vrot.slane %v2824, %v3506
        %v3508 = vlaneseq
        %v3509 = vshrl.u32 %v3508, 7
        %v3510 = vsub.s32 6, %v3509
        %v3511 = vrot.slane %v2824, %v3510
        %v3512 = vlaneseq
        %v3513 = vshrl.u32 %v3512, 7
        %v3514 = vsub.s32 7, %v3513
        %v3515 = vrot.slane %v2824, %v3514
        %v3516 = vlaneseq
        %v3517 = vshrl.u32 %v3516, 7
        %v3518 = vsub.s32 0, %v3517
        %v3519 = vrot.slane %v2827, %v3518
        %v3520 = vlaneseq
        %v3521 = vshrl.u32 %v3520, 7
        %v3522 = vsub.s32 1, %v3521
        %v3523 = vrot.slane %v2827, %v3522
        %v3524 = vlaneseq
        %v3525 = vshrl.u32 %v3524, 7
        %v3526 = vsub.s32 2, %v3525
        %v3527 = vrot.slane %v2827, %v3526
        %v3528 = vlaneseq
        %v3529 = vshrl.u32 %v3528, 7
        %v3530 = vsub.s32 3, %v3529
        %v3531 = vrot.slane %v2827, %v3530
        %v3532 = vlaneseq
        %v3533 = vshrl.u32 %v3532, 7
        %v3534 = vsub.s32 4, %v3533
        %v3535 = vrot.slane %v2827, %v3534
        %v3536 = vlaneseq
        %v3537 = vshrl.u32 %v3536, 7
        %v3538 = vsub.s32 5, %v3537
        %v3539 = vrot.slane %v2827, %v3538
        %v3540 = vlaneseq
        %v3541 = vshrl.u32 %v3540, 7
        %v3542 = vsub.s32 6, %v3541
        %v3543 = vrot.slane %v2827, %v3542
        %v3544 = vlaneseq
        %v3545 = vshrl.u32 %v3544, 7
        %v3546 = vsub.s32 7, %v3545
        %v3547 = vrot.slane %v2827, %v3546
        %v3548 = vlaneseq
        %v3549 = vshrl.u32 %v3548, 7
        %v3550 = vsub.s32 0, %v3549
        %v3551 = vrot.slane %v2830, %v3550
        %v3552 = vlaneseq
        %v3553 = vshrl.u32 %v3552, 7
        %v3554 = vsub.s32 1, %v3553
        %v3555 = vrot.slane %v2830, %v3554
        %v3556 = vlaneseq
        %v3557 = vshrl.u32 %v3556, 7
        %v3558 = vsub.s32 2, %v3557
        %v3559 = vrot.slane %v2830, %v3558
        %v3560 = vlaneseq
        %v3561 = vshrl.u32 %v3560, 7
        %v3562 = vsub.s32 3, %v3561
        %v3563 = vrot.slane %v2830, %v3562
        %v3564 = vlaneseq
        %v3565 = vshrl.u32 %v3564, 7
        %v3566 = vsub.s32 4, %v3565
        %v3567 = vrot.slane %v2830, %v3566
        %v3568 = vlaneseq
        %v3569 = vshrl.u32 %v3568, 7
        %v3570 = vsub.s32 5, %v3569
        %v3571 = vrot.slane %v2830, %v3570
        %v3572 = vlaneseq
        %v3573 = vshrl.u32 %v3572, 7
        %v3574 = vsub.s32 6, %v3573
        %v3575 = vrot.slane %v2830, %v3574
        %v3576 = vlaneseq
        %v3577 = vshrl.u32 %v3576, 7
        %v3578 = vsub.s32 7, %v3577
        %v3579 = vrot.slane %v2830, %v3578
        %v3580 = vlaneseq
        %v3581 = vshrl.u32 %v3580, 7
        %v3582 = vsub.s32 0, %v3581
        %v3583 = vrot.slane %v2833, %v3582
        %v3584 = vlaneseq
        %v3585 = vshrl.u32 %v3584, 7
        %v3586 = vsub.s32 1, %v3585
        %v3587 = vrot.slane %v2833, %v3586
        %v3588 = vlaneseq
        %v3589 = vshrl.u32 %v3588, 7
        %v3590 = vsub.s32 2, %v3589
        %v3591 = vrot.slane %v2833, %v3590
        %v3592 = vlaneseq
        %v3593 = vshrl.u32 %v3592, 7
        %v3594 = vsub.s32 3, %v3593
        %v3595 = vrot.slane %v2833, %v3594
        %v3596 = vlaneseq
        %v3597 = vshrl.u32 %v3596, 7
        %v3598 = vsub.s32 4, %v3597
        %v3599 = vrot.slane %v2833, %v3598
        %v3600 = vlaneseq
        %v3601 = vshrl.u32 %v3600, 7
        %v3602 = vsub.s32 5, %v3601
        %v3603 = vrot.slane %v2833, %v3602
        %v3604 = vlaneseq
        %v3605 = vshrl.u32 %v3604, 7
        %v3606 = vsub.s32 6, %v3605
        %v3607 = vrot.slane %v2833, %v3606
        %v3608 = vlaneseq
        %v3609 = vshrl.u32 %v3608, 7
        %v3610 = vsub.s32 7, %v3609
        %v3611 = vrot.slane %v2833, %v3610
        %v3612 = vlaneseq
        %v3613 = vshrl.u32 %v3612, 7
        %v3614 = vsub.s32 0, %v3613
        %v3615 = vrot.slane %v2836, %v3614
        %v3616 = vlaneseq
        %v3617 = vshrl.u32 %v3616, 7
        %v3618 = vsub.s32 1, %v3617
        %v3619 = vrot.slane %v2836, %v3618
        %v3620 = vlaneseq
        %v3621 = vshrl.u32 %v3620, 7
        %v3622 = vsub.s32 2, %v3621
        %v3623 = vrot.slane %v2836, %v3622
        %v3624 = vlaneseq
        %v3625 = vshrl.u32 %v3624, 7
        %v3626 = vsub.s32 3, %v3625
        %v3627 = vrot.slane %v2836, %v3626
        %v3628 = vlaneseq
        %v3629 = vshrl.u32 %v3628, 7
        %v3630 = vsub.s32 4, %v3629
        %v3631 = vrot.slane %v2836, %v3630
        %v3632 = vlaneseq
        %v3633 = vshrl.u32 %v3632, 7
        %v3634 = vsub.s32 5, %v3633
        %v3635 = vrot.slane %v2836, %v3634
        %v3636 = vlaneseq
        %v3637 = vshrl.u32 %v3636, 7
        %v3638 = vsub.s32 6, %v3637
        %v3639 = vrot.slane %v2836, %v3638
        %v3640 = vlaneseq
        %v3641 = vshrl.u32 %v3640, 7
        %v3642 = vsub.s32 7, %v3641
        %v3643 = vrot.slane %v2836, %v3642
        %v3644 = vlaneseq
        %v3645 = vshrl.u32 %v3644, 7
        %v3646 = vsub.s32 0, %v3645
        %v3647 = vrot.slane %v2839, %v3646
        %v3648 = vlaneseq
        %v3649 = vshrl.u32 %v3648, 7
        %v3650 = vsub.s32 1, %v3649
        %v3651 = vrot.slane %v2839, %v3650
        %v3652 = vlaneseq
        %v3653 = vshrl.u32 %v3652, 7
        %v3654 = vsub.s32 2, %v3653
        %v3655 = vrot.slane %v2839, %v3654
        %v3656 = vlaneseq
        %v3657 = vshrl.u32 %v3656, 7
        %v3658 = vsub.s32 3, %v3657
        %v3659 = vrot.slane %v2839, %v3658
        %v3660 = vlaneseq
        %v3661 = vshrl.u32 %v3660, 7
        %v3662 = vsub.s32 4, %v3661
        %v3663 = vrot.slane %v2839, %v3662
        %v3664 = vlaneseq
        %v3665 = vshrl.u32 %v3664, 7
        %v3666 = vsub.s32 5, %v3665
        %v3667 = vrot.slane %v2839, %v3666
        %v3668 = vlaneseq
        %v3669 = vshrl.u32 %v3668, 7
        %v3670 = vsub.s32 6, %v3669
        %v3671 = vrot.slane %v2839, %v3670
        %v3672 = vlaneseq
        %v3673 = vshrl.u32 %v3672, 7
        %v3674 = vsub.s32 7, %v3673
        %v3675 = vrot.slane %v2839, %v3674
        %v3676 = vlaneseq
        %v3677 = vshrl.u32 %v3676, 7
        %v3678 = vsub.s32 0, %v3677
        %v3679 = vrot.slane %v2842, %v3678
        %v3680 = vlaneseq
        %v3681 = vshrl.u32 %v3680, 7
        %v3682 = vsub.s32 1, %v3681
        %v3683 = vrot.slane %v2842, %v3682
        %v3684 = vlaneseq
        %v3685 = vshrl.u32 %v3684, 7
        %v3686 = vsub.s32 2, %v3685
        %v3687 = vrot.slane %v2842, %v3686
        %v3688 = vlaneseq
        %v3689 = vshrl.u32 %v3688, 7
        %v3690 = vsub.s32 3, %v3689
        %v3691 = vrot.slane %v2842, %v3690
        %v3692 = vlaneseq
        %v3693 = vshrl.u32 %v3692, 7
        %v3694 = vsub.s32 4, %v3693
        %v3695 = vrot.slane %v2842, %v3694
        %v3696 = vlaneseq
        %v3697 = vshrl.u32 %v3696, 7
        %v3698 = vsub.s32 5, %v3697
        %v3699 = vrot.slane %v2842, %v3698
        %v3700 = vlaneseq
        %v3701 = vshrl.u32 %v3700, 7
        %v3702 = vsub.s32 6, %v3701
        %v3703 = vrot.slane %v2842, %v3702
        %v3704 = vlaneseq
        %v3705 = vshrl.u32 %v3704, 7
        %v3706 = vsub.s32 7, %v3705
        %v3707 = vrot.slane %v2842, %v3706
        %v3708 = vlaneseq
        %v3709 = vshrl.u32 %v3708, 7
        %v3710 = vsub.s32 0, %v3709
        %v3711 = vrot.slane %v2845, %v3710
        %v3712 = vlaneseq
        %v3713 = vshrl.u32 %v3712, 7
        %v3714 = vsub.s32 1, %v3713
        %v3715 = vrot.slane %v2845, %v3714
        %v3716 = vlaneseq
        %v3717 = vshrl.u32 %v3716, 7
        %v3718 = vsub.s32 2, %v3717
        %v3719 = vrot.slane %v2845, %v3718
        %v3720 = vlaneseq
        %v3721 = vshrl.u32 %v3720, 7
        %v3722 = vsub.s32 3, %v3721
        %v3723 = vrot.slane %v2845, %v3722
        %v3724 = vlaneseq
        %v3725 = vshrl.u32 %v3724, 7
        %v3726 = vsub.s32 4, %v3725
        %v3727 = vrot.slane %v2845, %v3726
        %v3728 = vlaneseq
        %v3729 = vshrl.u32 %v3728, 7
        %v3730 = vsub.s32 5, %v3729
        %v3731 = vrot.slane %v2845, %v3730
        %v3732 = vlaneseq
        %v3733 = vshrl.u32 %v3732, 7
        %v3734 = vsub.s32 6, %v3733
        %v3735 = vrot.slane %v2845, %v3734
        %v3736 = vlaneseq
        %v3737 = vshrl.u32 %v3736, 7
        %v3738 = vsub.s32 7, %v3737
        %v3739 = vrot.slane %v2845, %v3738
        %v3740 = vlaneseq
        %v3741 = vshrl.u32 %v3740, 7
        %v3742 = vsub.s32 0, %v3741
        %v3743 = vrot.slane %v2848, %v3742
        %v3744 = vlaneseq
        %v3745 = vshrl.u32 %v3744, 7
        %v3746 = vsub.s32 1, %v3745
        %v3747 = vrot.slane %v2848, %v3746
        %v3748 = vlaneseq
        %v3749 = vshrl.u32 %v3748, 7
        %v3750 = vsub.s32 2, %v3749
        %v3751 = vrot.slane %v2848, %v3750
        %v3752 = vlaneseq
        %v3753 = vshrl.u32 %v3752, 7
        %v3754 = vsub.s32 3, %v3753
        %v3755 = vrot.slane %v2848, %v3754
        %v3756 = vlaneseq
        %v3757 = vshrl.u32 %v3756, 7
        %v3758 = vsub.s32 4, %v3757
        %v3759 = vrot.slane %v2848, %v3758
        %v3760 = vlaneseq
        %v3761 = vshrl.u32 %v3760, 7
        %v3762 = vsub.s32 5, %v3761
        %v3763 = vrot.slane %v2848, %v3762
        %v3764 = vlaneseq
        %v3765 = vshrl.u32 %v3764, 7
        %v3766 = vsub.s32 6, %v3765
        %v3767 = vrot.slane %v2848, %v3766
        %v3768 = vlaneseq
        %v3769 = vshrl.u32 %v3768, 7
        %v3770 = vsub.s32 7, %v3769
        %v3771 = vrot.slane %v2848, %v3770
        %v3772 = vlaneseq
        %v3773 = vshrl.u32 %v3772, 7
        %v3774 = vsub.s32 0, %v3773
        %v3775 = vrot.slane %v2851, %v3774
        %v3776 = vlaneseq
        %v3777 = vshrl.u32 %v3776, 7
        %v3778 = vsub.s32 1, %v3777
        %v3779 = vrot.slane %v2851, %v3778
        %v3780 = vlaneseq
        %v3781 = vshrl.u32 %v3780, 7
        %v3782 = vsub.s32 2, %v3781
        %v3783 = vrot.slane %v2851, %v3782
        %v3784 = vlaneseq
        %v3785 = vshrl.u32 %v3784, 7
        %v3786 = vsub.s32 3, %v3785
        %v3787 = vrot.slane %v2851, %v3786
        %v3788 = vlaneseq
        %v3789 = vshrl.u32 %v3788, 7
        %v3790 = vsub.s32 4, %v3789
        %v3791 = vrot.slane %v2851, %v3790
        %v3792 = vlaneseq
        %v3793 = vshrl.u32 %v3792, 7
        %v3794 = vsub.s32 5, %v3793
        %v3795 = vrot.slane %v2851, %v3794
        %v3796 = vlaneseq
        %v3797 = vshrl.u32 %v3796, 7
        %v3798 = vsub.s32 6, %v3797
        %v3799 = vrot.slane %v2851, %v3798
        %v3800 = vlaneseq
        %v3801 = vshrl.u32 %v3800, 7
        %v3802 = vsub.s32 7, %v3801
        %v3803 = vrot.slane %v2851, %v3802
        %v3804 = vlaneseq
        %v3805 = vshrl.u32 %v3804, 7
        %v3806 = vsub.s32 0, %v3805
        %v3807 = vrot.slane %v2854, %v3806
        %v3808 = vlaneseq
        %v3809 = vshrl.u32 %v3808, 7
        %v3810 = vsub.s32 1, %v3809
        %v3811 = vrot.slane %v2854, %v3810
        %v3812 = vlaneseq
        %v3813 = vshrl.u32 %v3812, 7
        %v3814 = vsub.s32 2, %v3813
        %v3815 = vrot.slane %v2854, %v3814
        %v3816 = vlaneseq
        %v3817 = vshrl.u32 %v3816, 7
        %v3818 = vsub.s32 3, %v3817
        %v3819 = vrot.slane %v2854, %v3818
        %v3820 = vlaneseq
        %v3821 = vshrl.u32 %v3820, 7
        %v3822 = vsub.s32 4, %v3821
        %v3823 = vrot.slane %v2854, %v3822
        %v3824 = vlaneseq
        %v3825 = vshrl.u32 %v3824, 7
        %v3826 = vsub.s32 5, %v3825
        %v3827 = vrot.slane %v2854, %v3826
        %v3828 = vlaneseq
        %v3829 = vshrl.u32 %v3828, 7
        %v3830 = vsub.s32 6, %v3829
        %v3831 = vrot.slane %v2854, %v3830
        %v3832 = vlaneseq
        %v3833 = vshrl.u32 %v3832, 7
        %v3834 = vsub.s32 7, %v3833
        %v3835 = vrot.slane %v2854, %v3834
        %v3836 = vlaneseq
        %v3837 = vshrl.u32 %v3836, 7
        %v3838 = vsub.s32 0, %v3837
        %v3839 = vrot.slane %v2857, %v3838
        %v3840 = vlaneseq
        %v3841 = vshrl.u32 %v3840, 7
        %v3842 = vsub.s32 1, %v3841
        %v3843 = vrot.slane %v2857, %v3842
        %v3844 = vlaneseq
        %v3845 = vshrl.u32 %v3844, 7
        %v3846 = vsub.s32 2, %v3845
        %v3847 = vrot.slane %v2857, %v3846
        %v3848 = vlaneseq
        %v3849 = vshrl.u32 %v3848, 7
        %v3850 = vsub.s32 3, %v3849
        %v3851 = vrot.slane %v2857, %v3850
        %v3852 = vlaneseq
        %v3853 = vshrl.u32 %v3852, 7
        %v3854 = vsub.s32 4, %v3853
        %v3855 = vrot.slane %v2857, %v3854
        %v3856 = vlaneseq
        %v3857 = vshrl.u32 %v3856, 7
        %v3858 = vsub.s32 5, %v3857
        %v3859 = vrot.slane %v2857, %v3858
        %v3860 = vlaneseq
        %v3861 = vshrl.u32 %v3860, 7
        %v3862 = vsub.s32 6, %v3861
        %v3863 = vrot.slane %v2857, %v3862
        %v3864 = vlaneseq
        %v3865 = vshrl.u32 %v3864, 7
        %v3866 = vsub.s32 7, %v3865
        %v3867 = vrot.slane %v2857, %v3866
        %v3868 = vlaneseq
        %v3869 = vshrl.u32 %v3868, 7
        %v3870 = vsub.s32 0, %v3869
        %v3871 = vrot.slane %v2860, %v3870
        %v3872 = vlaneseq
        %v3873 = vshrl.u32 %v3872, 7
        %v3874 = vsub.s32 1, %v3873
        %v3875 = vrot.slane %v2860, %v3874
        %v3876 = vlaneseq
        %v3877 = vshrl.u32 %v3876, 7
        %v3878 = vsub.s32 2, %v3877
        %v3879 = vrot.slane %v2860, %v3878
        %v3880 = vlaneseq
        %v3881 = vshrl.u32 %v3880, 7
        %v3882 = vsub.s32 3, %v3881
        %v3883 = vrot.slane %v2860, %v3882
        %v3884 = vlaneseq
        %v3885 = vshrl.u32 %v3884, 7
        %v3886 = vsub.s32 4, %v3885
        %v3887 = vrot.slane %v2860, %v3886
        %v3888 = vlaneseq
        %v3889 = vshrl.u32 %v3888, 7
        %v3890 = vsub.s32 5, %v3889
        %v3891 = vrot.slane %v2860, %v3890
        %v3892 = vlaneseq
        %v3893 = vshrl.u32 %v3892, 7
        %v3894 = vsub.s32 6, %v3893
        %v3895 = vrot.slane %v2860, %v3894
        %v3896 = vlaneseq
        %v3897 = vshrl.u32 %v3896, 7
        %v3898 = vsub.s32 7, %v3897
        %v3899 = vrot.slane %v2860, %v3898
        %v3900 = vlaneseq
        %v3901 = vshrl.u32 %v3900, 7
        %v3902 = vsub.s32 0, %v3901
        %v3903 = vrot.slane %v2863, %v3902
        %v3904 = vlaneseq
        %v3905 = vshrl.u32 %v3904, 7
        %v3906 = vsub.s32 1, %v3905
        %v3907 = vrot.slane %v2863, %v3906
        %v3908 = vlaneseq
        %v3909 = vshrl.u32 %v3908, 7
        %v3910 = vsub.s32 2, %v3909
        %v3911 = vrot.slane %v2863, %v3910
        %v3912 = vlaneseq
        %v3913 = vshrl.u32 %v3912, 7
        %v3914 = vsub.s32 3, %v3913
        %v3915 = vrot.slane %v2863, %v3914
        %v3916 = vlaneseq
        %v3917 = vshrl.u32 %v3916, 7
        %v3918 = vsub.s32 4, %v3917
        %v3919 = vrot.slane %v2863, %v3918
        %v3920 = vlaneseq
        %v3921 = vshrl.u32 %v3920, 7
        %v3922 = vsub.s32 5, %v3921
        %v3923 = vrot.slane %v2863, %v3922
        %v3924 = vlaneseq
        %v3925 = vshrl.u32 %v3924, 7
        %v3926 = vsub.s32 6, %v3925
        %v3927 = vrot.slane %v2863, %v3926
        %v3928 = vlaneseq
        %v3929 = vshrl.u32 %v3928, 7
        %v3930 = vsub.s32 7, %v3929
        %v3931 = vrot.slane %v2863, %v3930
        %v3932 = vlaneseq
        %v3933 = vshrl.u32 %v3932, 7
        %v3934 = vsub.s32 0, %v3933
        %v3935 = vrot.slane %v2866, %v3934
        %v3936 = vlaneseq
        %v3937 = vshrl.u32 %v3936, 7
        %v3938 = vsub.s32 1, %v3937
        %v3939 = vrot.slane %v2866, %v3938
        %v3940 = vlaneseq
        %v3941 = vshrl.u32 %v3940, 7
        %v3942 = vsub.s32 2, %v3941
        %v3943 = vrot.slane %v2866, %v3942
        %v3944 = vlaneseq
        %v3945 = vshrl.u32 %v3944, 7
        %v3946 = vsub.s32 3, %v3945
        %v3947 = vrot.slane %v2866, %v3946
        %v3948 = vlaneseq
        %v3949 = vshrl.u32 %v3948, 7
        %v3950 = vsub.s32 4, %v3949
        %v3951 = vrot.slane %v2866, %v3950
        %v3952 = vlaneseq
        %v3953 = vshrl.u32 %v3952, 7
        %v3954 = vsub.s32 5, %v3953
        %v3955 = vrot.slane %v2866, %v3954
        %v3956 = vlaneseq
        %v3957 = vshrl.u32 %v3956, 7
        %v3958 = vsub.s32 6, %v3957
        %v3959 = vrot.slane %v2866, %v3958
        %v3960 = vlaneseq
        %v3961 = vshrl.u32 %v3960, 7
        %v3962 = vsub.s32 7, %v3961
        %v3963 = vrot.slane %v2866, %v3962
        %v3964 = vlaneseq
        %v3965 = vshrl.u32 %v3964, 7
        %v3966 = vsub.s32 0, %v3965
        %v3967 = vrot.slane %v2869, %v3966
        %v3968 = vlaneseq
        %v3969 = vshrl.u32 %v3968, 7
        %v3970 = vsub.s32 1, %v3969
        %v3971 = vrot.slane %v2869, %v3970
        %v3972 = vlaneseq
        %v3973 = vshrl.u32 %v3972, 7
        %v3974 = vsub.s32 2, %v3973
        %v3975 = vrot.slane %v2869, %v3974
        %v3976 = vlaneseq
        %v3977 = vshrl.u32 %v3976, 7
        %v3978 = vsub.s32 3, %v3977
        %v3979 = vrot.slane %v2869, %v3978
        %v3980 = vlaneseq
        %v3981 = vshrl.u32 %v3980, 7
        %v3982 = vsub.s32 4, %v3981
        %v3983 = vrot.slane %v2869, %v3982
        %v3984 = vlaneseq
        %v3985 = vshrl.u32 %v3984, 7
        %v3986 = vsub.s32 5, %v3985
        %v3987 = vrot.slane %v2869, %v3986
        %v3988 = vlaneseq
        %v3989 = vshrl.u32 %v3988, 7
        %v3990 = vsub.s32 6, %v3989
        %v3991 = vrot.slane %v2869, %v3990
        %v3992 = vlaneseq
        %v3993 = vshrl.u32 %v3992, 7
        %v3994 = vsub.s32 7, %v3993
        %v3995 = vrot.slane %v2869, %v3994
        %v3996 = vlaneseq
        %v3997 = vshrl.u32 %v3996, 7
        %v3998 = vsub.s32 0, %v3997
        %v3999 = vrot.slane %v2872, %v3998
        %v4000 = vlaneseq
        %v4001 = vshrl.u32 %v4000, 7
        %v4002 = vsub.s32 1, %v4001
        %v4003 = vrot.slane %v2872, %v4002
        %v4004 = vlaneseq
        %v4005 = vshrl.u32 %v4004, 7
        %v4006 = vsub.s32 2, %v4005
        %v4007 = vrot.slane %v2872, %v4006
        %v4008 = vlaneseq
        %v4009 = vshrl.u32 %v4008, 7
        %v4010 = vsub.s32 3, %v4009
        %v4011 = vrot.slane %v2872, %v4010
        %v4012 = vlaneseq
        %v4013 = vshrl.u32 %v4012, 7
        %v4014 = vsub.s32 4, %v4013
        %v4015 = vrot.slane %v2872, %v4014
        %v4016 = vlaneseq
        %v4017 = vshrl.u32 %v4016, 7
        %v4018 = vsub.s32 5, %v4017
        %v4019 = vrot.slane %v2872, %v4018
        %v4020 = vlaneseq
        %v4021 = vshrl.u32 %v4020, 7
        %v4022 = vsub.s32 6, %v4021
        %v4023 = vrot.slane %v2872, %v4022
        %v4024 = vlaneseq
        %v4025 = vshrl.u32 %v4024, 7
        %v4026 = vsub.s32 7, %v4025
        %v4027 = vrot.slane %v2872, %v4026
        %v4028 = vlaneseq
        %v4029 = vshrl.u32 %v4028, 7
        %v4030 = vsub.s32 0, %v4029
        %v4031 = vrot.slane %v2875, %v4030
        %v4032 = vlaneseq
        %v4033 = vshrl.u32 %v4032, 7
        %v4034 = vsub.s32 1, %v4033
        %v4035 = vrot.slane %v2875, %v4034
        %v4036 = vlaneseq
        %v4037 = vshrl.u32 %v4036, 7
        %v4038 = vsub.s32 2, %v4037
        %v4039 = vrot.slane %v2875, %v4038
        %v4040 = vlaneseq
        %v4041 = vshrl.u32 %v4040, 7
        %v4042 = vsub.s32 3, %v4041
        %v4043 = vrot.slane %v2875, %v4042
        %v4044 = vlaneseq
        %v4045 = vshrl.u32 %v4044, 7
        %v4046 = vsub.s32 4, %v4045
        %v4047 = vrot.slane %v2875, %v4046
        %v4048 = vlaneseq
        %v4049 = vshrl.u32 %v4048, 7
        %v4050 = vsub.s32 5, %v4049
        %v4051 = vrot.slane %v2875, %v4050
        %v4052 = vlaneseq
        %v4053 = vshrl.u32 %v4052, 7
        %v4054 = vsub.s32 6, %v4053
        %v4055 = vrot.slane %v2875, %v4054
        %v4056 = vlaneseq
        %v4057 = vshrl.u32 %v4056, 7
        %v4058 = vsub.s32 7, %v4057
        %v4059 = vrot.slane %v2875, %v4058
        %v4060 = vlaneseq
        %v4061 = vshrl.u32 %v4060, 7
        %v4062 = vsub.s32 0, %v4061
        %v4063 = vrot.slane %v2878, %v4062
        %v4064 = vlaneseq
        %v4065 = vshrl.u32 %v4064, 7
        %v4066 = vsub.s32 1, %v4065
        %v4067 = vrot.slane %v2878, %v4066
        %v4068 = vlaneseq
        %v4069 = vshrl.u32 %v4068, 7
        %v4070 = vsub.s32 2, %v4069
        %v4071 = vrot.slane %v2878, %v4070
        %v4072 = vlaneseq
        %v4073 = vshrl.u32 %v4072, 7
        %v4074 = vsub.s32 3, %v4073
        %v4075 = vrot.slane %v2878, %v4074
        %v4076 = vlaneseq
        %v4077 = vshrl.u32 %v4076, 7
        %v4078 = vsub.s32 4, %v4077
        %v4079 = vrot.slane %v2878, %v4078
        %v4080 = vlaneseq
        %v4081 = vshrl.u32 %v4080, 7
        %v4082 = vsub.s32 5, %v4081
        %v4083 = vrot.slane %v2878, %v4082
        %v4084 = vlaneseq
        %v4085 = vshrl.u32 %v4084, 7
        %v4086 = vsub.s32 6, %v4085
        %v4087 = vrot.slane %v2878, %v4086
        %v4088 = vlaneseq
        %v4089 = vshrl.u32 %v4088, 7
        %v4090 = vsub.s32 7, %v4089
        %v4091 = vrot.slane %v2878, %v4090
        %v4092 = vlaneseq
        %v4093 = vshrl.u32 %v4092, 7
        %v4094 = vsub.s32 0, %v4093
        %v4095 = vrot.slane %v2881, %v4094
        %v4096 = vlaneseq
        %v4097 = vshrl.u32 %v4096, 7
        %v4098 = vsub.s32 1, %v4097
        %v4099 = vrot.slane %v2881, %v4098
        %v4100 = vlaneseq
        %v4101 = vshrl.u32 %v4100, 7
        %v4102 = vsub.s32 2, %v4101
        %v4103 = vrot.slane %v2881, %v4102
        %v4104 = vlaneseq
        %v4105 = vshrl.u32 %v4104, 7
        %v4106 = vsub.s32 3, %v4105
        %v4107 = vrot.slane %v2881, %v4106
        %v4108 = vlaneseq
        %v4109 = vshrl.u32 %v4108, 7
        %v4110 = vsub.s32 4, %v4109
        %v4111 = vrot.slane %v2881, %v4110
        %v4112 = vlaneseq
        %v4113 = vshrl.u32 %v4112, 7
        %v4114 = vsub.s32 5, %v4113
        %v4115 = vrot.slane %v2881, %v4114
        %v4116 = vlaneseq
        %v4117 = vshrl.u32 %v4116, 7
        %v4118 = vsub.s32 6, %v4117
        %v4119 = vrot.slane %v2881, %v4118
        %v4120 = vlaneseq
        %v4121 = vshrl.u32 %v4120, 7
        %v4122 = vsub.s32 7, %v4121
        %v4123 = vrot.slane %v2881, %v4122
        %v4124 = vlaneseq
        %v4125 = vshrl.u32 %v4124, 7
        %v4126 = vsub.s32 0, %v4125
        %v4127 = vrot.slane %v2884, %v4126
        %v4128 = vlaneseq
        %v4129 = vshrl.u32 %v4128, 7
        %v4130 = vsub.s32 1, %v4129
        %v4131 = vrot.slane %v2884, %v4130
        %v4132 = vlaneseq
        %v4133 = vshrl.u32 %v4132, 7
        %v4134 = vsub.s32 2, %v4133
        %v4135 = vrot.slane %v2884, %v4134
        %v4136 = vlaneseq
        %v4137 = vshrl.u32 %v4136, 7
        %v4138 = vsub.s32 3, %v4137
        %v4139 = vrot.slane %v2884, %v4138
        %v4140 = vlaneseq
        %v4141 = vshrl.u32 %v4140, 7
        %v4142 = vsub.s32 4, %v4141
        %v4143 = vrot.slane %v2884, %v4142
        %v4144 = vlaneseq
        %v4145 = vshrl.u32 %v4144, 7
        %v4146 = vsub.s32 5, %v4145
        %v4147 = vrot.slane %v2884, %v4146
        %v4148 = vlaneseq
        %v4149 = vshrl.u32 %v4148, 7
        %v4150 = vsub.s32 6, %v4149
        %v4151 = vrot.slane %v2884, %v4150
        %v4152 = vlaneseq
        %v4153 = vshrl.u32 %v4152, 7
        %v4154 = vsub.s32 7, %v4153
        %v4155 = vrot.slane %v2884, %v4154
        %v4156 = vlaneseq
        %v4157 = vshrl.u32 %v4156, 7
        %v4158 = vsub.s32 0, %v4157
        %v4159 = vrot.slane %v2887, %v4158
        %v4160 = vlaneseq
        %v4161 = vshrl.u32 %v4160, 7
        %v4162 = vsub.s32 1, %v4161
        %v4163 = vrot.slane %v2887, %v4162
        %v4164 = vlaneseq
        %v4165 = vshrl.u32 %v4164, 7
        %v4166 = vsub.s32 2, %v4165
        %v4167 = vrot.slane %v2887, %v4166
        %v4168 = vlaneseq
        %v4169 = vshrl.u32 %v4168, 7
        %v4170 = vsub.s32 3, %v4169
        %v4171 = vrot.slane %v2887, %v4170
        %v4172 = vlaneseq
        %v4173 = vshrl.u32 %v4172, 7
        %v4174 = vsub.s32 4, %v4173
        %v4175 = vrot.slane %v2887, %v4174
        %v4176 = vlaneseq
        %v4177 = vshrl.u32 %v4176, 7
        %v4178 = vsub.s32 5, %v4177
        %v4179 = vrot.slane %v2887, %v4178
        %v4180 = vlaneseq
        %v4181 = vshrl.u32 %v4180, 7
        %v4182 = vsub.s32 6, %v4181
        %v4183 = vrot.slane %v2887, %v4182
        %v4184 = vlaneseq
        %v4185 = vshrl.u32 %v4184, 7
        %v4186 = vsub.s32 7, %v4185
        %v4187 = vrot.slane %v2887, %v4186
        %v4188 = vlaneseq
        %v4189 = vshrl.u32 %v4188, 7
        %v4190 = vsub.s32 0, %v4189
        %v4191 = vrot.slane %v2890, %v4190
        %v4192 = vlaneseq
        %v4193 = vshrl.u32 %v4192, 7
        %v4194 = vsub.s32 1, %v4193
        %v4195 = vrot.slane %v2890, %v4194
        %v4196 = vlaneseq
        %v4197 = vshrl.u32 %v4196, 7
        %v4198 = vsub.s32 2, %v4197
        %v4199 = vrot.slane %v2890, %v4198
        %v4200 = vlaneseq
        %v4201 = vshrl.u32 %v4200, 7
        %v4202 = vsub.s32 3, %v4201
        %v4203 = vrot.slane %v2890, %v4202
        %v4204 = vlaneseq
        %v4205 = vshrl.u32 %v4204, 7
        %v4206 = vsub.s32 4, %v4205
        %v4207 = vrot.slane %v2890, %v4206
        %v4208 = vlaneseq
        %v4209 = vshrl.u32 %v4208, 7
        %v4210 = vsub.s32 5, %v4209
        %v4211 = vrot.slane %v2890, %v4210
        %v4212 = vlaneseq
        %v4213 = vshrl.u32 %v4212, 7
        %v4214 = vsub.s32 6, %v4213
        %v4215 = vrot.slane %v2890, %v4214
        %v4216 = vlaneseq
        %v4217 = vshrl.u32 %v4216, 7
        %v4218 = vsub.s32 7, %v4217
        %v4219 = vrot.slane %v2890, %v4218
        %v4220 = vlaneseq
        %v4221 = vshrl.u32 %v4220, 7
        %v4222 = vsub.s32 0, %v4221
        %v4223 = vrot.slane %v2893, %v4222
        %v4224 = vlaneseq
        %v4225 = vshrl.u32 %v4224, 7
        %v4226 = vsub.s32 1, %v4225
        %v4227 = vrot.slane %v2893, %v4226
        %v4228 = vlaneseq
        %v4229 = vshrl.u32 %v4228, 7
        %v4230 = vsub.s32 2, %v4229
        %v4231 = vrot.slane %v2893, %v4230
        %v4232 = vlaneseq
        %v4233 = vshrl.u32 %v4232, 7
        %v4234 = vsub.s32 3, %v4233
        %v4235 = vrot.slane %v2893, %v4234
        %v4236 = vlaneseq
        %v4237 = vshrl.u32 %v4236, 7
        %v4238 = vsub.s32 4, %v4237
        %v4239 = vrot.slane %v2893, %v4238
        %v4240 = vlaneseq
        %v4241 = vshrl.u32 %v4240, 7
        %v4242 = vsub.s32 5, %v4241
        %v4243 = vrot.slane %v2893, %v4242
        %v4244 = vlaneseq
        %v4245 = vshrl.u32 %v4244, 7
        %v4246 = vsub.s32 6, %v4245
        %v4247 = vrot.slane %v2893, %v4246
        %v4248 = vlaneseq
        %v4249 = vshrl.u32 %v4248, 7
        %v4250 = vsub.s32 7, %v4249
        %v4251 = vrot.slane %v2893, %v4250
        %v4252 = vlaneseq
        %v4253 = vshrl.u32 %v4252, 7
        %v4254 = vsub.s32 0, %v4253
        %v4255 = vrot.slane %v2896, %v4254
        %v4256 = vlaneseq
        %v4257 = vshrl.u32 %v4256, 7
        %v4258 = vsub.s32 1, %v4257
        %v4259 = vrot.slane %v2896, %v4258
        %v4260 = vlaneseq
        %v4261 = vshrl.u32 %v4260, 7
        %v4262 = vsub.s32 2, %v4261
        %v4263 = vrot.slane %v2896, %v4262
        %v4264 = vlaneseq
        %v4265 = vshrl.u32 %v4264, 7
        %v4266 = vsub.s32 3, %v4265
        %v4267 = vrot.slane %v2896, %v4266
        %v4268 = vlaneseq
        %v4269 = vshrl.u32 %v4268, 7
        %v4270 = vsub.s32 4, %v4269
        %v4271 = vrot.slane %v2896, %v4270
        %v4272 = vlaneseq
        %v4273 = vshrl.u32 %v4272, 7
        %v4274 = vsub.s32 5, %v4273
        %v4275 = vrot.slane %v2896, %v4274
        %v4276 = vlaneseq
        %v4277 = vshrl.u32 %v4276, 7
        %v4278 = vsub.s32 6, %v4277
        %v4279 = vrot.slane %v2896, %v4278
        %v4280 = vlaneseq
        %v4281 = vshrl.u32 %v4280, 7
        %v4282 = vsub.s32 7, %v4281
        %v4283 = vrot.slane %v2896, %v4282
        %v4284 = vlaneseq
        %v4285 = vshrl.u32 %v4284, 7
        %v4286 = vsub.s32 0, %v4285
        %v4287 = vrot.slane %v2899, %v4286
        %v4288 = vlaneseq
        %v4289 = vshrl.u32 %v4288, 7
        %v4290 = vsub.s32 1, %v4289
        %v4291 = vrot.slane %v2899, %v4290
        %v4292 = vlaneseq
        %v4293 = vshrl.u32 %v4292, 7
        %v4294 = vsub.s32 2, %v4293
        %v4295 = vrot.slane %v2899, %v4294
        %v4296 = vlaneseq
        %v4297 = vshrl.u32 %v4296, 7
        %v4298 = vsub.s32 3, %v4297
        %v4299 = vrot.slane %v2899, %v4298
        %v4300 = vlaneseq
        %v4301 = vshrl.u32 %v4300, 7
        %v4302 = vsub.s32 4, %v4301
        %v4303 = vrot.slane %v2899, %v4302
        %v4304 = vlaneseq
        %v4305 = vshrl.u32 %v4304, 7
        %v4306 = vsub.s32 5, %v4305
        %v4307 = vrot.slane %v2899, %v4306
        %v4308 = vlaneseq
        %v4309 = vshrl.u32 %v4308, 7
        %v4310 = vsub.s32 6, %v4309
        %v4311 = vrot.slane %v2899, %v4310
        %v4312 = vlaneseq
        %v4313 = vshrl.u32 %v4312, 7
        %v4314 = vsub.s32 7, %v4313
        %v4315 = vrot.slane %v2899, %v4314
        %v4316 = vlaneseq
        %v4317 = vshrl.u32 %v4316, 7
        %v4318 = vsub.s32 0, %v4317
        %v4319 = vrot.slane %v2902, %v4318
        %v4320 = vlaneseq
        %v4321 = vshrl.u32 %v4320, 7
        %v4322 = vsub.s32 1, %v4321
        %v4323 = vrot.slane %v2902, %v4322
        %v4324 = vlaneseq
        %v4325 = vshrl.u32 %v4324, 7
        %v4326 = vsub.s32 2, %v4325
        %v4327 = vrot.slane %v2902, %v4326
        %v4328 = vlaneseq
        %v4329 = vshrl.u32 %v4328, 7
        %v4330 = vsub.s32 3, %v4329
        %v4331 = vrot.slane %v2902, %v4330
        %v4332 = vlaneseq
        %v4333 = vshrl.u32 %v4332, 7
        %v4334 = vsub.s32 4, %v4333
        %v4335 = vrot.slane %v2902, %v4334
        %v4336 = vlaneseq
        %v4337 = vshrl.u32 %v4336, 7
        %v4338 = vsub.s32 5, %v4337
        %v4339 = vrot.slane %v2902, %v4338
        %v4340 = vlaneseq
        %v4341 = vshrl.u32 %v4340, 7
        %v4342 = vsub.s32 6, %v4341
        %v4343 = vrot.slane %v2902, %v4342
        %v4344 = vlaneseq
        %v4345 = vshrl.u32 %v4344, 7
        %v4346 = vsub.s32 7, %v4345
        %v4347 = vrot.slane %v2902, %v4346
        %v4348 = vlaneseq
        %v4349 = vshrl.u32 %v4348, 7
        %v4350 = vsub.s32 0, %v4349
        %v4351 = vrot.slane %v2905, %v4350
        %v4352 = vlaneseq
        %v4353 = vshrl.u32 %v4352, 7
        %v4354 = vsub.s32 1, %v4353
        %v4355 = vrot.slane %v2905, %v4354
        %v4356 = vlaneseq
        %v4357 = vshrl.u32 %v4356, 7
        %v4358 = vsub.s32 2, %v4357
        %v4359 = vrot.slane %v2905, %v4358
        %v4360 = vlaneseq
        %v4361 = vshrl.u32 %v4360, 7
        %v4362 = vsub.s32 3, %v4361
        %v4363 = vrot.slane %v2905, %v4362
        %v4364 = vlaneseq
        %v4365 = vshrl.u32 %v4364, 7
        %v4366 = vsub.s32 4, %v4365
        %v4367 = vrot.slane %v2905, %v4366
        %v4368 = vlaneseq
        %v4369 = vshrl.u32 %v4368, 7
        %v4370 = vsub.s32 5, %v4369
        %v4371 = vrot.slane %v2905, %v4370
        %v4372 = vlaneseq
        %v4373 = vshrl.u32 %v4372, 7
        %v4374 = vsub.s32 6, %v4373
        %v4375 = vrot.slane %v2905, %v4374
        %v4376 = vlaneseq
        %v4377 = vshrl.u32 %v4376, 7
        %v4378 = vsub.s32 7, %v4377
        %v4379 = vrot.slane %v2905, %v4378
        %v4380 = vlaneseq
        %v4381 = vshrl.u32 %v4380, 7
        %v4382 = vsub.s32 0, %v4381
        %v4383 = vrot.slane %v2908, %v4382
        %v4384 = vlaneseq
        %v4385 = vshrl.u32 %v4384, 7
        %v4386 = vsub.s32 1, %v4385
        %v4387 = vrot.slane %v2908, %v4386
        %v4388 = vlaneseq
        %v4389 = vshrl.u32 %v4388, 7
        %v4390 = vsub.s32 2, %v4389
        %v4391 = vrot.slane %v2908, %v4390
        %v4392 = vlaneseq
        %v4393 = vshrl.u32 %v4392, 7
        %v4394 = vsub.s32 3, %v4393
        %v4395 = vrot.slane %v2908, %v4394
        %v4396 = vlaneseq
        %v4397 = vshrl.u32 %v4396, 7
        %v4398 = vsub.s32 4, %v4397
        %v4399 = vrot.slane %v2908, %v4398
        %v4400 = vlaneseq
        %v4401 = vshrl.u32 %v4400, 7
        %v4402 = vsub.s32 5, %v4401
        %v4403 = vrot.slane %v2908, %v4402
        %v4404 = vlaneseq
        %v4405 = vshrl.u32 %v4404, 7
        %v4406 = vsub.s32 6, %v4405
        %v4407 = vrot.slane %v2908, %v4406
        %v4408 = vlaneseq
        %v4409 = vshrl.u32 %v4408, 7
        %v4410 = vsub.s32 7, %v4409
        %v4411 = vrot.slane %v2908, %v4410
        %v4412 = vlaneseq
        %v4413 = vshrl.u32 %v4412, 7
        %v4414 = vsub.s32 0, %v4413
        %v4415 = vrot.slane %v2911, %v4414
        %v4416 = vlaneseq
        %v4417 = vshrl.u32 %v4416, 7
        %v4418 = vsub.s32 1, %v4417
        %v4419 = vrot.slane %v2911, %v4418
        %v4420 = vlaneseq
        %v4421 = vshrl.u32 %v4420, 7
        %v4422 = vsub.s32 2, %v4421
        %v4423 = vrot.slane %v2911, %v4422
        %v4424 = vlaneseq
        %v4425 = vshrl.u32 %v4424, 7
        %v4426 = vsub.s32 3, %v4425
        %v4427 = vrot.slane %v2911, %v4426
        %v4428 = vlaneseq
        %v4429 = vshrl.u32 %v4428, 7
        %v4430 = vsub.s32 4, %v4429
        %v4431 = vrot.slane %v2911, %v4430
        %v4432 = vlaneseq
        %v4433 = vshrl.u32 %v4432, 7
        %v4434 = vsub.s32 5, %v4433
        %v4435 = vrot.slane %v2911, %v4434
        %v4436 = vlaneseq
        %v4437 = vshrl.u32 %v4436, 7
        %v4438 = vsub.s32 6, %v4437
        %v4439 = vrot.slane %v2911, %v4438
        %v4440 = vlaneseq
        %v4441 = vshrl.u32 %v4440, 7
        %v4442 = vsub.s32 7, %v4441
        %v4443 = vrot.slane %v2911, %v4442
        %v4444 = vlaneseq
        %v4445 = vshrl.u32 %v4444, 7
        %v4446 = vsub.s32 0, %v4445
        %v4447 = vrot.slane %v2914, %v4446
        %v4448 = vlaneseq
        %v4449 = vshrl.u32 %v4448, 7
        %v4450 = vsub.s32 1, %v4449
        %v4451 = vrot.slane %v2914, %v4450
        %v4452 = vlaneseq
        %v4453 = vshrl.u32 %v4452, 7
        %v4454 = vsub.s32 2, %v4453
        %v4455 = vrot.slane %v2914, %v4454
        %v4456 = vlaneseq
        %v4457 = vshrl.u32 %v4456, 7
        %v4458 = vsub.s32 3, %v4457
        %v4459 = vrot.slane %v2914, %v4458
        %v4460 = vlaneseq
        %v4461 = vshrl.u32 %v4460, 7
        %v4462 = vsub.s32 4, %v4461
        %v4463 = vrot.slane %v2914, %v4462
        %v4464 = vlaneseq
        %v4465 = vshrl.u32 %v4464, 7
        %v4466 = vsub.s32 5, %v4465
        %v4467 = vrot.slane %v2914, %v4466
        %v4468 = vlaneseq
        %v4469 = vshrl.u32 %v4468, 7
        %v4470 = vsub.s32 6, %v4469
        %v4471 = vrot.slane %v2914, %v4470
        %v4472 = vlaneseq
        %v4473 = vshrl.u32 %v4472, 7
        %v4474 = vsub.s32 7, %v4473
        %v4475 = vrot.slane %v2914, %v4474
        %v4476 = vlaneseq
        %v4477 = vshrl.u32 %v4476, 7
        %v4478 = vsub.s32 0, %v4477
        %v4479 = vrot.slane %v2917, %v4478
        %v4480 = vlaneseq
        %v4481 = vshrl.u32 %v4480, 7
        %v4482 = vsub.s32 1, %v4481
        %v4483 = vrot.slane %v2917, %v4482
        %v4484 = vlaneseq
        %v4485 = vshrl.u32 %v4484, 7
        %v4486 = vsub.s32 2, %v4485
        %v4487 = vrot.slane %v2917, %v4486
        %v4488 = vlaneseq
        %v4489 = vshrl.u32 %v4488, 7
        %v4490 = vsub.s32 3, %v4489
        %v4491 = vrot.slane %v2917, %v4490
        %v4492 = vlaneseq
        %v4493 = vshrl.u32 %v4492, 7
        %v4494 = vsub.s32 4, %v4493
        %v4495 = vrot.slane %v2917, %v4494
        %v4496 = vlaneseq
        %v4497 = vshrl.u32 %v4496, 7
        %v4498 = vsub.s32 5, %v4497
        %v4499 = vrot.slane %v2917, %v4498
        %v4500 = vlaneseq
        %v4501 = vshrl.u32 %v4500, 7
        %v4502 = vsub.s32 6, %v4501
        %v4503 = vrot.slane %v2917, %v4502
        %v4504 = vlaneseq
        %v4505 = vshrl.u32 %v4504, 7
        %v4506 = vsub.s32 7, %v4505
        %v4507 = vrot.slane %v2917, %v4506
        %v4508 = vlaneseq
        %v4509 = vshrl.u32 %v4508, 7
        %v4510 = vsub.s32 0, %v4509
        %v4511 = vrot.slane %v2920, %v4510
        %v4512 = vlaneseq
        %v4513 = vshrl.u32 %v4512, 7
        %v4514 = vsub.s32 1, %v4513
        %v4515 = vrot.slane %v2920, %v4514
        %v4516 = vlaneseq
        %v4517 = vshrl.u32 %v4516, 7
        %v4518 = vsub.s32 2, %v4517
        %v4519 = vrot.slane %v2920, %v4518
        %v4520 = vlaneseq
        %v4521 = vshrl.u32 %v4520, 7
        %v4522 = vsub.s32 3, %v4521
        %v4523 = vrot.slane %v2920, %v4522
        %v4524 = vlaneseq
        %v4525 = vshrl.u32 %v4524, 7
        %v4526 = vsub.s32 4, %v4525
        %v4527 = vrot.slane %v2920, %v4526
        %v4528 = vlaneseq
        %v4529 = vshrl.u32 %v4528, 7
        %v4530 = vsub.s32 5, %v4529
        %v4531 = vrot.slane %v2920, %v4530
        %v4532 = vlaneseq
        %v4533 = vshrl.u32 %v4532, 7
        %v4534 = vsub.s32 6, %v4533
        %v4535 = vrot.slane %v2920, %v4534
        %v4536 = vlaneseq
        %v4537 = vshrl.u32 %v4536, 7
        %v4538 = vsub.s32 7, %v4537
        %v4539 = vrot.slane %v2920, %v4538
        %v4540 = vlaneseq
        %v4541 = vshrl.u32 %v4540, 7
        %v4542 = vsub.s32 0, %v4541
        %v4543 = vrot.slane %v2923, %v4542
        %v4544 = vlaneseq
        %v4545 = vshrl.u32 %v4544, 7
        %v4546 = vsub.s32 1, %v4545
        %v4547 = vrot.slane %v2923, %v4546
        %v4548 = vlaneseq
        %v4549 = vshrl.u32 %v4548, 7
        %v4550 = vsub.s32 2, %v4549
        %v4551 = vrot.slane %v2923, %v4550
        %v4552 = vlaneseq
        %v4553 = vshrl.u32 %v4552, 7
        %v4554 = vsub.s32 3, %v4553
        %v4555 = vrot.slane %v2923, %v4554
        %v4556 = vlaneseq
        %v4557 = vshrl.u32 %v4556, 7
        %v4558 = vsub.s32 4, %v4557
        %v4559 = vrot.slane %v2923, %v4558
        %v4560 = vlaneseq
        %v4561 = vshrl.u32 %v4560, 7
        %v4562 = vsub.s32 5, %v4561
        %v4563 = vrot.slane %v2923, %v4562
        %v4564 = vlaneseq
        %v4565 = vshrl.u32 %v4564, 7
        %v4566 = vsub.s32 6, %v4565
        %v4567 = vrot.slane %v2923, %v4566
        %v4568 = vlaneseq
        %v4569 = vshrl.u32 %v4568, 7
        %v4570 = vsub.s32 7, %v4569
        %v4571 = vrot.slane %v2923, %v4570
        %v4572 = vlaneseq
        %v4573 = vshrl.u32 %v4572, 7
        %v4574 = vsub.s32 0, %v4573
        %v4575 = vrot.slane %v2926, %v4574
        %v4576 = vlaneseq
        %v4577 = vshrl.u32 %v4576, 7
        %v4578 = vsub.s32 1, %v4577
        %v4579 = vrot.slane %v2926, %v4578
        %v4580 = vlaneseq
        %v4581 = vshrl.u32 %v4580, 7
        %v4582 = vsub.s32 2, %v4581
        %v4583 = vrot.slane %v2926, %v4582
        %v4584 = vlaneseq
        %v4585 = vshrl.u32 %v4584, 7
        %v4586 = vsub.s32 3, %v4585
        %v4587 = vrot.slane %v2926, %v4586
        %v4588 = vlaneseq
        %v4589 = vshrl.u32 %v4588, 7
        %v4590 = vsub.s32 4, %v4589
        %v4591 = vrot.slane %v2926, %v4590
        %v4592 = vlaneseq
        %v4593 = vshrl.u32 %v4592, 7
        %v4594 = vsub.s32 5, %v4593
        %v4595 = vrot.slane %v2926, %v4594
        %v4596 = vlaneseq
        %v4597 = vshrl.u32 %v4596, 7
        %v4598 = vsub.s32 6, %v4597
        %v4599 = vrot.slane %v2926, %v4598
        %v4600 = vlaneseq
        %v4601 = vshrl.u32 %v4600, 7
        %v4602 = vsub.s32 7, %v4601
        %v4603 = vrot.slane %v2926, %v4602
        %v4604 = vlaneseq
        %v4605 = vshrl.u32 %v4604, 7
        %v4606 = vsub.s32 0, %v4605
        %v4607 = vrot.slane %v2929, %v4606
        %v4608 = vlaneseq
        %v4609 = vshrl.u32 %v4608, 7
        %v4610 = vsub.s32 1, %v4609
        %v4611 = vrot.slane %v2929, %v4610
        %v4612 = vlaneseq
        %v4613 = vshrl.u32 %v4612, 7
        %v4614 = vsub.s32 2, %v4613
        %v4615 = vrot.slane %v2929, %v4614
        %v4616 = vlaneseq
        %v4617 = vshrl.u32 %v4616, 7
        %v4618 = vsub.s32 3, %v4617
        %v4619 = vrot.slane %v2929, %v4618
        %v4620 = vlaneseq
        %v4621 = vshrl.u32 %v4620, 7
        %v4622 = vsub.s32 4, %v4621
        %v4623 = vrot.slane %v2929, %v4622
        %v4624 = vlaneseq
        %v4625 = vshrl.u32 %v4624, 7
        %v4626 = vsub.s32 5, %v4625
        %v4627 = vrot.slane %v2929, %v4626
        %v4628 = vlaneseq
        %v4629 = vshrl.u32 %v4628, 7
        %v4630 = vsub.s32 6, %v4629
        %v4631 = vrot.slane %v2929, %v4630
        %v4632 = vlaneseq
        %v4633 = vshrl.u32 %v4632, 7
        %v4634 = vsub.s32 7, %v4633
        %v4635 = vrot.slane %v2929, %v4634
        %v4636 = vlaneseq
        %v4637 = vshrl.u32 %v4636, 7
        %v4638 = vsub.s32 0, %v4637
        %v4639 = vrot.slane %v2932, %v4638
        %v4640 = vlaneseq
        %v4641 = vshrl.u32 %v4640, 7
        %v4642 = vsub.s32 1, %v4641
        %v4643 = vrot.slane %v2932, %v4642
        %v4644 = vlaneseq
        %v4645 = vshrl.u32 %v4644, 7
        %v4646 = vsub.s32 2, %v4645
        %v4647 = vrot.slane %v2932, %v4646
        %v4648 = vlaneseq
        %v4649 = vshrl.u32 %v4648, 7
        %v4650 = vsub.s32 3, %v4649
        %v4651 = vrot.slane %v2932, %v4650
        %v4652 = vlaneseq
        %v4653 = vshrl.u32 %v4652, 7
        %v4654 = vsub.s32 4, %v4653
        %v4655 = vrot.slane %v2932, %v4654
        %v4656 = vlaneseq
        %v4657 = vshrl.u32 %v4656, 7
        %v4658 = vsub.s32 5, %v4657
        %v4659 = vrot.slane %v2932, %v4658
        %v4660 = vlaneseq
        %v4661 = vshrl.u32 %v4660, 7
        %v4662 = vsub.s32 6, %v4661
        %v4663 = vrot.slane %v2932, %v4662
        %v4664 = vlaneseq
        %v4665 = vshrl.u32 %v4664, 7
        %v4666 = vsub.s32 7, %v4665
        %v4667 = vrot.slane %v2932, %v4666
        %v4668 = vlaneseq
        %v4669 = vshrl.u32 %v4668, 7
        %v4670 = vsub.s32 0, %v4669
        %v4671 = vrot.slane %v2935, %v4670
        %v4672 = vlaneseq
        %v4673 = vshrl.u32 %v4672, 7
        %v4674 = vsub.s32 1, %v4673
        %v4675 = vrot.slane %v2935, %v4674
        %v4676 = vlaneseq
        %v4677 = vshrl.u32 %v4676, 7
        %v4678 = vsub.s32 2, %v4677
        %v4679 = vrot.slane %v2935, %v4678
        %v4680 = vlaneseq
        %v4681 = vshrl.u32 %v4680, 7
        %v4682 = vsub.s32 3, %v4681
        %v4683 = vrot.slane %v2935, %v4682
        %v4684 = vlaneseq
        %v4685 = vshrl.u32 %v4684, 7
        %v4686 = vsub.s32 4, %v4685
        %v4687 = vrot.slane %v2935, %v4686
        %v4688 = vlaneseq
        %v4689 = vshrl.u32 %v4688, 7
        %v4690 = vsub.s32 5, %v4689
        %v4691 = vrot.slane %v2935, %v4690
        %v4692 = vlaneseq
        %v4693 = vshrl.u32 %v4692, 7
        %v4694 = vsub.s32 6, %v4693
        %v4695 = vrot.slane %v2935, %v4694
        %v4696 = vlaneseq
        %v4697 = vshrl.u32 %v4696, 7
        %v4698 = vsub.s32 7, %v4697
        %v4699 = vrot.slane %v2935, %v4698
        %v4700 = vlaneseq
        %v4701 = vshrl.u32 %v4700, 7
        %v4702 = vsub.s32 0, %v4701
        %v4703 = vrot.slane %v2938, %v4702
        %v4704 = vlaneseq
        %v4705 = vshrl.u32 %v4704, 7
        %v4706 = vsub.s32 1, %v4705
        %v4707 = vrot.slane %v2938, %v4706
        %v4708 = vlaneseq
        %v4709 = vshrl.u32 %v4708, 7
        %v4710 = vsub.s32 2, %v4709
        %v4711 = vrot.slane %v2938, %v4710
        %v4712 = vlaneseq
        %v4713 = vshrl.u32 %v4712, 7
        %v4714 = vsub.s32 3, %v4713
        %v4715 = vrot.slane %v2938, %v4714
        %v4716 = vlaneseq
        %v4717 = vshrl.u32 %v4716, 7
        %v4718 = vsub.s32 4, %v4717
        %v4719 = vrot.slane %v2938, %v4718
        %v4720 = vlaneseq
        %v4721 = vshrl.u32 %v4720, 7
        %v4722 = vsub.s32 5, %v4721
        %v4723 = vrot.slane %v2938, %v4722
        %v4724 = vlaneseq
        %v4725 = vshrl.u32 %v4724, 7
        %v4726 = vsub.s32 6, %v4725
        %v4727 = vrot.slane %v2938, %v4726
        %v4728 = vlaneseq
        %v4729 = vshrl.u32 %v4728, 7
        %v4730 = vsub.s32 7, %v4729
        %v4731 = vrot.slane %v2938, %v4730
        %v4732 = vlaneseq
        %v4733 = vshrl.u32 %v4732, 7
        %v4734 = vsub.s32 0, %v4733
        %v4735 = vrot.slane %v2941, %v4734
        %v4736 = vlaneseq
        %v4737 = vshrl.u32 %v4736, 7
        %v4738 = vsub.s32 1, %v4737
        %v4739 = vrot.slane %v2941, %v4738
        %v4740 = vlaneseq
        %v4741 = vshrl.u32 %v4740, 7
        %v4742 = vsub.s32 2, %v4741
        %v4743 = vrot.slane %v2941, %v4742
        %v4744 = vlaneseq
        %v4745 = vshrl.u32 %v4744, 7
        %v4746 = vsub.s32 3, %v4745
        %v4747 = vrot.slane %v2941, %v4746
        %v4748 = vlaneseq
        %v4749 = vshrl.u32 %v4748, 7
        %v4750 = vsub.s32 4, %v4749
        %v4751 = vrot.slane %v2941, %v4750
        %v4752 = vlaneseq
        %v4753 = vshrl.u32 %v4752, 7
        %v4754 = vsub.s32 5, %v4753
        %v4755 = vrot.slane %v2941, %v4754
        %v4756 = vlaneseq
        %v4757 = vshrl.u32 %v4756, 7
        %v4758 = vsub.s32 6, %v4757
        %v4759 = vrot.slane %v2941, %v4758
        %v4760 = vlaneseq
        %v4761 = vshrl.u32 %v4760, 7
        %v4762 = vsub.s32 7, %v4761
        %v4763 = vrot.slane %v2941, %v4762
        %v4764 = vlaneseq
        %v4765 = vshrl.u32 %v4764, 7
        %v4766 = vsub.s32 0, %v4765
        %v4767 = vrot.slane %v2944, %v4766
        %v4768 = vlaneseq
        %v4769 = vshrl.u32 %v4768, 7
        %v4770 = vsub.s32 1, %v4769
        %v4771 = vrot.slane %v2944, %v4770
        %v4772 = vlaneseq
        %v4773 = vshrl.u32 %v4772, 7
        %v4774 = vsub.s32 2, %v4773
        %v4775 = vrot.slane %v2944, %v4774
        %v4776 = vlaneseq
        %v4777 = vshrl.u32 %v4776, 7
        %v4778 = vsub.s32 3, %v4777
        %v4779 = vrot.slane %v2944, %v4778
        %v4780 = vlaneseq
        %v4781 = vshrl.u32 %v4780, 7
        %v4782 = vsub.s32 4, %v4781
        %v4783 = vrot.slane %v2944, %v4782
        %v4784 = vlaneseq
        %v4785 = vshrl.u32 %v4784, 7
        %v4786 = vsub.s32 5, %v4785
        %v4787 = vrot.slane %v2944, %v4786
        %v4788 = vlaneseq
        %v4789 = vshrl.u32 %v4788, 7
        %v4790 = vsub.s32 6, %v4789
        %v4791 = vrot.slane %v2944, %v4790
        %v4792 = vlaneseq
        %v4793 = vshrl.u32 %v4792, 7
        %v4794 = vsub.s32 7, %v4793
        %v4795 = vrot.slane %v2944, %v4794
        %v4796 = vlaneseq
        %v4797 = vshrl.u32 %v4796, 7
        %v4798 = vsub.s32 0, %v4797
        %v4799 = vrot.slane %v2947, %v4798
        %v4800 = vlaneseq
        %v4801 = vshrl.u32 %v4800, 7
        %v4802 = vsub.s32 1, %v4801
        %v4803 = vrot.slane %v2947, %v4802
        %v4804 = vlaneseq
        %v4805 = vshrl.u32 %v4804, 7
        %v4806 = vsub.s32 2, %v4805
        %v4807 = vrot.slane %v2947, %v4806
        %v4808 = vlaneseq
        %v4809 = vshrl.u32 %v4808, 7
        %v4810 = vsub.s32 3, %v4809
        %v4811 = vrot.slane %v2947, %v4810
        %v4812 = vlaneseq
        %v4813 = vshrl.u32 %v4812, 7
        %v4814 = vsub.s32 4, %v4813
        %v4815 = vrot.slane %v2947, %v4814
        %v4816 = vlaneseq
        %v4817 = vshrl.u32 %v4816, 7
        %v4818 = vsub.s32 5, %v4817
        %v4819 = vrot.slane %v2947, %v4818
        %v4820 = vlaneseq
        %v4821 = vshrl.u32 %v4820, 7
        %v4822 = vsub.s32 6, %v4821
        %v4823 = vrot.slane %v2947, %v4822
        %v4824 = vlaneseq
        %v4825 = vshrl.u32 %v4824, 7
        %v4826 = vsub.s32 7, %v4825
        %v4827 = vrot.slane %v2947, %v4826
        %v4828 = vlaneseq
        %v4829 = vshrl.u32 %v4828, 7
        %v4830 = vsub.s32 0, %v4829
        %v4831 = vrot.slane %v2950, %v4830
        %v4832 = vlaneseq
        %v4833 = vshrl.u32 %v4832, 7
        %v4834 = vsub.s32 1, %v4833
        %v4835 = vrot.slane %v2950, %v4834
        %v4836 = vlaneseq
        %v4837 = vshrl.u32 %v4836, 7
        %v4838 = vsub.s32 2, %v4837
        %v4839 = vrot.slane %v2950, %v4838
        %v4840 = vlaneseq
        %v4841 = vshrl.u32 %v4840, 7
        %v4842 = vsub.s32 3, %v4841
        %v4843 = vrot.slane %v2950, %v4842
        %v4844 = vlaneseq
        %v4845 = vshrl.u32 %v4844, 7
        %v4846 = vsub.s32 4, %v4845
        %v4847 = vrot.slane %v2950, %v4846
        %v4848 = vlaneseq
        %v4849 = vshrl.u32 %v4848, 7
        %v4850 = vsub.s32 5, %v4849
        %v4851 = vrot.slane %v2950, %v4850
        %v4852 = vlaneseq
        %v4853 = vshrl.u32 %v4852, 7
        %v4854 = vsub.s32 6, %v4853
        %v4855 = vrot.slane %v2950, %v4854
        %v4856 = vlaneseq
        %v4857 = vshrl.u32 %v4856, 7
        %v4858 = vsub.s32 7, %v4857
        %v4859 = vrot.slane %v2950, %v4858
        %v4860 = vlaneseq
        %v4861 = vshrl.u32 %v4860, 7
        %v4862 = vsub.s32 0, %v4861
        %v4863 = vrot.slane %v2953, %v4862
        %v4864 = vlaneseq
        %v4865 = vshrl.u32 %v4864, 7
        %v4866 = vsub.s32 1, %v4865
        %v4867 = vrot.slane %v2953, %v4866
        %v4868 = vlaneseq
        %v4869 = vshrl.u32 %v4868, 7
        %v4870 = vsub.s32 2, %v4869
        %v4871 = vrot.slane %v2953, %v4870
        %v4872 = vlaneseq
        %v4873 = vshrl.u32 %v4872, 7
        %v4874 = vsub.s32 3, %v4873
        %v4875 = vrot.slane %v2953, %v4874
        %v4876 = vlaneseq
        %v4877 = vshrl.u32 %v4876, 7
        %v4878 = vsub.s32 4, %v4877
        %v4879 = vrot.slane %v2953, %v4878
        %v4880 = vlaneseq
        %v4881 = vshrl.u32 %v4880, 7
        %v4882 = vsub.s32 5, %v4881
        %v4883 = vrot.slane %v2953, %v4882
        %v4884 = vlaneseq
        %v4885 = vshrl.u32 %v4884, 7
        %v4886 = vsub.s32 6, %v4885
        %v4887 = vrot.slane %v2953, %v4886
        %v4888 = vlaneseq
        %v4889 = vshrl.u32 %v4888, 7
        %v4890 = vsub.s32 7, %v4889
        %v4891 = vrot.slane %v2953, %v4890
        %v4892 = vlaneseq
        %v4893 = vshrl.u32 %v4892, 7
        %v4894 = vsub.s32 0, %v4893
        %v4895 = vrot.slane %v2956, %v4894
        %v4896 = vlaneseq
        %v4897 = vshrl.u32 %v4896, 7
        %v4898 = vsub.s32 1, %v4897
        %v4899 = vrot.slane %v2956, %v4898
        %v4900 = vlaneseq
        %v4901 = vshrl.u32 %v4900, 7
        %v4902 = vsub.s32 2, %v4901
        %v4903 = vrot.slane %v2956, %v4902
        %v4904 = vlaneseq
        %v4905 = vshrl.u32 %v4904, 7
        %v4906 = vsub.s32 3, %v4905
        %v4907 = vrot.slane %v2956, %v4906
        %v4908 = vlaneseq
        %v4909 = vshrl.u32 %v4908, 7
        %v4910 = vsub.s32 4, %v4909
        %v4911 = vrot.slane %v2956, %v4910
        %v4912 = vlaneseq
        %v4913 = vshrl.u32 %v4912, 7
        %v4914 = vsub.s32 5, %v4913
        %v4915 = vrot.slane %v2956, %v4914
        %v4916 = vlaneseq
        %v4917 = vshrl.u32 %v4916, 7
        %v4918 = vsub.s32 6, %v4917
        %v4919 = vrot.slane %v2956, %v4918
        %v4920 = vlaneseq
        %v4921 = vshrl.u32 %v4920, 7
        %v4922 = vsub.s32 7, %v4921
        %v4923 = vrot.slane %v2956, %v4922
        %v4924 = vlaneseq
        %v4925 = vshrl.u32 %v4924, 7
        %v4926 = vsub.s32 0, %v4925
        %v4927 = vrot.slane %v2959, %v4926
        %v4928 = vlaneseq
        %v4929 = vshrl.u32 %v4928, 7
        %v4930 = vsub.s32 1, %v4929
        %v4931 = vrot.slane %v2959, %v4930
        %v4932 = vlaneseq
        %v4933 = vshrl.u32 %v4932, 7
        %v4934 = vsub.s32 2, %v4933
        %v4935 = vrot.slane %v2959, %v4934
        %v4936 = vlaneseq
        %v4937 = vshrl.u32 %v4936, 7
        %v4938 = vsub.s32 3, %v4937
        %v4939 = vrot.slane %v2959, %v4938
        %v4940 = vlaneseq
        %v4941 = vshrl.u32 %v4940, 7
        %v4942 = vsub.s32 4, %v4941
        %v4943 = vrot.slane %v2959, %v4942
        %v4944 = vlaneseq
        %v4945 = vshrl.u32 %v4944, 7
        %v4946 = vsub.s32 5, %v4945
        %v4947 = vrot.slane %v2959, %v4946
        %v4948 = vlaneseq
        %v4949 = vshrl.u32 %v4948, 7
        %v4950 = vsub.s32 6, %v4949
        %v4951 = vrot.slane %v2959, %v4950
        %v4952 = vlaneseq
        %v4953 = vshrl.u32 %v4952, 7
        %v4954 = vsub.s32 7, %v4953
        %v4955 = vrot.slane %v2959, %v4954
        %v4956 = vlaneseq
        %v4957 = vshrl.u32 %v4956, 7
        %v4958 = vsub.s32 0, %v4957
        %v4959 = vrot.slane %v2962, %v4958
        %v4960 = vlaneseq
        %v4961 = vshrl.u32 %v4960, 7
        %v4962 = vsub.s32 1, %v4961
        %v4963 = vrot.slane %v2962, %v4962
        %v4964 = vlaneseq
        %v4965 = vshrl.u32 %v4964, 7
        %v4966 = vsub.s32 2, %v4965
        %v4967 = vrot.slane %v2962, %v4966
        %v4968 = vlaneseq
        %v4969 = vshrl.u32 %v4968, 7
        %v4970 = vsub.s32 3, %v4969
        %v4971 = vrot.slane %v2962, %v4970
        %v4972 = vlaneseq
        %v4973 = vshrl.u32 %v4972, 7
        %v4974 = vsub.s32 4, %v4973
        %v4975 = vrot.slane %v2962, %v4974
        %v4976 = vlaneseq
        %v4977 = vshrl.u32 %v4976, 7
        %v4978 = vsub.s32 5, %v4977
        %v4979 = vrot.slane %v2962, %v4978
        %v4980 = vlaneseq
        %v4981 = vshrl.u32 %v4980, 7
        %v4982 = vsub.s32 6, %v4981
        %v4983 = vrot.slane %v2962, %v4982
        %v4984 = vlaneseq
        %v4985 = vshrl.u32 %v4984, 7
        %v4986 = vsub.s32 7, %v4985
        %v4987 = vrot.slane %v2962, %v4986
        %v4988 = vlaneseq
        %v4989 = vshrl.u32 %v4988, 7
        %v4990 = vsub.s32 0, %v4989
        %v4991 = vrot.slane %v2965, %v4990
        %v4992 = vlaneseq
        %v4993 = vshrl.u32 %v4992, 7
        %v4994 = vsub.s32 1, %v4993
        %v4995 = vrot.slane %v2965, %v4994
        %v4996 = vlaneseq
        %v4997 = vshrl.u32 %v4996, 7
        %v4998 = vsub.s32 2, %v4997
        %v4999 = vrot.slane %v2965, %v4998
        %v5000 = vlaneseq
        %v5001 = vshrl.u32 %v5000, 7
        %v5002 = vsub.s32 3, %v5001
        %v5003 = vrot.slane %v2965, %v5002
        %v5004 = vlaneseq
        %v5005 = vshrl.u32 %v5004, 7
        %v5006 = vsub.s32 4, %v5005
        %v5007 = vrot.slane %v2965, %v5006
        %v5008 = vlaneseq
        %v5009 = vshrl.u32 %v5008, 7
        %v5010 = vsub.s32 5, %v5009
        %v5011 = vrot.slane %v2965, %v5010
        %v5012 = vlaneseq
        %v5013 = vshrl.u32 %v5012, 7
        %v5014 = vsub.s32 6, %v5013
        %v5015 = vrot.slane %v2965, %v5014
        %v5016 = vlaneseq
        %v5017 = vshrl.u32 %v5016, 7
        %v5018 = vsub.s32 7, %v5017
        %v5019 = vrot.slane %v2965, %v5018
        %v5020 = vlaneseq
        %v5021 = vshrl.u32 %v5020, 7
        %v5022 = vsub.s32 0, %v5021
        %v5023 = vrot.slane %v2968, %v5022
        %v5024 = vlaneseq
        %v5025 = vshrl.u32 %v5024, 7
        %v5026 = vsub.s32 1, %v5025
        %v5027 = vrot.slane %v2968, %v5026
        %v5028 = vlaneseq
        %v5029 = vshrl.u32 %v5028, 7
        %v5030 = vsub.s32 2, %v5029
        %v5031 = vrot.slane %v2968, %v5030
        %v5032 = vlaneseq
        %v5033 = vshrl.u32 %v5032, 7
        %v5034 = vsub.s32 3, %v5033
        %v5035 = vrot.slane %v2968, %v5034
        %v5036 = vlaneseq
        %v5037 = vshrl.u32 %v5036, 7
        %v5038 = vsub.s32 4, %v5037
        %v5039 = vrot.slane %v2968, %v5038
        %v5040 = vlaneseq
        %v5041 = vshrl.u32 %v5040, 7
        %v5042 = vsub.s32 5, %v5041
        %v5043 = vrot.slane %v2968, %v5042
        %v5044 = vlaneseq
        %v5045 = vshrl.u32 %v5044, 7
        %v5046 = vsub.s32 6, %v5045
        %v5047 = vrot.slane %v2968, %v5046
        %v5048 = vlaneseq
        %v5049 = vshrl.u32 %v5048, 7
        %v5050 = vsub.s32 7, %v5049
        %v5051 = vrot.slane %v2968, %v5050
        %v5052 = vlaneseq
        %v5053 = vshrl.u32 %v5052, 7
        %v5054 = vsub.s32 0, %v5053
        %v5055 = vrot.slane %v2971, %v5054
        %v5056 = vlaneseq
        %v5057 = vshrl.u32 %v5056, 7
        %v5058 = vsub.s32 1, %v5057
        %v5059 = vrot.slane %v2971, %v5058
        %v5060 = vlaneseq
        %v5061 = vshrl.u32 %v5060, 7
        %v5062 = vsub.s32 2, %v5061
        %v5063 = vrot.slane %v2971, %v5062
        %v5064 = vlaneseq
        %v5065 = vshrl.u32 %v5064, 7
        %v5066 = vsub.s32 3, %v5065
        %v5067 = vrot.slane %v2971, %v5066
        %v5068 = vlaneseq
        %v5069 = vshrl.u32 %v5068, 7
        %v5070 = vsub.s32 4, %v5069
        %v5071 = vrot.slane %v2971, %v5070
        %v5072 = vlaneseq
        %v5073 = vshrl.u32 %v5072, 7
        %v5074 = vsub.s32 5, %v5073
        %v5075 = vrot.slane %v2971, %v5074
        %v5076 = vlaneseq
        %v5077 = vshrl.u32 %v5076, 7
        %v5078 = vsub.s32 6, %v5077
        %v5079 = vrot.slane %v2971, %v5078
        %v5080 = vlaneseq
        %v5081 = vshrl.u32 %v5080, 7
        %v5082 = vsub.s32 7, %v5081
        %v5083 = vrot.slane %v2971, %v5082
        %v5084 = vcombine.low %v3039, %v3043
        %v5085 = vcombine.low %v3047, %v3051
        %v5086 = vcombine.low %v3055, %v3059
        %v5087 = vcombine.low %v3063, %v3067
        %v5089 = vunpack.c.l.s4 1966171168
        %v5090 = vunpack.c.0.s8 %v5089
        %v5091 = vlaneseq
        %v5092 = vshrl.u32 %v5091, 7
        %v5093 = vsub.s32 %v5090, %v5092
        %v5094 = vrot.slane %v5084, %v5093
        %v5096 = vunpack.c.l.s4 1966171168
        %v5097 = vunpack.c.0.s8 %v5096
        %v5098 = vlaneseq
        %v5099 = vshrl.u32 %v5098, 7
        %v5100 = vsub.s32 %v5097, %v5099
        %v5101 = vrot.slane %v5085, %v5100
        %v5103 = vunpack.c.l.s4 1966171168
        %v5104 = vunpack.c.0.s8 %v5103
        %v5105 = vlaneseq
        %v5106 = vshrl.u32 %v5105, 7
        %v5107 = vsub.s32 %v5104, %v5106
        %v5108 = vrot.slane %v5086, %v5107
        %v5110 = vunpack.c.l.s4 1966171168
        %v5111 = vunpack.c.0.s8 %v5110
        %v5112 = vlaneseq
        %v5113 = vshrl.u32 %v5112, 7
        %v5114 = vsub.s32 %v5111, %v5113
        %v5115 = vrot.slane %v5087, %v5114
        %v5116 = vcombine.low %v5094, %v5101
        %v5117 = vcombine.low %v5108, %v5115
        %v5119 = vunpack.c.l.s4 1966171168
        %v5120 = vunpack.c.0.s8 %v5119
        %v5121 = vlaneseq
        %v5122 = vshrl.u32 %v5121, 7
        %v5123 = vsub.s32 %v5120, %v5122
        %v5124 = vrot.slane %v5116, %v5123
        %v5126 = vunpack.c.l.s4 1966171168
        %v5127 = vunpack.c.0.s8 %v5126
        %v5128 = vlaneseq
        %v5129 = vshrl.u32 %v5128, 7
        %v5130 = vsub.s32 %v5127, %v5129
        %v5131 = vrot.slane %v5117, %v5130
        %v5132 = vcombine.low %v5124, %v5131
        %v5133 = vcombine.low %v3071, %v3075
        %v5134 = vcombine.low %v3079, %v3083
        %v5135 = vcombine.low %v3087, %v3091
        %v5136 = vcombine.low %v3095, %v3099
        %v5138 = vunpack.c.l.s4 1966171168
        %v5139 = vunpack.c.0.s8 %v5138
        %v5140 = vlaneseq
        %v5141 = vshrl.u32 %v5140, 7
        %v5142 = vsub.s32 %v5139, %v5141
        %v5143 = vrot.slane %v5133, %v5142
        %v5145 = vunpack.c.l.s4 1966171168
        %v5146 = vunpack.c.0.s8 %v5145
        %v5147 = vlaneseq
        %v5148 = vshrl.u32 %v5147, 7
        %v5149 = vsub.s32 %v5146, %v5148
        %v5150 = vrot.slane %v5134, %v5149
        %v5152 = vunpack.c.l.s4 1966171168
        %v5153 = vunpack.c.0.s8 %v5152
        %v5154 = vlaneseq
        %v5155 = vshrl.u32 %v5154, 7
        %v5156 = vsub.s32 %v5153, %v5155
        %v5157 = vrot.slane %v5135, %v5156
        %v5159 = vunpack.c.l.s4 1966171168
        %v5160 = vunpack.c.0.s8 %v5159
        %v5161 = vlaneseq
        %v5162 = vshrl.u32 %v5161, 7
        %v5163 = vsub.s32 %v5160, %v5162
        %v5164 = vrot.slane %v5136, %v5163
        %v5165 = vcombine.low %v5143, %v5150
        %v5166 = vcombine.low %v5157, %v5164
        %v5168 = vunpack.c.l.s4 1966171168
        %v5169 = vunpack.c.0.s8 %v5168
        %v5170 = vlaneseq
        %v5171 = vshrl.u32 %v5170, 7
        %v5172 = vsub.s32 %v5169, %v5171
        %v5173 = vrot.slane %v5165, %v5172
        %v5175 = vunpack.c.l.s4 1966171168
        %v5176 = vunpack.c.0.s8 %v5175
        %v5177 = vlaneseq
        %v5178 = vshrl.u32 %v5177, 7
        %v5179 = vsub.s32 %v5176, %v5178
        %v5180 = vrot.slane %v5166, %v5179
        %v5181 = vcombine.low %v5173, %v5180
        %v5182 = vcombine.low %v3103, %v3107
        %v5183 = vcombine.low %v3111, %v3115
        %v5184 = vcombine.low %v3119, %v3123
        %v5185 = vcombine.low %v3127, %v3131
        %v5187 = vunpack.c.l.s4 1966171168
        %v5188 = vunpack.c.0.s8 %v5187
        %v5189 = vlaneseq
        %v5190 = vshrl.u32 %v5189, 7
        %v5191 = vsub.s32 %v5188, %v5190
        %v5192 = vrot.slane %v5182, %v5191
        %v5194 = vunpack.c.l.s4 1966171168
        %v5195 = vunpack.c.0.s8 %v5194
        %v5196 = vlaneseq
        %v5197 = vshrl.u32 %v5196, 7
        %v5198 = vsub.s32 %v5195, %v5197
        %v5199 = vrot.slane %v5183, %v5198
        %v5201 = vunpack.c.l.s4 1966171168
        %v5202 = vunpack.c.0.s8 %v5201
        %v5203 = vlaneseq
        %v5204 = vshrl.u32 %v5203, 7
        %v5205 = vsub.s32 %v5202, %v5204
        %v5206 = vrot.slane %v5184, %v5205
        %v5208 = vunpack.c.l.s4 1966171168
        %v5209 = vunpack.c.0.s8 %v5208
        %v5210 = vlaneseq
        %v5211 = vshrl.u32 %v5210, 7
        %v5212 = vsub.s32 %v5209, %v5211
        %v5213 = vrot.slane %v5185, %v5212
        %v5214 = vcombine.low %v5192, %v5199
        %v5215 = vcombine.low %v5206, %v5213
        %v5217 = vunpack.c.l.s4 1966171168
        %v5218 = vunpack.c.0.s8 %v5217
        %v5219 = vlaneseq
        %v5220 = vshrl.u32 %v5219, 7
        %v5221 = vsub.s32 %v5218, %v5220
        %v5222 = vrot.slane %v5214, %v5221
        %v5224 = vunpack.c.l.s4 1966171168
        %v5225 = vunpack.c.0.s8 %v5224
        %v5226 = vlaneseq
        %v5227 = vshrl.u32 %v5226, 7
        %v5228 = vsub.s32 %v5225, %v5227
        %v5229 = vrot.slane %v5215, %v5228
        %v5230 = vcombine.low %v5222, %v5229
        %v5231 = vcombine.low %v3135, %v3139
        %v5232 = vcombine.low %v3143, %v3147
        %v5233 = vcombine.low %v3151, %v3155
        %v5234 = vcombine.low %v3159, %v3163
        %v5236 = vunpack.c.l.s4 1966171168
        %v5237 = vunpack.c.0.s8 %v5236
        %v5238 = vlaneseq
        %v5239 = vshrl.u32 %v5238, 7
        %v5240 = vsub.s32 %v5237, %v5239
        %v5241 = vrot.slane %v5231, %v5240
        %v5243 = vunpack.c.l.s4 1966171168
        %v5244 = vunpack.c.0.s8 %v5243
        %v5245 = vlaneseq
        %v5246 = vshrl.u32 %v5245, 7
        %v5247 = vsub.s32 %v5244, %v5246
        %v5248 = vrot.slane %v5232, %v5247
        %v5250 = vunpack.c.l.s4 1966171168
        %v5251 = vunpack.c.0.s8 %v5250
        %v5252 = vlaneseq
        %v5253 = vshrl.u32 %v5252, 7
        %v5254 = vsub.s32 %v5251, %v5253
        %v5255 = vrot.slane %v5233, %v5254
        %v5257 = vunpack.c.l.s4 1966171168
        %v5258 = vunpack.c.0.s8 %v5257
        %v5259 = vlaneseq
        %v5260 = vshrl.u32 %v5259, 7
        %v5261 = vsub.s32 %v5258, %v5260
        %v5262 = vrot.slane %v5234, %v5261
        %v5263 = vcombine.low %v5241, %v5248
        %v5264 = vcombine.low %v5255, %v5262
        %v5266 = vunpack.c.l.s4 1966171168
        %v5267 = vunpack.c.0.s8 %v5266
        %v5268 = vlaneseq
        %v5269 = vshrl.u32 %v5268, 7
        %v5270 = vsub.s32 %v5267, %v5269
        %v5271 = vrot.slane %v5263, %v5270
        %v5273 = vunpack.c.l.s4 1966171168
        %v5274 = vunpack.c.0.s8 %v5273
        %v5275 = vlaneseq
        %v5276 = vshrl.u32 %v5275, 7
        %v5277 = vsub.s32 %v5274, %v5276
        %v5278 = vrot.slane %v5264, %v5277
        %v5279 = vcombine.low %v5271, %v5278
        %v5280 = vcombine.low %v3167, %v3171
        %v5281 = vcombine.low %v3175, %v3179
        %v5282 = vcombine.low %v3183, %v3187
        %v5283 = vcombine.low %v3191, %v3195
        %v5285 = vunpack.c.l.s4 1966171168
        %v5286 = vunpack.c.0.s8 %v5285
        %v5287 = vlaneseq
        %v5288 = vshrl.u32 %v5287, 7
        %v5289 = vsub.s32 %v5286, %v5288
        %v5290 = vrot.slane %v5280, %v5289
        %v5292 = vunpack.c.l.s4 1966171168
        %v5293 = vunpack.c.0.s8 %v5292
        %v5294 = vlaneseq
        %v5295 = vshrl.u32 %v5294, 7
        %v5296 = vsub.s32 %v5293, %v5295
        %v5297 = vrot.slane %v5281, %v5296
        %v5299 = vunpack.c.l.s4 1966171168
        %v5300 = vunpack.c.0.s8 %v5299
        %v5301 = vlaneseq
        %v5302 = vshrl.u32 %v5301, 7
        %v5303 = vsub.s32 %v5300, %v5302
        %v5304 = vrot.slane %v5282, %v5303
        %v5306 = vunpack.c.l.s4 1966171168
        %v5307 = vunpack.c.0.s8 %v5306
        %v5308 = vlaneseq
        %v5309 = vshrl.u32 %v5308, 7
        %v5310 = vsub.s32 %v5307, %v5309
        %v5311 = vrot.slane %v5283, %v5310
        %v5312 = vcombine.low %v5290, %v5297
        %v5313 = vcombine.low %v5304, %v5311
        %v5315 = vunpack.c.l.s4 1966171168
        %v5316 = vunpack.c.0.s8 %v5315
        %v5317 = vlaneseq
        %v5318 = vshrl.u32 %v5317, 7
        %v5319 = vsub.s32 %v5316, %v5318
        %v5320 = vrot.slane %v5312, %v5319
        %v5322 = vunpack.c.l.s4 1966171168
        %v5323 = vunpack.c.0.s8 %v5322
        %v5324 = vlaneseq
        %v5325 = vshrl.u32 %v5324, 7
        %v5326 = vsub.s32 %v5323, %v5325
        %v5327 = vrot.slane %v5313, %v5326
        %v5328 = vcombine.low %v5320, %v5327
        %v5329 = vcombine.low %v3199, %v3203
        %v5330 = vcombine.low %v3207, %v3211
        %v5331 = vcombine.low %v3215, %v3219
        %v5332 = vcombine.low %v3223, %v3227
        %v5334 = vunpack.c.l.s4 1966171168
        %v5335 = vunpack.c.0.s8 %v5334
        %v5336 = vlaneseq
        %v5337 = vshrl.u32 %v5336, 7
        %v5338 = vsub.s32 %v5335, %v5337
        %v5339 = vrot.slane %v5329, %v5338
        %v5341 = vunpack.c.l.s4 1966171168
        %v5342 = vunpack.c.0.s8 %v5341
        %v5343 = vlaneseq
        %v5344 = vshrl.u32 %v5343, 7
        %v5345 = vsub.s32 %v5342, %v5344
        %v5346 = vrot.slane %v5330, %v5345
        %v5348 = vunpack.c.l.s4 1966171168
        %v5349 = vunpack.c.0.s8 %v5348
        %v5350 = vlaneseq
        %v5351 = vshrl.u32 %v5350, 7
        %v5352 = vsub.s32 %v5349, %v5351
        %v5353 = vrot.slane %v5331, %v5352
        %v5355 = vunpack.c.l.s4 1966171168
        %v5356 = vunpack.c.0.s8 %v5355
        %v5357 = vlaneseq
        %v5358 = vshrl.u32 %v5357, 7
        %v5359 = vsub.s32 %v5356, %v5358
        %v5360 = vrot.slane %v5332, %v5359
        %v5361 = vcombine.low %v5339, %v5346
        %v5362 = vcombine.low %v5353, %v5360
        %v5364 = vunpack.c.l.s4 1966171168
        %v5365 = vunpack.c.0.s8 %v5364
        %v5366 = vlaneseq
        %v5367 = vshrl.u32 %v5366, 7
        %v5368 = vsub.s32 %v5365, %v5367
        %v5369 = vrot.slane %v5361, %v5368
        %v5371 = vunpack.c.l.s4 1966171168
        %v5372 = vunpack.c.0.s8 %v5371
        %v5373 = vlaneseq
        %v5374 = vshrl.u32 %v5373, 7
        %v5375 = vsub.s32 %v5372, %v5374
        %v5376 = vrot.slane %v5362, %v5375
        %v5377 = vcombine.low %v5369, %v5376
        %v5378 = vcombine.low %v3231, %v3235
        %v5379 = vcombine.low %v3239, %v3243
        %v5380 = vcombine.low %v3247, %v3251
        %v5381 = vcombine.low %v3255, %v3259
        %v5383 = vunpack.c.l.s4 1966171168
        %v5384 = vunpack.c.0.s8 %v5383
        %v5385 = vlaneseq
        %v5386 = vshrl.u32 %v5385, 7
        %v5387 = vsub.s32 %v5384, %v5386
        %v5388 = vrot.slane %v5378, %v5387
        %v5390 = vunpack.c.l.s4 1966171168
        %v5391 = vunpack.c.0.s8 %v5390
        %v5392 = vlaneseq
        %v5393 = vshrl.u32 %v5392, 7
        %v5394 = vsub.s32 %v5391, %v5393
        %v5395 = vrot.slane %v5379, %v5394
        %v5397 = vunpack.c.l.s4 1966171168
        %v5398 = vunpack.c.0.s8 %v5397
        %v5399 = vlaneseq
        %v5400 = vshrl.u32 %v5399, 7
        %v5401 = vsub.s32 %v5398, %v5400
        %v5402 = vrot.slane %v5380, %v5401
        %v5404 = vunpack.c.l.s4 1966171168
        %v5405 = vunpack.c.0.s8 %v5404
        %v5406 = vlaneseq
        %v5407 = vshrl.u32 %v5406, 7
        %v5408 = vsub.s32 %v5405, %v5407
        %v5409 = vrot.slane %v5381, %v5408
        %v5410 = vcombine.low %v5388, %v5395
        %v5411 = vcombine.low %v5402, %v5409
        %v5413 = vunpack.c.l.s4 1966171168
        %v5414 = vunpack.c.0.s8 %v5413
        %v5415 = vlaneseq
        %v5416 = vshrl.u32 %v5415, 7
        %v5417 = vsub.s32 %v5414, %v5416
        %v5418 = vrot.slane %v5410, %v5417
        %v5420 = vunpack.c.l.s4 1966171168
        %v5421 = vunpack.c.0.s8 %v5420
        %v5422 = vlaneseq
        %v5423 = vshrl.u32 %v5422, 7
        %v5424 = vsub.s32 %v5421, %v5423
        %v5425 = vrot.slane %v5411, %v5424
        %v5426 = vcombine.low %v5418, %v5425
        %v5427 = vcombine.low %v3263, %v3267
        %v5428 = vcombine.low %v3271, %v3275
        %v5429 = vcombine.low %v3279, %v3283
        %v5430 = vcombine.low %v3287, %v3291
        %v5432 = vunpack.c.l.s4 1966171168
        %v5433 = vunpack.c.0.s8 %v5432
        %v5434 = vlaneseq
        %v5435 = vshrl.u32 %v5434, 7
        %v5436 = vsub.s32 %v5433, %v5435
        %v5437 = vrot.slane %v5427, %v5436
        %v5439 = vunpack.c.l.s4 1966171168
        %v5440 = vunpack.c.0.s8 %v5439
        %v5441 = vlaneseq
        %v5442 = vshrl.u32 %v5441, 7
        %v5443 = vsub.s32 %v5440, %v5442
        %v5444 = vrot.slane %v5428, %v5443
        %v5446 = vunpack.c.l.s4 1966171168
        %v5447 = vunpack.c.0.s8 %v5446
        %v5448 = vlaneseq
        %v5449 = vshrl.u32 %v5448, 7
        %v5450 = vsub.s32 %v5447, %v5449
        %v5451 = vrot.slane %v5429, %v5450
        %v5453 = vunpack.c.l.s4 1966171168
        %v5454 = vunpack.c.0.s8 %v5453
        %v5455 = vlaneseq
        %v5456 = vshrl.u32 %v5455, 7
        %v5457 = vsub.s32 %v5454, %v5456
        %v5458 = vrot.slane %v5430, %v5457
        %v5459 = vcombine.low %v5437, %v5444
        %v5460 = vcombine.low %v5451, %v5458
        %v5462 = vunpack.c.l.s4 1966171168
        %v5463 = vunpack.c.0.s8 %v5462
        %v5464 = vlaneseq
        %v5465 = vshrl.u32 %v5464, 7
        %v5466 = vsub.s32 %v5463, %v5465
        %v5467 = vrot.slane %v5459, %v5466
        %v5469 = vunpack.c.l.s4 1966171168
        %v5470 = vunpack.c.0.s8 %v5469
        %v5471 = vlaneseq
        %v5472 = vshrl.u32 %v5471, 7
        %v5473 = vsub.s32 %v5470, %v5472
        %v5474 = vrot.slane %v5460, %v5473
        %v5475 = vcombine.low %v5467, %v5474
        %v5476 = vcombine.low %v3295, %v3299
        %v5477 = vcombine.low %v3303, %v3307
        %v5478 = vcombine.low %v3311, %v3315
        %v5479 = vcombine.low %v3319, %v3323
        %v5481 = vunpack.c.l.s4 1966171168
        %v5482 = vunpack.c.0.s8 %v5481
        %v5483 = vlaneseq
        %v5484 = vshrl.u32 %v5483, 7
        %v5485 = vsub.s32 %v5482, %v5484
        %v5486 = vrot.slane %v5476, %v5485
        %v5488 = vunpack.c.l.s4 1966171168
        %v5489 = vunpack.c.0.s8 %v5488
        %v5490 = vlaneseq
        %v5491 = vshrl.u32 %v5490, 7
        %v5492 = vsub.s32 %v5489, %v5491
        %v5493 = vrot.slane %v5477, %v5492
        %v5495 = vunpack.c.l.s4 1966171168
        %v5496 = vunpack.c.0.s8 %v5495
        %v5497 = vlaneseq
        %v5498 = vshrl.u32 %v5497, 7
        %v5499 = vsub.s32 %v5496, %v5498
        %v5500 = vrot.slane %v5478, %v5499
        %v5502 = vunpack.c.l.s4 1966171168
        %v5503 = vunpack.c.0.s8 %v5502
        %v5504 = vlaneseq
        %v5505 = vshrl.u32 %v5504, 7
        %v5506 = vsub.s32 %v5503, %v5505
        %v5507 = vrot.slane %v5479, %v5506
        %v5508 = vcombine.low %v5486, %v5493
        %v5509 = vcombine.low %v5500, %v5507
        %v5511 = vunpack.c.l.s4 1966171168
        %v5512 = vunpack.c.0.s8 %v5511
        %v5513 = vlaneseq
        %v5514 = vshrl.u32 %v5513, 7
        %v5515 = vsub.s32 %v5512, %v5514
        %v5516 = vrot.slane %v5508, %v5515
        %v5518 = vunpack.c.l.s4 1966171168
        %v5519 = vunpack.c.0.s8 %v5518
        %v5520 = vlaneseq
        %v5521 = vshrl.u32 %v5520, 7
        %v5522 = vsub.s32 %v5519, %v5521
        %v5523 = vrot.slane %v5509, %v5522
        %v5524 = vcombine.low %v5516, %v5523
        %v5525 = vcombine.low %v3327, %v3331
        %v5526 = vcombine.low %v3335, %v3339
        %v5527 = vcombine.low %v3343, %v3347
        %v5528 = vcombine.low %v3351, %v3355
        %v5530 = vunpack.c.l.s4 1966171168
        %v5531 = vunpack.c.0.s8 %v5530
        %v5532 = vlaneseq
        %v5533 = vshrl.u32 %v5532, 7
        %v5534 = vsub.s32 %v5531, %v5533
        %v5535 = vrot.slane %v5525, %v5534
        %v5537 = vunpack.c.l.s4 1966171168
        %v5538 = vunpack.c.0.s8 %v5537
        %v5539 = vlaneseq
        %v5540 = vshrl.u32 %v5539, 7
        %v5541 = vsub.s32 %v5538, %v5540
        %v5542 = vrot.slane %v5526, %v5541
        %v5544 = vunpack.c.l.s4 1966171168
        %v5545 = vunpack.c.0.s8 %v5544
        %v5546 = vlaneseq
        %v5547 = vshrl.u32 %v5546, 7
        %v5548 = vsub.s32 %v5545, %v5547
        %v5549 = vrot.slane %v5527, %v5548
        %v5551 = vunpack.c.l.s4 1966171168
        %v5552 = vunpack.c.0.s8 %v5551
        %v5553 = vlaneseq
        %v5554 = vshrl.u32 %v5553, 7
        %v5555 = vsub.s32 %v5552, %v5554
        %v5556 = vrot.slane %v5528, %v5555
        %v5557 = vcombine.low %v5535, %v5542
        %v5558 = vcombine.low %v5549, %v5556
        %v5560 = vunpack.c.l.s4 1966171168
        %v5561 = vunpack.c.0.s8 %v5560
        %v5562 = vlaneseq
        %v5563 = vshrl.u32 %v5562, 7
        %v5564 = vsub.s32 %v5561, %v5563
        %v5565 = vrot.slane %v5557, %v5564
        %v5567 = vunpack.c.l.s4 1966171168
        %v5568 = vunpack.c.0.s8 %v5567
        %v5569 = vlaneseq
        %v5570 = vshrl.u32 %v5569, 7
        %v5571 = vsub.s32 %v5568, %v5570
        %v5572 = vrot.slane %v5558, %v5571
        %v5573 = vcombine.low %v5565, %v5572
        %v5574 = vcombine.low %v3359, %v3363
        %v5575 = vcombine.low %v3367, %v3371
        %v5576 = vcombine.low %v3375, %v3379
        %v5577 = vcombine.low %v3383, %v3387
        %v5579 = vunpack.c.l.s4 1966171168
        %v5580 = vunpack.c.0.s8 %v5579
        %v5581 = vlaneseq
        %v5582 = vshrl.u32 %v5581, 7
        %v5583 = vsub.s32 %v5580, %v5582
        %v5584 = vrot.slane %v5574, %v5583
        %v5586 = vunpack.c.l.s4 1966171168
        %v5587 = vunpack.c.0.s8 %v5586
        %v5588 = vlaneseq
        %v5589 = vshrl.u32 %v5588, 7
        %v5590 = vsub.s32 %v5587, %v5589
        %v5591 = vrot.slane %v5575, %v5590
        %v5593 = vunpack.c.l.s4 1966171168
        %v5594 = vunpack.c.0.s8 %v5593
        %v5595 = vlaneseq
        %v5596 = vshrl.u32 %v5595, 7
        %v5597 = vsub.s32 %v5594, %v5596
        %v5598 = vrot.slane %v5576, %v5597
        %v5600 = vunpack.c.l.s4 1966171168
        %v5601 = vunpack.c.0.s8 %v5600
        %v5602 = vlaneseq
        %v5603 = vshrl.u32 %v5602, 7
        %v5604 = vsub.s32 %v5601, %v5603
        %v5605 = vrot.slane %v5577, %v5604
        %v5606 = vcombine.low %v5584, %v5591
        %v5607 = vcombine.low %v5598, %v5605
        %v5609 = vunpack.c.l.s4 1966171168
        %v5610 = vunpack.c.0.s8 %v5609
        %v5611 = vlaneseq
        %v5612 = vshrl.u32 %v5611, 7
        %v5613 = vsub.s32 %v5610, %v5612
        %v5614 = vrot.slane %v5606, %v5613
        %v5616 = vunpack.c.l.s4 1966171168
        %v5617 = vunpack.c.0.s8 %v5616
        %v5618 = vlaneseq
        %v5619 = vshrl.u32 %v5618, 7
        %v5620 = vsub.s32 %v5617, %v5619
        %v5621 = vrot.slane %v5607, %v5620
        %v5622 = vcombine.low %v5614, %v5621
        %v5623 = vcombine.low %v3391, %v3395
        %v5624 = vcombine.low %v3399, %v3403
        %v5625 = vcombine.low %v3407, %v3411
        %v5626 = vcombine.low %v3415, %v3419
        %v5628 = vunpack.c.l.s4 1966171168
        %v5629 = vunpack.c.0.s8 %v5628
        %v5630 = vlaneseq
        %v5631 = vshrl.u32 %v5630, 7
        %v5632 = vsub.s32 %v5629, %v5631
        %v5633 = vrot.slane %v5623, %v5632
        %v5635 = vunpack.c.l.s4 1966171168
        %v5636 = vunpack.c.0.s8 %v5635
        %v5637 = vlaneseq
        %v5638 = vshrl.u32 %v5637, 7
        %v5639 = vsub.s32 %v5636, %v5638
        %v5640 = vrot.slane %v5624, %v5639
        %v5642 = vunpack.c.l.s4 1966171168
        %v5643 = vunpack.c.0.s8 %v5642
        %v5644 = vlaneseq
        %v5645 = vshrl.u32 %v5644, 7
        %v5646 = vsub.s32 %v5643, %v5645
        %v5647 = vrot.slane %v5625, %v5646
        %v5649 = vunpack.c.l.s4 1966171168
        %v5650 = vunpack.c.0.s8 %v5649
        %v5651 = vlaneseq
        %v5652 = vshrl.u32 %v5651, 7
        %v5653 = vsub.s32 %v5650, %v5652
        %v5654 = vrot.slane %v5626, %v5653
        %v5655 = vcombine.low %v5633, %v5640
        %v5656 = vcombine.low %v5647, %v5654
        %v5658 = vunpack.c.l.s4 1966171168
        %v5659 = vunpack.c.0.s8 %v5658
        %v5660 = vlaneseq
        %v5661 = vshrl.u32 %v5660, 7
        %v5662 = vsub.s32 %v5659, %v5661
        %v5663 = vrot.slane %v5655, %v5662
        %v5665 = vunpack.c.l.s4 1966171168
        %v5666 = vunpack.c.0.s8 %v5665
        %v5667 = vlaneseq
        %v5668 = vshrl.u32 %v5667, 7
        %v5669 = vsub.s32 %v5666, %v5668
        %v5670 = vrot.slane %v5656, %v5669
        %v5671 = vcombine.low %v5663, %v5670
        %v5672 = vcombine.low %v3423, %v3427
        %v5673 = vcombine.low %v3431, %v3435
        %v5674 = vcombine.low %v3439, %v3443
        %v5675 = vcombine.low %v3447, %v3451
        %v5677 = vunpack.c.l.s4 1966171168
        %v5678 = vunpack.c.0.s8 %v5677
        %v5679 = vlaneseq
        %v5680 = vshrl.u32 %v5679, 7
        %v5681 = vsub.s32 %v5678, %v5680
        %v5682 = vrot.slane %v5672, %v5681
        %v5684 = vunpack.c.l.s4 1966171168
        %v5685 = vunpack.c.0.s8 %v5684
        %v5686 = vlaneseq
        %v5687 = vshrl.u32 %v5686, 7
        %v5688 = vsub.s32 %v5685, %v5687
        %v5689 = vrot.slane %v5673, %v5688
        %v5691 = vunpack.c.l.s4 1966171168
        %v5692 = vunpack.c.0.s8 %v5691
        %v5693 = vlaneseq
        %v5694 = vshrl.u32 %v5693, 7
        %v5695 = vsub.s32 %v5692, %v5694
        %v5696 = vrot.slane %v5674, %v5695
        %v5698 = vunpack.c.l.s4 1966171168
        %v5699 = vunpack.c.0.s8 %v5698
        %v5700 = vlaneseq
        %v5701 = vshrl.u32 %v5700, 7
        %v5702 = vsub.s32 %v5699, %v5701
        %v5703 = vrot.slane %v5675, %v5702
        %v5704 = vcombine.low %v5682, %v5689
        %v5705 = vcombine.low %v5696, %v5703
        %v5707 = vunpack.c.l.s4 1966171168
        %v5708 = vunpack.c.0.s8 %v5707
        %v5709 = vlaneseq
        %v5710 = vshrl.u32 %v5709, 7
        %v5711 = vsub.s32 %v5708, %v5710
        %v5712 = vrot.slane %v5704, %v5711
        %v5714 = vunpack.c.l.s4 1966171168
        %v5715 = vunpack.c.0.s8 %v5714
        %v5716 = vlaneseq
        %v5717 = vshrl.u32 %v5716, 7
        %v5718 = vsub.s32 %v5715, %v5717
        %v5719 = vrot.slane %v5705, %v5718
        %v5720 = vcombine.low %v5712, %v5719
        %v5721 = vcombine.low %v3455, %v3459
        %v5722 = vcombine.low %v3463, %v3467
        %v5723 = vcombine.low %v3471, %v3475
        %v5724 = vcombine.low %v3479, %v3483
        %v5726 = vunpack.c.l.s4 1966171168
        %v5727 = vunpack.c.0.s8 %v5726
        %v5728 = vlaneseq
        %v5729 = vshrl.u32 %v5728, 7
        %v5730 = vsub.s32 %v5727, %v5729
        %v5731 = vrot.slane %v5721, %v5730
        %v5733 = vunpack.c.l.s4 1966171168
        %v5734 = vunpack.c.0.s8 %v5733
        %v5735 = vlaneseq
        %v5736 = vshrl.u32 %v5735, 7
        %v5737 = vsub.s32 %v5734, %v5736
        %v5738 = vrot.slane %v5722, %v5737
        %v5740 = vunpack.c.l.s4 1966171168
        %v5741 = vunpack.c.0.s8 %v5740
        %v5742 = vlaneseq
        %v5743 = vshrl.u32 %v5742, 7
        %v5744 = vsub.s32 %v5741, %v5743
        %v5745 = vrot.slane %v5723, %v5744
        %v5747 = vunpack.c.l.s4 1966171168
        %v5748 = vunpack.c.0.s8 %v5747
        %v5749 = vlaneseq
        %v5750 = vshrl.u32 %v5749, 7
        %v5751 = vsub.s32 %v5748, %v5750
        %v5752 = vrot.slane %v5724, %v5751
        %v5753 = vcombine.low %v5731, %v5738
        %v5754 = vcombine.low %v5745, %v5752
        %v5756 = vunpack.c.l.s4 1966171168
        %v5757 = vunpack.c.0.s8 %v5756
        %v5758 = vlaneseq
        %v5759 = vshrl.u32 %v5758, 7
        %v5760 = vsub.s32 %v5757, %v5759
        %v5761 = vrot.slane %v5753, %v5760
        %v5763 = vunpack.c.l.s4 1966171168
        %v5764 = vunpack.c.0.s8 %v5763
        %v5765 = vlaneseq
        %v5766 = vshrl.u32 %v5765, 7
        %v5767 = vsub.s32 %v5764, %v5766
        %v5768 = vrot.slane %v5754, %v5767
        %v5769 = vcombine.low %v5761, %v5768
        %v5770 = vcombine.low %v3487, %v3491
        %v5771 = vcombine.low %v3495, %v3499
        %v5772 = vcombine.low %v3503, %v3507
        %v5773 = vcombine.low %v3511, %v3515
        %v5775 = vunpack.c.l.s4 1966171168
        %v5776 = vunpack.c.0.s8 %v5775
        %v5777 = vlaneseq
        %v5778 = vshrl.u32 %v5777, 7
        %v5779 = vsub.s32 %v5776, %v5778
        %v5780 = vrot.slane %v5770, %v5779
        %v5782 = vunpack.c.l.s4 1966171168
        %v5783 = vunpack.c.0.s8 %v5782
        %v5784 = vlaneseq
        %v5785 = vshrl.u32 %v5784, 7
        %v5786 = vsub.s32 %v5783, %v5785
        %v5787 = vrot.slane %v5771, %v5786
        %v5789 = vunpack.c.l.s4 1966171168
        %v5790 = vunpack.c.0.s8 %v5789
        %v5791 = vlaneseq
        %v5792 = vshrl.u32 %v5791, 7
        %v5793 = vsub.s32 %v5790, %v5792
        %v5794 = vrot.slane %v5772, %v5793
        %v5796 = vunpack.c.l.s4 1966171168
        %v5797 = vunpack.c.0.s8 %v5796
        %v5798 = vlaneseq
        %v5799 = vshrl.u32 %v5798, 7
        %v5800 = vsub.s32 %v5797, %v5799
        %v5801 = vrot.slane %v5773, %v5800
        %v5802 = vcombine.low %v5780, %v5787
        %v5803 = vcombine.low %v5794, %v5801
        %v5805 = vunpack.c.l.s4 1966171168
        %v5806 = vunpack.c.0.s8 %v5805
        %v5807 = vlaneseq
        %v5808 = vshrl.u32 %v5807, 7
        %v5809 = vsub.s32 %v5806, %v5808
        %v5810 = vrot.slane %v5802, %v5809
        %v5812 = vunpack.c.l.s4 1966171168
        %v5813 = vunpack.c.0.s8 %v5812
        %v5814 = vlaneseq
        %v5815 = vshrl.u32 %v5814, 7
        %v5816 = vsub.s32 %v5813, %v5815
        %v5817 = vrot.slane %v5803, %v5816
        %v5818 = vcombine.low %v5810, %v5817
        %v5819 = vcombine.low %v3519, %v3523
        %v5820 = vcombine.low %v3527, %v3531
        %v5821 = vcombine.low %v3535, %v3539
        %v5822 = vcombine.low %v3543, %v3547
        %v5824 = vunpack.c.l.s4 1966171168
        %v5825 = vunpack.c.0.s8 %v5824
        %v5826 = vlaneseq
        %v5827 = vshrl.u32 %v5826, 7
        %v5828 = vsub.s32 %v5825, %v5827
        %v5829 = vrot.slane %v5819, %v5828
        %v5831 = vunpack.c.l.s4 1966171168
        %v5832 = vunpack.c.0.s8 %v5831
        %v5833 = vlaneseq
        %v5834 = vshrl.u32 %v5833, 7
        %v5835 = vsub.s32 %v5832, %v5834
        %v5836 = vrot.slane %v5820, %v5835
        %v5838 = vunpack.c.l.s4 1966171168
        %v5839 = vunpack.c.0.s8 %v5838
        %v5840 = vlaneseq
        %v5841 = vshrl.u32 %v5840, 7
        %v5842 = vsub.s32 %v5839, %v5841
        %v5843 = vrot.slane %v5821, %v5842
        %v5845 = vunpack.c.l.s4 1966171168
        %v5846 = vunpack.c.0.s8 %v5845
        %v5847 = vlaneseq
        %v5848 = vshrl.u32 %v5847, 7
        %v5849 = vsub.s32 %v5846, %v5848
        %v5850 = vrot.slane %v5822, %v5849
        %v5851 = vcombine.low %v5829, %v5836
        %v5852 = vcombine.low %v5843, %v5850
        %v5854 = vunpack.c.l.s4 1966171168
        %v5855 = vunpack.c.0.s8 %v5854
        %v5856 = vlaneseq
        %v5857 = vshrl.u32 %v5856, 7
        %v5858 = vsub.s32 %v5855, %v5857
        %v5859 = vrot.slane %v5851, %v5858
        %v5861 = vunpack.c.l.s4 1966171168
        %v5862 = vunpack.c.0.s8 %v5861
        %v5863 = vlaneseq
        %v5864 = vshrl.u32 %v5863, 7
        %v5865 = vsub.s32 %v5862, %v5864
        %v5866 = vrot.slane %v5852, %v5865
        %v5867 = vcombine.low %v5859, %v5866
        %v5868 = vcombine.low %v3551, %v3555
        %v5869 = vcombine.low %v3559, %v3563
        %v5870 = vcombine.low %v3567, %v3571
        %v5871 = vcombine.low %v3575, %v3579
        %v5873 = vunpack.c.l.s4 1966171168
        %v5874 = vunpack.c.0.s8 %v5873
        %v5875 = vlaneseq
        %v5876 = vshrl.u32 %v5875, 7
        %v5877 = vsub.s32 %v5874, %v5876
        %v5878 = vrot.slane %v5868, %v5877
        %v5880 = vunpack.c.l.s4 1966171168
        %v5881 = vunpack.c.0.s8 %v5880
        %v5882 = vlaneseq
        %v5883 = vshrl.u32 %v5882, 7
        %v5884 = vsub.s32 %v5881, %v5883
        %v5885 = vrot.slane %v5869, %v5884
        %v5887 = vunpack.c.l.s4 1966171168
        %v5888 = vunpack.c.0.s8 %v5887
        %v5889 = vlaneseq
        %v5890 = vshrl.u32 %v5889, 7
        %v5891 = vsub.s32 %v5888, %v5890
        %v5892 = vrot.slane %v5870, %v5891
        %v5894 = vunpack.c.l.s4 1966171168
        %v5895 = vunpack.c.0.s8 %v5894
        %v5896 = vlaneseq
        %v5897 = vshrl.u32 %v5896, 7
        %v5898 = vsub.s32 %v5895, %v5897
        %v5899 = vrot.slane %v5871, %v5898
        %v5900 = vcombine.low %v5878, %v5885
        %v5901 = vcombine.low %v5892, %v5899
        %v5903 = vunpack.c.l.s4 1966171168
        %v5904 = vunpack.c.0.s8 %v5903
        %v5905 = vlaneseq
        %v5906 = vshrl.u32 %v5905, 7
        %v5907 = vsub.s32 %v5904, %v5906
        %v5908 = vrot.slane %v5900, %v5907
        %v5910 = vunpack.c.l.s4 1966171168
        %v5911 = vunpack.c.0.s8 %v5910
        %v5912 = vlaneseq
        %v5913 = vshrl.u32 %v5912, 7
        %v5914 = vsub.s32 %v5911, %v5913
        %v5915 = vrot.slane %v5901, %v5914
        %v5916 = vcombine.low %v5908, %v5915
        %v5917 = vcombine.low %v3583, %v3587
        %v5918 = vcombine.low %v3591, %v3595
        %v5919 = vcombine.low %v3599, %v3603
        %v5920 = vcombine.low %v3607, %v3611
        %v5922 = vunpack.c.l.s4 1966171168
        %v5923 = vunpack.c.0.s8 %v5922
        %v5924 = vlaneseq
        %v5925 = vshrl.u32 %v5924, 7
        %v5926 = vsub.s32 %v5923, %v5925
        %v5927 = vrot.slane %v5917, %v5926
        %v5929 = vunpack.c.l.s4 1966171168
        %v5930 = vunpack.c.0.s8 %v5929
        %v5931 = vlaneseq
        %v5932 = vshrl.u32 %v5931, 7
        %v5933 = vsub.s32 %v5930, %v5932
        %v5934 = vrot.slane %v5918, %v5933
        %v5936 = vunpack.c.l.s4 1966171168
        %v5937 = vunpack.c.0.s8 %v5936
        %v5938 = vlaneseq
        %v5939 = vshrl.u32 %v5938, 7
        %v5940 = vsub.s32 %v5937, %v5939
        %v5941 = vrot.slane %v5919, %v5940
        %v5943 = vunpack.c.l.s4 1966171168
        %v5944 = vunpack.c.0.s8 %v5943
        %v5945 = vlaneseq
        %v5946 = vshrl.u32 %v5945, 7
        %v5947 = vsub.s32 %v5944, %v5946
        %v5948 = vrot.slane %v5920, %v5947
        %v5949 = vcombine.low %v5927, %v5934
        %v5950 = vcombine.low %v5941, %v5948
        %v5952 = vunpack.c.l.s4 1966171168
        %v5953 = vunpack.c.0.s8 %v5952
        %v5954 = vlaneseq
        %v5955 = vshrl.u32 %v5954, 7
        %v5956 = vsub.s32 %v5953, %v5955
        %v5957 = vrot.slane %v5949, %v5956
        %v5959 = vunpack.c.l.s4 1966171168
        %v5960 = vunpack.c.0.s8 %v5959
        %v5961 = vlaneseq
        %v5962 = vshrl.u32 %v5961, 7
        %v5963 = vsub.s32 %v5960, %v5962
        %v5964 = vrot.slane %v5950, %v5963
        %v5965 = vcombine.low %v5957, %v5964
        %v5966 = vcombine.low %v3615, %v3619
        %v5967 = vcombine.low %v3623, %v3627
        %v5968 = vcombine.low %v3631, %v3635
        %v5969 = vcombine.low %v3639, %v3643
        %v5971 = vunpack.c.l.s4 1966171168
        %v5972 = vunpack.c.0.s8 %v5971
        %v5973 = vlaneseq
        %v5974 = vshrl.u32 %v5973, 7
        %v5975 = vsub.s32 %v5972, %v5974
        %v5976 = vrot.slane %v5966, %v5975
        %v5978 = vunpack.c.l.s4 1966171168
        %v5979 = vunpack.c.0.s8 %v5978
        %v5980 = vlaneseq
        %v5981 = vshrl.u32 %v5980, 7
        %v5982 = vsub.s32 %v5979, %v5981
        %v5983 = vrot.slane %v5967, %v5982
        %v5985 = vunpack.c.l.s4 1966171168
        %v5986 = vunpack.c.0.s8 %v5985
        %v5987 = vlaneseq
        %v5988 = vshrl.u32 %v5987, 7
        %v5989 = vsub.s32 %v5986, %v5988
        %v5990 = vrot.slane %v5968, %v5989
        %v5992 = vunpack.c.l.s4 1966171168
        %v5993 = vunpack.c.0.s8 %v5992
        %v5994 = vlaneseq
        %v5995 = vshrl.u32 %v5994, 7
        %v5996 = vsub.s32 %v5993, %v5995
        %v5997 = vrot.slane %v5969, %v5996
        %v5998 = vcombine.low %v5976, %v5983
        %v5999 = vcombine.low %v5990, %v5997
        %v6001 = vunpack.c.l.s4 1966171168
        %v6002 = vunpack.c.0.s8 %v6001
        %v6003 = vlaneseq
        %v6004 = vshrl.u32 %v6003, 7
        %v6005 = vsub.s32 %v6002, %v6004
        %v6006 = vrot.slane %v5998, %v6005
        %v6008 = vunpack.c.l.s4 1966171168
        %v6009 = vunpack.c.0.s8 %v6008
        %v6010 = vlaneseq
        %v6011 = vshrl.u32 %v6010, 7
        %v6012 = vsub.s32 %v6009, %v6011
        %v6013 = vrot.slane %v5999, %v6012
        %v6014 = vcombine.low %v6006, %v6013
        %v6015 = vcombine.low %v3647, %v3651
        %v6016 = vcombine.low %v3655, %v3659
        %v6017 = vcombine.low %v3663, %v3667
        %v6018 = vcombine.low %v3671, %v3675
        %v6020 = vunpack.c.l.s4 1966171168
        %v6021 = vunpack.c.0.s8 %v6020
        %v6022 = vlaneseq
        %v6023 = vshrl.u32 %v6022, 7
        %v6024 = vsub.s32 %v6021, %v6023
        %v6025 = vrot.slane %v6015, %v6024
        %v6027 = vunpack.c.l.s4 1966171168
        %v6028 = vunpack.c.0.s8 %v6027
        %v6029 = vlaneseq
        %v6030 = vshrl.u32 %v6029, 7
        %v6031 = vsub.s32 %v6028, %v6030
        %v6032 = vrot.slane %v6016, %v6031
        %v6034 = vunpack.c.l.s4 1966171168
        %v6035 = vunpack.c.0.s8 %v6034
        %v6036 = vlaneseq
        %v6037 = vshrl.u32 %v6036, 7
        %v6038 = vsub.s32 %v6035, %v6037
        %v6039 = vrot.slane %v6017, %v6038
        %v6041 = vunpack.c.l.s4 1966171168
        %v6042 = vunpack.c.0.s8 %v6041
        %v6043 = vlaneseq
        %v6044 = vshrl.u32 %v6043, 7
        %v6045 = vsub.s32 %v6042, %v6044
        %v6046 = vrot.slane %v6018, %v6045
        %v6047 = vcombine.low %v6025, %v6032
        %v6048 = vcombine.low %v6039, %v6046
        %v6050 = vunpack.c.l.s4 1966171168
        %v6051 = vunpack.c.0.s8 %v6050
        %v6052 = vlaneseq
        %v6053 = vshrl.u32 %v6052, 7
        %v6054 = vsub.s32 %v6051, %v6053
        %v6055 = vrot.slane %v6047, %v6054
        %v6057 = vunpack.c.l.s4 1966171168
        %v6058 = vunpack.c.0.s8 %v6057
        %v6059 = vlaneseq
        %v6060 = vshrl.u32 %v6059, 7
        %v6061 = vsub.s32 %v6058, %v6060
        %v6062 = vrot.slane %v6048, %v6061
        %v6063 = vcombine.low %v6055, %v6062
        %v6064 = vcombine.low %v3679, %v3683
        %v6065 = vcombine.low %v3687, %v3691
        %v6066 = vcombine.low %v3695, %v3699
        %v6067 = vcombine.low %v3703, %v3707
        %v6069 = vunpack.c.l.s4 1966171168
        %v6070 = vunpack.c.0.s8 %v6069
        %v6071 = vlaneseq
        %v6072 = vshrl.u32 %v6071, 7
        %v6073 = vsub.s32 %v6070, %v6072
        %v6074 = vrot.slane %v6064, %v6073
        %v6076 = vunpack.c.l.s4 1966171168
        %v6077 = vunpack.c.0.s8 %v6076
        %v6078 = vlaneseq
        %v6079 = vshrl.u32 %v6078, 7
        %v6080 = vsub.s32 %v6077, %v6079
        %v6081 = vrot.slane %v6065, %v6080
        %v6083 = vunpack.c.l.s4 1966171168
        %v6084 = vunpack.c.0.s8 %v6083
        %v6085 = vlaneseq
        %v6086 = vshrl.u32 %v6085, 7
        %v6087 = vsub.s32 %v6084, %v6086
        %v6088 = vrot.slane %v6066, %v6087
        %v6090 = vunpack.c.l.s4 1966171168
        %v6091 = vunpack.c.0.s8 %v6090
        %v6092 = vlaneseq
        %v6093 = vshrl.u32 %v6092, 7
        %v6094 = vsub.s32 %v6091, %v6093
        %v6095 = vrot.slane %v6067, %v6094
        %v6096 = vcombine.low %v6074, %v6081
        %v6097 = vcombine.low %v6088, %v6095
        %v6099 = vunpack.c.l.s4 1966171168
        %v6100 = vunpack.c.0.s8 %v6099
        %v6101 = vlaneseq
        %v6102 = vshrl.u32 %v6101, 7
        %v6103 = vsub.s32 %v6100, %v6102
        %v6104 = vrot.slane %v6096, %v6103
        %v6106 = vunpack.c.l.s4 1966171168
        %v6107 = vunpack.c.0.s8 %v6106
        %v6108 = vlaneseq
        %v6109 = vshrl.u32 %v6108, 7
        %v6110 = vsub.s32 %v6107, %v6109
        %v6111 = vrot.slane %v6097, %v6110
        %v6112 = vcombine.low %v6104, %v6111
        %v6113 = vcombine.low %v3711, %v3715
        %v6114 = vcombine.low %v3719, %v3723
        %v6115 = vcombine.low %v3727, %v3731
        %v6116 = vcombine.low %v3735, %v3739
        %v6118 = vunpack.c.l.s4 1966171168
        %v6119 = vunpack.c.0.s8 %v6118
        %v6120 = vlaneseq
        %v6121 = vshrl.u32 %v6120, 7
        %v6122 = vsub.s32 %v6119, %v6121
        %v6123 = vrot.slane %v6113, %v6122
        %v6125 = vunpack.c.l.s4 1966171168
        %v6126 = vunpack.c.0.s8 %v6125
        %v6127 = vlaneseq
        %v6128 = vshrl.u32 %v6127, 7
        %v6129 = vsub.s32 %v6126, %v6128
        %v6130 = vrot.slane %v6114, %v6129
        %v6132 = vunpack.c.l.s4 1966171168
        %v6133 = vunpack.c.0.s8 %v6132
        %v6134 = vlaneseq
        %v6135 = vshrl.u32 %v6134, 7
        %v6136 = vsub.s32 %v6133, %v6135
        %v6137 = vrot.slane %v6115, %v6136
        %v6139 = vunpack.c.l.s4 1966171168
        %v6140 = vunpack.c.0.s8 %v6139
        %v6141 = vlaneseq
        %v6142 = vshrl.u32 %v6141, 7
        %v6143 = vsub.s32 %v6140, %v6142
        %v6144 = vrot.slane %v6116, %v6143
        %v6145 = vcombine.low %v6123, %v6130
        %v6146 = vcombine.low %v6137, %v6144
        %v6148 = vunpack.c.l.s4 1966171168
        %v6149 = vunpack.c.0.s8 %v6148
        %v6150 = vlaneseq
        %v6151 = vshrl.u32 %v6150, 7
        %v6152 = vsub.s32 %v6149, %v6151
        %v6153 = vrot.slane %v6145, %v6152
        %v6155 = vunpack.c.l.s4 1966171168
        %v6156 = vunpack.c.0.s8 %v6155
        %v6157 = vlaneseq
        %v6158 = vshrl.u32 %v6157, 7
        %v6159 = vsub.s32 %v6156, %v6158
        %v6160 = vrot.slane %v6146, %v6159
        %v6161 = vcombine.low %v6153, %v6160
        %v6162 = vcombine.low %v3743, %v3747
        %v6163 = vcombine.low %v3751, %v3755
        %v6164 = vcombine.low %v3759, %v3763
        %v6165 = vcombine.low %v3767, %v3771
        %v6167 = vunpack.c.l.s4 1966171168
        %v6168 = vunpack.c.0.s8 %v6167
        %v6169 = vlaneseq
        %v6170 = vshrl.u32 %v6169, 7
        %v6171 = vsub.s32 %v6168, %v6170
        %v6172 = vrot.slane %v6162, %v6171
        %v6174 = vunpack.c.l.s4 1966171168
        %v6175 = vunpack.c.0.s8 %v6174
        %v6176 = vlaneseq
        %v6177 = vshrl.u32 %v6176, 7
        %v6178 = vsub.s32 %v6175, %v6177
        %v6179 = vrot.slane %v6163, %v6178
        %v6181 = vunpack.c.l.s4 1966171168
        %v6182 = vunpack.c.0.s8 %v6181
        %v6183 = vlaneseq
        %v6184 = vshrl.u32 %v6183, 7
        %v6185 = vsub.s32 %v6182, %v6184
        %v6186 = vrot.slane %v6164, %v6185
        %v6188 = vunpack.c.l.s4 1966171168
        %v6189 = vunpack.c.0.s8 %v6188
        %v6190 = vlaneseq
        %v6191 = vshrl.u32 %v6190, 7
        %v6192 = vsub.s32 %v6189, %v6191
        %v6193 = vrot.slane %v6165, %v6192
        %v6194 = vcombine.low %v6172, %v6179
        %v6195 = vcombine.low %v6186, %v6193
        %v6197 = vunpack.c.l.s4 1966171168
        %v6198 = vunpack.c.0.s8 %v6197
        %v6199 = vlaneseq
        %v6200 = vshrl.u32 %v6199, 7
        %v6201 = vsub.s32 %v6198, %v6200
        %v6202 = vrot.slane %v6194, %v6201
        %v6204 = vunpack.c.l.s4 1966171168
        %v6205 = vunpack.c.0.s8 %v6204
        %v6206 = vlaneseq
        %v6207 = vshrl.u32 %v6206, 7
        %v6208 = vsub.s32 %v6205, %v6207
        %v6209 = vrot.slane %v6195, %v6208
        %v6210 = vcombine.low %v6202, %v6209
        %v6211 = vcombine.low %v3775, %v3779
        %v6212 = vcombine.low %v3783, %v3787
        %v6213 = vcombine.low %v3791, %v3795
        %v6214 = vcombine.low %v3799, %v3803
        %v6216 = vunpack.c.l.s4 1966171168
        %v6217 = vunpack.c.0.s8 %v6216
        %v6218 = vlaneseq
        %v6219 = vshrl.u32 %v6218, 7
        %v6220 = vsub.s32 %v6217, %v6219
        %v6221 = vrot.slane %v6211, %v6220
        %v6223 = vunpack.c.l.s4 1966171168
        %v6224 = vunpack.c.0.s8 %v6223
        %v6225 = vlaneseq
        %v6226 = vshrl.u32 %v6225, 7
        %v6227 = vsub.s32 %v6224, %v6226
        %v6228 = vrot.slane %v6212, %v6227
        %v6230 = vunpack.c.l.s4 1966171168
        %v6231 = vunpack.c.0.s8 %v6230
        %v6232 = vlaneseq
        %v6233 = vshrl.u32 %v6232, 7
        %v6234 = vsub.s32 %v6231, %v6233
        %v6235 = vrot.slane %v6213, %v6234
        %v6237 = vunpack.c.l.s4 1966171168
        %v6238 = vunpack.c.0.s8 %v6237
        %v6239 = vlaneseq
        %v6240 = vshrl.u32 %v6239, 7
        %v6241 = vsub.s32 %v6238, %v6240
        %v6242 = vrot.slane %v6214, %v6241
        %v6243 = vcombine.low %v6221, %v6228
        %v6244 = vcombine.low %v6235, %v6242
        %v6246 = vunpack.c.l.s4 1966171168
        %v6247 = vunpack.c.0.s8 %v6246
        %v6248 = vlaneseq
        %v6249 = vshrl.u32 %v6248, 7
        %v6250 = vsub.s32 %v6247, %v6249
        %v6251 = vrot.slane %v6243, %v6250
        %v6253 = vunpack.c.l.s4 1966171168
        %v6254 = vunpack.c.0.s8 %v6253
        %v6255 = vlaneseq
        %v6256 = vshrl.u32 %v6255, 7
        %v6257 = vsub.s32 %v6254, %v6256
        %v6258 = vrot.slane %v6244, %v6257
        %v6259 = vcombine.low %v6251, %v6258
        %v6260 = vcombine.low %v3807, %v3811
        %v6261 = vcombine.low %v3815, %v3819
        %v6262 = vcombine.low %v3823, %v3827
        %v6263 = vcombine.low %v3831, %v3835
        %v6265 = vunpack.c.l.s4 1966171168
        %v6266 = vunpack.c.0.s8 %v6265
        %v6267 = vlaneseq
        %v6268 = vshrl.u32 %v6267, 7
        %v6269 = vsub.s32 %v6266, %v6268
        %v6270 = vrot.slane %v6260, %v6269
        %v6272 = vunpack.c.l.s4 1966171168
        %v6273 = vunpack.c.0.s8 %v6272
        %v6274 = vlaneseq
        %v6275 = vshrl.u32 %v6274, 7
        %v6276 = vsub.s32 %v6273, %v6275
        %v6277 = vrot.slane %v6261, %v6276
        %v6279 = vunpack.c.l.s4 1966171168
        %v6280 = vunpack.c.0.s8 %v6279
        %v6281 = vlaneseq
        %v6282 = vshrl.u32 %v6281, 7
        %v6283 = vsub.s32 %v6280, %v6282
        %v6284 = vrot.slane %v6262, %v6283
        %v6286 = vunpack.c.l.s4 1966171168
        %v6287 = vunpack.c.0.s8 %v6286
        %v6288 = vlaneseq
        %v6289 = vshrl.u32 %v6288, 7
        %v6290 = vsub.s32 %v6287, %v6289
        %v6291 = vrot.slane %v6263, %v6290
        %v6292 = vcombine.low %v6270, %v6277
        %v6293 = vcombine.low %v6284, %v6291
        %v6295 = vunpack.c.l.s4 1966171168
        %v6296 = vunpack.c.0.s8 %v6295
        %v6297 = vlaneseq
        %v6298 = vshrl.u32 %v6297, 7
        %v6299 = vsub.s32 %v6296, %v6298
        %v6300 = vrot.slane %v6292, %v6299
        %v6302 = vunpack.c.l.s4 1966171168
        %v6303 = vunpack.c.0.s8 %v6302
        %v6304 = vlaneseq
        %v6305 = vshrl.u32 %v6304, 7
        %v6306 = vsub.s32 %v6303, %v6305
        %v6307 = vrot.slane %v6293, %v6306
        %v6308 = vcombine.low %v6300, %v6307
        %v6309 = vcombine.low %v3839, %v3843
        %v6310 = vcombine.low %v3847, %v3851
        %v6311 = vcombine.low %v3855, %v3859
        %v6312 = vcombine.low %v3863, %v3867
        %v6314 = vunpack.c.l.s4 1966171168
        %v6315 = vunpack.c.0.s8 %v6314
        %v6316 = vlaneseq
        %v6317 = vshrl.u32 %v6316, 7
        %v6318 = vsub.s32 %v6315, %v6317
        %v6319 = vrot.slane %v6309, %v6318
        %v6321 = vunpack.c.l.s4 1966171168
        %v6322 = vunpack.c.0.s8 %v6321
        %v6323 = vlaneseq
        %v6324 = vshrl.u32 %v6323, 7
        %v6325 = vsub.s32 %v6322, %v6324
        %v6326 = vrot.slane %v6310, %v6325
        %v6328 = vunpack.c.l.s4 1966171168
        %v6329 = vunpack.c.0.s8 %v6328
        %v6330 = vlaneseq
        %v6331 = vshrl.u32 %v6330, 7
        %v6332 = vsub.s32 %v6329, %v6331
        %v6333 = vrot.slane %v6311, %v6332
        %v6335 = vunpack.c.l.s4 1966171168
        %v6336 = vunpack.c.0.s8 %v6335
        %v6337 = vlaneseq
        %v6338 = vshrl.u32 %v6337, 7
        %v6339 = vsub.s32 %v6336, %v6338
        %v6340 = vrot.slane %v6312, %v6339
        %v6341 = vcombine.low %v6319, %v6326
        %v6342 = vcombine.low %v6333, %v6340
        %v6344 = vunpack.c.l.s4 1966171168
        %v6345 = vunpack.c.0.s8 %v6344
        %v6346 = vlaneseq
        %v6347 = vshrl.u32 %v6346, 7
        %v6348 = vsub.s32 %v6345, %v6347
        %v6349 = vrot.slane %v6341, %v6348
        %v6351 = vunpack.c.l.s4 1966171168
        %v6352 = vunpack.c.0.s8 %v6351
        %v6353 = vlaneseq
        %v6354 = vshrl.u32 %v6353, 7
        %v6355 = vsub.s32 %v6352, %v6354
        %v6356 = vrot.slane %v6342, %v6355
        %v6357 = vcombine.low %v6349, %v6356
        %v6358 = vcombine.low %v3871, %v3875
        %v6359 = vcombine.low %v3879, %v3883
        %v6360 = vcombine.low %v3887, %v3891
        %v6361 = vcombine.low %v3895, %v3899
        %v6363 = vunpack.c.l.s4 1966171168
        %v6364 = vunpack.c.0.s8 %v6363
        %v6365 = vlaneseq
        %v6366 = vshrl.u32 %v6365, 7
        %v6367 = vsub.s32 %v6364, %v6366
        %v6368 = vrot.slane %v6358, %v6367
        %v6370 = vunpack.c.l.s4 1966171168
        %v6371 = vunpack.c.0.s8 %v6370
        %v6372 = vlaneseq
        %v6373 = vshrl.u32 %v6372, 7
        %v6374 = vsub.s32 %v6371, %v6373
        %v6375 = vrot.slane %v6359, %v6374
        %v6377 = vunpack.c.l.s4 1966171168
        %v6378 = vunpack.c.0.s8 %v6377
        %v6379 = vlaneseq
        %v6380 = vshrl.u32 %v6379, 7
        %v6381 = vsub.s32 %v6378, %v6380
        %v6382 = vrot.slane %v6360, %v6381
        %v6384 = vunpack.c.l.s4 1966171168
        %v6385 = vunpack.c.0.s8 %v6384
        %v6386 = vlaneseq
        %v6387 = vshrl.u32 %v6386, 7
        %v6388 = vsub.s32 %v6385, %v6387
        %v6389 = vrot.slane %v6361, %v6388
        %v6390 = vcombine.low %v6368, %v6375
        %v6391 = vcombine.low %v6382, %v6389
        %v6393 = vunpack.c.l.s4 1966171168
        %v6394 = vunpack.c.0.s8 %v6393
        %v6395 = vlaneseq
        %v6396 = vshrl.u32 %v6395, 7
        %v6397 = vsub.s32 %v6394, %v6396
        %v6398 = vrot.slane %v6390, %v6397
        %v6400 = vunpack.c.l.s4 1966171168
        %v6401 = vunpack.c.0.s8 %v6400
        %v6402 = vlaneseq
        %v6403 = vshrl.u32 %v6402, 7
        %v6404 = vsub.s32 %v6401, %v6403
        %v6405 = vrot.slane %v6391, %v6404
        %v6406 = vcombine.low %v6398, %v6405
        %v6407 = vcombine.low %v3903, %v3907
        %v6408 = vcombine.low %v3911, %v3915
        %v6409 = vcombine.low %v3919, %v3923
        %v6410 = vcombine.low %v3927, %v3931
        %v6412 = vunpack.c.l.s4 1966171168
        %v6413 = vunpack.c.0.s8 %v6412
        %v6414 = vlaneseq
        %v6415 = vshrl.u32 %v6414, 7
        %v6416 = vsub.s32 %v6413, %v6415
        %v6417 = vrot.slane %v6407, %v6416
        %v6419 = vunpack.c.l.s4 1966171168
        %v6420 = vunpack.c.0.s8 %v6419
        %v6421 = vlaneseq
        %v6422 = vshrl.u32 %v6421, 7
        %v6423 = vsub.s32 %v6420, %v6422
        %v6424 = vrot.slane %v6408, %v6423
        %v6426 = vunpack.c.l.s4 1966171168
        %v6427 = vunpack.c.0.s8 %v6426
        %v6428 = vlaneseq
        %v6429 = vshrl.u32 %v6428, 7
        %v6430 = vsub.s32 %v6427, %v6429
        %v6431 = vrot.slane %v6409, %v6430
        %v6433 = vunpack.c.l.s4 1966171168
        %v6434 = vunpack.c.0.s8 %v6433
        %v6435 = vlaneseq
        %v6436 = vshrl.u32 %v6435, 7
        %v6437 = vsub.s32 %v6434, %v6436
        %v6438 = vrot.slane %v6410, %v6437
        %v6439 = vcombine.low %v6417, %v6424
        %v6440 = vcombine.low %v6431, %v6438
        %v6442 = vunpack.c.l.s4 1966171168
        %v6443 = vunpack.c.0.s8 %v6442
        %v6444 = vlaneseq
        %v6445 = vshrl.u32 %v6444, 7
        %v6446 = vsub.s32 %v6443, %v6445
        %v6447 = vrot.slane %v6439, %v6446
        %v6449 = vunpack.c.l.s4 1966171168
        %v6450 = vunpack.c.0.s8 %v6449
        %v6451 = vlaneseq
        %v6452 = vshrl.u32 %v6451, 7
        %v6453 = vsub.s32 %v6450, %v6452
        %v6454 = vrot.slane %v6440, %v6453
        %v6455 = vcombine.low %v6447, %v6454
        %v6456 = vcombine.low %v3935, %v3939
        %v6457 = vcombine.low %v3943, %v3947
        %v6458 = vcombine.low %v3951, %v3955
        %v6459 = vcombine.low %v3959, %v3963
        %v6461 = vunpack.c.l.s4 1966171168
        %v6462 = vunpack.c.0.s8 %v6461
        %v6463 = vlaneseq
        %v6464 = vshrl.u32 %v6463, 7
        %v6465 = vsub.s32 %v6462, %v6464
        %v6466 = vrot.slane %v6456, %v6465
        %v6468 = vunpack.c.l.s4 1966171168
        %v6469 = vunpack.c.0.s8 %v6468
        %v6470 = vlaneseq
        %v6471 = vshrl.u32 %v6470, 7
        %v6472 = vsub.s32 %v6469, %v6471
        %v6473 = vrot.slane %v6457, %v6472
        %v6475 = vunpack.c.l.s4 1966171168
        %v6476 = vunpack.c.0.s8 %v6475
        %v6477 = vlaneseq
        %v6478 = vshrl.u32 %v6477, 7
        %v6479 = vsub.s32 %v6476, %v6478
        %v6480 = vrot.slane %v6458, %v6479
        %v6482 = vunpack.c.l.s4 1966171168
        %v6483 = vunpack.c.0.s8 %v6482
        %v6484 = vlaneseq
        %v6485 = vshrl.u32 %v6484, 7
        %v6486 = vsub.s32 %v6483, %v6485
        %v6487 = vrot.slane %v6459, %v6486
        %v6488 = vcombine.low %v6466, %v6473
        %v6489 = vcombine.low %v6480, %v6487
        %v6491 = vunpack.c.l.s4 1966171168
        %v6492 = vunpack.c.0.s8 %v6491
        %v6493 = vlaneseq
        %v6494 = vshrl.u32 %v6493, 7
        %v6495 = vsub.s32 %v6492, %v6494
        %v6496 = vrot.slane %v6488, %v6495
        %v6498 = vunpack.c.l.s4 1966171168
        %v6499 = vunpack.c.0.s8 %v6498
        %v6500 = vlaneseq
        %v6501 = vshrl.u32 %v6500, 7
        %v6502 = vsub.s32 %v6499, %v6501
        %v6503 = vrot.slane %v6489, %v6502
        %v6504 = vcombine.low %v6496, %v6503
        %v6505 = vcombine.low %v3967, %v3971
        %v6506 = vcombine.low %v3975, %v3979
        %v6507 = vcombine.low %v3983, %v3987
        %v6508 = vcombine.low %v3991, %v3995
        %v6510 = vunpack.c.l.s4 1966171168
        %v6511 = vunpack.c.0.s8 %v6510
        %v6512 = vlaneseq
        %v6513 = vshrl.u32 %v6512, 7
        %v6514 = vsub.s32 %v6511, %v6513
        %v6515 = vrot.slane %v6505, %v6514
        %v6517 = vunpack.c.l.s4 1966171168
        %v6518 = vunpack.c.0.s8 %v6517
        %v6519 = vlaneseq
        %v6520 = vshrl.u32 %v6519, 7
        %v6521 = vsub.s32 %v6518, %v6520
        %v6522 = vrot.slane %v6506, %v6521
        %v6524 = vunpack.c.l.s4 1966171168
        %v6525 = vunpack.c.0.s8 %v6524
        %v6526 = vlaneseq
        %v6527 = vshrl.u32 %v6526, 7
        %v6528 = vsub.s32 %v6525, %v6527
        %v6529 = vrot.slane %v6507, %v6528
        %v6531 = vunpack.c.l.s4 1966171168
        %v6532 = vunpack.c.0.s8 %v6531
        %v6533 = vlaneseq
        %v6534 = vshrl.u32 %v6533, 7
        %v6535 = vsub.s32 %v6532, %v6534
        %v6536 = vrot.slane %v6508, %v6535
        %v6537 = vcombine.low %v6515, %v6522
        %v6538 = vcombine.low %v6529, %v6536
        %v6540 = vunpack.c.l.s4 1966171168
        %v6541 = vunpack.c.0.s8 %v6540
        %v6542 = vlaneseq
        %v6543 = vshrl.u32 %v6542, 7
        %v6544 = vsub.s32 %v6541, %v6543
        %v6545 = vrot.slane %v6537, %v6544
        %v6547 = vunpack.c.l.s4 1966171168
        %v6548 = vunpack.c.0.s8 %v6547
        %v6549 = vlaneseq
        %v6550 = vshrl.u32 %v6549, 7
        %v6551 = vsub.s32 %v6548, %v6550
        %v6552 = vrot.slane %v6538, %v6551
        %v6553 = vcombine.low %v6545, %v6552
        %v6554 = vcombine.low %v3999, %v4003
        %v6555 = vcombine.low %v4007, %v4011
        %v6556 = vcombine.low %v4015, %v4019
        %v6557 = vcombine.low %v4023, %v4027
        %v6559 = vunpack.c.l.s4 1966171168
        %v6560 = vunpack.c.0.s8 %v6559
        %v6561 = vlaneseq
        %v6562 = vshrl.u32 %v6561, 7
        %v6563 = vsub.s32 %v6560, %v6562
        %v6564 = vrot.slane %v6554, %v6563
        %v6566 = vunpack.c.l.s4 1966171168
        %v6567 = vunpack.c.0.s8 %v6566
        %v6568 = vlaneseq
        %v6569 = vshrl.u32 %v6568, 7
        %v6570 = vsub.s32 %v6567, %v6569
        %v6571 = vrot.slane %v6555, %v6570
        %v6573 = vunpack.c.l.s4 1966171168
        %v6574 = vunpack.c.0.s8 %v6573
        %v6575 = vlaneseq
        %v6576 = vshrl.u32 %v6575, 7
        %v6577 = vsub.s32 %v6574, %v6576
        %v6578 = vrot.slane %v6556, %v6577
        %v6580 = vunpack.c.l.s4 1966171168
        %v6581 = vunpack.c.0.s8 %v6580
        %v6582 = vlaneseq
        %v6583 = vshrl.u32 %v6582, 7
        %v6584 = vsub.s32 %v6581, %v6583
        %v6585 = vrot.slane %v6557, %v6584
        %v6586 = vcombine.low %v6564, %v6571
        %v6587 = vcombine.low %v6578, %v6585
        %v6589 = vunpack.c.l.s4 1966171168
        %v6590 = vunpack.c.0.s8 %v6589
        %v6591 = vlaneseq
        %v6592 = vshrl.u32 %v6591, 7
        %v6593 = vsub.s32 %v6590, %v6592
        %v6594 = vrot.slane %v6586, %v6593
        %v6596 = vunpack.c.l.s4 1966171168
        %v6597 = vunpack.c.0.s8 %v6596
        %v6598 = vlaneseq
        %v6599 = vshrl.u32 %v6598, 7
        %v6600 = vsub.s32 %v6597, %v6599
        %v6601 = vrot.slane %v6587, %v6600
        %v6602 = vcombine.low %v6594, %v6601
        %v6603 = vcombine.low %v4031, %v4035
        %v6604 = vcombine.low %v4039, %v4043
        %v6605 = vcombine.low %v4047, %v4051
        %v6606 = vcombine.low %v4055, %v4059
        %v6608 = vunpack.c.l.s4 1966171168
        %v6609 = vunpack.c.0.s8 %v6608
        %v6610 = vlaneseq
        %v6611 = vshrl.u32 %v6610, 7
        %v6612 = vsub.s32 %v6609, %v6611
        %v6613 = vrot.slane %v6603, %v6612
        %v6615 = vunpack.c.l.s4 1966171168
        %v6616 = vunpack.c.0.s8 %v6615
        %v6617 = vlaneseq
        %v6618 = vshrl.u32 %v6617, 7
        %v6619 = vsub.s32 %v6616, %v6618
        %v6620 = vrot.slane %v6604, %v6619
        %v6622 = vunpack.c.l.s4 1966171168
        %v6623 = vunpack.c.0.s8 %v6622
        %v6624 = vlaneseq
        %v6625 = vshrl.u32 %v6624, 7
        %v6626 = vsub.s32 %v6623, %v6625
        %v6627 = vrot.slane %v6605, %v6626
        %v6629 = vunpack.c.l.s4 1966171168
        %v6630 = vunpack.c.0.s8 %v6629
        %v6631 = vlaneseq
        %v6632 = vshrl.u32 %v6631, 7
        %v6633 = vsub.s32 %v6630, %v6632
        %v6634 = vrot.slane %v6606, %v6633
        %v6635 = vcombine.low %v6613, %v6620
        %v6636 = vcombine.low %v6627, %v6634
        %v6638 = vunpack.c.l.s4 1966171168
        %v6639 = vunpack.c.0.s8 %v6638
        %v6640 = vlaneseq
        %v6641 = vshrl.u32 %v6640, 7
        %v6642 = vsub.s32 %v6639, %v6641
        %v6643 = vrot.slane %v6635, %v6642
        %v6645 = vunpack.c.l.s4 1966171168
        %v6646 = vunpack.c.0.s8 %v6645
        %v6647 = vlaneseq
        %v6648 = vshrl.u32 %v6647, 7
        %v6649 = vsub.s32 %v6646, %v6648
        %v6650 = vrot.slane %v6636, %v6649
        %v6651 = vcombine.low %v6643, %v6650
        %v6652 = vcombine.low %v4063, %v4067
        %v6653 = vcombine.low %v4071, %v4075
        %v6654 = vcombine.low %v4079, %v4083
        %v6655 = vcombine.low %v4087, %v4091
        %v6657 = vunpack.c.l.s4 1966171168
        %v6658 = vunpack.c.0.s8 %v6657
        %v6659 = vlaneseq
        %v6660 = vshrl.u32 %v6659, 7
        %v6661 = vsub.s32 %v6658, %v6660
        %v6662 = vrot.slane %v6652, %v6661
        %v6664 = vunpack.c.l.s4 1966171168
        %v6665 = vunpack.c.0.s8 %v6664
        %v6666 = vlaneseq
        %v6667 = vshrl.u32 %v6666, 7
        %v6668 = vsub.s32 %v6665, %v6667
        %v6669 = vrot.slane %v6653, %v6668
        %v6671 = vunpack.c.l.s4 1966171168
        %v6672 = vunpack.c.0.s8 %v6671
        %v6673 = vlaneseq
        %v6674 = vshrl.u32 %v6673, 7
        %v6675 = vsub.s32 %v6672, %v6674
        %v6676 = vrot.slane %v6654, %v6675
        %v6678 = vunpack.c.l.s4 1966171168
        %v6679 = vunpack.c.0.s8 %v6678
        %v6680 = vlaneseq
        %v6681 = vshrl.u32 %v6680, 7
        %v6682 = vsub.s32 %v6679, %v6681
        %v6683 = vrot.slane %v6655, %v6682
        %v6684 = vcombine.low %v6662, %v6669
        %v6685 = vcombine.low %v6676, %v6683
        %v6687 = vunpack.c.l.s4 1966171168
        %v6688 = vunpack.c.0.s8 %v6687
        %v6689 = vlaneseq
        %v6690 = vshrl.u32 %v6689, 7
        %v6691 = vsub.s32 %v6688, %v6690
        %v6692 = vrot.slane %v6684, %v6691
        %v6694 = vunpack.c.l.s4 1966171168
        %v6695 = vunpack.c.0.s8 %v6694
        %v6696 = vlaneseq
        %v6697 = vshrl.u32 %v6696, 7
        %v6698 = vsub.s32 %v6695, %v6697
        %v6699 = vrot.slane %v6685, %v6698
        %v6700 = vcombine.low %v6692, %v6699
        %v6701 = vcombine.low %v4095, %v4099
        %v6702 = vcombine.low %v4103, %v4107
        %v6703 = vcombine.low %v4111, %v4115
        %v6704 = vcombine.low %v4119, %v4123
        %v6706 = vunpack.c.l.s4 1966171168
        %v6707 = vunpack.c.0.s8 %v6706
        %v6708 = vlaneseq
        %v6709 = vshrl.u32 %v6708, 7
        %v6710 = vsub.s32 %v6707, %v6709
        %v6711 = vrot.slane %v6701, %v6710
        %v6713 = vunpack.c.l.s4 1966171168
        %v6714 = vunpack.c.0.s8 %v6713
        %v6715 = vlaneseq
        %v6716 = vshrl.u32 %v6715, 7
        %v6717 = vsub.s32 %v6714, %v6716
        %v6718 = vrot.slane %v6702, %v6717
        %v6720 = vunpack.c.l.s4 1966171168
        %v6721 = vunpack.c.0.s8 %v6720
        %v6722 = vlaneseq
        %v6723 = vshrl.u32 %v6722, 7
        %v6724 = vsub.s32 %v6721, %v6723
        %v6725 = vrot.slane %v6703, %v6724
        %v6727 = vunpack.c.l.s4 1966171168
        %v6728 = vunpack.c.0.s8 %v6727
        %v6729 = vlaneseq
        %v6730 = vshrl.u32 %v6729, 7
        %v6731 = vsub.s32 %v6728, %v6730
        %v6732 = vrot.slane %v6704, %v6731
        %v6733 = vcombine.low %v6711, %v6718
        %v6734 = vcombine.low %v6725, %v6732
        %v6736 = vunpack.c.l.s4 1966171168
        %v6737 = vunpack.c.0.s8 %v6736
        %v6738 = vlaneseq
        %v6739 = vshrl.u32 %v6738, 7
        %v6740 = vsub.s32 %v6737, %v6739
        %v6741 = vrot.slane %v6733, %v6740
        %v6743 = vunpack.c.l.s4 1966171168
        %v6744 = vunpack.c.0.s8 %v6743
        %v6745 = vlaneseq
        %v6746 = vshrl.u32 %v6745, 7
        %v6747 = vsub.s32 %v6744, %v6746
        %v6748 = vrot.slane %v6734, %v6747
        %v6749 = vcombine.low %v6741, %v6748
        %v6750 = vcombine.low %v4127, %v4131
        %v6751 = vcombine.low %v4135, %v4139
        %v6752 = vcombine.low %v4143, %v4147
        %v6753 = vcombine.low %v4151, %v4155
        %v6755 = vunpack.c.l.s4 1966171168
        %v6756 = vunpack.c.0.s8 %v6755
        %v6757 = vlaneseq
        %v6758 = vshrl.u32 %v6757, 7
        %v6759 = vsub.s32 %v6756, %v6758
        %v6760 = vrot.slane %v6750, %v6759
        %v6762 = vunpack.c.l.s4 1966171168
        %v6763 = vunpack.c.0.s8 %v6762
        %v6764 = vlaneseq
        %v6765 = vshrl.u32 %v6764, 7
        %v6766 = vsub.s32 %v6763, %v6765
        %v6767 = vrot.slane %v6751, %v6766
        %v6769 = vunpack.c.l.s4 1966171168
        %v6770 = vunpack.c.0.s8 %v6769
        %v6771 = vlaneseq
        %v6772 = vshrl.u32 %v6771, 7
        %v6773 = vsub.s32 %v6770, %v6772
        %v6774 = vrot.slane %v6752, %v6773
        %v6776 = vunpack.c.l.s4 1966171168
        %v6777 = vunpack.c.0.s8 %v6776
        %v6778 = vlaneseq
        %v6779 = vshrl.u32 %v6778, 7
        %v6780 = vsub.s32 %v6777, %v6779
        %v6781 = vrot.slane %v6753, %v6780
        %v6782 = vcombine.low %v6760, %v6767
        %v6783 = vcombine.low %v6774, %v6781
        %v6785 = vunpack.c.l.s4 1966171168
        %v6786 = vunpack.c.0.s8 %v6785
        %v6787 = vlaneseq
        %v6788 = vshrl.u32 %v6787, 7
        %v6789 = vsub.s32 %v6786, %v6788
        %v6790 = vrot.slane %v6782, %v6789
        %v6792 = vunpack.c.l.s4 1966171168
        %v6793 = vunpack.c.0.s8 %v6792
        %v6794 = vlaneseq
        %v6795 = vshrl.u32 %v6794, 7
        %v6796 = vsub.s32 %v6793, %v6795
        %v6797 = vrot.slane %v6783, %v6796
        %v6798 = vcombine.low %v6790, %v6797
        %v6799 = vcombine.low %v4159, %v4163
        %v6800 = vcombine.low %v4167, %v4171
        %v6801 = vcombine.low %v4175, %v4179
        %v6802 = vcombine.low %v4183, %v4187
        %v6804 = vunpack.c.l.s4 1966171168
        %v6805 = vunpack.c.0.s8 %v6804
        %v6806 = vlaneseq
        %v6807 = vshrl.u32 %v6806, 7
        %v6808 = vsub.s32 %v6805, %v6807
        %v6809 = vrot.slane %v6799, %v6808
        %v6811 = vunpack.c.l.s4 1966171168
        %v6812 = vunpack.c.0.s8 %v6811
        %v6813 = vlaneseq
        %v6814 = vshrl.u32 %v6813, 7
        %v6815 = vsub.s32 %v6812, %v6814
        %v6816 = vrot.slane %v6800, %v6815
        %v6818 = vunpack.c.l.s4 1966171168
        %v6819 = vunpack.c.0.s8 %v6818
        %v6820 = vlaneseq
        %v6821 = vshrl.u32 %v6820, 7
        %v6822 = vsub.s32 %v6819, %v6821
        %v6823 = vrot.slane %v6801, %v6822
        %v6825 = vunpack.c.l.s4 1966171168
        %v6826 = vunpack.c.0.s8 %v6825
        %v6827 = vlaneseq
        %v6828 = vshrl.u32 %v6827, 7
        %v6829 = vsub.s32 %v6826, %v6828
        %v6830 = vrot.slane %v6802, %v6829
        %v6831 = vcombine.low %v6809, %v6816
        %v6832 = vcombine.low %v6823, %v6830
        %v6834 = vunpack.c.l.s4 1966171168
        %v6835 = vunpack.c.0.s8 %v6834
        %v6836 = vlaneseq
        %v6837 = vshrl.u32 %v6836, 7
        %v6838 = vsub.s32 %v6835, %v6837
        %v6839 = vrot.slane %v6831, %v6838
        %v6841 = vunpack.c.l.s4 1966171168
        %v6842 = vunpack.c.0.s8 %v6841
        %v6843 = vlaneseq
        %v6844 = vshrl.u32 %v6843, 7
        %v6845 = vsub.s32 %v6842, %v6844
        %v6846 = vrot.slane %v6832, %v6845
        %v6847 = vcombine.low %v6839, %v6846
        %v6848 = vcombine.low %v4191, %v4195
        %v6849 = vcombine.low %v4199, %v4203
        %v6850 = vcombine.low %v4207, %v4211
        %v6851 = vcombine.low %v4215, %v4219
        %v6853 = vunpack.c.l.s4 1966171168
        %v6854 = vunpack.c.0.s8 %v6853
        %v6855 = vlaneseq
        %v6856 = vshrl.u32 %v6855, 7
        %v6857 = vsub.s32 %v6854, %v6856
        %v6858 = vrot.slane %v6848, %v6857
        %v6860 = vunpack.c.l.s4 1966171168
        %v6861 = vunpack.c.0.s8 %v6860
        %v6862 = vlaneseq
        %v6863 = vshrl.u32 %v6862, 7
        %v6864 = vsub.s32 %v6861, %v6863
        %v6865 = vrot.slane %v6849, %v6864
        %v6867 = vunpack.c.l.s4 1966171168
        %v6868 = vunpack.c.0.s8 %v6867
        %v6869 = vlaneseq
        %v6870 = vshrl.u32 %v6869, 7
        %v6871 = vsub.s32 %v6868, %v6870
        %v6872 = vrot.slane %v6850, %v6871
        %v6874 = vunpack.c.l.s4 1966171168
        %v6875 = vunpack.c.0.s8 %v6874
        %v6876 = vlaneseq
        %v6877 = vshrl.u32 %v6876, 7
        %v6878 = vsub.s32 %v6875, %v6877
        %v6879 = vrot.slane %v6851, %v6878
        %v6880 = vcombine.low %v6858, %v6865
        %v6881 = vcombine.low %v6872, %v6879
        %v6883 = vunpack.c.l.s4 1966171168
        %v6884 = vunpack.c.0.s8 %v6883
        %v6885 = vlaneseq
        %v6886 = vshrl.u32 %v6885, 7
        %v6887 = vsub.s32 %v6884, %v6886
        %v6888 = vrot.slane %v6880, %v6887
        %v6890 = vunpack.c.l.s4 1966171168
        %v6891 = vunpack.c.0.s8 %v6890
        %v6892 = vlaneseq
        %v6893 = vshrl.u32 %v6892, 7
        %v6894 = vsub.s32 %v6891, %v6893
        %v6895 = vrot.slane %v6881, %v6894
        %v6896 = vcombine.low %v6888, %v6895
        %v6897 = vcombine.low %v4223, %v4227
        %v6898 = vcombine.low %v4231, %v4235
        %v6899 = vcombine.low %v4239, %v4243
        %v6900 = vcombine.low %v4247, %v4251
        %v6902 = vunpack.c.l.s4 1966171168
        %v6903 = vunpack.c.0.s8 %v6902
        %v6904 = vlaneseq
        %v6905 = vshrl.u32 %v6904, 7
        %v6906 = vsub.s32 %v6903, %v6905
        %v6907 = vrot.slane %v6897, %v6906
        %v6909 = vunpack.c.l.s4 1966171168
        %v6910 = vunpack.c.0.s8 %v6909
        %v6911 = vlaneseq
        %v6912 = vshrl.u32 %v6911, 7
        %v6913 = vsub.s32 %v6910, %v6912
        %v6914 = vrot.slane %v6898, %v6913
        %v6916 = vunpack.c.l.s4 1966171168
        %v6917 = vunpack.c.0.s8 %v6916
        %v6918 = vlaneseq
        %v6919 = vshrl.u32 %v6918, 7
        %v6920 = vsub.s32 %v6917, %v6919
        %v6921 = vrot.slane %v6899, %v6920
        %v6923 = vunpack.c.l.s4 1966171168
        %v6924 = vunpack.c.0.s8 %v6923
        %v6925 = vlaneseq
        %v6926 = vshrl.u32 %v6925, 7
        %v6927 = vsub.s32 %v6924, %v6926
        %v6928 = vrot.slane %v6900, %v6927
        %v6929 = vcombine.low %v6907, %v6914
        %v6930 = vcombine.low %v6921, %v6928
        %v6932 = vunpack.c.l.s4 1966171168
        %v6933 = vunpack.c.0.s8 %v6932
        %v6934 = vlaneseq
        %v6935 = vshrl.u32 %v6934, 7
        %v6936 = vsub.s32 %v6933, %v6935
        %v6937 = vrot.slane %v6929, %v6936
        %v6939 = vunpack.c.l.s4 1966171168
        %v6940 = vunpack.c.0.s8 %v6939
        %v6941 = vlaneseq
        %v6942 = vshrl.u32 %v6941, 7
        %v6943 = vsub.s32 %v6940, %v6942
        %v6944 = vrot.slane %v6930, %v6943
        %v6945 = vcombine.low %v6937, %v6944
        %v6946 = vcombine.low %v4255, %v4259
        %v6947 = vcombine.low %v4263, %v4267
        %v6948 = vcombine.low %v4271, %v4275
        %v6949 = vcombine.low %v4279, %v4283
        %v6951 = vunpack.c.l.s4 1966171168
        %v6952 = vunpack.c.0.s8 %v6951
        %v6953 = vlaneseq
        %v6954 = vshrl.u32 %v6953, 7
        %v6955 = vsub.s32 %v6952, %v6954
        %v6956 = vrot.slane %v6946, %v6955
        %v6958 = vunpack.c.l.s4 1966171168
        %v6959 = vunpack.c.0.s8 %v6958
        %v6960 = vlaneseq
        %v6961 = vshrl.u32 %v6960, 7
        %v6962 = vsub.s32 %v6959, %v6961
        %v6963 = vrot.slane %v6947, %v6962
        %v6965 = vunpack.c.l.s4 1966171168
        %v6966 = vunpack.c.0.s8 %v6965
        %v6967 = vlaneseq
        %v6968 = vshrl.u32 %v6967, 7
        %v6969 = vsub.s32 %v6966, %v6968
        %v6970 = vrot.slane %v6948, %v6969
        %v6972 = vunpack.c.l.s4 1966171168
        %v6973 = vunpack.c.0.s8 %v6972
        %v6974 = vlaneseq
        %v6975 = vshrl.u32 %v6974, 7
        %v6976 = vsub.s32 %v6973, %v6975
        %v6977 = vrot.slane %v6949, %v6976
        %v6978 = vcombine.low %v6956, %v6963
        %v6979 = vcombine.low %v6970, %v6977
        %v6981 = vunpack.c.l.s4 1966171168
        %v6982 = vunpack.c.0.s8 %v6981
        %v6983 = vlaneseq
        %v6984 = vshrl.u32 %v6983, 7
        %v6985 = vsub.s32 %v6982, %v6984
        %v6986 = vrot.slane %v6978, %v6985
        %v6988 = vunpack.c.l.s4 1966171168
        %v6989 = vunpack.c.0.s8 %v6988
        %v6990 = vlaneseq
        %v6991 = vshrl.u32 %v6990, 7
        %v6992 = vsub.s32 %v6989, %v6991
        %v6993 = vrot.slane %v6979, %v6992
        %v6994 = vcombine.low %v6986, %v6993
        %v6995 = vcombine.low %v4287, %v4291
        %v6996 = vcombine.low %v4295, %v4299
        %v6997 = vcombine.low %v4303, %v4307
        %v6998 = vcombine.low %v4311, %v4315
        %v7000 = vunpack.c.l.s4 1966171168
        %v7001 = vunpack.c.0.s8 %v7000
        %v7002 = vlaneseq
        %v7003 = vshrl.u32 %v7002, 7
        %v7004 = vsub.s32 %v7001, %v7003
        %v7005 = vrot.slane %v6995, %v7004
        %v7007 = vunpack.c.l.s4 1966171168
        %v7008 = vunpack.c.0.s8 %v7007
        %v7009 = vlaneseq
        %v7010 = vshrl.u32 %v7009, 7
        %v7011 = vsub.s32 %v7008, %v7010
        %v7012 = vrot.slane %v6996, %v7011
        %v7014 = vunpack.c.l.s4 1966171168
        %v7015 = vunpack.c.0.s8 %v7014
        %v7016 = vlaneseq
        %v7017 = vshrl.u32 %v7016, 7
        %v7018 = vsub.s32 %v7015, %v7017
        %v7019 = vrot.slane %v6997, %v7018
        %v7021 = vunpack.c.l.s4 1966171168
        %v7022 = vunpack.c.0.s8 %v7021
        %v7023 = vlaneseq
        %v7024 = vshrl.u32 %v7023, 7
        %v7025 = vsub.s32 %v7022, %v7024
        %v7026 = vrot.slane %v6998, %v7025
        %v7027 = vcombine.low %v7005, %v7012
        %v7028 = vcombine.low %v7019, %v7026
        %v7030 = vunpack.c.l.s4 1966171168
        %v7031 = vunpack.c.0.s8 %v7030
        %v7032 = vlaneseq
        %v7033 = vshrl.u32 %v7032, 7
        %v7034 = vsub.s32 %v7031, %v7033
        %v7035 = vrot.slane %v7027, %v7034
        %v7037 = vunpack.c.l.s4 1966171168
        %v7038 = vunpack.c.0.s8 %v7037
        %v7039 = vlaneseq
        %v7040 = vshrl.u32 %v7039, 7
        %v7041 = vsub.s32 %v7038, %v7040
        %v7042 = vrot.slane %v7028, %v7041
        %v7043 = vcombine.low %v7035, %v7042
        %v7044 = vcombine.low %v4319, %v4323
        %v7045 = vcombine.low %v4327, %v4331
        %v7046 = vcombine.low %v4335, %v4339
        %v7047 = vcombine.low %v4343, %v4347
        %v7049 = vunpack.c.l.s4 1966171168
        %v7050 = vunpack.c.0.s8 %v7049
        %v7051 = vlaneseq
        %v7052 = vshrl.u32 %v7051, 7
        %v7053 = vsub.s32 %v7050, %v7052
        %v7054 = vrot.slane %v7044, %v7053
        %v7056 = vunpack.c.l.s4 1966171168
        %v7057 = vunpack.c.0.s8 %v7056
        %v7058 = vlaneseq
        %v7059 = vshrl.u32 %v7058, 7
        %v7060 = vsub.s32 %v7057, %v7059
        %v7061 = vrot.slane %v7045, %v7060
        %v7063 = vunpack.c.l.s4 1966171168
        %v7064 = vunpack.c.0.s8 %v7063
        %v7065 = vlaneseq
        %v7066 = vshrl.u32 %v7065, 7
        %v7067 = vsub.s32 %v7064, %v7066
        %v7068 = vrot.slane %v7046, %v7067
        %v7070 = vunpack.c.l.s4 1966171168
        %v7071 = vunpack.c.0.s8 %v7070
        %v7072 = vlaneseq
        %v7073 = vshrl.u32 %v7072, 7
        %v7074 = vsub.s32 %v7071, %v7073
        %v7075 = vrot.slane %v7047, %v7074
        %v7076 = vcombine.low %v7054, %v7061
        %v7077 = vcombine.low %v7068, %v7075
        %v7079 = vunpack.c.l.s4 1966171168
        %v7080 = vunpack.c.0.s8 %v7079
        %v7081 = vlaneseq
        %v7082 = vshrl.u32 %v7081, 7
        %v7083 = vsub.s32 %v7080, %v7082
        %v7084 = vrot.slane %v7076, %v7083
        %v7086 = vunpack.c.l.s4 1966171168
        %v7087 = vunpack.c.0.s8 %v7086
        %v7088 = vlaneseq
        %v7089 = vshrl.u32 %v7088, 7
        %v7090 = vsub.s32 %v7087, %v7089
        %v7091 = vrot.slane %v7077, %v7090
        %v7092 = vcombine.low %v7084, %v7091
        %v7093 = vcombine.low %v4351, %v4355
        %v7094 = vcombine.low %v4359, %v4363
        %v7095 = vcombine.low %v4367, %v4371
        %v7096 = vcombine.low %v4375, %v4379
        %v7098 = vunpack.c.l.s4 1966171168
        %v7099 = vunpack.c.0.s8 %v7098
        %v7100 = vlaneseq
        %v7101 = vshrl.u32 %v7100, 7
        %v7102 = vsub.s32 %v7099, %v7101
        %v7103 = vrot.slane %v7093, %v7102
        %v7105 = vunpack.c.l.s4 1966171168
        %v7106 = vunpack.c.0.s8 %v7105
        %v7107 = vlaneseq
        %v7108 = vshrl.u32 %v7107, 7
        %v7109 = vsub.s32 %v7106, %v7108
        %v7110 = vrot.slane %v7094, %v7109
        %v7112 = vunpack.c.l.s4 1966171168
        %v7113 = vunpack.c.0.s8 %v7112
        %v7114 = vlaneseq
        %v7115 = vshrl.u32 %v7114, 7
        %v7116 = vsub.s32 %v7113, %v7115
        %v7117 = vrot.slane %v7095, %v7116
        %v7119 = vunpack.c.l.s4 1966171168
        %v7120 = vunpack.c.0.s8 %v7119
        %v7121 = vlaneseq
        %v7122 = vshrl.u32 %v7121, 7
        %v7123 = vsub.s32 %v7120, %v7122
        %v7124 = vrot.slane %v7096, %v7123
        %v7125 = vcombine.low %v7103, %v7110
        %v7126 = vcombine.low %v7117, %v7124
        %v7128 = vunpack.c.l.s4 1966171168
        %v7129 = vunpack.c.0.s8 %v7128
        %v7130 = vlaneseq
        %v7131 = vshrl.u32 %v7130, 7
        %v7132 = vsub.s32 %v7129, %v7131
        %v7133 = vrot.slane %v7125, %v7132
        %v7135 = vunpack.c.l.s4 1966171168
        %v7136 = vunpack.c.0.s8 %v7135
        %v7137 = vlaneseq
        %v7138 = vshrl.u32 %v7137, 7
        %v7139 = vsub.s32 %v7136, %v7138
        %v7140 = vrot.slane %v7126, %v7139
        %v7141 = vcombine.low %v7133, %v7140
        %v7142 = vcombine.low %v4383, %v4387
        %v7143 = vcombine.low %v4391, %v4395
        %v7144 = vcombine.low %v4399, %v4403
        %v7145 = vcombine.low %v4407, %v4411
        %v7147 = vunpack.c.l.s4 1966171168
        %v7148 = vunpack.c.0.s8 %v7147
        %v7149 = vlaneseq
        %v7150 = vshrl.u32 %v7149, 7
        %v7151 = vsub.s32 %v7148, %v7150
        %v7152 = vrot.slane %v7142, %v7151
        %v7154 = vunpack.c.l.s4 1966171168
        %v7155 = vunpack.c.0.s8 %v7154
        %v7156 = vlaneseq
        %v7157 = vshrl.u32 %v7156, 7
        %v7158 = vsub.s32 %v7155, %v7157
        %v7159 = vrot.slane %v7143, %v7158
        %v7161 = vunpack.c.l.s4 1966171168
        %v7162 = vunpack.c.0.s8 %v7161
        %v7163 = vlaneseq
        %v7164 = vshrl.u32 %v7163, 7
        %v7165 = vsub.s32 %v7162, %v7164
        %v7166 = vrot.slane %v7144, %v7165
        %v7168 = vunpack.c.l.s4 1966171168
        %v7169 = vunpack.c.0.s8 %v7168
        %v7170 = vlaneseq
        %v7171 = vshrl.u32 %v7170, 7
        %v7172 = vsub.s32 %v7169, %v7171
        %v7173 = vrot.slane %v7145, %v7172
        %v7174 = vcombine.low %v7152, %v7159
        %v7175 = vcombine.low %v7166, %v7173
        %v7177 = vunpack.c.l.s4 1966171168
        %v7178 = vunpack.c.0.s8 %v7177
        %v7179 = vlaneseq
        %v7180 = vshrl.u32 %v7179, 7
        %v7181 = vsub.s32 %v7178, %v7180
        %v7182 = vrot.slane %v7174, %v7181
        %v7184 = vunpack.c.l.s4 1966171168
        %v7185 = vunpack.c.0.s8 %v7184
        %v7186 = vlaneseq
        %v7187 = vshrl.u32 %v7186, 7
        %v7188 = vsub.s32 %v7185, %v7187
        %v7189 = vrot.slane %v7175, %v7188
        %v7190 = vcombine.low %v7182, %v7189
        %v7191 = vcombine.low %v4415, %v4419
        %v7192 = vcombine.low %v4423, %v4427
        %v7193 = vcombine.low %v4431, %v4435
        %v7194 = vcombine.low %v4439, %v4443
        %v7196 = vunpack.c.l.s4 1966171168
        %v7197 = vunpack.c.0.s8 %v7196
        %v7198 = vlaneseq
        %v7199 = vshrl.u32 %v7198, 7
        %v7200 = vsub.s32 %v7197, %v7199
        %v7201 = vrot.slane %v7191, %v7200
        %v7203 = vunpack.c.l.s4 1966171168
        %v7204 = vunpack.c.0.s8 %v7203
        %v7205 = vlaneseq
        %v7206 = vshrl.u32 %v7205, 7
        %v7207 = vsub.s32 %v7204, %v7206
        %v7208 = vrot.slane %v7192, %v7207
        %v7210 = vunpack.c.l.s4 1966171168
        %v7211 = vunpack.c.0.s8 %v7210
        %v7212 = vlaneseq
        %v7213 = vshrl.u32 %v7212, 7
        %v7214 = vsub.s32 %v7211, %v7213
        %v7215 = vrot.slane %v7193, %v7214
        %v7217 = vunpack.c.l.s4 1966171168
        %v7218 = vunpack.c.0.s8 %v7217
        %v7219 = vlaneseq
        %v7220 = vshrl.u32 %v7219, 7
        %v7221 = vsub.s32 %v7218, %v7220
        %v7222 = vrot.slane %v7194, %v7221
        %v7223 = vcombine.low %v7201, %v7208
        %v7224 = vcombine.low %v7215, %v7222
        %v7226 = vunpack.c.l.s4 1966171168
        %v7227 = vunpack.c.0.s8 %v7226
        %v7228 = vlaneseq
        %v7229 = vshrl.u32 %v7228, 7
        %v7230 = vsub.s32 %v7227, %v7229
        %v7231 = vrot.slane %v7223, %v7230
        %v7233 = vunpack.c.l.s4 1966171168
        %v7234 = vunpack.c.0.s8 %v7233
        %v7235 = vlaneseq
        %v7236 = vshrl.u32 %v7235, 7
        %v7237 = vsub.s32 %v7234, %v7236
        %v7238 = vrot.slane %v7224, %v7237
        %v7239 = vcombine.low %v7231, %v7238
        %v7240 = vcombine.low %v4447, %v4451
        %v7241 = vcombine.low %v4455, %v4459
        %v7242 = vcombine.low %v4463, %v4467
        %v7243 = vcombine.low %v4471, %v4475
        %v7245 = vunpack.c.l.s4 1966171168
        %v7246 = vunpack.c.0.s8 %v7245
        %v7247 = vlaneseq
        %v7248 = vshrl.u32 %v7247, 7
        %v7249 = vsub.s32 %v7246, %v7248
        %v7250 = vrot.slane %v7240, %v7249
        %v7252 = vunpack.c.l.s4 1966171168
        %v7253 = vunpack.c.0.s8 %v7252
        %v7254 = vlaneseq
        %v7255 = vshrl.u32 %v7254, 7
        %v7256 = vsub.s32 %v7253, %v7255
        %v7257 = vrot.slane %v7241, %v7256
        %v7259 = vunpack.c.l.s4 1966171168
        %v7260 = vunpack.c.0.s8 %v7259
        %v7261 = vlaneseq
        %v7262 = vshrl.u32 %v7261, 7
        %v7263 = vsub.s32 %v7260, %v7262
        %v7264 = vrot.slane %v7242, %v7263
        %v7266 = vunpack.c.l.s4 1966171168
        %v7267 = vunpack.c.0.s8 %v7266
        %v7268 = vlaneseq
        %v7269 = vshrl.u32 %v7268, 7
        %v7270 = vsub.s32 %v7267, %v7269
        %v7271 = vrot.slane %v7243, %v7270
        %v7272 = vcombine.low %v7250, %v7257
        %v7273 = vcombine.low %v7264, %v7271
        %v7275 = vunpack.c.l.s4 1966171168
        %v7276 = vunpack.c.0.s8 %v7275
        %v7277 = vlaneseq
        %v7278 = vshrl.u32 %v7277, 7
        %v7279 = vsub.s32 %v7276, %v7278
        %v7280 = vrot.slane %v7272, %v7279
        %v7282 = vunpack.c.l.s4 1966171168
        %v7283 = vunpack.c.0.s8 %v7282
        %v7284 = vlaneseq
        %v7285 = vshrl.u32 %v7284, 7
        %v7286 = vsub.s32 %v7283, %v7285
        %v7287 = vrot.slane %v7273, %v7286
        %v7288 = vcombine.low %v7280, %v7287
        %v7289 = vcombine.low %v4479, %v4483
        %v7290 = vcombine.low %v4487, %v4491
        %v7291 = vcombine.low %v4495, %v4499
        %v7292 = vcombine.low %v4503, %v4507
        %v7294 = vunpack.c.l.s4 1966171168
        %v7295 = vunpack.c.0.s8 %v7294
        %v7296 = vlaneseq
        %v7297 = vshrl.u32 %v7296, 7
        %v7298 = vsub.s32 %v7295, %v7297
        %v7299 = vrot.slane %v7289, %v7298
        %v7301 = vunpack.c.l.s4 1966171168
        %v7302 = vunpack.c.0.s8 %v7301
        %v7303 = vlaneseq
        %v7304 = vshrl.u32 %v7303, 7
        %v7305 = vsub.s32 %v7302, %v7304
        %v7306 = vrot.slane %v7290, %v7305
        %v7308 = vunpack.c.l.s4 1966171168
        %v7309 = vunpack.c.0.s8 %v7308
        %v7310 = vlaneseq
        %v7311 = vshrl.u32 %v7310, 7
        %v7312 = vsub.s32 %v7309, %v7311
        %v7313 = vrot.slane %v7291, %v7312
        %v7315 = vunpack.c.l.s4 1966171168
        %v7316 = vunpack.c.0.s8 %v7315
        %v7317 = vlaneseq
        %v7318 = vshrl.u32 %v7317, 7
        %v7319 = vsub.s32 %v7316, %v7318
        %v7320 = vrot.slane %v7292, %v7319
        %v7321 = vcombine.low %v7299, %v7306
        %v7322 = vcombine.low %v7313, %v7320
        %v7324 = vunpack.c.l.s4 1966171168
        %v7325 = vunpack.c.0.s8 %v7324
        %v7326 = vlaneseq
        %v7327 = vshrl.u32 %v7326, 7
        %v7328 = vsub.s32 %v7325, %v7327
        %v7329 = vrot.slane %v7321, %v7328
        %v7331 = vunpack.c.l.s4 1966171168
        %v7332 = vunpack.c.0.s8 %v7331
        %v7333 = vlaneseq
        %v7334 = vshrl.u32 %v7333, 7
        %v7335 = vsub.s32 %v7332, %v7334
        %v7336 = vrot.slane %v7322, %v7335
        %v7337 = vcombine.low %v7329, %v7336
        %v7338 = vcombine.low %v4511, %v4515
        %v7339 = vcombine.low %v4519, %v4523
        %v7340 = vcombine.low %v4527, %v4531
        %v7341 = vcombine.low %v4535, %v4539
        %v7343 = vunpack.c.l.s4 1966171168
        %v7344 = vunpack.c.0.s8 %v7343
        %v7345 = vlaneseq
        %v7346 = vshrl.u32 %v7345, 7
        %v7347 = vsub.s32 %v7344, %v7346
        %v7348 = vrot.slane %v7338, %v7347
        %v7350 = vunpack.c.l.s4 1966171168
        %v7351 = vunpack.c.0.s8 %v7350
        %v7352 = vlaneseq
        %v7353 = vshrl.u32 %v7352, 7
        %v7354 = vsub.s32 %v7351, %v7353
        %v7355 = vrot.slane %v7339, %v7354
        %v7357 = vunpack.c.l.s4 1966171168
        %v7358 = vunpack.c.0.s8 %v7357
        %v7359 = vlaneseq
        %v7360 = vshrl.u32 %v7359, 7
        %v7361 = vsub.s32 %v7358, %v7360
        %v7362 = vrot.slane %v7340, %v7361
        %v7364 = vunpack.c.l.s4 1966171168
        %v7365 = vunpack.c.0.s8 %v7364
        %v7366 = vlaneseq
        %v7367 = vshrl.u32 %v7366, 7
        %v7368 = vsub.s32 %v7365, %v7367
        %v7369 = vrot.slane %v7341, %v7368
        %v7370 = vcombine.low %v7348, %v7355
        %v7371 = vcombine.low %v7362, %v7369
        %v7373 = vunpack.c.l.s4 1966171168
        %v7374 = vunpack.c.0.s8 %v7373
        %v7375 = vlaneseq
        %v7376 = vshrl.u32 %v7375, 7
        %v7377 = vsub.s32 %v7374, %v7376
        %v7378 = vrot.slane %v7370, %v7377
        %v7380 = vunpack.c.l.s4 1966171168
        %v7381 = vunpack.c.0.s8 %v7380
        %v7382 = vlaneseq
        %v7383 = vshrl.u32 %v7382, 7
        %v7384 = vsub.s32 %v7381, %v7383
        %v7385 = vrot.slane %v7371, %v7384
        %v7386 = vcombine.low %v7378, %v7385
        %v7387 = vcombine.low %v4543, %v4547
        %v7388 = vcombine.low %v4551, %v4555
        %v7389 = vcombine.low %v4559, %v4563
        %v7390 = vcombine.low %v4567, %v4571
        %v7392 = vunpack.c.l.s4 1966171168
        %v7393 = vunpack.c.0.s8 %v7392
        %v7394 = vlaneseq
        %v7395 = vshrl.u32 %v7394, 7
        %v7396 = vsub.s32 %v7393, %v7395
        %v7397 = vrot.slane %v7387, %v7396
        %v7399 = vunpack.c.l.s4 1966171168
        %v7400 = vunpack.c.0.s8 %v7399
        %v7401 = vlaneseq
        %v7402 = vshrl.u32 %v7401, 7
        %v7403 = vsub.s32 %v7400, %v7402
        %v7404 = vrot.slane %v7388, %v7403
        %v7406 = vunpack.c.l.s4 1966171168
        %v7407 = vunpack.c.0.s8 %v7406
        %v7408 = vlaneseq
        %v7409 = vshrl.u32 %v7408, 7
        %v7410 = vsub.s32 %v7407, %v7409
        %v7411 = vrot.slane %v7389, %v7410
        %v7413 = vunpack.c.l.s4 1966171168
        %v7414 = vunpack.c.0.s8 %v7413
        %v7415 = vlaneseq
        %v7416 = vshrl.u32 %v7415, 7
        %v7417 = vsub.s32 %v7414, %v7416
        %v7418 = vrot.slane %v7390, %v7417
        %v7419 = vcombine.low %v7397, %v7404
        %v7420 = vcombine.low %v7411, %v7418
        %v7422 = vunpack.c.l.s4 1966171168
        %v7423 = vunpack.c.0.s8 %v7422
        %v7424 = vlaneseq
        %v7425 = vshrl.u32 %v7424, 7
        %v7426 = vsub.s32 %v7423, %v7425
        %v7427 = vrot.slane %v7419, %v7426
        %v7429 = vunpack.c.l.s4 1966171168
        %v7430 = vunpack.c.0.s8 %v7429
        %v7431 = vlaneseq
        %v7432 = vshrl.u32 %v7431, 7
        %v7433 = vsub.s32 %v7430, %v7432
        %v7434 = vrot.slane %v7420, %v7433
        %v7435 = vcombine.low %v7427, %v7434
        %v7436 = vcombine.low %v4575, %v4579
        %v7437 = vcombine.low %v4583, %v4587
        %v7438 = vcombine.low %v4591, %v4595
        %v7439 = vcombine.low %v4599, %v4603
        %v7441 = vunpack.c.l.s4 1966171168
        %v7442 = vunpack.c.0.s8 %v7441
        %v7443 = vlaneseq
        %v7444 = vshrl.u32 %v7443, 7
        %v7445 = vsub.s32 %v7442, %v7444
        %v7446 = vrot.slane %v7436, %v7445
        %v7448 = vunpack.c.l.s4 1966171168
        %v7449 = vunpack.c.0.s8 %v7448
        %v7450 = vlaneseq
        %v7451 = vshrl.u32 %v7450, 7
        %v7452 = vsub.s32 %v7449, %v7451
        %v7453 = vrot.slane %v7437, %v7452
        %v7455 = vunpack.c.l.s4 1966171168
        %v7456 = vunpack.c.0.s8 %v7455
        %v7457 = vlaneseq
        %v7458 = vshrl.u32 %v7457, 7
        %v7459 = vsub.s32 %v7456, %v7458
        %v7460 = vrot.slane %v7438, %v7459
        %v7462 = vunpack.c.l.s4 1966171168
        %v7463 = vunpack.c.0.s8 %v7462
        %v7464 = vlaneseq
        %v7465 = vshrl.u32 %v7464, 7
        %v7466 = vsub.s32 %v7463, %v7465
        %v7467 = vrot.slane %v7439, %v7466
        %v7468 = vcombine.low %v7446, %v7453
        %v7469 = vcombine.low %v7460, %v7467
        %v7471 = vunpack.c.l.s4 1966171168
        %v7472 = vunpack.c.0.s8 %v7471
        %v7473 = vlaneseq
        %v7474 = vshrl.u32 %v7473, 7
        %v7475 = vsub.s32 %v7472, %v7474
        %v7476 = vrot.slane %v7468, %v7475
        %v7478 = vunpack.c.l.s4 1966171168
        %v7479 = vunpack.c.0.s8 %v7478
        %v7480 = vlaneseq
        %v7481 = vshrl.u32 %v7480, 7
        %v7482 = vsub.s32 %v7479, %v7481
        %v7483 = vrot.slane %v7469, %v7482
        %v7484 = vcombine.low %v7476, %v7483
        %v7485 = vcombine.low %v4607, %v4611
        %v7486 = vcombine.low %v4615, %v4619
        %v7487 = vcombine.low %v4623, %v4627
        %v7488 = vcombine.low %v4631, %v4635
        %v7490 = vunpack.c.l.s4 1966171168
        %v7491 = vunpack.c.0.s8 %v7490
        %v7492 = vlaneseq
        %v7493 = vshrl.u32 %v7492, 7
        %v7494 = vsub.s32 %v7491, %v7493
        %v7495 = vrot.slane %v7485, %v7494
        %v7497 = vunpack.c.l.s4 1966171168
        %v7498 = vunpack.c.0.s8 %v7497
        %v7499 = vlaneseq
        %v7500 = vshrl.u32 %v7499, 7
        %v7501 = vsub.s32 %v7498, %v7500
        %v7502 = vrot.slane %v7486, %v7501
        %v7504 = vunpack.c.l.s4 1966171168
        %v7505 = vunpack.c.0.s8 %v7504
        %v7506 = vlaneseq
        %v7507 = vshrl.u32 %v7506, 7
        %v7508 = vsub.s32 %v7505, %v7507
        %v7509 = vrot.slane %v7487, %v7508
        %v7511 = vunpack.c.l.s4 1966171168
        %v7512 = vunpack.c.0.s8 %v7511
        %v7513 = vlaneseq
        %v7514 = vshrl.u32 %v7513, 7
        %v7515 = vsub.s32 %v7512, %v7514
        %v7516 = vrot.slane %v7488, %v7515
        %v7517 = vcombine.low %v7495, %v7502
        %v7518 = vcombine.low %v7509, %v7516
        %v7520 = vunpack.c.l.s4 1966171168
        %v7521 = vunpack.c.0.s8 %v7520
        %v7522 = vlaneseq
        %v7523 = vshrl.u32 %v7522, 7
        %v7524 = vsub.s32 %v7521, %v7523
        %v7525 = vrot.slane %v7517, %v7524
        %v7527 = vunpack.c.l.s4 1966171168
        %v7528 = vunpack.c.0.s8 %v7527
        %v7529 = vlaneseq
        %v7530 = vshrl.u32 %v7529, 7
        %v7531 = vsub.s32 %v7528, %v7530
        %v7532 = vrot.slane %v7518, %v7531
        %v7533 = vcombine.low %v7525, %v7532
        %v7534 = vcombine.low %v4639, %v4643
        %v7535 = vcombine.low %v4647, %v4651
        %v7536 = vcombine.low %v4655, %v4659
        %v7537 = vcombine.low %v4663, %v4667
        %v7539 = vunpack.c.l.s4 1966171168
        %v7540 = vunpack.c.0.s8 %v7539
        %v7541 = vlaneseq
        %v7542 = vshrl.u32 %v7541, 7
        %v7543 = vsub.s32 %v7540, %v7542
        %v7544 = vrot.slane %v7534, %v7543
        %v7546 = vunpack.c.l.s4 1966171168
        %v7547 = vunpack.c.0.s8 %v7546
        %v7548 = vlaneseq
        %v7549 = vshrl.u32 %v7548, 7
        %v7550 = vsub.s32 %v7547, %v7549
        %v7551 = vrot.slane %v7535, %v7550
        %v7553 = vunpack.c.l.s4 1966171168
        %v7554 = vunpack.c.0.s8 %v7553
        %v7555 = vlaneseq
        %v7556 = vshrl.u32 %v7555, 7
        %v7557 = vsub.s32 %v7554, %v7556
        %v7558 = vrot.slane %v7536, %v7557
        %v7560 = vunpack.c.l.s4 1966171168
        %v7561 = vunpack.c.0.s8 %v7560
        %v7562 = vlaneseq
        %v7563 = vshrl.u32 %v7562, 7
        %v7564 = vsub.s32 %v7561, %v7563
        %v7565 = vrot.slane %v7537, %v7564
        %v7566 = vcombine.low %v7544, %v7551
        %v7567 = vcombine.low %v7558, %v7565
        %v7569 = vunpack.c.l.s4 1966171168
        %v7570 = vunpack.c.0.s8 %v7569
        %v7571 = vlaneseq
        %v7572 = vshrl.u32 %v7571, 7
        %v7573 = vsub.s32 %v7570, %v7572
        %v7574 = vrot.slane %v7566, %v7573
        %v7576 = vunpack.c.l.s4 1966171168
        %v7577 = vunpack.c.0.s8 %v7576
        %v7578 = vlaneseq
        %v7579 = vshrl.u32 %v7578, 7
        %v7580 = vsub.s32 %v7577, %v7579
        %v7581 = vrot.slane %v7567, %v7580
        %v7582 = vcombine.low %v7574, %v7581
        %v7583 = vcombine.low %v4671, %v4675
        %v7584 = vcombine.low %v4679, %v4683
        %v7585 = vcombine.low %v4687, %v4691
        %v7586 = vcombine.low %v4695, %v4699
        %v7588 = vunpack.c.l.s4 1966171168
        %v7589 = vunpack.c.0.s8 %v7588
        %v7590 = vlaneseq
        %v7591 = vshrl.u32 %v7590, 7
        %v7592 = vsub.s32 %v7589, %v7591
        %v7593 = vrot.slane %v7583, %v7592
        %v7595 = vunpack.c.l.s4 1966171168
        %v7596 = vunpack.c.0.s8 %v7595
        %v7597 = vlaneseq
        %v7598 = vshrl.u32 %v7597, 7
        %v7599 = vsub.s32 %v7596, %v7598
        %v7600 = vrot.slane %v7584, %v7599
        %v7602 = vunpack.c.l.s4 1966171168
        %v7603 = vunpack.c.0.s8 %v7602
        %v7604 = vlaneseq
        %v7605 = vshrl.u32 %v7604, 7
        %v7606 = vsub.s32 %v7603, %v7605
        %v7607 = vrot.slane %v7585, %v7606
        %v7609 = vunpack.c.l.s4 1966171168
        %v7610 = vunpack.c.0.s8 %v7609
        %v7611 = vlaneseq
        %v7612 = vshrl.u32 %v7611, 7
        %v7613 = vsub.s32 %v7610, %v7612
        %v7614 = vrot.slane %v7586, %v7613
        %v7615 = vcombine.low %v7593, %v7600
        %v7616 = vcombine.low %v7607, %v7614
        %v7618 = vunpack.c.l.s4 1966171168
        %v7619 = vunpack.c.0.s8 %v7618
        %v7620 = vlaneseq
        %v7621 = vshrl.u32 %v7620, 7
        %v7622 = vsub.s32 %v7619, %v7621
        %v7623 = vrot.slane %v7615, %v7622
        %v7625 = vunpack.c.l.s4 1966171168
        %v7626 = vunpack.c.0.s8 %v7625
        %v7627 = vlaneseq
        %v7628 = vshrl.u32 %v7627, 7
        %v7629 = vsub.s32 %v7626, %v7628
        %v7630 = vrot.slane %v7616, %v7629
        %v7631 = vcombine.low %v7623, %v7630
        %v7632 = vcombine.low %v4703, %v4707
        %v7633 = vcombine.low %v4711, %v4715
        %v7634 = vcombine.low %v4719, %v4723
        %v7635 = vcombine.low %v4727, %v4731
        %v7637 = vunpack.c.l.s4 1966171168
        %v7638 = vunpack.c.0.s8 %v7637
        %v7639 = vlaneseq
        %v7640 = vshrl.u32 %v7639, 7
        %v7641 = vsub.s32 %v7638, %v7640
        %v7642 = vrot.slane %v7632, %v7641
        %v7644 = vunpack.c.l.s4 1966171168
        %v7645 = vunpack.c.0.s8 %v7644
        %v7646 = vlaneseq
        %v7647 = vshrl.u32 %v7646, 7
        %v7648 = vsub.s32 %v7645, %v7647
        %v7649 = vrot.slane %v7633, %v7648
        %v7651 = vunpack.c.l.s4 1966171168
        %v7652 = vunpack.c.0.s8 %v7651
        %v7653 = vlaneseq
        %v7654 = vshrl.u32 %v7653, 7
        %v7655 = vsub.s32 %v7652, %v7654
        %v7656 = vrot.slane %v7634, %v7655
        %v7658 = vunpack.c.l.s4 1966171168
        %v7659 = vunpack.c.0.s8 %v7658
        %v7660 = vlaneseq
        %v7661 = vshrl.u32 %v7660, 7
        %v7662 = vsub.s32 %v7659, %v7661
        %v7663 = vrot.slane %v7635, %v7662
        %v7664 = vcombine.low %v7642, %v7649
        %v7665 = vcombine.low %v7656, %v7663
        %v7667 = vunpack.c.l.s4 1966171168
        %v7668 = vunpack.c.0.s8 %v7667
        %v7669 = vlaneseq
        %v7670 = vshrl.u32 %v7669, 7
        %v7671 = vsub.s32 %v7668, %v7670
        %v7672 = vrot.slane %v7664, %v7671
        %v7674 = vunpack.c.l.s4 1966171168
        %v7675 = vunpack.c.0.s8 %v7674
        %v7676 = vlaneseq
        %v7677 = vshrl.u32 %v7676, 7
        %v7678 = vsub.s32 %v7675, %v7677
        %v7679 = vrot.slane %v7665, %v7678
        %v7680 = vcombine.low %v7672, %v7679
        %v7681 = vcombine.low %v4735, %v4739
        %v7682 = vcombine.low %v4743, %v4747
        %v7683 = vcombine.low %v4751, %v4755
        %v7684 = vcombine.low %v4759, %v4763
        %v7686 = vunpack.c.l.s4 1966171168
        %v7687 = vunpack.c.0.s8 %v7686
        %v7688 = vlaneseq
        %v7689 = vshrl.u32 %v7688, 7
        %v7690 = vsub.s32 %v7687, %v7689
        %v7691 = vrot.slane %v7681, %v7690
        %v7693 = vunpack.c.l.s4 1966171168
        %v7694 = vunpack.c.0.s8 %v7693
        %v7695 = vlaneseq
        %v7696 = vshrl.u32 %v7695, 7
        %v7697 = vsub.s32 %v7694, %v7696
        %v7698 = vrot.slane %v7682, %v7697
        %v7700 = vunpack.c.l.s4 1966171168
        %v7701 = vunpack.c.0.s8 %v7700
        %v7702 = vlaneseq
        %v7703 = vshrl.u32 %v7702, 7
        %v7704 = vsub.s32 %v7701, %v7703
        %v7705 = vrot.slane %v7683, %v7704
        %v7707 = vunpack.c.l.s4 1966171168
        %v7708 = vunpack.c.0.s8 %v7707
        %v7709 = vlaneseq
        %v7710 = vshrl.u32 %v7709, 7
        %v7711 = vsub.s32 %v7708, %v7710
        %v7712 = vrot.slane %v7684, %v7711
        %v7713 = vcombine.low %v7691, %v7698
        %v7714 = vcombine.low %v7705, %v7712
        %v7716 = vunpack.c.l.s4 1966171168
        %v7717 = vunpack.c.0.s8 %v7716
        %v7718 = vlaneseq
        %v7719 = vshrl.u32 %v7718, 7
        %v7720 = vsub.s32 %v7717, %v7719
        %v7721 = vrot.slane %v7713, %v7720
        %v7723 = vunpack.c.l.s4 1966171168
        %v7724 = vunpack.c.0.s8 %v7723
        %v7725 = vlaneseq
        %v7726 = vshrl.u32 %v7725, 7
        %v7727 = vsub.s32 %v7724, %v7726
        %v7728 = vrot.slane %v7714, %v7727
        %v7729 = vcombine.low %v7721, %v7728
        %v7730 = vcombine.low %v4767, %v4771
        %v7731 = vcombine.low %v4775, %v4779
        %v7732 = vcombine.low %v4783, %v4787
        %v7733 = vcombine.low %v4791, %v4795
        %v7735 = vunpack.c.l.s4 1966171168
        %v7736 = vunpack.c.0.s8 %v7735
        %v7737 = vlaneseq
        %v7738 = vshrl.u32 %v7737, 7
        %v7739 = vsub.s32 %v7736, %v7738
        %v7740 = vrot.slane %v7730, %v7739
        %v7742 = vunpack.c.l.s4 1966171168
        %v7743 = vunpack.c.0.s8 %v7742
        %v7744 = vlaneseq
        %v7745 = vshrl.u32 %v7744, 7
        %v7746 = vsub.s32 %v7743, %v7745
        %v7747 = vrot.slane %v7731, %v7746
        %v7749 = vunpack.c.l.s4 1966171168
        %v7750 = vunpack.c.0.s8 %v7749
        %v7751 = vlaneseq
        %v7752 = vshrl.u32 %v7751, 7
        %v7753 = vsub.s32 %v7750, %v7752
        %v7754 = vrot.slane %v7732, %v7753
        %v7756 = vunpack.c.l.s4 1966171168
        %v7757 = vunpack.c.0.s8 %v7756
        %v7758 = vlaneseq
        %v7759 = vshrl.u32 %v7758, 7
        %v7760 = vsub.s32 %v7757, %v7759
        %v7761 = vrot.slane %v7733, %v7760
        %v7762 = vcombine.low %v7740, %v7747
        %v7763 = vcombine.low %v7754, %v7761
        %v7765 = vunpack.c.l.s4 1966171168
        %v7766 = vunpack.c.0.s8 %v7765
        %v7767 = vlaneseq
        %v7768 = vshrl.u32 %v7767, 7
        %v7769 = vsub.s32 %v7766, %v7768
        %v7770 = vrot.slane %v7762, %v7769
        %v7772 = vunpack.c.l.s4 1966171168
        %v7773 = vunpack.c.0.s8 %v7772
        %v7774 = vlaneseq
        %v7775 = vshrl.u32 %v7774, 7
        %v7776 = vsub.s32 %v7773, %v7775
        %v7777 = vrot.slane %v7763, %v7776
        %v7778 = vcombine.low %v7770, %v7777
        %v7779 = vcombine.low %v4799, %v4803
        %v7780 = vcombine.low %v4807, %v4811
        %v7781 = vcombine.low %v4815, %v4819
        %v7782 = vcombine.low %v4823, %v4827
        %v7784 = vunpack.c.l.s4 1966171168
        %v7785 = vunpack.c.0.s8 %v7784
        %v7786 = vlaneseq
        %v7787 = vshrl.u32 %v7786, 7
        %v7788 = vsub.s32 %v7785, %v7787
        %v7789 = vrot.slane %v7779, %v7788
        %v7791 = vunpack.c.l.s4 1966171168
        %v7792 = vunpack.c.0.s8 %v7791
        %v7793 = vlaneseq
        %v7794 = vshrl.u32 %v7793, 7
        %v7795 = vsub.s32 %v7792, %v7794
        %v7796 = vrot.slane %v7780, %v7795
        %v7798 = vunpack.c.l.s4 1966171168
        %v7799 = vunpack.c.0.s8 %v7798
        %v7800 = vlaneseq
        %v7801 = vshrl.u32 %v7800, 7
        %v7802 = vsub.s32 %v7799, %v7801
        %v7803 = vrot.slane %v7781, %v7802
        %v7805 = vunpack.c.l.s4 1966171168
        %v7806 = vunpack.c.0.s8 %v7805
        %v7807 = vlaneseq
        %v7808 = vshrl.u32 %v7807, 7
        %v7809 = vsub.s32 %v7806, %v7808
        %v7810 = vrot.slane %v7782, %v7809
        %v7811 = vcombine.low %v7789, %v7796
        %v7812 = vcombine.low %v7803, %v7810
        %v7814 = vunpack.c.l.s4 1966171168
        %v7815 = vunpack.c.0.s8 %v7814
        %v7816 = vlaneseq
        %v7817 = vshrl.u32 %v7816, 7
        %v7818 = vsub.s32 %v7815, %v7817
        %v7819 = vrot.slane %v7811, %v7818
        %v7821 = vunpack.c.l.s4 1966171168
        %v7822 = vunpack.c.0.s8 %v7821
        %v7823 = vlaneseq
        %v7824 = vshrl.u32 %v7823, 7
        %v7825 = vsub.s32 %v7822, %v7824
        %v7826 = vrot.slane %v7812, %v7825
        %v7827 = vcombine.low %v7819, %v7826
        %v7828 = vcombine.low %v4831, %v4835
        %v7829 = vcombine.low %v4839, %v4843
        %v7830 = vcombine.low %v4847, %v4851
        %v7831 = vcombine.low %v4855, %v4859
        %v7833 = vunpack.c.l.s4 1966171168
        %v7834 = vunpack.c.0.s8 %v7833
        %v7835 = vlaneseq
        %v7836 = vshrl.u32 %v7835, 7
        %v7837 = vsub.s32 %v7834, %v7836
        %v7838 = vrot.slane %v7828, %v7837
        %v7840 = vunpack.c.l.s4 1966171168
        %v7841 = vunpack.c.0.s8 %v7840
        %v7842 = vlaneseq
        %v7843 = vshrl.u32 %v7842, 7
        %v7844 = vsub.s32 %v7841, %v7843
        %v7845 = vrot.slane %v7829, %v7844
        %v7847 = vunpack.c.l.s4 1966171168
        %v7848 = vunpack.c.0.s8 %v7847
        %v7849 = vlaneseq
        %v7850 = vshrl.u32 %v7849, 7
        %v7851 = vsub.s32 %v7848, %v7850
        %v7852 = vrot.slane %v7830, %v7851
        %v7854 = vunpack.c.l.s4 1966171168
        %v7855 = vunpack.c.0.s8 %v7854
        %v7856 = vlaneseq
        %v7857 = vshrl.u32 %v7856, 7
        %v7858 = vsub.s32 %v7855, %v7857
        %v7859 = vrot.slane %v7831, %v7858
        %v7860 = vcombine.low %v7838, %v7845
        %v7861 = vcombine.low %v7852, %v7859
        %v7863 = vunpack.c.l.s4 1966171168
        %v7864 = vunpack.c.0.s8 %v7863
        %v7865 = vlaneseq
        %v7866 = vshrl.u32 %v7865, 7
        %v7867 = vsub.s32 %v7864, %v7866
        %v7868 = vrot.slane %v7860, %v7867
        %v7870 = vunpack.c.l.s4 1966171168
        %v7871 = vunpack.c.0.s8 %v7870
        %v7872 = vlaneseq
        %v7873 = vshrl.u32 %v7872, 7
        %v7874 = vsub.s32 %v7871, %v7873
        %v7875 = vrot.slane %v7861, %v7874
        %v7876 = vcombine.low %v7868, %v7875
        %v7877 = vcombine.low %v4863, %v4867
        %v7878 = vcombine.low %v4871, %v4875
        %v7879 = vcombine.low %v4879, %v4883
        %v7880 = vcombine.low %v4887, %v4891
        %v7882 = vunpack.c.l.s4 1966171168
        %v7883 = vunpack.c.0.s8 %v7882
        %v7884 = vlaneseq
        %v7885 = vshrl.u32 %v7884, 7
        %v7886 = vsub.s32 %v7883, %v7885
        %v7887 = vrot.slane %v7877, %v7886
        %v7889 = vunpack.c.l.s4 1966171168
        %v7890 = vunpack.c.0.s8 %v7889
        %v7891 = vlaneseq
        %v7892 = vshrl.u32 %v7891, 7
        %v7893 = vsub.s32 %v7890, %v7892
        %v7894 = vrot.slane %v7878, %v7893
        %v7896 = vunpack.c.l.s4 1966171168
        %v7897 = vunpack.c.0.s8 %v7896
        %v7898 = vlaneseq
        %v7899 = vshrl.u32 %v7898, 7
        %v7900 = vsub.s32 %v7897, %v7899
        %v7901 = vrot.slane %v7879, %v7900
        %v7903 = vunpack.c.l.s4 1966171168
        %v7904 = vunpack.c.0.s8 %v7903
        %v7905 = vlaneseq
        %v7906 = vshrl.u32 %v7905, 7
        %v7907 = vsub.s32 %v7904, %v7906
        %v7908 = vrot.slane %v7880, %v7907
        %v7909 = vcombine.low %v7887, %v7894
        %v7910 = vcombine.low %v7901, %v7908
        %v7912 = vunpack.c.l.s4 1966171168
        %v7913 = vunpack.c.0.s8 %v7912
        %v7914 = vlaneseq
        %v7915 = vshrl.u32 %v7914, 7
        %v7916 = vsub.s32 %v7913, %v7915
        %v7917 = vrot.slane %v7909, %v7916
        %v7919 = vunpack.c.l.s4 1966171168
        %v7920 = vunpack.c.0.s8 %v7919
        %v7921 = vlaneseq
        %v7922 = vshrl.u32 %v7921, 7
        %v7923 = vsub.s32 %v7920, %v7922
        %v7924 = vrot.slane %v7910, %v7923
        %v7925 = vcombine.low %v7917, %v7924
        %v7926 = vcombine.low %v4895, %v4899
        %v7927 = vcombine.low %v4903, %v4907
        %v7928 = vcombine.low %v4911, %v4915
        %v7929 = vcombine.low %v4919, %v4923
        %v7931 = vunpack.c.l.s4 1966171168
        %v7932 = vunpack.c.0.s8 %v7931
        %v7933 = vlaneseq
        %v7934 = vshrl.u32 %v7933, 7
        %v7935 = vsub.s32 %v7932, %v7934
        %v7936 = vrot.slane %v7926, %v7935
        %v7938 = vunpack.c.l.s4 1966171168
        %v7939 = vunpack.c.0.s8 %v7938
        %v7940 = vlaneseq
        %v7941 = vshrl.u32 %v7940, 7
        %v7942 = vsub.s32 %v7939, %v7941
        %v7943 = vrot.slane %v7927, %v7942
        %v7945 = vunpack.c.l.s4 1966171168
        %v7946 = vunpack.c.0.s8 %v7945
        %v7947 = vlaneseq
        %v7948 = vshrl.u32 %v7947, 7
        %v7949 = vsub.s32 %v7946, %v7948
        %v7950 = vrot.slane %v7928, %v7949
        %v7952 = vunpack.c.l.s4 1966171168
        %v7953 = vunpack.c.0.s8 %v7952
        %v7954 = vlaneseq
        %v7955 = vshrl.u32 %v7954, 7
        %v7956 = vsub.s32 %v7953, %v7955
        %v7957 = vrot.slane %v7929, %v7956
        %v7958 = vcombine.low %v7936, %v7943
        %v7959 = vcombine.low %v7950, %v7957
        %v7961 = vunpack.c.l.s4 1966171168
        %v7962 = vunpack.c.0.s8 %v7961
        %v7963 = vlaneseq
        %v7964 = vshrl.u32 %v7963, 7
        %v7965 = vsub.s32 %v7962, %v7964
        %v7966 = vrot.slane %v7958, %v7965
        %v7968 = vunpack.c.l.s4 1966171168
        %v7969 = vunpack.c.0.s8 %v7968
        %v7970 = vlaneseq
        %v7971 = vshrl.u32 %v7970, 7
        %v7972 = vsub.s32 %v7969, %v7971
        %v7973 = vrot.slane %v7959, %v7972
        %v7974 = vcombine.low %v7966, %v7973
        %v7975 = vcombine.low %v4927, %v4931
        %v7976 = vcombine.low %v4935, %v4939
        %v7977 = vcombine.low %v4943, %v4947
        %v7978 = vcombine.low %v4951, %v4955
        %v7980 = vunpack.c.l.s4 1966171168
        %v7981 = vunpack.c.0.s8 %v7980
        %v7982 = vlaneseq
        %v7983 = vshrl.u32 %v7982, 7
        %v7984 = vsub.s32 %v7981, %v7983
        %v7985 = vrot.slane %v7975, %v7984
        %v7987 = vunpack.c.l.s4 1966171168
        %v7988 = vunpack.c.0.s8 %v7987
        %v7989 = vlaneseq
        %v7990 = vshrl.u32 %v7989, 7
        %v7991 = vsub.s32 %v7988, %v7990
        %v7992 = vrot.slane %v7976, %v7991
        %v7994 = vunpack.c.l.s4 1966171168
        %v7995 = vunpack.c.0.s8 %v7994
        %v7996 = vlaneseq
        %v7997 = vshrl.u32 %v7996, 7
        %v7998 = vsub.s32 %v7995, %v7997
        %v7999 = vrot.slane %v7977, %v7998
        %v8001 = vunpack.c.l.s4 1966171168
        %v8002 = vunpack.c.0.s8 %v8001
        %v8003 = vlaneseq
        %v8004 = vshrl.u32 %v8003, 7
        %v8005 = vsub.s32 %v8002, %v8004
        %v8006 = vrot.slane %v7978, %v8005
        %v8007 = vcombine.low %v7985, %v7992
        %v8008 = vcombine.low %v7999, %v8006
        %v8010 = vunpack.c.l.s4 1966171168
        %v8011 = vunpack.c.0.s8 %v8010
        %v8012 = vlaneseq
        %v8013 = vshrl.u32 %v8012, 7
        %v8014 = vsub.s32 %v8011, %v8013
        %v8015 = vrot.slane %v8007, %v8014
        %v8017 = vunpack.c.l.s4 1966171168
        %v8018 = vunpack.c.0.s8 %v8017
        %v8019 = vlaneseq
        %v8020 = vshrl.u32 %v8019, 7
        %v8021 = vsub.s32 %v8018, %v8020
        %v8022 = vrot.slane %v8008, %v8021
        %v8023 = vcombine.low %v8015, %v8022
        %v8024 = vcombine.low %v4959, %v4963
        %v8025 = vcombine.low %v4967, %v4971
        %v8026 = vcombine.low %v4975, %v4979
        %v8027 = vcombine.low %v4983, %v4987
        %v8029 = vunpack.c.l.s4 1966171168
        %v8030 = vunpack.c.0.s8 %v8029
        %v8031 = vlaneseq
        %v8032 = vshrl.u32 %v8031, 7
        %v8033 = vsub.s32 %v8030, %v8032
        %v8034 = vrot.slane %v8024, %v8033
        %v8036 = vunpack.c.l.s4 1966171168
        %v8037 = vunpack.c.0.s8 %v8036
        %v8038 = vlaneseq
        %v8039 = vshrl.u32 %v8038, 7
        %v8040 = vsub.s32 %v8037, %v8039
        %v8041 = vrot.slane %v8025, %v8040
        %v8043 = vunpack.c.l.s4 1966171168
        %v8044 = vunpack.c.0.s8 %v8043
        %v8045 = vlaneseq
        %v8046 = vshrl.u32 %v8045, 7
        %v8047 = vsub.s32 %v8044, %v8046
        %v8048 = vrot.slane %v8026, %v8047
        %v8050 = vunpack.c.l.s4 1966171168
        %v8051 = vunpack.c.0.s8 %v8050
        %v8052 = vlaneseq
        %v8053 = vshrl.u32 %v8052, 7
        %v8054 = vsub.s32 %v8051, %v8053
        %v8055 = vrot.slane %v8027, %v8054
        %v8056 = vcombine.low %v8034, %v8041
        %v8057 = vcombine.low %v8048, %v8055
        %v8059 = vunpack.c.l.s4 1966171168
        %v8060 = vunpack.c.0.s8 %v8059
        %v8061 = vlaneseq
        %v8062 = vshrl.u32 %v8061, 7
        %v8063 = vsub.s32 %v8060, %v8062
        %v8064 = vrot.slane %v8056, %v8063
        %v8066 = vunpack.c.l.s4 1966171168
        %v8067 = vunpack.c.0.s8 %v8066
        %v8068 = vlaneseq
        %v8069 = vshrl.u32 %v8068, 7
        %v8070 = vsub.s32 %v8067, %v8069
        %v8071 = vrot.slane %v8057, %v8070
        %v8072 = vcombine.low %v8064, %v8071
        %v8073 = vcombine.low %v4991, %v4995
        %v8074 = vcombine.low %v4999, %v5003
        %v8075 = vcombine.low %v5007, %v5011
        %v8076 = vcombine.low %v5015, %v5019
        %v8078 = vunpack.c.l.s4 1966171168
        %v8079 = vunpack.c.0.s8 %v8078
        %v8080 = vlaneseq
        %v8081 = vshrl.u32 %v8080, 7
        %v8082 = vsub.s32 %v8079, %v8081
        %v8083 = vrot.slane %v8073, %v8082
        %v8085 = vunpack.c.l.s4 1966171168
        %v8086 = vunpack.c.0.s8 %v8085
        %v8087 = vlaneseq
        %v8088 = vshrl.u32 %v8087, 7
        %v8089 = vsub.s32 %v8086, %v8088
        %v8090 = vrot.slane %v8074, %v8089
        %v8092 = vunpack.c.l.s4 1966171168
        %v8093 = vunpack.c.0.s8 %v8092
        %v8094 = vlaneseq
        %v8095 = vshrl.u32 %v8094, 7
        %v8096 = vsub.s32 %v8093, %v8095
        %v8097 = vrot.slane %v8075, %v8096
        %v8099 = vunpack.c.l.s4 1966171168
        %v8100 = vunpack.c.0.s8 %v8099
        %v8101 = vlaneseq
        %v8102 = vshrl.u32 %v8101, 7
        %v8103 = vsub.s32 %v8100, %v8102
        %v8104 = vrot.slane %v8076, %v8103
        %v8105 = vcombine.low %v8083, %v8090
        %v8106 = vcombine.low %v8097, %v8104
        %v8108 = vunpack.c.l.s4 1966171168
        %v8109 = vunpack.c.0.s8 %v8108
        %v8110 = vlaneseq
        %v8111 = vshrl.u32 %v8110, 7
        %v8112 = vsub.s32 %v8109, %v8111
        %v8113 = vrot.slane %v8105, %v8112
        %v8115 = vunpack.c.l.s4 1966171168
        %v8116 = vunpack.c.0.s8 %v8115
        %v8117 = vlaneseq
        %v8118 = vshrl.u32 %v8117, 7
        %v8119 = vsub.s32 %v8116, %v8118
        %v8120 = vrot.slane %v8106, %v8119
        %v8121 = vcombine.low %v8113, %v8120
        %v8122 = vcombine.low %v5023, %v5027
        %v8123 = vcombine.low %v5031, %v5035
        %v8124 = vcombine.low %v5039, %v5043
        %v8125 = vcombine.low %v5047, %v5051
        %v8127 = vunpack.c.l.s4 1966171168
        %v8128 = vunpack.c.0.s8 %v8127
        %v8129 = vlaneseq
        %v8130 = vshrl.u32 %v8129, 7
        %v8131 = vsub.s32 %v8128, %v8130
        %v8132 = vrot.slane %v8122, %v8131
        %v8134 = vunpack.c.l.s4 1966171168
        %v8135 = vunpack.c.0.s8 %v8134
        %v8136 = vlaneseq
        %v8137 = vshrl.u32 %v8136, 7
        %v8138 = vsub.s32 %v8135, %v8137
        %v8139 = vrot.slane %v8123, %v8138
        %v8141 = vunpack.c.l.s4 1966171168
        %v8142 = vunpack.c.0.s8 %v8141
        %v8143 = vlaneseq
        %v8144 = vshrl.u32 %v8143, 7
        %v8145 = vsub.s32 %v8142, %v8144
        %v8146 = vrot.slane %v8124, %v8145
        %v8148 = vunpack.c.l.s4 1966171168
        %v8149 = vunpack.c.0.s8 %v8148
        %v8150 = vlaneseq
        %v8151 = vshrl.u32 %v8150, 7
        %v8152 = vsub.s32 %v8149, %v8151
        %v8153 = vrot.slane %v8125, %v8152
        %v8154 = vcombine.low %v8132, %v8139
        %v8155 = vcombine.low %v8146, %v8153
        %v8157 = vunpack.c.l.s4 1966171168
        %v8158 = vunpack.c.0.s8 %v8157
        %v8159 = vlaneseq
        %v8160 = vshrl.u32 %v8159, 7
        %v8161 = vsub.s32 %v8158, %v8160
        %v8162 = vrot.slane %v8154, %v8161
        %v8164 = vunpack.c.l.s4 1966171168
        %v8165 = vunpack.c.0.s8 %v8164
        %v8166 = vlaneseq
        %v8167 = vshrl.u32 %v8166, 7
        %v8168 = vsub.s32 %v8165, %v8167
        %v8169 = vrot.slane %v8155, %v8168
        %v8170 = vcombine.low %v8162, %v8169
        %v8171 = vcombine.low %v5055, %v5059
        %v8172 = vcombine.low %v5063, %v5067
        %v8173 = vcombine.low %v5071, %v5075
        %v8174 = vcombine.low %v5079, %v5083
        %v8176 = vunpack.c.l.s4 1966171168
        %v8177 = vunpack.c.0.s8 %v8176
        %v8178 = vlaneseq
        %v8179 = vshrl.u32 %v8178, 7
        %v8180 = vsub.s32 %v8177, %v8179
        %v8181 = vrot.slane %v8171, %v8180
        %v8183 = vunpack.c.l.s4 1966171168
        %v8184 = vunpack.c.0.s8 %v8183
        %v8185 = vlaneseq
        %v8186 = vshrl.u32 %v8185, 7
        %v8187 = vsub.s32 %v8184, %v8186
        %v8188 = vrot.slane %v8172, %v8187
        %v8190 = vunpack.c.l.s4 1966171168
        %v8191 = vunpack.c.0.s8 %v8190
        %v8192 = vlaneseq
        %v8193 = vshrl.u32 %v8192, 7
        %v8194 = vsub.s32 %v8191, %v8193
        %v8195 = vrot.slane %v8173, %v8194
        %v8197 = vunpack.c.l.s4 1966171168
        %v8198 = vunpack.c.0.s8 %v8197
        %v8199 = vlaneseq
        %v8200 = vshrl.u32 %v8199, 7
        %v8201 = vsub.s32 %v8198, %v8200
        %v8202 = vrot.slane %v8174, %v8201
        %v8203 = vcombine.low %v8181, %v8188
        %v8204 = vcombine.low %v8195, %v8202
        %v8206 = vunpack.c.l.s4 1966171168
        %v8207 = vunpack.c.0.s8 %v8206
        %v8208 = vlaneseq
        %v8209 = vshrl.u32 %v8208, 7
        %v8210 = vsub.s32 %v8207, %v8209
        %v8211 = vrot.slane %v8203, %v8210
        %v8213 = vunpack.c.l.s4 1966171168
        %v8214 = vunpack.c.0.s8 %v8213
        %v8215 = vlaneseq
        %v8216 = vshrl.u32 %v8215, 7
        %v8217 = vsub.s32 %v8214, %v8216
        %v8218 = vrot.slane %v8204, %v8217
        %v8219 = vcombine.low %v8211, %v8218
        %8220 = vset.pattern.permute.xlu0 0
        %8221 = vperm.xlu0 %8220, %v5132
        %v8222 = vpop.permute.xlu0 %8221
        %8223 = vset.pattern.permute.xlu0 0
        %8224 = vperm.xlu0 %8223, %v5181
        %v8225 = vpop.permute.xlu0 %8224
        %8226 = vset.pattern.permute.xlu0 0
        %8227 = vperm.xlu0 %8226, %v5230
        %v8228 = vpop.permute.xlu0 %8227
        %8229 = vset.pattern.permute.xlu0 0
        %8230 = vperm.xlu0 %8229, %v5279
        %v8231 = vpop.permute.xlu0 %8230
        %8232 = vset.pattern.permute.xlu0 0
        %8233 = vperm.xlu0 %8232, %v5328
        %v8234 = vpop.permute.xlu0 %8233
        %8235 = vset.pattern.permute.xlu0 0
        %8236 = vperm.xlu0 %8235, %v5377
        %v8237 = vpop.permute.xlu0 %8236
        %8238 = vset.pattern.permute.xlu0 0
        %8239 = vperm.xlu0 %8238, %v5426
        %v8240 = vpop.permute.xlu0 %8239
        %8241 = vset.pattern.permute.xlu0 0
        %8242 = vperm.xlu0 %8241, %v5475
        %v8243 = vpop.permute.xlu0 %8242
        %8244 = vset.pattern.permute.xlu0 0
        %8245 = vperm.xlu0 %8244, %v5524
        %v8246 = vpop.permute.xlu0 %8245
        %8247 = vset.pattern.permute.xlu0 0
        %8248 = vperm.xlu0 %8247, %v5573
        %v8249 = vpop.permute.xlu0 %8248
        %8250 = vset.pattern.permute.xlu0 0
        %8251 = vperm.xlu0 %8250, %v5622
        %v8252 = vpop.permute.xlu0 %8251
        %8253 = vset.pattern.permute.xlu0 0
        %8254 = vperm.xlu0 %8253, %v5671
        %v8255 = vpop.permute.xlu0 %8254
        %8256 = vset.pattern.permute.xlu0 0
        %8257 = vperm.xlu0 %8256, %v5720
        %v8258 = vpop.permute.xlu0 %8257
        %8259 = vset.pattern.permute.xlu0 0
        %8260 = vperm.xlu0 %8259, %v5769
        %v8261 = vpop.permute.xlu0 %8260
        %8262 = vset.pattern.permute.xlu0 0
        %8263 = vperm.xlu0 %8262, %v5818
        %v8264 = vpop.permute.xlu0 %8263
        %8265 = vset.pattern.permute.xlu0 0
        %8266 = vperm.xlu0 %8265, %v5867
        %v8267 = vpop.permute.xlu0 %8266
        %8268 = vset.pattern.permute.xlu0 0
        %8269 = vperm.xlu0 %8268, %v5916
        %v8270 = vpop.permute.xlu0 %8269
        %8271 = vset.pattern.permute.xlu0 0
        %8272 = vperm.xlu0 %8271, %v5965
        %v8273 = vpop.permute.xlu0 %8272
        %8274 = vset.pattern.permute.xlu0 0
        %8275 = vperm.xlu0 %8274, %v6014
        %v8276 = vpop.permute.xlu0 %8275
        %8277 = vset.pattern.permute.xlu0 0
        %8278 = vperm.xlu0 %8277, %v6063
        %v8279 = vpop.permute.xlu0 %8278
        %8280 = vset.pattern.permute.xlu0 0
        %8281 = vperm.xlu0 %8280, %v6112
        %v8282 = vpop.permute.xlu0 %8281
        %8283 = vset.pattern.permute.xlu0 0
        %8284 = vperm.xlu0 %8283, %v6161
        %v8285 = vpop.permute.xlu0 %8284
        %8286 = vset.pattern.permute.xlu0 0
        %8287 = vperm.xlu0 %8286, %v6210
        %v8288 = vpop.permute.xlu0 %8287
        %8289 = vset.pattern.permute.xlu0 0
        %8290 = vperm.xlu0 %8289, %v6259
        %v8291 = vpop.permute.xlu0 %8290
        %8292 = vset.pattern.permute.xlu0 0
        %8293 = vperm.xlu0 %8292, %v6308
        %v8294 = vpop.permute.xlu0 %8293
        %8295 = vset.pattern.permute.xlu0 0
        %8296 = vperm.xlu0 %8295, %v6357
        %v8297 = vpop.permute.xlu0 %8296
        %8298 = vset.pattern.permute.xlu0 0
        %8299 = vperm.xlu0 %8298, %v6406
        %v8300 = vpop.permute.xlu0 %8299
        %8301 = vset.pattern.permute.xlu0 0
        %8302 = vperm.xlu0 %8301, %v6455
        %v8303 = vpop.permute.xlu0 %8302
        %8304 = vset.pattern.permute.xlu0 0
        %8305 = vperm.xlu0 %8304, %v6504
        %v8306 = vpop.permute.xlu0 %8305
        %8307 = vset.pattern.permute.xlu0 0
        %8308 = vperm.xlu0 %8307, %v6553
        %v8309 = vpop.permute.xlu0 %8308
        %8310 = vset.pattern.permute.xlu0 0
        %8311 = vperm.xlu0 %8310, %v6602
        %v8312 = vpop.permute.xlu0 %8311
        %8313 = vset.pattern.permute.xlu0 0
        %8314 = vperm.xlu0 %8313, %v6651
        %v8315 = vpop.permute.xlu0 %8314
        %8316 = vset.pattern.permute.xlu0 0
        %8317 = vperm.xlu0 %8316, %v6700
        %v8318 = vpop.permute.xlu0 %8317
        %8319 = vset.pattern.permute.xlu0 0
        %8320 = vperm.xlu0 %8319, %v6749
        %v8321 = vpop.permute.xlu0 %8320
        %8322 = vset.pattern.permute.xlu0 0
        %8323 = vperm.xlu0 %8322, %v6798
        %v8324 = vpop.permute.xlu0 %8323
        %8325 = vset.pattern.permute.xlu0 0
        %8326 = vperm.xlu0 %8325, %v6847
        %v8327 = vpop.permute.xlu0 %8326
        %8328 = vset.pattern.permute.xlu0 0
        %8329 = vperm.xlu0 %8328, %v6896
        %v8330 = vpop.permute.xlu0 %8329
        %8331 = vset.pattern.permute.xlu0 0
        %8332 = vperm.xlu0 %8331, %v6945
        %v8333 = vpop.permute.xlu0 %8332
        %8334 = vset.pattern.permute.xlu0 0
        %8335 = vperm.xlu0 %8334, %v6994
        %v8336 = vpop.permute.xlu0 %8335
        %8337 = vset.pattern.permute.xlu0 0
        %8338 = vperm.xlu0 %8337, %v7043
        %v8339 = vpop.permute.xlu0 %8338
        %8340 = vset.pattern.permute.xlu0 0
        %8341 = vperm.xlu0 %8340, %v7092
        %v8342 = vpop.permute.xlu0 %8341
        %8343 = vset.pattern.permute.xlu0 0
        %8344 = vperm.xlu0 %8343, %v7141
        %v8345 = vpop.permute.xlu0 %8344
        %8346 = vset.pattern.permute.xlu0 0
        %8347 = vperm.xlu0 %8346, %v7190
        %v8348 = vpop.permute.xlu0 %8347
        %8349 = vset.pattern.permute.xlu0 0
        %8350 = vperm.xlu0 %8349, %v7239
        %v8351 = vpop.permute.xlu0 %8350
        %8352 = vset.pattern.permute.xlu0 0
        %8353 = vperm.xlu0 %8352, %v7288
        %v8354 = vpop.permute.xlu0 %8353
        %8355 = vset.pattern.permute.xlu0 0
        %8356 = vperm.xlu0 %8355, %v7337
        %v8357 = vpop.permute.xlu0 %8356
        %8358 = vset.pattern.permute.xlu0 0
        %8359 = vperm.xlu0 %8358, %v7386
        %v8360 = vpop.permute.xlu0 %8359
        %8361 = vset.pattern.permute.xlu0 0
        %8362 = vperm.xlu0 %8361, %v7435
        %v8363 = vpop.permute.xlu0 %8362
        %8364 = vset.pattern.permute.xlu0 0
        %8365 = vperm.xlu0 %8364, %v7484
        %v8366 = vpop.permute.xlu0 %8365
        %8367 = vset.pattern.permute.xlu0 0
        %8368 = vperm.xlu0 %8367, %v7533
        %v8369 = vpop.permute.xlu0 %8368
        %8370 = vset.pattern.permute.xlu0 0
        %8371 = vperm.xlu0 %8370, %v7582
        %v8372 = vpop.permute.xlu0 %8371
        %8373 = vset.pattern.permute.xlu0 0
        %8374 = vperm.xlu0 %8373, %v7631
        %v8375 = vpop.permute.xlu0 %8374
        %8376 = vset.pattern.permute.xlu0 0
        %8377 = vperm.xlu0 %8376, %v7680
        %v8378 = vpop.permute.xlu0 %8377
        %8379 = vset.pattern.permute.xlu0 0
        %8380 = vperm.xlu0 %8379, %v7729
        %v8381 = vpop.permute.xlu0 %8380
        %8382 = vset.pattern.permute.xlu0 0
        %8383 = vperm.xlu0 %8382, %v7778
        %v8384 = vpop.permute.xlu0 %8383
        %8385 = vset.pattern.permute.xlu0 0
        %8386 = vperm.xlu0 %8385, %v7827
        %v8387 = vpop.permute.xlu0 %8386
        %8388 = vset.pattern.permute.xlu0 0
        %8389 = vperm.xlu0 %8388, %v7876
        %v8390 = vpop.permute.xlu0 %8389
        %8391 = vset.pattern.permute.xlu0 0
        %8392 = vperm.xlu0 %8391, %v7925
        %v8393 = vpop.permute.xlu0 %8392
        %8394 = vset.pattern.permute.xlu0 0
        %8395 = vperm.xlu0 %8394, %v7974
        %v8396 = vpop.permute.xlu0 %8395
        %8397 = vset.pattern.permute.xlu0 0
        %8398 = vperm.xlu0 %8397, %v8023
        %v8399 = vpop.permute.xlu0 %8398
        %8400 = vset.pattern.permute.xlu0 0
        %8401 = vperm.xlu0 %8400, %v8072
        %v8402 = vpop.permute.xlu0 %8401
        %8403 = vset.pattern.permute.xlu0 0
        %8404 = vperm.xlu0 %8403, %v8121
        %v8405 = vpop.permute.xlu0 %8404
        %8406 = vset.pattern.permute.xlu0 0
        %8407 = vperm.xlu0 %8406, %v8170
        %v8408 = vpop.permute.xlu0 %8407
        %8409 = vset.pattern.permute.xlu0 0
        %8410 = vperm.xlu0 %8409, %v8219
        %v8411 = vpop.permute.xlu0 %8410
        %v8412 = vlaneseq
        %v8413 = vand.u32 %v8412, 127
        %v8414 = vlaneseq
        %v8415 = vshrl.u32 %v8414, 7
        %v8416 = vsub.s32 %v8413, %v8415
        %v8417 = vrot.slane %v8222, %v8416
        %v8418 = vadd.s32 %v8413, 4294967288
        %v8419 = vlaneseq
        %v8420 = vshrl.u32 %v8419, 7
        %v8421 = vsub.s32 %v8418, %v8420
        %v8422 = vrot.slane %v8225, %v8421
        %vm8423 = vcmask 130112
        %v8424 = vsel %vm8423, %v8422, %v8417
        %v8425 = vadd.s32 %v8413, 4294967280
        %v8426 = vlaneseq
        %v8427 = vshrl.u32 %v8426, 7
        %v8428 = vsub.s32 %v8425, %v8427
        %v8429 = vrot.slane %v8228, %v8428
        %vm8430 = vcmask 195712
        %v8431 = vsel %vm8430, %v8429, %v8424
        %v8432 = vadd.s32 %v8413, 4294967272
        %v8433 = vlaneseq
        %v8434 = vshrl.u32 %v8433, 7
        %v8435 = vsub.s32 %v8432, %v8434
        %v8436 = vrot.slane %v8231, %v8435
        %vm8437 = vcmask 261312
        %v8438 = vsel %vm8437, %v8436, %v8431
        %v8439 = vadd.s32 %v8413, 4294967264
        %v8440 = vlaneseq
        %v8441 = vshrl.u32 %v8440, 7
        %v8442 = vsub.s32 %v8439, %v8441
        %v8443 = vrot.slane %v8234, %v8442
        %vm8444 = vcmask 326912
        %v8445 = vsel %vm8444, %v8443, %v8438
        %v8446 = vadd.s32 %v8413, 4294967256
        %v8447 = vlaneseq
        %v8448 = vshrl.u32 %v8447, 7
        %v8449 = vsub.s32 %v8446, %v8448
        %v8450 = vrot.slane %v8237, %v8449
        %vm8451 = vcmask 392512
        %v8452 = vsel %vm8451, %v8450, %v8445
        %v8453 = vadd.s32 %v8413, 4294967248
        %v8454 = vlaneseq
        %v8455 = vshrl.u32 %v8454, 7
        %v8456 = vsub.s32 %v8453, %v8455
        %v8457 = vrot.slane %v8240, %v8456
        %vm8458 = vcmask 458112
        %v8459 = vsel %vm8458, %v8457, %v8452
        %v8460 = vadd.s32 %v8413, 4294967240
        %v8461 = vlaneseq
        %v8462 = vshrl.u32 %v8461, 7
        %v8463 = vsub.s32 %v8460, %v8462
        %v8464 = vrot.slane %v8243, %v8463
        %vm8465 = vcmask 523712
        %v8466 = vsel %vm8465, %v8464, %v8459
        %v8467 = vadd.s32 %v8413, 4294967232
        %v8468 = vlaneseq
        %v8469 = vshrl.u32 %v8468, 7
        %v8470 = vsub.s32 %v8467, %v8469
        %v8471 = vrot.slane %v8246, %v8470
        %vm8472 = vcmask 589312
        %v8473 = vsel %vm8472, %v8471, %v8466
        %v8474 = vadd.s32 %v8413, 4294967224
        %v8475 = vlaneseq
        %v8476 = vshrl.u32 %v8475, 7
        %v8477 = vsub.s32 %v8474, %v8476
        %v8478 = vrot.slane %v8249, %v8477
        %vm8479 = vcmask 654912
        %v8480 = vsel %vm8479, %v8478, %v8473
        %v8481 = vadd.s32 %v8413, 4294967216
        %v8482 = vlaneseq
        %v8483 = vshrl.u32 %v8482, 7
        %v8484 = vsub.s32 %v8481, %v8483
        %v8485 = vrot.slane %v8252, %v8484
        %vm8486 = vcmask 720512
        %v8487 = vsel %vm8486, %v8485, %v8480
        %v8488 = vadd.s32 %v8413, 4294967208
        %v8489 = vlaneseq
        %v8490 = vshrl.u32 %v8489, 7
        %v8491 = vsub.s32 %v8488, %v8490
        %v8492 = vrot.slane %v8255, %v8491
        %vm8493 = vcmask 786112
        %v8494 = vsel %vm8493, %v8492, %v8487
        %v8495 = vadd.s32 %v8413, 4294967200
        %v8496 = vlaneseq
        %v8497 = vshrl.u32 %v8496, 7
        %v8498 = vsub.s32 %v8495, %v8497
        %v8499 = vrot.slane %v8258, %v8498
        %vm8500 = vcmask 851712
        %v8501 = vsel %vm8500, %v8499, %v8494
        %v8502 = vadd.s32 %v8413, 4294967192
        %v8503 = vlaneseq
        %v8504 = vshrl.u32 %v8503, 7
        %v8505 = vsub.s32 %v8502, %v8504
        %v8506 = vrot.slane %v8261, %v8505
        %vm8507 = vcmask 917312
        %v8508 = vsel %vm8507, %v8506, %v8501
        %v8509 = vadd.s32 %v8413, 4294967184
        %v8510 = vlaneseq
        %v8511 = vshrl.u32 %v8510, 7
        %v8512 = vsub.s32 %v8509, %v8511
        %v8513 = vrot.slane %v8264, %v8512
        %vm8514 = vcmask 982912
        %v8515 = vsel %vm8514, %v8513, %v8508
        %v8516 = vadd.s32 %v8413, 4294967176
        %v8517 = vlaneseq
        %v8518 = vshrl.u32 %v8517, 7
        %v8519 = vsub.s32 %v8516, %v8518
        %v8520 = vrot.slane %v8267, %v8519
        %vm8521 = vcmask 1048512
        %v8522 = vsel %vm8521, %v8520, %v8515
        %v8523 = vlaneseq
        %v8524 = vshrl.u32 %v8523, 7
        %v8525 = vsub.s32 %v8413, %v8524
        %v8526 = vrot.slane %v8270, %v8525
        %v8527 = vlaneseq
        %v8528 = vshrl.u32 %v8527, 7
        %v8529 = vsub.s32 %v8418, %v8528
        %v8530 = vrot.slane %v8273, %v8529
        %v8531 = vsel %vm8423, %v8530, %v8526
        %v8532 = vlaneseq
        %v8533 = vshrl.u32 %v8532, 7
        %v8534 = vsub.s32 %v8425, %v8533
        %v8535 = vrot.slane %v8276, %v8534
        %v8536 = vsel %vm8430, %v8535, %v8531
        %v8537 = vlaneseq
        %v8538 = vshrl.u32 %v8537, 7
        %v8539 = vsub.s32 %v8432, %v8538
        %v8540 = vrot.slane %v8279, %v8539
        %v8541 = vsel %vm8437, %v8540, %v8536
        %v8542 = vlaneseq
        %v8543 = vshrl.u32 %v8542, 7
        %v8544 = vsub.s32 %v8439, %v8543
        %v8545 = vrot.slane %v8282, %v8544
        %v8546 = vsel %vm8444, %v8545, %v8541
        %v8547 = vlaneseq
        %v8548 = vshrl.u32 %v8547, 7
        %v8549 = vsub.s32 %v8446, %v8548
        %v8550 = vrot.slane %v8285, %v8549
        %v8551 = vsel %vm8451, %v8550, %v8546
        %v8552 = vlaneseq
        %v8553 = vshrl.u32 %v8552, 7
        %v8554 = vsub.s32 %v8453, %v8553
        %v8555 = vrot.slane %v8288, %v8554
        %v8556 = vsel %vm8458, %v8555, %v8551
        %v8557 = vlaneseq
        %v8558 = vshrl.u32 %v8557, 7
        %v8559 = vsub.s32 %v8460, %v8558
        %v8560 = vrot.slane %v8291, %v8559
        %v8561 = vsel %vm8465, %v8560, %v8556
        %v8562 = vlaneseq
        %v8563 = vshrl.u32 %v8562, 7
        %v8564 = vsub.s32 %v8467, %v8563
        %v8565 = vrot.slane %v8294, %v8564
        %v8566 = vsel %vm8472, %v8565, %v8561
        %v8567 = vlaneseq
        %v8568 = vshrl.u32 %v8567, 7
        %v8569 = vsub.s32 %v8474, %v8568
        %v8570 = vrot.slane %v8297, %v8569
        %v8571 = vsel %vm8479, %v8570, %v8566
        %v8572 = vlaneseq
        %v8573 = vshrl.u32 %v8572, 7
        %v8574 = vsub.s32 %v8481, %v8573
        %v8575 = vrot.slane %v8300, %v8574
        %v8576 = vsel %vm8486, %v8575, %v8571
        %v8577 = vlaneseq
        %v8578 = vshrl.u32 %v8577, 7
        %v8579 = vsub.s32 %v8488, %v8578
        %v8580 = vrot.slane %v8303, %v8579
        %v8581 = vsel %vm8493, %v8580, %v8576
        %v8582 = vlaneseq
        %v8583 = vshrl.u32 %v8582, 7
        %v8584 = vsub.s32 %v8495, %v8583
        %v8585 = vrot.slane %v8306, %v8584
        %v8586 = vsel %vm8500, %v8585, %v8581
        %v8587 = vlaneseq
        %v8588 = vshrl.u32 %v8587, 7
        %v8589 = vsub.s32 %v8502, %v8588
        %v8590 = vrot.slane %v8309, %v8589
        %v8591 = vsel %vm8507, %v8590, %v8586
        %v8592 = vlaneseq
        %v8593 = vshrl.u32 %v8592, 7
        %v8594 = vsub.s32 %v8509, %v8593
        %v8595 = vrot.slane %v8312, %v8594
        %v8596 = vsel %vm8514, %v8595, %v8591
        %v8597 = vlaneseq
        %v8598 = vshrl.u32 %v8597, 7
        %v8599 = vsub.s32 %v8516, %v8598
        %v8600 = vrot.slane %v8315, %v8599
        %v8601 = vsel %vm8521, %v8600, %v8596
        %v8602 = vlaneseq
        %v8603 = vshrl.u32 %v8602, 7
        %v8604 = vsub.s32 %v8413, %v8603
        %v8605 = vrot.slane %v8318, %v8604
        %v8606 = vlaneseq
        %v8607 = vshrl.u32 %v8606, 7
        %v8608 = vsub.s32 %v8418, %v8607
        %v8609 = vrot.slane %v8321, %v8608
        %v8610 = vsel %vm8423, %v8609, %v8605
        %v8611 = vlaneseq
        %v8612 = vshrl.u32 %v8611, 7
        %v8613 = vsub.s32 %v8425, %v8612
        %v8614 = vrot.slane %v8324, %v8613
        %v8615 = vsel %vm8430, %v8614, %v8610
        %v8616 = vlaneseq
        %v8617 = vshrl.u32 %v8616, 7
        %v8618 = vsub.s32 %v8432, %v8617
        %v8619 = vrot.slane %v8327, %v8618
        %v8620 = vsel %vm8437, %v8619, %v8615
        %v8621 = vlaneseq
        %v8622 = vshrl.u32 %v8621, 7
        %v8623 = vsub.s32 %v8439, %v8622
        %v8624 = vrot.slane %v8330, %v8623
        %v8625 = vsel %vm8444, %v8624, %v8620
        %v8626 = vlaneseq
        %v8627 = vshrl.u32 %v8626, 7
        %v8628 = vsub.s32 %v8446, %v8627
        %v8629 = vrot.slane %v8333, %v8628
        %v8630 = vsel %vm8451, %v8629, %v8625
        %v8631 = vlaneseq
        %v8632 = vshrl.u32 %v8631, 7
        %v8633 = vsub.s32 %v8453, %v8632
        %v8634 = vrot.slane %v8336, %v8633
        %v8635 = vsel %vm8458, %v8634, %v8630
        %v8636 = vlaneseq
        %v8637 = vshrl.u32 %v8636, 7
        %v8638 = vsub.s32 %v8460, %v8637
        %v8639 = vrot.slane %v8339, %v8638
        %v8640 = vsel %vm8465, %v8639, %v8635
        %v8641 = vlaneseq
        %v8642 = vshrl.u32 %v8641, 7
        %v8643 = vsub.s32 %v8467, %v8642
        %v8644 = vrot.slane %v8342, %v8643
        %v8645 = vsel %vm8472, %v8644, %v8640
        %v8646 = vlaneseq
        %v8647 = vshrl.u32 %v8646, 7
        %v8648 = vsub.s32 %v8474, %v8647
        %v8649 = vrot.slane %v8345, %v8648
        %v8650 = vsel %vm8479, %v8649, %v8645
        %v8651 = vlaneseq
        %v8652 = vshrl.u32 %v8651, 7
        %v8653 = vsub.s32 %v8481, %v8652
        %v8654 = vrot.slane %v8348, %v8653
        %v8655 = vsel %vm8486, %v8654, %v8650
        %v8656 = vlaneseq
        %v8657 = vshrl.u32 %v8656, 7
        %v8658 = vsub.s32 %v8488, %v8657
        %v8659 = vrot.slane %v8351, %v8658
        %v8660 = vsel %vm8493, %v8659, %v8655
        %v8661 = vlaneseq
        %v8662 = vshrl.u32 %v8661, 7
        %v8663 = vsub.s32 %v8495, %v8662
        %v8664 = vrot.slane %v8354, %v8663
        %v8665 = vsel %vm8500, %v8664, %v8660
        %v8666 = vlaneseq
        %v8667 = vshrl.u32 %v8666, 7
        %v8668 = vsub.s32 %v8502, %v8667
        %v8669 = vrot.slane %v8357, %v8668
        %v8670 = vsel %vm8507, %v8669, %v8665
        %v8671 = vlaneseq
        %v8672 = vshrl.u32 %v8671, 7
        %v8673 = vsub.s32 %v8509, %v8672
        %v8674 = vrot.slane %v8360, %v8673
        %v8675 = vsel %vm8514, %v8674, %v8670
        %v8676 = vlaneseq
        %v8677 = vshrl.u32 %v8676, 7
        %v8678 = vsub.s32 %v8516, %v8677
        %v8679 = vrot.slane %v8363, %v8678
        %v8680 = vsel %vm8521, %v8679, %v8675
        %v8681 = vlaneseq
        %v8682 = vshrl.u32 %v8681, 7
        %v8683 = vsub.s32 %v8413, %v8682
        %v8684 = vrot.slane %v8366, %v8683
        %v8685 = vlaneseq
        %v8686 = vshrl.u32 %v8685, 7
        %v8687 = vsub.s32 %v8418, %v8686
        %v8688 = vrot.slane %v8369, %v8687
        %v8689 = vsel %vm8423, %v8688, %v8684
        %v8690 = vlaneseq
        %v8691 = vshrl.u32 %v8690, 7
        %v8692 = vsub.s32 %v8425, %v8691
        %v8693 = vrot.slane %v8372, %v8692
        %v8694 = vsel %vm8430, %v8693, %v8689
        %v8695 = vlaneseq
        %v8696 = vshrl.u32 %v8695, 7
        %v8697 = vsub.s32 %v8432, %v8696
        %v8698 = vrot.slane %v8375, %v8697
        %v8699 = vsel %vm8437, %v8698, %v8694
        %v8700 = vlaneseq
        %v8701 = vshrl.u32 %v8700, 7
        %v8702 = vsub.s32 %v8439, %v8701
        %v8703 = vrot.slane %v8378, %v8702
        %v8704 = vsel %vm8444, %v8703, %v8699
        %v8705 = vlaneseq
        %v8706 = vshrl.u32 %v8705, 7
        %v8707 = vsub.s32 %v8446, %v8706
        %v8708 = vrot.slane %v8381, %v8707
        %v8709 = vsel %vm8451, %v8708, %v8704
        %v8710 = vlaneseq
        %v8711 = vshrl.u32 %v8710, 7
        %v8712 = vsub.s32 %v8453, %v8711
        %v8713 = vrot.slane %v8384, %v8712
        %v8714 = vsel %vm8458, %v8713, %v8709
        %v8715 = vlaneseq
        %v8716 = vshrl.u32 %v8715, 7
        %v8717 = vsub.s32 %v8460, %v8716
        %v8718 = vrot.slane %v8387, %v8717
        %v8719 = vsel %vm8465, %v8718, %v8714
        %v8720 = vlaneseq
        %v8721 = vshrl.u32 %v8720, 7
        %v8722 = vsub.s32 %v8467, %v8721
        %v8723 = vrot.slane %v8390, %v8722
        %v8724 = vsel %vm8472, %v8723, %v8719
        %v8725 = vlaneseq
        %v8726 = vshrl.u32 %v8725, 7
        %v8727 = vsub.s32 %v8474, %v8726
        %v8728 = vrot.slane %v8393, %v8727
        %v8729 = vsel %vm8479, %v8728, %v8724
        %v8730 = vlaneseq
        %v8731 = vshrl.u32 %v8730, 7
        %v8732 = vsub.s32 %v8481, %v8731
        %v8733 = vrot.slane %v8396, %v8732
        %v8734 = vsel %vm8486, %v8733, %v8729
        %v8735 = vlaneseq
        %v8736 = vshrl.u32 %v8735, 7
        %v8737 = vsub.s32 %v8488, %v8736
        %v8738 = vrot.slane %v8399, %v8737
        %v8739 = vsel %vm8493, %v8738, %v8734
        %v8740 = vlaneseq
        %v8741 = vshrl.u32 %v8740, 7
        %v8742 = vsub.s32 %v8495, %v8741
        %v8743 = vrot.slane %v8402, %v8742
        %v8744 = vsel %vm8500, %v8743, %v8739
        %v8745 = vlaneseq
        %v8746 = vshrl.u32 %v8745, 7
        %v8747 = vsub.s32 %v8502, %v8746
        %v8748 = vrot.slane %v8405, %v8747
        %v8749 = vsel %vm8507, %v8748, %v8744
        %v8750 = vlaneseq
        %v8751 = vshrl.u32 %v8750, 7
        %v8752 = vsub.s32 %v8509, %v8751
        %v8753 = vrot.slane %v8408, %v8752
        %v8754 = vsel %vm8514, %v8753, %v8749
        %v8755 = vlaneseq
        %v8756 = vshrl.u32 %v8755, 7
        %v8757 = vsub.s32 %v8516, %v8756
        %v8758 = vrot.slane %v8411, %v8757
        %v8759 = vsel %vm8521, %v8758, %v8754
        %v8760 = vcombine.low %v8522, %v8601
        %v8761 = vcombine.low %v8680, %v8759
        %v8763 = vunpack.c.l.s4 1966171168
        %v8764 = vunpack.c.0.s8 %v8763
        %v8765 = vlaneseq
        %v8766 = vshrl.u32 %v8765, 7
        %v8767 = vsub.s32 %v8764, %v8766
        %v8768 = vrot.slane %v8760, %v8767
        %v8770 = vunpack.c.l.s4 1966171168
        %v8771 = vunpack.c.0.s8 %v8770
        %v8772 = vlaneseq
        %v8773 = vshrl.u32 %v8772, 7
        %v8774 = vsub.s32 %v8771, %v8773
        %v8775 = vrot.slane %v8761, %v8774
        %v8776 = vcombine.low %v8768, %v8775
        %v8778 = vunpack.c.l.s4 1966171168
        %v8779 = vunpack.c.0.s8 %v8778
        %v8780 = vlaneseq
        %v8781 = vshrl.u32 %v8780, 7
        %v8782 = vsub.s32 %v8779, %v8781
        %v8783 = vrot.slane %v8776, %v8782
        %v8785 = vlaneseq
        %vm8786 = vcmp.ge.s32.totalorder %v8785, 0
        %vm8787 = vcmp.lt.s32.totalorder %v8785, 512
        %vm8788 = vmand %vm8786, %vm8787
        %8789 = vst.msk [vmem:[%s244] sm:$0xf] %vm8788, %v8783
        %s8790 = sand.u32 %s147, 1
        %s8791 = scalar_lea.sflag [#allocation3], %s8790
        %s8792 = sand.u32 %s147, 1
        %s8793 = smul.addr %s8792, 4
        %s8794 = scalar_lea.vmem [#allocation2], %s8793
        // Predicated region
        $region41: #{tpu_custom_call.1} parent=39 // pred_check
          %p8795 = pneg %p157
        $region42: #{tpu_custom_call.1} parent=39 // pred_check_branch
          %8797 = sbr.rel (%p8795) target = $region44
        $region43: #{tpu_custom_call.1} parent=39 // pred_region
          %s8798 = smul.u32 4, %s19
          %s8800 = ssub.s32 64, 64
          %8801 = vsyncadd %s8791, %s8800
          %s8802 = smul.addr %s8798, 16
          %s8803 = scalar_lea.hbm %s5, %s8802
          %s8805 = sshll.u32 %s8794, 4
          %s8806 = int_to_ptr.vmem [resolvable:$true] %s8805
          %8808 = dma.vmem_to_hbm [thread:$0]  %s8806, 64, %s8803, %s8791
        $region44: #{tpu_custom_call.1} parent=39 // pred_fallthru
          _
      $region40: #{tpu_custom_call.1} parent=5 // pred_fallthru
        _
      %p8809 = scmp.le.s32.totalorder 2, %s14
      // Predicated region
      $region45: #{tpu_custom_call.1} parent=5 // pred_check
        %p8810 = pneg %p8809
      $region46: #{tpu_custom_call.1} parent=5 // pred_check_branch
        %8812 = sbr.rel (%p8810) target = $region48
      $region47: #{tpu_custom_call.1} parent=5 // pred_region
        %s8813 = ssub.s32 %s14, 2
        // Predicated region
        $region49: #{tpu_custom_call.1} parent=47 // pred_check
          %p8814 = pneg %p163
        $region50: #{tpu_custom_call.1} parent=47 // pred_check_branch
          %8816 = sbr.rel (%p8814) target = $region52
        $region51: #{tpu_custom_call.1} parent=47 // pred_region
          %s8817 = sand.u32 %s148, 1
          %s8818 = scalar_lea.sflag [#allocation3], %s8817
          %s8819 = sand.u32 %s148, 1
          %s8820 = smul.addr %s8819, 4
          %s8821 = scalar_lea.vmem [#allocation2], %s8820
          %8822 = dma.done %s8818, 64
        $region52: #{tpu_custom_call.1} parent=47 // pred_fallthru
          _
      $region48: #{tpu_custom_call.1} parent=5 // pred_fallthru
        _
    $region6: #{tpu_custom_call.1} parent=1 // loop_footer
      %s18 = sadd.s32 1, %s14
    $region7: #{tpu_custom_call.1} parent=1 // loop_footer_branch
      %13 = sbr.rel target = $region3
    $region8: #{tpu_custom_call.1} parent=1 // loop_exit
      _
    %8823 = vsyncpa [#allocation3], 1
    %s8824 = scalar_lea.sflag [#allocation3], 1
    %8825 = vsyncpa %s8824, 1

</llo_original>
